<compile_context>
chip_gen: v7x
topology: tpu7x:2x2x1
jax: 0.10.0
libtpu: 0.0.40
codegen_flags: <defaults>
</compile_context>

<pallas_src>
import functools

import jax
import jax.numpy as jnp
from jax import lax
from jax.experimental import pallas as pl
from jax.experimental.pallas import tpu as pltpu

dropout = 0.2        # eval-mode dropout == identity
n_embd = 384
block_size = 256
n_head = 6

_NEG_INF = -1e30     # large finite negative (safer than -inf if reused with padding masks)


def mha_kernel(x_ref, wq_ref, wkv_ref, wproj_ref, bproj_ref, o_ref, *, num_heads):
    # x_ref:     (T, C)   bf16  full sequence for this batch element
    # wq_ref:    (C, C)   bf16  fused per-head query weights (head-major columns)
    # wkv_ref:   (C, 2C)  bf16  fused per-head key | value weights
    # wproj_ref: (C, C)   bf16  output projection (out = att @ wproj)
    # bproj_ref: (1, C)   f32   output projection bias
    # o_ref:     (tq, C)  f32   output rows for this query tile
    T, C = x_ref.shape
    tq = o_ref.shape[0]
    Hd = C // num_heads
    scale = float(C) ** -0.5            # PyTorch Head scales by C = n_embd, not head_size

    qi = pl.program_id(1)
    q_start = pl.multiple_of(qi * tq, tq)

    x = x_ref[...]                                   # (T, C)  bf16
    xq = x_ref[pl.ds(q_start, tq), :]                # (tq, C) bf16  query rows of this tile

    # fused projections, f32 accumulation on the MXU
    q = jnp.dot(xq, wq_ref[...], preferred_element_type=jnp.float32)    # (tq, C)
    kv = jnp.dot(x, wkv_ref[...], preferred_element_type=jnp.float32)   # (T, 2C)

    q_b = q.astype(jnp.bfloat16)
    k_b = kv[:, :C].astype(jnp.bfloat16)
    v_b = kv[:, C:].astype(jnp.bfloat16)

    # causal additive bias for this query tile, built once, reused across heads
    rows = q_start + lax.broadcasted_iota(jnp.int32, (tq, T), 0)
    cols = lax.broadcasted_iota(jnp.int32, (tq, T), 1)
    causal_bias = jnp.where(cols <= rows, 0.0, _NEG_INF).astype(jnp.float32)

    head_outs = []
    for h in range(num_heads):
        sl = slice(h * Hd, (h + 1) * Hd)
        qh, kh, vh = q_b[:, sl], k_b[:, sl], v_b[:, sl]
        # scores: contract the head dim directly (no explicit k transpose)
        s = lax.dot_general(qh, kh, dimension_numbers=(((1,), (1,)), ((), ())),
                            preferred_element_type=jnp.float32)          # (tq, T)
        s = s * scale + causal_bias
        m = jnp.max(s, axis=-1, keepdims=True)
        p = jnp.exp(s - m)                                               # f32 elementwise (v5e-safe)
        denom = jnp.sum(p, axis=-1, keepdims=True)                       # (tq, 1)
        pv = jnp.dot(p.astype(jnp.bfloat16), vh,
                     preferred_element_type=jnp.float32)                 # (tq, Hd)
        # deferred normalisation on the small (tq, Hd) output, EUP reciprocal
        head_outs.append(pv * pl.reciprocal(denom, approx=True))

    att = jnp.concatenate(head_outs, axis=-1)                            # (tq, C) == concat of heads
    out = jnp.dot(att.astype(jnp.bfloat16), wproj_ref[...],
                  preferred_element_type=jnp.float32) + bproj_ref[...]
    # TODO(synk): nn.Dropout(0.2) on the attention weights and after the projection
    # is omitted -- forward is reproduced in eval mode where dropout is the identity.
    o_ref[...] = out.astype(o_ref.dtype)


def mha_forward(x, wq, wkv, wproj, bproj, *, num_heads=n_head, tq=128):
    """Causal multi-head self-attention + output projection (eval mode).

    x:     (B, T, C) float, C = n_embd
    wq:    (C, C)  per-head query weights; head h occupies columns [h*Hd, (h+1)*Hd)
    wkv:   (C, 2C) per-head key weights (first C cols) | value weights (last C cols)
    wproj: (C, C)  output projection (stored transposed vs. PyTorch)
    bproj: (1, C)  output projection bias
    returns (B, T, C) float32
    """
    B, T, C = x.shape
    tq = min(tq, T)
    assert T % tq == 0 and T % 8 == 0 and C % 128 == 0 and C % num_heads == 0
    nq = T // tq

    # bf16 operands for the MXU (f32 accumulation inside the kernel); halves x DMA bytes
    x_b = x.astype(jnp.bfloat16)
    wq_b = wq.astype(jnp.bfloat16)
    wkv_b = wkv.astype(jnp.bfloat16)
    wproj_b = wproj.astype(jnp.bfloat16)
    bproj_f = bproj.astype(jnp.float32)

    kernel = functools.partial(mha_kernel, num_heads=num_heads)
    return pl.pallas_call(
        kernel,
        out_shape=jax.ShapeDtypeStruct((B, T, C), jnp.float32),
        grid_spec=pltpu.PrefetchScalarGridSpec(
            num_scalar_prefetch=0,
            grid=(B, nq),
            in_specs=[
                pl.BlockSpec((None, T, C), lambda b, q: (b, 0, 0)),  # x (full seq, resident per batch)
                pl.BlockSpec((C, C), lambda b, q: (0, 0)),           # Wq      (resident)
                pl.BlockSpec((C, 2 * C), lambda b, q: (0, 0)),       # Wk|Wv   (resident)
                pl.BlockSpec((C, C), lambda b, q: (0, 0)),           # Wproj   (resident)
                pl.BlockSpec((1, C), lambda b, q: (0, 0)),           # bias    (resident)
            ],
            out_specs=pl.BlockSpec((None, tq, C), lambda b, q: (b, q, 0)),
        ),
        compiler_params=pltpu.CompilerParams(
            dimension_semantics=("parallel", "parallel")),
    )(x_b, wq_b, wkv_b, wproj_b, bproj_f)


def mha_reference(x, wq, wkv, wproj, bproj, *, num_heads):
    """Pure-JAX reference mirroring the PyTorch MultiHeadAttention forward (eval mode).
    Inputs are rounded to bf16 to match the kernel's MXU operands; math is f32."""
    rnd = lambda a: a.astype(jnp.bfloat16).astype(jnp.float32)
    x, wq, wkv, wproj = rnd(x), rnd(wq), rnd(wkv), rnd(wproj)
    bproj = bproj.astype(jnp.float32)

    B, T, C = x.shape
    Hd = C // num_heads
    q = x @ wq                                   # (B, T, C)
    kvp = x @ wkv                                # (B, T, 2C)
    k, v = kvp[..., :C], kvp[..., C:]
    mask = jnp.tril(jnp.ones((T, T), dtype=bool))

    outs = []
    for h in range(num_heads):
        sl = slice(h * Hd, (h + 1) * Hd)
        wei = jnp.einsum("btd,bsd->bts", q[..., sl], k[..., sl]) * (C ** -0.5)
        wei = jnp.where(mask[None], wei, -jnp.inf)
        wei = jax.nn.softmax(wei, axis=-1)
        outs.append(jnp.einsum("bts,bsd->btd", wei, v[..., sl]))
    att = jnp.concatenate(outs, axis=-1)         # torch.cat([h(x) for h in heads], -1)
    return att @ wproj + bproj


if __name__ == "__main__":
    B, T = 2, block_size          # (2, 256): full causal context, small batch
    head_size = n_embd // n_head  # 64

    key = jax.random.PRNGKey(0)
    kx, kq, kk, kv, kp, kb = jax.random.split(key, 6)

    x = jax.random.normal(kx, (B, T, n_embd), dtype=jnp.float32)

    # nn.Linear(n_embd, head_size, bias=False) weights for all 6 heads, stored
    # transposed ((C, Hd) per head) and fused head-major along the columns.
    bound = 1.0 / (n_embd ** 0.5)
    wq = jax.random.uniform(kq, (n_embd, n_embd), jnp.float32, -bound, bound)
    wk = jax.random.uniform(kk, (n_embd, n_embd), jnp.float32, -bound, bound)
    wv = jax.random.uniform(kv, (n_embd, n_embd), jnp.float32, -bound, bound)
    wkv = jnp.concatenate([wk, wv], axis=1)                      # (C, 2C)

    # nn.Linear(n_head*head_size, n_embd) projection (transposed) + bias
    pbound = 1.0 / ((n_head * head_size) ** 0.5)
    wproj = jax.random.uniform(kp, (n_embd, n_embd), jnp.float32, -pbound, pbound)
    bproj = jax.random.uniform(kb, (1, n_embd), jnp.float32, -pbound, pbound)

    out = mha_forward(x, wq, wkv, wproj, bproj)
    out = jax.block_until_ready(out)

    ref = mha_reference(x, wq, wkv, wproj, bproj, num_heads=n_head)
    assert out.shape == (B, T, n_embd)
    max_err = float(jnp.max(jnp.abs(out - ref)))
    assert jnp.allclose(out, ref, atol=5e-2, rtol=5e-2), f"mismatch vs reference (max |err| = {max_err})"

    print("KERNEL_OK")
</pallas_src>

<mosaic_0001>
module attributes {stable_mosaic.version = 11 : i64} {
  func.func @mha_kernel(%arg0: i32, %arg1: i32, %arg2: memref<1x256x384xbf16, #tpu.memory_space<vmem>>, %arg3: memref<384x384xbf16, #tpu.memory_space<vmem>>, %arg4: memref<384x768xbf16, #tpu.memory_space<vmem>>, %arg5: memref<384x384xbf16, #tpu.memory_space<vmem>>, %arg6: memref<1x384xf32, #tpu.memory_space<vmem>>, %arg7: memref<1x128x384xf32, #tpu.memory_space<vmem>>) attributes {dimension_semantics = [#tpu.dimension_semantics<parallel>, #tpu.dimension_semantics<parallel>], iteration_bounds = array<i64: 2, 2>, scalar_prefetch = 0 : i64, scratch_operands = 0 : i64, tpu.core_type = #tpu.core_type<tc>, window_params = [{transform_indices = @transform_0, window_bounds = array<i64: 1, 256, 384>}, {pipeline_mode = #tpu.pipeline_mode<synchronous>, transform_indices = @transform_1, window_bounds = array<i64: 384, 384>}, {pipeline_mode = #tpu.pipeline_mode<synchronous>, transform_indices = @transform_2, window_bounds = array<i64: 384, 768>}, {pipeline_mode = #tpu.pipeline_mode<synchronous>, transform_indices = @transform_3, window_bounds = array<i64: 384, 384>}, {pipeline_mode = #tpu.pipeline_mode<synchronous>, transform_indices = @transform_4, window_bounds = array<i64: 1, 384>}, {transform_indices = @transform_5, window_bounds = array<i64: 1, 128, 384>}]} {
    %c128_i32 = arith.constant 128 : i32
    %0 = arith.muli %arg1, %c128_i32 : i32
    %1 = tpu.assume_multiple %0, 128 : i32
    %c0 = arith.constant 0 : index
    %c0_0 = arith.constant 0 : index
    %c0_1 = arith.constant 0 : index
    %2 = vector.load %arg2[%c0, %c0_0, %c0_1] : memref<1x256x384xbf16, #tpu.memory_space<vmem>>, vector<1x256x384xbf16>
    %3 = vector.shape_cast %2 : vector<1x256x384xbf16> to vector<256x384xbf16>
    %c0_2 = arith.constant 0 : index
    %4 = arith.index_cast %1 : i32 to index
    %c0_3 = arith.constant 0 : index
    %5 = vector.load %arg2[%c0_2, %4, %c0_3] : memref<1x256x384xbf16, #tpu.memory_space<vmem>>, vector<1x128x384xbf16>
    %6 = vector.shape_cast %5 : vector<1x128x384xbf16> to vector<128x384xbf16>
    %c0_4 = arith.constant 0 : index
    %c0_5 = arith.constant 0 : index
    %7 = vector.load %arg3[%c0_4, %c0_5] : memref<384x384xbf16, #tpu.memory_space<vmem>>, vector<384x384xbf16>
    %cst = arith.constant dense<0.000000e+00> : vector<128x384xf32>
    %8 = tpu.matmul %6, %7, %cst {dimension_numbers = #tpu.dot_dimension_numbers<[1], [0], [0], [1], [0, 0, 1, 1], [], []>} : vector<128x384xbf16>, vector<384x384xbf16>, vector<128x384xf32> -> vector<128x384xf32>
    %c0_6 = arith.constant 0 : index
    %c0_7 = arith.constant 0 : index
    %9 = vector.load %arg4[%c0_6, %c0_7] : memref<384x768xbf16, #tpu.memory_space<vmem>>, vector<384x768xbf16>
    %cst_8 = arith.constant dense<0.000000e+00> : vector<256x768xf32>
    %10 = tpu.matmul %3, %9, %cst_8 {dimension_numbers = #tpu.dot_dimension_numbers<[1], [0], [0], [1], [0, 0, 1, 1], [], []>} : vector<256x384xbf16>, vector<384x768xbf16>, vector<256x768xf32> -> vector<256x768xf32>
    %11 = arith.truncf %8 : vector<128x384xf32> to vector<128x384xbf16>
    %12 = vector.extract_strided_slice %10 {offsets = [0, 0], sizes = [256, 384], strides = [1, 1]} : vector<256x768xf32> to vector<256x384xf32>
    %13 = arith.truncf %12 : vector<256x384xf32> to vector<256x384xbf16>
    %14 = vector.extract_strided_slice %10 {offsets = [0, 384], sizes = [256, 384], strides = [1, 1]} : vector<256x768xf32> to vector<256x384xf32>
    %15 = arith.truncf %14 : vector<256x384xf32> to vector<256x384xbf16>
    %16 = tpu.iota {dimensions = array<i32: 0>} : vector<128x256xi32>
    %17 = vector.broadcast %1 : i32 to vector<128x256xi32>
    %18 = arith.addi %17, %16 : vector<128x256xi32>
    %19 = tpu.iota {dimensions = array<i32: 1>} : vector<128x256xi32>
    %20 = arith.cmpi sle, %19, %18 : vector<128x256xi32>
    %cst_9 = arith.constant 0.000000e+00 : f32
    %cst_10 = arith.constant -1.000000e+30 : f32
    %21 = vector.broadcast %cst_9 : f32 to vector<128x256xf32>
    %22 = vector.broadcast %cst_10 : f32 to vector<128x256xf32>
    %23 = arith.select %20, %21, %22 : vector<128x256xi1>, vector<128x256xf32>
    %24 = vector.extract_strided_slice %11 {offsets = [0, 0], sizes = [128, 64], strides = [1, 1]} : vector<128x384xbf16> to vector<128x64xbf16>
    %25 = vector.extract_strided_slice %13 {offsets = [0, 0], sizes = [256, 64], strides = [1, 1]} : vector<256x384xbf16> to vector<256x64xbf16>
    %26 = vector.extract_strided_slice %15 {offsets = [0, 0], sizes = [256, 64], strides = [1, 1]} : vector<256x384xbf16> to vector<256x64xbf16>
    %cst_11 = arith.constant dense<0.000000e+00> : vector<128x256xf32>
    %27 = tpu.matmul %24, %25, %cst_11 {dimension_numbers = #tpu.dot_dimension_numbers<[1], [1], [0], [0], [0, 0, 1, 0], [], []>} : vector<128x64xbf16>, vector<256x64xbf16>, vector<128x256xf32> -> vector<128x256xf32>
    %cst_12 = arith.constant 0.0510310382 : f32
    %28 = vector.broadcast %cst_12 : f32 to vector<128x256xf32>
    %29 = arith.mulf %27, %28 : vector<128x256xf32>
    %30 = arith.addf %29, %23 : vector<128x256xf32>
    %cst_13 = arith.constant dense<0xFF800000> : vector<128xf32>
    %31 = vector.multi_reduction <maximumf>, %30, %cst_13 [1] : vector<128x256xf32> to vector<128xf32>
    %32 = vector.shape_cast %31 : vector<128xf32> to vector<128x1xf32>
    %33 = vector.broadcast %32 : vector<128x1xf32> to vector<128x256xf32>
    %34 = arith.subf %30, %33 : vector<128x256xf32>
    %35 = math.exp %34 : vector<128x256xf32>
    %cst_14 = arith.constant dense<0.000000e+00> : vector<128xf32>
    %36 = vector.multi_reduction <add>, %35, %cst_14 [1] : vector<128x256xf32> to vector<128xf32>
    %37 = vector.shape_cast %36 : vector<128xf32> to vector<128x1xf32>
    %38 = arith.truncf %35 : vector<128x256xf32> to vector<128x256xbf16>
    %cst_15 = arith.constant dense<0.000000e+00> : vector<128x64xf32>
    %39 = tpu.matmul %38, %26, %cst_15 {dimension_numbers = #tpu.dot_dimension_numbers<[1], [0], [0], [1], [0, 0, 1, 1], [], []>} : vector<128x256xbf16>, vector<256x64xbf16>, vector<128x64xf32> -> vector<128x64xf32>
    %40 = tpu.reciprocal %37 {approx = true} : vector<128x1xf32> -> vector<128x1xf32>
    %41 = vector.broadcast %40 : vector<128x1xf32> to vector<128x64xf32>
    %42 = arith.mulf %39, %41 : vector<128x64xf32>
    %43 = vector.extract_strided_slice %11 {offsets = [0, 64], sizes = [128, 64], strides = [1, 1]} : vector<128x384xbf16> to vector<128x64xbf16>
    %44 = vector.extract_strided_slice %13 {offsets = [0, 64], sizes = [256, 64], strides = [1, 1]} : vector<256x384xbf16> to vector<256x64xbf16>
    %45 = vector.extract_strided_slice %15 {offsets = [0, 64], sizes = [256, 64], strides = [1, 1]} : vector<256x384xbf16> to vector<256x64xbf16>
    %cst_16 = arith.constant dense<0.000000e+00> : vector<128x256xf32>
    %46 = tpu.matmul %43, %44, %cst_16 {dimension_numbers = #tpu.dot_dimension_numbers<[1], [1], [0], [0], [0, 0, 1, 0], [], []>} : vector<128x64xbf16>, vector<256x64xbf16>, vector<128x256xf32> -> vector<128x256xf32>
    %cst_17 = arith.constant 0.0510310382 : f32
    %47 = vector.broadcast %cst_17 : f32 to vector<128x256xf32>
    %48 = arith.mulf %46, %47 : vector<128x256xf32>
    %49 = arith.addf %48, %23 : vector<128x256xf32>
    %cst_18 = arith.constant dense<0xFF800000> : vector<128xf32>
    %50 = vector.multi_reduction <maximumf>, %49, %cst_18 [1] : vector<128x256xf32> to vector<128xf32>
    %51 = vector.shape_cast %50 : vector<128xf32> to vector<128x1xf32>
    %52 = vector.broadcast %51 : vector<128x1xf32> to vector<128x256xf32>
    %53 = arith.subf %49, %52 : vector<128x256xf32>
    %54 = math.exp %53 : vector<128x256xf32>
    %cst_19 = arith.constant dense<0.000000e+00> : vector<128xf32>
    %55 = vector.multi_reduction <add>, %54, %cst_19 [1] : vector<128x256xf32> to vector<128xf32>
    %56 = vector.shape_cast %55 : vector<128xf32> to vector<128x1xf32>
    %57 = arith.truncf %54 : vector<128x256xf32> to vector<128x256xbf16>
    %cst_20 = arith.constant dense<0.000000e+00> : vector<128x64xf32>
    %58 = tpu.matmul %57, %45, %cst_20 {dimension_numbers = #tpu.dot_dimension_numbers<[1], [0], [0], [1], [0, 0, 1, 1], [], []>} : vector<128x256xbf16>, vector<256x64xbf16>, vector<128x64xf32> -> vector<128x64xf32>
    %59 = tpu.reciprocal %56 {approx = true} : vector<128x1xf32> -> vector<128x1xf32>
    %60 = vector.broadcast %59 : vector<128x1xf32> to vector<128x64xf32>
    %61 = arith.mulf %58, %60 : vector<128x64xf32>
    %62 = vector.extract_strided_slice %11 {offsets = [0, 128], sizes = [128, 64], strides = [1, 1]} : vector<128x384xbf16> to vector<128x64xbf16>
    %63 = vector.extract_strided_slice %13 {offsets = [0, 128], sizes = [256, 64], strides = [1, 1]} : vector<256x384xbf16> to vector<256x64xbf16>
    %64 = vector.extract_strided_slice %15 {offsets = [0, 128], sizes = [256, 64], strides = [1, 1]} : vector<256x384xbf16> to vector<256x64xbf16>
    %cst_21 = arith.constant dense<0.000000e+00> : vector<128x256xf32>
    %65 = tpu.matmul %62, %63, %cst_21 {dimension_numbers = #tpu.dot_dimension_numbers<[1], [1], [0], [0], [0, 0, 1, 0], [], []>} : vector<128x64xbf16>, vector<256x64xbf16>, vector<128x256xf32> -> vector<128x256xf32>
    %cst_22 = arith.constant 0.0510310382 : f32
    %66 = vector.broadcast %cst_22 : f32 to vector<128x256xf32>
    %67 = arith.mulf %65, %66 : vector<128x256xf32>
    %68 = arith.addf %67, %23 : vector<128x256xf32>
    %cst_23 = arith.constant dense<0xFF800000> : vector<128xf32>
    %69 = vector.multi_reduction <maximumf>, %68, %cst_23 [1] : vector<128x256xf32> to vector<128xf32>
    %70 = vector.shape_cast %69 : vector<128xf32> to vector<128x1xf32>
    %71 = vector.broadcast %70 : vector<128x1xf32> to vector<128x256xf32>
    %72 = arith.subf %68, %71 : vector<128x256xf32>
    %73 = math.exp %72 : vector<128x256xf32>
    %cst_24 = arith.constant dense<0.000000e+00> : vector<128xf32>
    %74 = vector.multi_reduction <add>, %73, %cst_24 [1] : vector<128x256xf32> to vector<128xf32>
    %75 = vector.shape_cast %74 : vector<128xf32> to vector<128x1xf32>
    %76 = arith.truncf %73 : vector<128x256xf32> to vector<128x256xbf16>
    %cst_25 = arith.constant dense<0.000000e+00> : vector<128x64xf32>
    %77 = tpu.matmul %76, %64, %cst_25 {dimension_numbers = #tpu.dot_dimension_numbers<[1], [0], [0], [1], [0, 0, 1, 1], [], []>} : vector<128x256xbf16>, vector<256x64xbf16>, vector<128x64xf32> -> vector<128x64xf32>
    %78 = tpu.reciprocal %75 {approx = true} : vector<128x1xf32> -> vector<128x1xf32>
    %79 = vector.broadcast %78 : vector<128x1xf32> to vector<128x64xf32>
    %80 = arith.mulf %77, %79 : vector<128x64xf32>
    %81 = vector.extract_strided_slice %11 {offsets = [0, 192], sizes = [128, 64], strides = [1, 1]} : vector<128x384xbf16> to vector<128x64xbf16>
    %82 = vector.extract_strided_slice %13 {offsets = [0, 192], sizes = [256, 64], strides = [1, 1]} : vector<256x384xbf16> to vector<256x64xbf16>
    %83 = vector.extract_strided_slice %15 {offsets = [0, 192], sizes = [256, 64], strides = [1, 1]} : vector<256x384xbf16> to vector<256x64xbf16>
    %cst_26 = arith.constant dense<0.000000e+00> : vector<128x256xf32>
    %84 = tpu.matmul %81, %82, %cst_26 {dimension_numbers = #tpu.dot_dimension_numbers<[1], [1], [0], [0], [0, 0, 1, 0], [], []>} : vector<128x64xbf16>, vector<256x64xbf16>, vector<128x256xf32> -> vector<128x256xf32>
    %cst_27 = arith.constant 0.0510310382 : f32
    %85 = vector.broadcast %cst_27 : f32 to vector<128x256xf32>
    %86 = arith.mulf %84, %85 : vector<128x256xf32>
    %87 = arith.addf %86, %23 : vector<128x256xf32>
    %cst_28 = arith.constant dense<0xFF800000> : vector<128xf32>
    %88 = vector.multi_reduction <maximumf>, %87, %cst_28 [1] : vector<128x256xf32> to vector<128xf32>
    %89 = vector.shape_cast %88 : vector<128xf32> to vector<128x1xf32>
    %90 = vector.broadcast %89 : vector<128x1xf32> to vector<128x256xf32>
    %91 = arith.subf %87, %90 : vector<128x256xf32>
    %92 = math.exp %91 : vector<128x256xf32>
    %cst_29 = arith.constant dense<0.000000e+00> : vector<128xf32>
    %93 = vector.multi_reduction <add>, %92, %cst_29 [1] : vector<128x256xf32> to vector<128xf32>
    %94 = vector.shape_cast %93 : vector<128xf32> to vector<128x1xf32>
    %95 = arith.truncf %92 : vector<128x256xf32> to vector<128x256xbf16>
    %cst_30 = arith.constant dense<0.000000e+00> : vector<128x64xf32>
    %96 = tpu.matmul %95, %83, %cst_30 {dimension_numbers = #tpu.dot_dimension_numbers<[1], [0], [0], [1], [0, 0, 1, 1], [], []>} : vector<128x256xbf16>, vector<256x64xbf16>, vector<128x64xf32> -> vector<128x64xf32>
    %97 = tpu.reciprocal %94 {approx = true} : vector<128x1xf32> -> vector<128x1xf32>
    %98 = vector.broadcast %97 : vector<128x1xf32> to vector<128x64xf32>
    %99 = arith.mulf %96, %98 : vector<128x64xf32>
    %100 = vector.extract_strided_slice %11 {offsets = [0, 256], sizes = [128, 64], strides = [1, 1]} : vector<128x384xbf16> to vector<128x64xbf16>
    %101 = vector.extract_strided_slice %13 {offsets = [0, 256], sizes = [256, 64], strides = [1, 1]} : vector<256x384xbf16> to vector<256x64xbf16>
    %102 = vector.extract_strided_slice %15 {offsets = [0, 256], sizes = [256, 64], strides = [1, 1]} : vector<256x384xbf16> to vector<256x64xbf16>
    %cst_31 = arith.constant dense<0.000000e+00> : vector<128x256xf32>
    %103 = tpu.matmul %100, %101, %cst_31 {dimension_numbers = #tpu.dot_dimension_numbers<[1], [1], [0], [0], [0, 0, 1, 0], [], []>} : vector<128x64xbf16>, vector<256x64xbf16>, vector<128x256xf32> -> vector<128x256xf32>
    %cst_32 = arith.constant 0.0510310382 : f32
    %104 = vector.broadcast %cst_32 : f32 to vector<128x256xf32>
    %105 = arith.mulf %103, %104 : vector<128x256xf32>
    %106 = arith.addf %105, %23 : vector<128x256xf32>
    %cst_33 = arith.constant dense<0xFF800000> : vector<128xf32>
    %107 = vector.multi_reduction <maximumf>, %106, %cst_33 [1] : vector<128x256xf32> to vector<128xf32>
    %108 = vector.shape_cast %107 : vector<128xf32> to vector<128x1xf32>
    %109 = vector.broadcast %108 : vector<128x1xf32> to vector<128x256xf32>
    %110 = arith.subf %106, %109 : vector<128x256xf32>
    %111 = math.exp %110 : vector<128x256xf32>
    %cst_34 = arith.constant dense<0.000000e+00> : vector<128xf32>
    %112 = vector.multi_reduction <add>, %111, %cst_34 [1] : vector<128x256xf32> to vector<128xf32>
    %113 = vector.shape_cast %112 : vector<128xf32> to vector<128x1xf32>
    %114 = arith.truncf %111 : vector<128x256xf32> to vector<128x256xbf16>
    %cst_35 = arith.constant dense<0.000000e+00> : vector<128x64xf32>
    %115 = tpu.matmul %114, %102, %cst_35 {dimension_numbers = #tpu.dot_dimension_numbers<[1], [0], [0], [1], [0, 0, 1, 1], [], []>} : vector<128x256xbf16>, vector<256x64xbf16>, vector<128x64xf32> -> vector<128x64xf32>
    %116 = tpu.reciprocal %113 {approx = true} : vector<128x1xf32> -> vector<128x1xf32>
    %117 = vector.broadcast %116 : vector<128x1xf32> to vector<128x64xf32>
    %118 = arith.mulf %115, %117 : vector<128x64xf32>
    %119 = vector.extract_strided_slice %11 {offsets = [0, 320], sizes = [128, 64], strides = [1, 1]} : vector<128x384xbf16> to vector<128x64xbf16>
    %120 = vector.extract_strided_slice %13 {offsets = [0, 320], sizes = [256, 64], strides = [1, 1]} : vector<256x384xbf16> to vector<256x64xbf16>
    %121 = vector.extract_strided_slice %15 {offsets = [0, 320], sizes = [256, 64], strides = [1, 1]} : vector<256x384xbf16> to vector<256x64xbf16>
    %cst_36 = arith.constant dense<0.000000e+00> : vector<128x256xf32>
    %122 = tpu.matmul %119, %120, %cst_36 {dimension_numbers = #tpu.dot_dimension_numbers<[1], [1], [0], [0], [0, 0, 1, 0], [], []>} : vector<128x64xbf16>, vector<256x64xbf16>, vector<128x256xf32> -> vector<128x256xf32>
    %cst_37 = arith.constant 0.0510310382 : f32
    %123 = vector.broadcast %cst_37 : f32 to vector<128x256xf32>
    %124 = arith.mulf %122, %123 : vector<128x256xf32>
    %125 = arith.addf %124, %23 : vector<128x256xf32>
    %cst_38 = arith.constant dense<0xFF800000> : vector<128xf32>
    %126 = vector.multi_reduction <maximumf>, %125, %cst_38 [1] : vector<128x256xf32> to vector<128xf32>
    %127 = vector.shape_cast %126 : vector<128xf32> to vector<128x1xf32>
    %128 = vector.broadcast %127 : vector<128x1xf32> to vector<128x256xf32>
    %129 = arith.subf %125, %128 : vector<128x256xf32>
    %130 = math.exp %129 : vector<128x256xf32>
    %cst_39 = arith.constant dense<0.000000e+00> : vector<128xf32>
    %131 = vector.multi_reduction <add>, %130, %cst_39 [1] : vector<128x256xf32> to vector<128xf32>
    %132 = vector.shape_cast %131 : vector<128xf32> to vector<128x1xf32>
    %133 = arith.truncf %130 : vector<128x256xf32> to vector<128x256xbf16>
    %cst_40 = arith.constant dense<0.000000e+00> : vector<128x64xf32>
    %134 = tpu.matmul %133, %121, %cst_40 {dimension_numbers = #tpu.dot_dimension_numbers<[1], [0], [0], [1], [0, 0, 1, 1], [], []>} : vector<128x256xbf16>, vector<256x64xbf16>, vector<128x64xf32> -> vector<128x64xf32>
    %135 = tpu.reciprocal %132 {approx = true} : vector<128x1xf32> -> vector<128x1xf32>
    %136 = vector.broadcast %135 : vector<128x1xf32> to vector<128x64xf32>
    %137 = arith.mulf %134, %136 : vector<128x64xf32>
    %138 = tpu.concatenate %42, %61, %80, %99, %118, %137 in 1 : vector<128x64xf32>, vector<128x64xf32>, vector<128x64xf32>, vector<128x64xf32>, vector<128x64xf32>, vector<128x64xf32> -> vector<128x384xf32>
    %139 = arith.truncf %138 : vector<128x384xf32> to vector<128x384xbf16>
    %c0_41 = arith.constant 0 : index
    %c0_42 = arith.constant 0 : index
    %140 = vector.load %arg5[%c0_41, %c0_42] : memref<384x384xbf16, #tpu.memory_space<vmem>>, vector<384x384xbf16>
    %cst_43 = arith.constant dense<0.000000e+00> : vector<128x384xf32>
    %141 = tpu.matmul %139, %140, %cst_43 {dimension_numbers = #tpu.dot_dimension_numbers<[1], [0], [0], [1], [0, 0, 1, 1], [], []>} : vector<128x384xbf16>, vector<384x384xbf16>, vector<128x384xf32> -> vector<128x384xf32>
    %c0_44 = arith.constant 0 : index
    %c0_45 = arith.constant 0 : index
    %142 = vector.load %arg6[%c0_44, %c0_45] : memref<1x384xf32, #tpu.memory_space<vmem>>, vector<1x384xf32>
    %143 = vector.broadcast %142 : vector<1x384xf32> to vector<128x384xf32>
    %144 = arith.addf %141, %143 : vector<128x384xf32>
    %c0_46 = arith.constant 0 : index
    %c0_47 = arith.constant 0 : index
    %c0_48 = arith.constant 0 : index
    %145 = vector.load %arg7[%c0_46, %c0_47, %c0_48] : memref<1x128x384xf32, #tpu.memory_space<vmem>>, vector<1x128x384xf32>
    %146 = vector.shape_cast %145 : vector<1x128x384xf32> to vector<128x384xf32>
    %147 = vector.shape_cast %144 : vector<128x384xf32> to vector<1x128x384xf32>
    tpu.vector_store %arg7[%c0_46, %c0_47, %c0_48], %147 {strides = array<i32>} : memref<1x128x384xf32, #tpu.memory_space<vmem>>, vector<1x128x384xf32>,
    return
  }
  func.func @transform_0(%arg0: i32, %arg1: i32) -> (i32, i32, i32) {
    %c0_i32 = arith.constant 0 : i32
    %c0_i32_0 = arith.constant 0 : i32
    %c0_i32_1 = arith.constant 0 : i32
    return %arg0, %c0_i32, %c0_i32_0 : i32, i32, i32
  }
  func.func @transform_1(%arg0: i32, %arg1: i32) -> (i32, i32) {
    %c0_i32 = arith.constant 0 : i32
    %c0_i32_0 = arith.constant 0 : i32
    %c0_i32_1 = arith.constant 0 : i32
    return %c0_i32, %c0_i32_0 : i32, i32
  }
  func.func @transform_2(%arg0: i32, %arg1: i32) -> (i32, i32) {
    %c0_i32 = arith.constant 0 : i32
    %c0_i32_0 = arith.constant 0 : i32
    %c0_i32_1 = arith.constant 0 : i32
    return %c0_i32, %c0_i32_0 : i32, i32
  }
  func.func @transform_3(%arg0: i32, %arg1: i32) -> (i32, i32) {
    %c0_i32 = arith.constant 0 : i32
    %c0_i32_0 = arith.constant 0 : i32
    %c0_i32_1 = arith.constant 0 : i32
    return %c0_i32, %c0_i32_0 : i32, i32
  }
  func.func @transform_4(%arg0: i32, %arg1: i32) -> (i32, i32) {
    %c0_i32 = arith.constant 0 : i32
    %c0_i32_0 = arith.constant 0 : i32
    %c0_i32_1 = arith.constant 0 : i32
    return %c0_i32, %c0_i32_0 : i32, i32
  }
  func.func @transform_5(%arg0: i32, %arg1: i32) -> (i32, i32, i32) {
    %c0_i32 = arith.constant 0 : i32
    %c0_i32_0 = arith.constant 0 : i32
    return %arg0, %arg1, %c0_i32 : i32, i32, i32
  }
}

</mosaic_0001>

<llo_original>
// kernel: tpu_custom_call.1
$region0: #{tpu_custom_call.1}
  #allocation0 [shape = 'u32[]', space=smem, size = 0x4, offset = 0x4, fixed_abs, tag = 'smem constant byte address 0x4 - core index']
  #allocation1 [shape = 'u32[144,128]{1,0:T(1,128)}', space=vmem, size = 0x12000, scoped, tag = 'internal scratch']
  %s0 = inlined_call_operand.hbm [shape: bf16[2,256,384], index: 0, kind: input, shape index: {}]
  %s1 = inlined_call_operand.hbm [shape: bf16[384,384], index: 1, kind: input, shape index: {}]
  %s2 = inlined_call_operand.hbm [shape: bf16[384,768], index: 2, kind: input, shape index: {}]
  %s3 = inlined_call_operand.hbm [shape: bf16[384,384], index: 3, kind: input, shape index: {}]
  %s4 = inlined_call_operand.vmem [shape: f32[1,384], index: 4, kind: input, shape index: {}]
  %s5 = inlined_call_operand.hbm [shape: f32[2,256,384], index: 5, kind: output, shape index: {}]
  %s6 = sld [smem:[#allocation0]]
  $region69: #{tpu_custom_call.1} parent=0
    _
  %s8 = ssub.s32 1, %s6
  %s9 = scalar_select 0, %s8, %s6
  $region1: #{tpu_custom_call.1} parent=0
    #allocation2 [shape = 'u8[393216]{0}', space=vmem, size = 0x60000, scoped, tag = 'input window, operand 0']
    #allocation3 [shape = 's32[2]{0}', space=sflag, size = 0x8, scoped, tag = 'scoped memory for tpu_custom_call.1']
    #allocation4 [shape = 's32[2]{0}', space=sflag, size = 0x8, scoped, tag = 'scoped memory for tpu_custom_call.1']
    #allocation5 [shape = 'u8[294912]{0}', space=vmem, size = 0x48000, scoped, tag = 'input window, operand 1, single buffered']
    #allocation6 [shape = 's32[1]{0}', space=sflag, size = 0x4, scoped, tag = 'scoped memory for tpu_custom_call.1']
    #allocation7 [shape = 'u8[589824]{0}', space=vmem, size = 0x90000, scoped, tag = 'input window, operand 2, single buffered']
    #allocation8 [shape = 'u8[294912]{0}', space=vmem, size = 0x48000, scoped, tag = 'input window, operand 3, single buffered']
    #allocation9 [shape = 's32[1]{0}', space=sflag, size = 0x4, scoped, tag = 'scoped memory for tpu_custom_call.1']
    #allocation10 [shape = 'u8[393216]{0}', space=vmem, size = 0x60000, scoped, tag = 'output window, operand 0']
    %10 = vsyncpa [#allocation3], 0
    %s11 = scalar_lea.sflag [#allocation3], 1
    %12 = vsyncpa %s11, 0
    %13 = vsyncpa [#allocation6], 0
    %14 = vsyncpa [#allocation9], 0
    %15 = vsyncpa [#allocation4], 0
    %s16 = scalar_lea.sflag [#allocation4], 1
    %17 = vsyncpa %s16, 0
    loop: start=0, step=1, limit=6
    $region2: #{tpu_custom_call.1} parent=1 // loop_pre_header
      _
    $region3: #{tpu_custom_call.1} parent=1 // loop_header
      %s19 = sphi 0, %s23
      %p20 = scmp.ge.s32.totalorder %s19, 6
      %s26 = sphi 0, %s38
      %s27 = sphi 0, %s34
      %s28 = sphi 0, %s26
      %s29 = sphi 0, %s27
      %s30 = sphi 0, %s28
      %s31 = sphi 0, %s29
      %s41 = sphi 0, %s43
      %s44 = sphi 0, %s41
      %s45 = sphi 0, %s44
      %s61 = sphi 0, %s45
      %s65 = sphi 0, %s65
      %s67 = sphi 0, %s65
      %s68 = sphi 0, %s67
      %s82 = sphi 0, %s68
      %s86 = sphi 0, %s86
      %s88 = sphi 0, %s86
      %s89 = sphi 0, %s88
      %s103 = sphi 0, %s89
      %s107 = sphi 0, %s107
      %s109 = sphi 0, %s107
      %s110 = sphi 0, %s109
      %s124 = sphi 0, %s110
      %s128 = sphi 0, %s128
      %s130 = sphi 0, %s128
      %s131 = sphi 0, %s130
      %s145 = sphi 0, %s131
      %s153 = sphi 0, %s155
      %s156 = sphi 0, %s153
      %s157 = sphi 0, %s156
      %s173 = sphi 0, %s157
    $region4: #{tpu_custom_call.1} parent=1 // loop_header_branch
      %22 = sbr.rel (%p20) target = $region8
    $region5: #{tpu_custom_call.1} parent=1 // loop_body
      %s24 = ssub.s32 %s19, 1
      %s25 = ssub.s32 %s19, 2
      %s32 = sadd.s32 1, %s27
      %p33 = scmp.ge.s32.totalorder %s32, 2
      %s34 = scalar_select %p33, 0, %s32
      %s35 = sadd.s32 1, %s26
      %s36 = scalar_select %p33, %s35, %s26
      %p37 = scmp.ge.s32.totalorder %s36, 2
      %s38 = scalar_select %p37, 0, %s36
      %s39 = ssub.s32 %s26, %s38
      %p40 = scmp.eq.s32.totalorder %s39, 0
      %s42 = sadd.s32 %s41, 1
      %s43 = scalar_select %p40, %s41, %s42
      %p46 = pneg %p40
      %p47 = scmp.eq.s32.totalorder %s19, 3
      %p48 = por %p46, %p47
      %p49 = scmp.ne.s32.totalorder %s41, %s44
      %p50 = scmp.eq.s32.totalorder %s19, 0
      %p51 = por %p49, %p50
      %p52 = scmp.ne.s32.totalorder %s41, %s44
      %p53 = scmp.eq.s32.totalorder %s24, 3
      %p54 = por %p52, %p53
      %p55 = scmp.ne.s32.totalorder %s44, %s45
      %p56 = scmp.eq.s32.totalorder %s24, 0
      %p57 = por %p55, %p56
      %p58 = scmp.ne.s32.totalorder %s44, %s45
      %p59 = scmp.eq.s32.totalorder %s25, 3
      %p60 = por %p58, %p59
      %p62 = scmp.ne.s32.totalorder %s45, %s61
      %p63 = scmp.eq.s32.totalorder %s25, 0
      %p64 = por %p62, %p63
      %s66 = sadd.s32 %s65, 1
      %p69 = scmp.eq.s32.totalorder %s19, 3
      %p70 = scmp.ne.s32.totalorder %s65, %s67
      %p71 = scmp.eq.s32.totalorder %s19, 0
      %p72 = por %p70, %p71
      %p73 = scmp.ne.s32.totalorder %s65, %s67
      %p74 = scmp.eq.s32.totalorder %s24, 3
      %p75 = por %p73, %p74
      %p76 = scmp.ne.s32.totalorder %s67, %s68
      %p77 = scmp.eq.s32.totalorder %s24, 0
      %p78 = por %p76, %p77
      %p79 = scmp.ne.s32.totalorder %s67, %s68
      %p80 = scmp.eq.s32.totalorder %s25, 3
      %p81 = por %p79, %p80
      %p83 = scmp.ne.s32.totalorder %s68, %s82
      %p84 = scmp.eq.s32.totalorder %s25, 0
      %p85 = por %p83, %p84
      %s87 = sadd.s32 %s86, 1
      %p90 = scmp.eq.s32.totalorder %s19, 3
      %p91 = scmp.ne.s32.totalorder %s86, %s88
      %p92 = scmp.eq.s32.totalorder %s19, 0
      %p93 = por %p91, %p92
      %p94 = scmp.ne.s32.totalorder %s86, %s88
      %p95 = scmp.eq.s32.totalorder %s24, 3
      %p96 = por %p94, %p95
      %p97 = scmp.ne.s32.totalorder %s88, %s89
      %p98 = scmp.eq.s32.totalorder %s24, 0
      %p99 = por %p97, %p98
      %p100 = scmp.ne.s32.totalorder %s88, %s89
      %p101 = scmp.eq.s32.totalorder %s25, 3
      %p102 = por %p100, %p101
      %p104 = scmp.ne.s32.totalorder %s89, %s103
      %p105 = scmp.eq.s32.totalorder %s25, 0
      %p106 = por %p104, %p105
      %s108 = sadd.s32 %s107, 1
      %p111 = scmp.eq.s32.totalorder %s19, 3
      %p112 = scmp.ne.s32.totalorder %s107, %s109
      %p113 = scmp.eq.s32.totalorder %s19, 0
      %p114 = por %p112, %p113
      %p115 = scmp.ne.s32.totalorder %s107, %s109
      %p116 = scmp.eq.s32.totalorder %s24, 3
      %p117 = por %p115, %p116
      %p118 = scmp.ne.s32.totalorder %s109, %s110
      %p119 = scmp.eq.s32.totalorder %s24, 0
      %p120 = por %p118, %p119
      %p121 = scmp.ne.s32.totalorder %s109, %s110
      %p122 = scmp.eq.s32.totalorder %s25, 3
      %p123 = por %p121, %p122
      %p125 = scmp.ne.s32.totalorder %s110, %s124
      %p126 = scmp.eq.s32.totalorder %s25, 0
      %p127 = por %p125, %p126
      %s129 = sadd.s32 %s128, 1
      %p132 = scmp.eq.s32.totalorder %s19, 3
      %p133 = scmp.ne.s32.totalorder %s128, %s130
      %p134 = scmp.eq.s32.totalorder %s19, 0
      %p135 = por %p133, %p134
      %p136 = scmp.ne.s32.totalorder %s128, %s130
      %p137 = scmp.eq.s32.totalorder %s24, 3
      %p138 = por %p136, %p137
      %p139 = scmp.ne.s32.totalorder %s130, %s131
      %p140 = scmp.eq.s32.totalorder %s24, 0
      %p141 = por %p139, %p140
      %p142 = scmp.ne.s32.totalorder %s130, %s131
      %p143 = scmp.eq.s32.totalorder %s25, 3
      %p144 = por %p142, %p143
      %p146 = scmp.ne.s32.totalorder %s131, %s145
      %p147 = scmp.eq.s32.totalorder %s25, 0
      %p148 = por %p146, %p147
      %s149 = ssub.s32 %s26, %s38
      %s150 = ssub.s32 %s27, %s34
      %s151 = sor.u32 %s149, %s150
      %p152 = scmp.eq.s32.totalorder %s151, 0
      %s154 = sadd.s32 %s153, 1
      %s155 = scalar_select %p152, %s153, %s154
      %p158 = pneg %p152
      %p159 = scmp.eq.s32.totalorder %s19, 3
      %p160 = por %p158, %p159
      %p161 = scmp.ne.s32.totalorder %s153, %s156
      %p162 = scmp.eq.s32.totalorder %s19, 0
      %p163 = por %p161, %p162
      %p164 = scmp.ne.s32.totalorder %s153, %s156
      %p165 = scmp.eq.s32.totalorder %s24, 3
      %p166 = por %p164, %p165
      %p167 = scmp.ne.s32.totalorder %s156, %s157
      %p168 = scmp.eq.s32.totalorder %s24, 0
      %p169 = por %p167, %p168
      %p170 = scmp.ne.s32.totalorder %s156, %s157
      %p171 = scmp.eq.s32.totalorder %s25, 3
      %p172 = por %p170, %p171
      %p174 = scmp.ne.s32.totalorder %s157, %s173
      %p175 = scmp.eq.s32.totalorder %s25, 0
      %p176 = por %p174, %p175
      %p177 = scmp.le.s32.totalorder 1, %s19
      %p178 = scmp.lt.s32.totalorder %s19, 5
      %p179 = pnand %p177, %p178
      %p180 = pneg %p179
      // Predicated region
      $region9: #{tpu_custom_call.1} parent=5 // pred_check
        _
      $region10: #{tpu_custom_call.1} parent=5 // pred_check_branch
        %182 = sbr.rel (%p179) target = $region12
      $region11: #{tpu_custom_call.1} parent=5 // pred_region
        %s183 = ssub.s32 %s19, 1
        // Predicated region
        $region13: #{tpu_custom_call.1} parent=11 // pred_check
          %p184 = pneg %p78
        $region14: #{tpu_custom_call.1} parent=11 // pred_check_branch
          %186 = sbr.rel (%p184) target = $region16
        $region15: #{tpu_custom_call.1} parent=11 // pred_region
          %s188 = ssub.s32 9216, 9216
          %189 = vsyncadd [#allocation6], %s188
          %s190 = sshll.u32 [#allocation5], 4
          %s191 = int_to_ptr.vmem [resolvable:$true] %s190
          %196 = dma.hbm_to_vmem [thread:$0]  %s1, 9216, %s191, [#allocation6], 192, 192, 12
        $region16: #{tpu_custom_call.1} parent=11 // pred_fallthru
          _
        // Predicated region
        $region17: #{tpu_custom_call.1} parent=11 // pred_check
          %p197 = pneg %p99
        $region18: #{tpu_custom_call.1} parent=11 // pred_check_branch
          %199 = sbr.rel (%p197) target = $region20
        $region19: #{tpu_custom_call.1} parent=11 // pred_region
          %s201 = ssub.s32 18432, 18432
          %202 = vsyncadd [#allocation6], %s201
          %s203 = sshll.u32 [#allocation7], 4
          %s204 = int_to_ptr.vmem [resolvable:$true] %s203
          %209 = dma.hbm_to_vmem [thread:$0]  %s2, 18432, %s204, [#allocation6], 384, 384, 24
        $region20: #{tpu_custom_call.1} parent=11 // pred_fallthru
          _
        // Predicated region
        $region21: #{tpu_custom_call.1} parent=11 // pred_check
          %p210 = pneg %p120
        $region22: #{tpu_custom_call.1} parent=11 // pred_check_branch
          %212 = sbr.rel (%p210) target = $region24
        $region23: #{tpu_custom_call.1} parent=11 // pred_region
          %s214 = ssub.s32 9216, 9216
          %215 = vsyncadd [#allocation9], %s214
          %s216 = sshll.u32 [#allocation8], 4
          %s217 = int_to_ptr.vmem [resolvable:$true] %s216
          %222 = dma.hbm_to_vmem [thread:$0]  %s3, 9216, %s217, [#allocation9], 192, 192, 12
        $region24: #{tpu_custom_call.1} parent=11 // pred_fallthru
          _
        // Predicated region
        $region25: #{tpu_custom_call.1} parent=11 // pred_check
          %p223 = pneg %p141
        $region26: #{tpu_custom_call.1} parent=11 // pred_check_branch
          %225 = sbr.rel (%p223) target = $region28
        $region27: #{tpu_custom_call.1} parent=11 // pred_region
          _
        $region28: #{tpu_custom_call.1} parent=11 // pred_fallthru
          _
      $region12: #{tpu_custom_call.1} parent=5 // pred_fallthru
        _
      %p226 = scmp.lt.s32.totalorder %s19, 4
      // Predicated region
      $region29: #{tpu_custom_call.1} parent=5 // pred_check
        %p227 = pneg %p226
      $region30: #{tpu_custom_call.1} parent=5 // pred_check_branch
        %229 = sbr.rel (%p227) target = $region32
      $region31: #{tpu_custom_call.1} parent=5 // pred_region
        // Predicated region
        $region33: #{tpu_custom_call.1} parent=31 // pred_check
          %p230 = pneg %p51
        $region34: #{tpu_custom_call.1} parent=31 // pred_check_branch
          %232 = sbr.rel (%p230) target = $region36
        $region35: #{tpu_custom_call.1} parent=31 // pred_region
          %s233 = sand.u32 %s41, 1
          %s234 = scalar_lea.sflag [#allocation3], %s233
          %s235 = sand.u32 %s41, 1
          %s236 = smul.addr %s235, 384
          %s237 = scalar_lea.vmem [#allocation2], %s236
          %s239 = ssub.s32 6144, 6144
          %240 = vsyncadd %s234, %s239
          %s241 = smul.addr %s26, 96
          %s242 = smul.addr %s241, 64
          %s243 = scalar_lea.hbm %s0, %s242
          %s244 = sshll.u32 %s237, 4
          %s245 = int_to_ptr.vmem [resolvable:$true] %s244
          %250 = dma.hbm_to_vmem [thread:$0]  %s243, 6144, %s245, %s234, 192, 192, 12
        $region36: #{tpu_custom_call.1} parent=31 // pred_fallthru
          _
      $region32: #{tpu_custom_call.1} parent=5 // pred_fallthru
        _
      %p251 = scmp.le.s32.totalorder 1, %s19
      %p252 = scmp.lt.s32.totalorder %s19, 5
      %p253 = pnand %p251, %p252
      %p254 = pneg %p253
      // Predicated region
      $region37: #{tpu_custom_call.1} parent=5 // pred_check
        _
      $region38: #{tpu_custom_call.1} parent=5 // pred_check_branch
        %256 = sbr.rel (%p253) target = $region40
      $region39: #{tpu_custom_call.1} parent=5 // pred_region
        %s257 = ssub.s32 %s19, 1
        %s258 = sand.u32 %s44, 1
        %s259 = scalar_lea.sflag [#allocation3], %s258
        %s260 = sand.u32 %s44, 1
        %s261 = smul.addr %s260, 384
        %s262 = scalar_lea.vmem [#allocation2], %s261
        // Predicated region
        $region41: #{tpu_custom_call.1} parent=39 // pred_check
          %p263 = pneg %p57
        $region42: #{tpu_custom_call.1} parent=39 // pred_check_branch
          %265 = sbr.rel (%p263) target = $region44
        $region43: #{tpu_custom_call.1} parent=39 // pred_region
          %266 = dma.done %s259, 6144
        $region44: #{tpu_custom_call.1} parent=39 // pred_fallthru
          _
        // Predicated region
        $region45: #{tpu_custom_call.1} parent=39 // pred_check
          %p267 = pneg %p78
        $region46: #{tpu_custom_call.1} parent=39 // pred_check_branch
          %269 = sbr.rel (%p267) target = $region48
        $region47: #{tpu_custom_call.1} parent=39 // pred_region
          %270 = dma.done [#allocation6], 9216
        $region48: #{tpu_custom_call.1} parent=39 // pred_fallthru
          _
        // Predicated region
        $region49: #{tpu_custom_call.1} parent=39 // pred_check
          %p271 = pneg %p99
        $region50: #{tpu_custom_call.1} parent=39 // pred_check_branch
          %273 = sbr.rel (%p271) target = $region52
        $region51: #{tpu_custom_call.1} parent=39 // pred_region
          %274 = dma.done [#allocation6], 18432
        $region52: #{tpu_custom_call.1} parent=39 // pred_fallthru
          _
        // Predicated region
        $region53: #{tpu_custom_call.1} parent=39 // pred_check
          %p275 = pneg %p120
        $region54: #{tpu_custom_call.1} parent=39 // pred_check_branch
          %277 = sbr.rel (%p275) target = $region56
        $region55: #{tpu_custom_call.1} parent=39 // pred_region
          %278 = dma.done [#allocation9], 9216
        $region56: #{tpu_custom_call.1} parent=39 // pred_fallthru
          _
        %s279 = sand.u32 %s44, 1
        %s280 = scalar_lea.sflag [#allocation3], %s279
        %s281 = sand.u32 %s44, 1
        %s282 = smul.addr %s281, 384
        %s283 = scalar_lea.vmem [#allocation2], %s282
        %p284 = pneg %p57
        %p285 = pneg %p54
        %p286 = pneg %p78
        %p287 = pneg %p75
        %p288 = pneg %p99
        %p289 = pneg %p96
        %p290 = pneg %p120
        %p291 = pneg %p117
        %p292 = pneg %p141
        %p293 = pneg %p138
        %p294 = pneg %p169
        %p295 = pneg %p166
        %s296 = sand.u32 %s156, 1
        %s297 = scalar_lea.sflag [#allocation4], %s296
        %s298 = sand.u32 %s156, 1
        %s299 = smul.addr %s298, 384
        %s300 = scalar_lea.vmem [#allocation10], %s299
        %s301 = smul.u32 16, %s29
        %s303 = smul.u32 %s29, 128
        %v304 = vld [vmem:[%s262] sm:$0xff]
        %v305 = vld [vmem:[%s262 + $0x8] sm:$0xf]
        %v306 = vld [vmem:[%s262 + $0xc] sm:$0xff]
        %v307 = vld [vmem:[%s262 + $0x14] sm:$0xf]
        %v308 = vld [vmem:[%s262 + $0x18] sm:$0xff]
        %v309 = vld [vmem:[%s262 + $0x20] sm:$0xf]
        %v310 = vld [vmem:[%s262 + $0x24] sm:$0xff]
        %v311 = vld [vmem:[%s262 + $0x2c] sm:$0xf]
        %v312 = vld [vmem:[%s262 + $0x30] sm:$0xff]
        %v313 = vld [vmem:[%s262 + $0x38] sm:$0xf]
        %v314 = vld [vmem:[%s262 + $0x3c] sm:$0xff]
        %v315 = vld [vmem:[%s262 + $0x44] sm:$0xf]
        %v316 = vld [vmem:[%s262 + $0x48] sm:$0xff]
        %v317 = vld [vmem:[%s262 + $0x50] sm:$0xf]
        %v318 = vld [vmem:[%s262 + $0x54] sm:$0xff]
        %v319 = vld [vmem:[%s262 + $0x5c] sm:$0xf]
        %v320 = vld [vmem:[%s262 + $0x60] sm:$0xff]
        %v321 = vld [vmem:[%s262 + $0x68] sm:$0xf]
        %v322 = vld [vmem:[%s262 + $0x6c] sm:$0xff]
        %v323 = vld [vmem:[%s262 + $0x74] sm:$0xf]
        %v324 = vld [vmem:[%s262 + $0x78] sm:$0xff]
        %v325 = vld [vmem:[%s262 + $0x80] sm:$0xf]
        %v326 = vld [vmem:[%s262 + $0x84] sm:$0xff]
        %v327 = vld [vmem:[%s262 + $0x8c] sm:$0xf]
        %v328 = vld [vmem:[%s262 + $0x90] sm:$0xff]
        %v329 = vld [vmem:[%s262 + $0x98] sm:$0xf]
        %v330 = vld [vmem:[%s262 + $0x9c] sm:$0xff]
        %v331 = vld [vmem:[%s262 + $0xa4] sm:$0xf]
        %v332 = vld [vmem:[%s262 + $0xa8] sm:$0xff]
        %v333 = vld [vmem:[%s262 + $0xb0] sm:$0xf]
        %v334 = vld [vmem:[%s262 + $0xb4] sm:$0xff]
        %v335 = vld [vmem:[%s262 + $0xbc] sm:$0xf]
        %v336 = vld [vmem:[%s262 + $0xc0] sm:$0xff]
        %v337 = vld [vmem:[%s262 + $0xc8] sm:$0xf]
        %v338 = vld [vmem:[%s262 + $0xcc] sm:$0xff]
        %v339 = vld [vmem:[%s262 + $0xd4] sm:$0xf]
        %v340 = vld [vmem:[%s262 + $0xd8] sm:$0xff]
        %v341 = vld [vmem:[%s262 + $0xe0] sm:$0xf]
        %v342 = vld [vmem:[%s262 + $0xe4] sm:$0xff]
        %v343 = vld [vmem:[%s262 + $0xec] sm:$0xf]
        %v344 = vld [vmem:[%s262 + $0xf0] sm:$0xff]
        %v345 = vld [vmem:[%s262 + $0xf8] sm:$0xf]
        %v346 = vld [vmem:[%s262 + $0xfc] sm:$0xff]
        %v347 = vld [vmem:[%s262 + $0x104] sm:$0xf]
        %v348 = vld [vmem:[%s262 + $0x108] sm:$0xff]
        %v349 = vld [vmem:[%s262 + $0x110] sm:$0xf]
        %v350 = vld [vmem:[%s262 + $0x114] sm:$0xff]
        %v351 = vld [vmem:[%s262 + $0x11c] sm:$0xf]
        %v352 = vld [vmem:[%s262 + $0x120] sm:$0xff]
        %v353 = vld [vmem:[%s262 + $0x128] sm:$0xf]
        %v354 = vld [vmem:[%s262 + $0x12c] sm:$0xff]
        %v355 = vld [vmem:[%s262 + $0x134] sm:$0xf]
        %v356 = vld [vmem:[%s262 + $0x138] sm:$0xff]
        %v357 = vld [vmem:[%s262 + $0x140] sm:$0xf]
        %v358 = vld [vmem:[%s262 + $0x144] sm:$0xff]
        %v359 = vld [vmem:[%s262 + $0x14c] sm:$0xf]
        %v360 = vld [vmem:[%s262 + $0x150] sm:$0xff]
        %v361 = vld [vmem:[%s262 + $0x158] sm:$0xf]
        %v362 = vld [vmem:[%s262 + $0x15c] sm:$0xff]
        %v363 = vld [vmem:[%s262 + $0x164] sm:$0xf]
        %v364 = vld [vmem:[%s262 + $0x168] sm:$0xff]
        %v365 = vld [vmem:[%s262 + $0x170] sm:$0xf]
        %v366 = vld [vmem:[%s262 + $0x174] sm:$0xff]
        %v367 = vld [vmem:[%s262 + $0x17c] sm:$0xf]
        %s368 = sshra.s32 %s303, 3
        %s369 = sand.u32 %s303, 7
        %s370 = smul.u32 %s368, 3
        %s371 = smul.addr %s370, 4
        %s372 = scalar_lea.vmem %s262, %s371 [#allocation2]
        %v373 = vld [vmem:[%s372] sm:$0xff]
        %v374 = vld [vmem:[%s372 + $0x8] sm:$0xf]
        %v375 = vld [vmem:[%s372 + $0xc] sm:$0xff]
        %v376 = vld [vmem:[%s372 + $0x14] sm:$0xf]
        %v377 = vld [vmem:[%s372 + $0x18] sm:$0xff]
        %v378 = vld [vmem:[%s372 + $0x20] sm:$0xf]
        %v379 = vld [vmem:[%s372 + $0x24] sm:$0xff]
        %v380 = vld [vmem:[%s372 + $0x2c] sm:$0xf]
        %v381 = vld [vmem:[%s372 + $0x30] sm:$0xff]
        %v382 = vld [vmem:[%s372 + $0x38] sm:$0xf]
        %v383 = vld [vmem:[%s372 + $0x3c] sm:$0xff]
        %v384 = vld [vmem:[%s372 + $0x44] sm:$0xf]
        %v385 = vld [vmem:[%s372 + $0x48] sm:$0xff]
        %v386 = vld [vmem:[%s372 + $0x50] sm:$0xf]
        %v387 = vld [vmem:[%s372 + $0x54] sm:$0xff]
        %v388 = vld [vmem:[%s372 + $0x5c] sm:$0xf]
        %v389 = vld [vmem:[%s372 + $0x60] sm:$0xff]
        %v390 = vld [vmem:[%s372 + $0x68] sm:$0xf]
        %v391 = vld [vmem:[%s372 + $0x6c] sm:$0xff]
        %v392 = vld [vmem:[%s372 + $0x74] sm:$0xf]
        %v393 = vld [vmem:[%s372 + $0x78] sm:$0xff]
        %v394 = vld [vmem:[%s372 + $0x80] sm:$0xf]
        %v395 = vld [vmem:[%s372 + $0x84] sm:$0xff]
        %v396 = vld [vmem:[%s372 + $0x8c] sm:$0xf]
        %v397 = vld [vmem:[%s372 + $0x90] sm:$0xff]
        %v398 = vld [vmem:[%s372 + $0x98] sm:$0xf]
        %v399 = vld [vmem:[%s372 + $0x9c] sm:$0xff]
        %v400 = vld [vmem:[%s372 + $0xa4] sm:$0xf]
        %v401 = vld [vmem:[%s372 + $0xa8] sm:$0xff]
        %v402 = vld [vmem:[%s372 + $0xb0] sm:$0xf]
        %v403 = vld [vmem:[%s372 + $0xb4] sm:$0xff]
        %v404 = vld [vmem:[%s372 + $0xbc] sm:$0xf]
        %v405 = vld [vmem:[#allocation5] sm:$0xff]
        %v406 = vld [vmem:[#allocation5 + $0x8] sm:$0xf]
        %v407 = vld [vmem:[#allocation5 + $0xc] sm:$0xff]
        %v408 = vld [vmem:[#allocation5 + $0x14] sm:$0xf]
        %v409 = vld [vmem:[#allocation5 + $0x18] sm:$0xff]
        %v410 = vld [vmem:[#allocation5 + $0x20] sm:$0xf]
        %v411 = vld [vmem:[#allocation5 + $0x24] sm:$0xff]
        %v412 = vld [vmem:[#allocation5 + $0x2c] sm:$0xf]
        %v413 = vld [vmem:[#allocation5 + $0x30] sm:$0xff]
        %v414 = vld [vmem:[#allocation5 + $0x38] sm:$0xf]
        %v415 = vld [vmem:[#allocation5 + $0x3c] sm:$0xff]
        %v416 = vld [vmem:[#allocation5 + $0x44] sm:$0xf]
        %v417 = vld [vmem:[#allocation5 + $0x48] sm:$0xff]
        %v418 = vld [vmem:[#allocation5 + $0x50] sm:$0xf]
        %v419 = vld [vmem:[#allocation5 + $0x54] sm:$0xff]
        %v420 = vld [vmem:[#allocation5 + $0x5c] sm:$0xf]
        %v421 = vld [vmem:[#allocation5 + $0x60] sm:$0xff]
        %v422 = vld [vmem:[#allocation5 + $0x68] sm:$0xf]
        %v423 = vld [vmem:[#allocation5 + $0x6c] sm:$0xff]
        %v424 = vld [vmem:[#allocation5 + $0x74] sm:$0xf]
        %v425 = vld [vmem:[#allocation5 + $0x78] sm:$0xff]
        %v426 = vld [vmem:[#allocation5 + $0x80] sm:$0xf]
        %v427 = vld [vmem:[#allocation5 + $0x84] sm:$0xff]
        %v428 = vld [vmem:[#allocation5 + $0x8c] sm:$0xf]
        %v429 = vld [vmem:[#allocation5 + $0x90] sm:$0xff]
        %v430 = vld [vmem:[#allocation5 + $0x98] sm:$0xf]
        %v431 = vld [vmem:[#allocation5 + $0x9c] sm:$0xff]
        %v432 = vld [vmem:[#allocation5 + $0xa4] sm:$0xf]
        %v433 = vld [vmem:[#allocation5 + $0xa8] sm:$0xff]
        %v434 = vld [vmem:[#allocation5 + $0xb0] sm:$0xf]
        %v435 = vld [vmem:[#allocation5 + $0xb4] sm:$0xff]
        %v436 = vld [vmem:[#allocation5 + $0xbc] sm:$0xf]
        %v437 = vld [vmem:[#allocation5 + $0xc0] sm:$0xff]
        %v438 = vld [vmem:[#allocation5 + $0xc8] sm:$0xf]
        %v439 = vld [vmem:[#allocation5 + $0xcc] sm:$0xff]
        %v440 = vld [vmem:[#allocation5 + $0xd4] sm:$0xf]
        %v441 = vld [vmem:[#allocation5 + $0xd8] sm:$0xff]
        %v442 = vld [vmem:[#allocation5 + $0xe0] sm:$0xf]
        %v443 = vld [vmem:[#allocation5 + $0xe4] sm:$0xff]
        %v444 = vld [vmem:[#allocation5 + $0xec] sm:$0xf]
        %v445 = vld [vmem:[#allocation5 + $0xf0] sm:$0xff]
        %v446 = vld [vmem:[#allocation5 + $0xf8] sm:$0xf]
        %v447 = vld [vmem:[#allocation5 + $0xfc] sm:$0xff]
        %v448 = vld [vmem:[#allocation5 + $0x104] sm:$0xf]
        %v449 = vld [vmem:[#allocation5 + $0x108] sm:$0xff]
        %v450 = vld [vmem:[#allocation5 + $0x110] sm:$0xf]
        %v451 = vld [vmem:[#allocation5 + $0x114] sm:$0xff]
        %v452 = vld [vmem:[#allocation5 + $0x11c] sm:$0xf]
        %v453 = vld [vmem:[#allocation5 + $0x120] sm:$0xff]
        %v454 = vld [vmem:[#allocation5 + $0x128] sm:$0xf]
        %v455 = vld [vmem:[#allocation5 + $0x12c] sm:$0xff]
        %v456 = vld [vmem:[#allocation5 + $0x134] sm:$0xf]
        %v457 = vld [vmem:[#allocation5 + $0x138] sm:$0xff]
        %v458 = vld [vmem:[#allocation5 + $0x140] sm:$0xf]
        %v459 = vld [vmem:[#allocation5 + $0x144] sm:$0xff]
        %v460 = vld [vmem:[#allocation5 + $0x14c] sm:$0xf]
        %v461 = vld [vmem:[#allocation5 + $0x150] sm:$0xff]
        %v462 = vld [vmem:[#allocation5 + $0x158] sm:$0xf]
        %v463 = vld [vmem:[#allocation5 + $0x15c] sm:$0xff]
        %v464 = vld [vmem:[#allocation5 + $0x164] sm:$0xf]
        %v465 = vld [vmem:[#allocation5 + $0x168] sm:$0xff]
        %v466 = vld [vmem:[#allocation5 + $0x170] sm:$0xf]
        %v467 = vld [vmem:[#allocation5 + $0x174] sm:$0xff]
        %v468 = vld [vmem:[#allocation5 + $0x17c] sm:$0xf]
        %v469 = vld [vmem:[#allocation5 + $0x180] sm:$0xff]
        %v470 = vld [vmem:[#allocation5 + $0x188] sm:$0xf]
        %v471 = vld [vmem:[#allocation5 + $0x18c] sm:$0xff]
        %v472 = vld [vmem:[#allocation5 + $0x194] sm:$0xf]
        %v473 = vld [vmem:[#allocation5 + $0x198] sm:$0xff]
        %v474 = vld [vmem:[#allocation5 + $0x1a0] sm:$0xf]
        %v475 = vld [vmem:[#allocation5 + $0x1a4] sm:$0xff]
        %v476 = vld [vmem:[#allocation5 + $0x1ac] sm:$0xf]
        %v477 = vld [vmem:[#allocation5 + $0x1b0] sm:$0xff]
        %v478 = vld [vmem:[#allocation5 + $0x1b8] sm:$0xf]
        %v479 = vld [vmem:[#allocation5 + $0x1bc] sm:$0xff]
        %v480 = vld [vmem:[#allocation5 + $0x1c4] sm:$0xf]
        %v481 = vld [vmem:[#allocation5 + $0x1c8] sm:$0xff]
        %v482 = vld [vmem:[#allocation5 + $0x1d0] sm:$0xf]
        %v483 = vld [vmem:[#allocation5 + $0x1d4] sm:$0xff]
        %v484 = vld [vmem:[#allocation5 + $0x1dc] sm:$0xf]
        %v485 = vld [vmem:[#allocation5 + $0x1e0] sm:$0xff]
        %v486 = vld [vmem:[#allocation5 + $0x1e8] sm:$0xf]
        %v487 = vld [vmem:[#allocation5 + $0x1ec] sm:$0xff]
        %v488 = vld [vmem:[#allocation5 + $0x1f4] sm:$0xf]
        %v489 = vld [vmem:[#allocation5 + $0x1f8] sm:$0xff]
        %v490 = vld [vmem:[#allocation5 + $0x200] sm:$0xf]
        %v491 = vld [vmem:[#allocation5 + $0x204] sm:$0xff]
        %v492 = vld [vmem:[#allocation5 + $0x20c] sm:$0xf]
        %v493 = vld [vmem:[#allocation5 + $0x210] sm:$0xff]
        %v494 = vld [vmem:[#allocation5 + $0x218] sm:$0xf]
        %v495 = vld [vmem:[#allocation5 + $0x21c] sm:$0xff]
        %v496 = vld [vmem:[#allocation5 + $0x224] sm:$0xf]
        %v497 = vld [vmem:[#allocation5 + $0x228] sm:$0xff]
        %v498 = vld [vmem:[#allocation5 + $0x230] sm:$0xf]
        %v499 = vld [vmem:[#allocation5 + $0x234] sm:$0xff]
        %v500 = vld [vmem:[#allocation5 + $0x23c] sm:$0xf]
        %v533 = vunpack.c.l.b16 %v373
        %v534 = vunpack.c.h.b16 %v373
        %v535 = vunpack.c.l.b16 %v374
        %v536 = vunpack.c.l.b16 %v375
        %v537 = vunpack.c.h.b16 %v375
        %v538 = vunpack.c.l.b16 %v376
        %v539 = vunpack.c.l.b16 %v377
        %v540 = vunpack.c.h.b16 %v377
        %v541 = vunpack.c.l.b16 %v378
        %v542 = vunpack.c.l.b16 %v379
        %v543 = vunpack.c.h.b16 %v379
        %v544 = vunpack.c.l.b16 %v380
        %v545 = vunpack.c.l.b16 %v381
        %v546 = vunpack.c.h.b16 %v381
        %v547 = vunpack.c.l.b16 %v382
        %v548 = vunpack.c.l.b16 %v383
        %v549 = vunpack.c.h.b16 %v383
        %v550 = vunpack.c.l.b16 %v384
        %v551 = vunpack.c.l.b16 %v385
        %v552 = vunpack.c.h.b16 %v385
        %v553 = vunpack.c.l.b16 %v386
        %v554 = vunpack.c.l.b16 %v387
        %v555 = vunpack.c.h.b16 %v387
        %v556 = vunpack.c.l.b16 %v388
        %v557 = vunpack.c.l.b16 %v389
        %v558 = vunpack.c.h.b16 %v389
        %v559 = vunpack.c.l.b16 %v390
        %v560 = vunpack.c.l.b16 %v391
        %v561 = vunpack.c.h.b16 %v391
        %v562 = vunpack.c.l.b16 %v392
        %v563 = vunpack.c.l.b16 %v393
        %v564 = vunpack.c.h.b16 %v393
        %v565 = vunpack.c.l.b16 %v394
        %v566 = vunpack.c.l.b16 %v395
        %v567 = vunpack.c.h.b16 %v395
        %v568 = vunpack.c.l.b16 %v396
        %v569 = vunpack.c.l.b16 %v397
        %v570 = vunpack.c.h.b16 %v397
        %v571 = vunpack.c.l.b16 %v398
        %v572 = vunpack.c.l.b16 %v399
        %v573 = vunpack.c.h.b16 %v399
        %v574 = vunpack.c.l.b16 %v400
        %v575 = vunpack.c.l.b16 %v401
        %v576 = vunpack.c.h.b16 %v401
        %v577 = vunpack.c.l.b16 %v402
        %v578 = vunpack.c.l.b16 %v403
        %v579 = vunpack.c.h.b16 %v403
        %v580 = vunpack.c.l.b16 %v404
        %v581 = vpack.c.b16 %v536, %v533
        %v582 = vpack.c.b16 %v537, %v534
        %v583 = vpack.c.b16 %v538, %v535
        %v584 = vpack.c.b16 %v542, %v539
        %v585 = vpack.c.b16 %v543, %v540
        %v586 = vpack.c.b16 %v544, %v541
        %v587 = vpack.c.b16 %v548, %v545
        %v588 = vpack.c.b16 %v549, %v546
        %v589 = vpack.c.b16 %v550, %v547
        %v590 = vpack.c.b16 %v554, %v551
        %v591 = vpack.c.b16 %v555, %v552
        %v592 = vpack.c.b16 %v556, %v553
        %v593 = vpack.c.b16 %v560, %v557
        %v594 = vpack.c.b16 %v561, %v558
        %v595 = vpack.c.b16 %v562, %v559
        %v596 = vpack.c.b16 %v566, %v563
        %v597 = vpack.c.b16 %v567, %v564
        %v598 = vpack.c.b16 %v568, %v565
        %v599 = vpack.c.b16 %v572, %v569
        %v600 = vpack.c.b16 %v573, %v570
        %v601 = vpack.c.b16 %v574, %v571
        %v602 = vpack.c.b16 %v578, %v575
        %v603 = vpack.c.b16 %v579, %v576
        %v604 = vpack.c.b16 %v580, %v577
        %v725 = vunpack.c.l.b16 %v405
        %v726 = vunpack.c.h.b16 %v405
        %v727 = vunpack.c.l.b16 %v406
        %v728 = vunpack.c.l.b16 %v407
        %v729 = vunpack.c.h.b16 %v407
        %v730 = vunpack.c.l.b16 %v408
        %v731 = vunpack.c.l.b16 %v409
        %v732 = vunpack.c.h.b16 %v409
        %v733 = vunpack.c.l.b16 %v410
        %v734 = vunpack.c.l.b16 %v411
        %v735 = vunpack.c.h.b16 %v411
        %v736 = vunpack.c.l.b16 %v412
        %v737 = vunpack.c.l.b16 %v413
        %v738 = vunpack.c.h.b16 %v413
        %v739 = vunpack.c.l.b16 %v414
        %v740 = vunpack.c.l.b16 %v415
        %v741 = vunpack.c.h.b16 %v415
        %v742 = vunpack.c.l.b16 %v416
        %v743 = vunpack.c.l.b16 %v417
        %v744 = vunpack.c.h.b16 %v417
        %v745 = vunpack.c.l.b16 %v418
        %v746 = vunpack.c.l.b16 %v419
        %v747 = vunpack.c.h.b16 %v419
        %v748 = vunpack.c.l.b16 %v420
        %v749 = vunpack.c.l.b16 %v421
        %v750 = vunpack.c.h.b16 %v421
        %v751 = vunpack.c.l.b16 %v422
        %v752 = vunpack.c.l.b16 %v423
        %v753 = vunpack.c.h.b16 %v423
        %v754 = vunpack.c.l.b16 %v424
        %v755 = vunpack.c.l.b16 %v425
        %v756 = vunpack.c.h.b16 %v425
        %v757 = vunpack.c.l.b16 %v426
        %v758 = vunpack.c.l.b16 %v427
        %v759 = vunpack.c.h.b16 %v427
        %v760 = vunpack.c.l.b16 %v428
        %v761 = vunpack.c.l.b16 %v429
        %v762 = vunpack.c.h.b16 %v429
        %v763 = vunpack.c.l.b16 %v430
        %v764 = vunpack.c.l.b16 %v431
        %v765 = vunpack.c.h.b16 %v431
        %v766 = vunpack.c.l.b16 %v432
        %v767 = vunpack.c.l.b16 %v433
        %v768 = vunpack.c.h.b16 %v433
        %v769 = vunpack.c.l.b16 %v434
        %v770 = vunpack.c.l.b16 %v435
        %v771 = vunpack.c.h.b16 %v435
        %v772 = vunpack.c.l.b16 %v436
        %v773 = vunpack.c.l.b16 %v437
        %v774 = vunpack.c.h.b16 %v437
        %v775 = vunpack.c.l.b16 %v438
        %v776 = vunpack.c.l.b16 %v439
        %v777 = vunpack.c.h.b16 %v439
        %v778 = vunpack.c.l.b16 %v440
        %v779 = vunpack.c.l.b16 %v441
        %v780 = vunpack.c.h.b16 %v441
        %v781 = vunpack.c.l.b16 %v442
        %v782 = vunpack.c.l.b16 %v443
        %v783 = vunpack.c.h.b16 %v443
        %v784 = vunpack.c.l.b16 %v444
        %v785 = vunpack.c.l.b16 %v445
        %v786 = vunpack.c.h.b16 %v445
        %v787 = vunpack.c.l.b16 %v446
        %v788 = vunpack.c.l.b16 %v447
        %v789 = vunpack.c.h.b16 %v447
        %v790 = vunpack.c.l.b16 %v448
        %v791 = vunpack.c.l.b16 %v449
        %v792 = vunpack.c.h.b16 %v449
        %v793 = vunpack.c.l.b16 %v450
        %v794 = vunpack.c.l.b16 %v451
        %v795 = vunpack.c.h.b16 %v451
        %v796 = vunpack.c.l.b16 %v452
        %v797 = vunpack.c.l.b16 %v453
        %v798 = vunpack.c.h.b16 %v453
        %v799 = vunpack.c.l.b16 %v454
        %v800 = vunpack.c.l.b16 %v455
        %v801 = vunpack.c.h.b16 %v455
        %v802 = vunpack.c.l.b16 %v456
        %v803 = vunpack.c.l.b16 %v457
        %v804 = vunpack.c.h.b16 %v457
        %v805 = vunpack.c.l.b16 %v458
        %v806 = vunpack.c.l.b16 %v459
        %v807 = vunpack.c.h.b16 %v459
        %v808 = vunpack.c.l.b16 %v460
        %v809 = vunpack.c.l.b16 %v461
        %v810 = vunpack.c.h.b16 %v461
        %v811 = vunpack.c.l.b16 %v462
        %v812 = vunpack.c.l.b16 %v463
        %v813 = vunpack.c.h.b16 %v463
        %v814 = vunpack.c.l.b16 %v464
        %v815 = vunpack.c.l.b16 %v465
        %v816 = vunpack.c.h.b16 %v465
        %v817 = vunpack.c.l.b16 %v466
        %v818 = vunpack.c.l.b16 %v467
        %v819 = vunpack.c.h.b16 %v467
        %v820 = vunpack.c.l.b16 %v468
        %v821 = vunpack.c.l.b16 %v469
        %v822 = vunpack.c.h.b16 %v469
        %v823 = vunpack.c.l.b16 %v470
        %v824 = vunpack.c.l.b16 %v471
        %v825 = vunpack.c.h.b16 %v471
        %v826 = vunpack.c.l.b16 %v472
        %v827 = vunpack.c.l.b16 %v473
        %v828 = vunpack.c.h.b16 %v473
        %v829 = vunpack.c.l.b16 %v474
        %v830 = vunpack.c.l.b16 %v475
        %v831 = vunpack.c.h.b16 %v475
        %v832 = vunpack.c.l.b16 %v476
        %v833 = vunpack.c.l.b16 %v477
        %v834 = vunpack.c.h.b16 %v477
        %v835 = vunpack.c.l.b16 %v478
        %v836 = vunpack.c.l.b16 %v479
        %v837 = vunpack.c.h.b16 %v479
        %v838 = vunpack.c.l.b16 %v480
        %v839 = vunpack.c.l.b16 %v481
        %v840 = vunpack.c.h.b16 %v481
        %v841 = vunpack.c.l.b16 %v482
        %v842 = vunpack.c.l.b16 %v483
        %v843 = vunpack.c.h.b16 %v483
        %v844 = vunpack.c.l.b16 %v484
        %v845 = vunpack.c.l.b16 %v485
        %v846 = vunpack.c.h.b16 %v485
        %v847 = vunpack.c.l.b16 %v486
        %v848 = vunpack.c.l.b16 %v487
        %v849 = vunpack.c.h.b16 %v487
        %v850 = vunpack.c.l.b16 %v488
        %v851 = vunpack.c.l.b16 %v489
        %v852 = vunpack.c.h.b16 %v489
        %v853 = vunpack.c.l.b16 %v490
        %v854 = vunpack.c.l.b16 %v491
        %v855 = vunpack.c.h.b16 %v491
        %v856 = vunpack.c.l.b16 %v492
        %v857 = vunpack.c.l.b16 %v493
        %v858 = vunpack.c.h.b16 %v493
        %v859 = vunpack.c.l.b16 %v494
        %v860 = vunpack.c.l.b16 %v495
        %v861 = vunpack.c.h.b16 %v495
        %v862 = vunpack.c.l.b16 %v496
        %v863 = vunpack.c.l.b16 %v497
        %v864 = vunpack.c.h.b16 %v497
        %v865 = vunpack.c.l.b16 %v498
        %v866 = vunpack.c.l.b16 %v499
        %v867 = vunpack.c.h.b16 %v499
        %v868 = vunpack.c.l.b16 %v500
        %v869 = vpack.c.b16 %v728, %v725
        %v870 = vpack.c.b16 %v729, %v726
        %v871 = vpack.c.b16 %v730, %v727
        %v872 = vpack.c.b16 %v734, %v731
        %v873 = vpack.c.b16 %v735, %v732
        %v874 = vpack.c.b16 %v736, %v733
        %v875 = vpack.c.b16 %v740, %v737
        %v876 = vpack.c.b16 %v741, %v738
        %v877 = vpack.c.b16 %v742, %v739
        %v878 = vpack.c.b16 %v746, %v743
        %v879 = vpack.c.b16 %v747, %v744
        %v880 = vpack.c.b16 %v748, %v745
        %v881 = vpack.c.b16 %v752, %v749
        %v882 = vpack.c.b16 %v753, %v750
        %v883 = vpack.c.b16 %v754, %v751
        %v884 = vpack.c.b16 %v758, %v755
        %v885 = vpack.c.b16 %v759, %v756
        %v886 = vpack.c.b16 %v760, %v757
        %v887 = vpack.c.b16 %v764, %v761
        %v888 = vpack.c.b16 %v765, %v762
        %v889 = vpack.c.b16 %v766, %v763
        %v890 = vpack.c.b16 %v770, %v767
        %v891 = vpack.c.b16 %v771, %v768
        %v892 = vpack.c.b16 %v772, %v769
        %v893 = vpack.c.b16 %v776, %v773
        %v894 = vpack.c.b16 %v777, %v774
        %v895 = vpack.c.b16 %v778, %v775
        %v896 = vpack.c.b16 %v782, %v779
        %v897 = vpack.c.b16 %v783, %v780
        %v898 = vpack.c.b16 %v784, %v781
        %v899 = vpack.c.b16 %v788, %v785
        %v900 = vpack.c.b16 %v789, %v786
        %v901 = vpack.c.b16 %v790, %v787
        %v902 = vpack.c.b16 %v794, %v791
        %v903 = vpack.c.b16 %v795, %v792
        %v904 = vpack.c.b16 %v796, %v793
        %v905 = vpack.c.b16 %v800, %v797
        %v906 = vpack.c.b16 %v801, %v798
        %v907 = vpack.c.b16 %v802, %v799
        %v908 = vpack.c.b16 %v806, %v803
        %v909 = vpack.c.b16 %v807, %v804
        %v910 = vpack.c.b16 %v808, %v805
        %v911 = vpack.c.b16 %v812, %v809
        %v912 = vpack.c.b16 %v813, %v810
        %v913 = vpack.c.b16 %v814, %v811
        %v914 = vpack.c.b16 %v818, %v815
        %v915 = vpack.c.b16 %v819, %v816
        %v916 = vpack.c.b16 %v820, %v817
        %v917 = vpack.c.b16 %v824, %v821
        %v918 = vpack.c.b16 %v825, %v822
        %v919 = vpack.c.b16 %v826, %v823
        %v920 = vpack.c.b16 %v830, %v827
        %v921 = vpack.c.b16 %v831, %v828
        %v922 = vpack.c.b16 %v832, %v829
        %v923 = vpack.c.b16 %v836, %v833
        %v924 = vpack.c.b16 %v837, %v834
        %v925 = vpack.c.b16 %v838, %v835
        %v926 = vpack.c.b16 %v842, %v839
        %v927 = vpack.c.b16 %v843, %v840
        %v928 = vpack.c.b16 %v844, %v841
        %v929 = vpack.c.b16 %v848, %v845
        %v930 = vpack.c.b16 %v849, %v846
        %v931 = vpack.c.b16 %v850, %v847
        %v932 = vpack.c.b16 %v854, %v851
        %v933 = vpack.c.b16 %v855, %v852
        %v934 = vpack.c.b16 %v856, %v853
        %v935 = vpack.c.b16 %v860, %v857
        %v936 = vpack.c.b16 %v861, %v858
        %v937 = vpack.c.b16 %v862, %v859
        %v938 = vpack.c.b16 %v866, %v863
        %v939 = vpack.c.b16 %v867, %v864
        %v940 = vpack.c.b16 %v868, %v865
        %1013 = vmatprep.subr.bf16.mxu0 %v870
        %1014 = vmatpush1.bf16.msra.mxu0 %v869
        %1015 = vmatprep.subr.bf16.mxu0 %v873
        %1016 = vmatpush1.bf16.msra.mxu0 %v872
        %1017 = vmatprep.subr.bf16.mxu0 %v876
        %1018 = vmatpush1.bf16.msra.mxu0 %v875
        %1019 = vmatprep.subr.bf16.mxu0 %v879
        %1020 = vmatpush1.bf16.msra.mxu0 %v878
        %1021 = vmatprep.subr.bf16.mxu0 %v882
        %1022 = vmatpush1.bf16.msra.mxu0 %v881
        %1023 = vmatprep.subr.bf16.mxu0 %v885
        %1024 = vmatpush1.bf16.msra.mxu0 %v884
        %1025 = vmatprep.subr.bf16.mxu0 %v888
        %1026 = vmatpush1.bf16.msra.mxu0 %v887
        %1027 = vmatprep.subr.bf16.mxu0 %v891
        %1028 = vmatpush1.bf16.msra.mxu0 %v890
        %1029 = vmatprep.subr.bf16.mxu0 %v894
        %1030 = vmatpush1.bf16.msra.mxu0 %v893
        %1031 = vmatprep.subr.bf16.mxu0 %v897
        %1032 = vmatpush1.bf16.msra.mxu0 %v896
        %1033 = vmatprep.subr.bf16.mxu0 %v900
        %1034 = vmatpush1.bf16.msra.mxu0 %v899
        %1035 = vmatprep.subr.bf16.mxu0 %v903
        %1036 = vmatpush1.bf16.msra.mxu0 %v902
        %1037 = vmatprep.subr.bf16.mxu0 %v906
        %1038 = vmatpush1.bf16.msra.mxu0 %v905
        %1039 = vmatprep.subr.bf16.mxu0 %v909
        %1040 = vmatpush1.bf16.msra.mxu0 %v908
        %1041 = vmatprep.subr.bf16.mxu0 %v912
        %1042 = vmatpush1.bf16.msra.mxu0 %v911
        %1043 = vmatprep.subr.bf16.mxu0 %v915
        %1044 = vmatpush1.bf16.msra.mxu0 %v914
        %1045 = vmatprep.mubr.bf16.mxu0 %v582
        %1046 = vmatmul.mubr.bf16.gmra.mrb[0].mxu0 %v581
        %v1047 = vpop.f32.mrb[0].mxu0
        %v1048 = vadd.f32 0.0, %v1047
        %v1049 = vpop.f32.mrb[0].mxu0
        %v1050 = vadd.f32 0.0, %v1049
        %v1051 = vpop.f32.mrb[0].mxu0
        %v1052 = vadd.f32 0.0, %v1051
        %v1053 = vpop.f32.mrb[0].mxu0
        %v1054 = vadd.f32 0.0, %v1053
        %1055 = vmatprep.mubr.bf16.mxu0 %v585
        %1056 = vmatmul.mubr.bf16.gmra.mrb[0].mxu0 %v584
        %v1057 = vpop.f32.mrb[0].mxu0
        %v1058 = vadd.f32 0.0, %v1057
        %v1059 = vpop.f32.mrb[0].mxu0
        %v1060 = vadd.f32 0.0, %v1059
        %v1061 = vpop.f32.mrb[0].mxu0
        %v1062 = vadd.f32 0.0, %v1061
        %v1063 = vpop.f32.mrb[0].mxu0
        %v1064 = vadd.f32 0.0, %v1063
        %1065 = vmatprep.mubr.bf16.mxu0 %v588
        %1066 = vmatmul.mubr.bf16.gmra.mrb[0].mxu0 %v587
        %v1067 = vpop.f32.mrb[0].mxu0
        %v1068 = vadd.f32 0.0, %v1067
        %v1069 = vpop.f32.mrb[0].mxu0
        %v1070 = vadd.f32 0.0, %v1069
        %v1071 = vpop.f32.mrb[0].mxu0
        %v1072 = vadd.f32 0.0, %v1071
        %v1073 = vpop.f32.mrb[0].mxu0
        %v1074 = vadd.f32 0.0, %v1073
        %1075 = vmatprep.mubr.bf16.mxu0 %v591
        %1076 = vmatmul.mubr.bf16.gmra.mrb[0].mxu0 %v590
        %v1077 = vpop.f32.mrb[0].mxu0
        %v1078 = vadd.f32 0.0, %v1077
        %v1079 = vpop.f32.mrb[0].mxu0
        %v1080 = vadd.f32 0.0, %v1079
        %v1081 = vpop.f32.mrb[0].mxu0
        %v1082 = vadd.f32 0.0, %v1081
        %v1083 = vpop.f32.mrb[0].mxu0
        %v1084 = vadd.f32 0.0, %v1083
        %1085 = vmatprep.mubr.bf16.mxu0 %v594
        %1086 = vmatmul.mubr.bf16.gmra.mrb[0].mxu0 %v593
        %v1087 = vpop.f32.mrb[0].mxu0
        %v1088 = vadd.f32 0.0, %v1087
        %v1089 = vpop.f32.mrb[0].mxu0
        %v1090 = vadd.f32 0.0, %v1089
        %v1091 = vpop.f32.mrb[0].mxu0
        %v1092 = vadd.f32 0.0, %v1091
        %v1093 = vpop.f32.mrb[0].mxu0
        %v1094 = vadd.f32 0.0, %v1093
        %1095 = vmatprep.mubr.bf16.mxu0 %v597
        %1096 = vmatmul.mubr.bf16.gmra.mrb[0].mxu0 %v596
        %v1097 = vpop.f32.mrb[0].mxu0
        %v1098 = vadd.f32 0.0, %v1097
        %v1099 = vpop.f32.mrb[0].mxu0
        %v1100 = vadd.f32 0.0, %v1099
        %v1101 = vpop.f32.mrb[0].mxu0
        %v1102 = vadd.f32 0.0, %v1101
        %v1103 = vpop.f32.mrb[0].mxu0
        %v1104 = vadd.f32 0.0, %v1103
        %1105 = vmatprep.mubr.bf16.mxu0 %v600
        %1106 = vmatmul.mubr.bf16.gmra.mrb[0].mxu0 %v599
        %v1107 = vpop.f32.mrb[0].mxu0
        %v1108 = vadd.f32 0.0, %v1107
        %v1109 = vpop.f32.mrb[0].mxu0
        %v1110 = vadd.f32 0.0, %v1109
        %v1111 = vpop.f32.mrb[0].mxu0
        %v1112 = vadd.f32 0.0, %v1111
        %v1113 = vpop.f32.mrb[0].mxu0
        %v1114 = vadd.f32 0.0, %v1113
        %1115 = vmatprep.mubr.bf16.mxu0 %v603
        %1116 = vmatmul.mubr.bf16.gmra.mrb[0].mxu0 %v602
        %v1117 = vpop.f32.mrb[0].mxu0
        %v1118 = vadd.f32 0.0, %v1117
        %v1119 = vpop.f32.mrb[0].mxu0
        %v1120 = vadd.f32 0.0, %v1119
        %v1121 = vpop.f32.mrb[0].mxu0
        %v1122 = vadd.f32 0.0, %v1121
        %v1123 = vpop.f32.mrb[0].mxu0
        %v1124 = vadd.f32 0.0, %v1123
        %1125 = vdwg.mxu0
        %1126 = vmatprep.subr.bf16.mxu0 %v918
        %1127 = vmatpush1.bf16.msra.mxu0 %v917
        %1128 = vmatprep.subr.bf16.mxu0 %v921
        %1129 = vmatpush1.bf16.msra.mxu0 %v920
        %1130 = vmatprep.subr.bf16.mxu0 %v924
        %1131 = vmatpush1.bf16.msra.mxu0 %v923
        %1132 = vmatprep.subr.bf16.mxu0 %v927
        %1133 = vmatpush1.bf16.msra.mxu0 %v926
        %1134 = vmatprep.subr.bf16.mxu0 %v930
        %1135 = vmatpush1.bf16.msra.mxu0 %v929
        %1136 = vmatprep.subr.bf16.mxu0 %v933
        %1137 = vmatpush1.bf16.msra.mxu0 %v932
        %1138 = vmatprep.subr.bf16.mxu0 %v936
        %1139 = vmatpush1.bf16.msra.mxu0 %v935
        %1140 = vmatprep.subr.bf16.mxu0 %v939
        %1141 = vmatpush1.bf16.msra.mxu0 %v938
        %1142 = vmatprep.subr.bf16.mxu0 0
        %1143 = vmatpush1.bf16.msra.mxu0 0
        %1144 = vmatprep.subr.bf16.mxu0 0
        %1145 = vmatpush1.bf16.msra.mxu0 0
        %1146 = vmatprep.subr.bf16.mxu0 0
        %1147 = vmatpush1.bf16.msra.mxu0 0
        %1148 = vmatprep.subr.bf16.mxu0 0
        %1149 = vmatpush1.bf16.msra.mxu0 0
        %1150 = vmatprep.subr.bf16.mxu0 0
        %1151 = vmatpush1.bf16.msra.mxu0 0
        %1152 = vmatprep.subr.bf16.mxu0 0
        %1153 = vmatpush1.bf16.msra.mxu0 0
        %1154 = vmatprep.subr.bf16.mxu0 0
        %1155 = vmatpush1.bf16.msra.mxu0 0
        %1156 = vmatprep.subr.bf16.mxu0 0
        %1157 = vmatpush1.bf16.msra.mxu0 0
        %1158 = vmatprep.mubr.bf16.mxu0 0
        %1159 = vmatmul.mubr.bf16.gmra.mrb[0].mxu0 %v583
        %v1160 = vpop.f32.mrb[0].mxu0
        %v1161 = vadd.f32 %v1048, %v1160
        %v1162 = vpop.f32.mrb[0].mxu0
        %v1163 = vadd.f32 %v1050, %v1162
        %v1164 = vpop.f32.mrb[0].mxu0
        %v1165 = vadd.f32 %v1052, %v1164
        %v1166 = vpop.f32.mrb[0].mxu0
        %v1167 = vadd.f32 %v1054, %v1166
        %1168 = vmatprep.mubr.bf16.mxu0 0
        %1169 = vmatmul.mubr.bf16.gmra.mrb[0].mxu0 %v586
        %v1170 = vpop.f32.mrb[0].mxu0
        %v1171 = vadd.f32 %v1058, %v1170
        %v1172 = vpop.f32.mrb[0].mxu0
        %v1173 = vadd.f32 %v1060, %v1172
        %v1174 = vpop.f32.mrb[0].mxu0
        %v1175 = vadd.f32 %v1062, %v1174
        %v1176 = vpop.f32.mrb[0].mxu0
        %v1177 = vadd.f32 %v1064, %v1176
        %1178 = vmatprep.mubr.bf16.mxu0 0
        %1179 = vmatmul.mubr.bf16.gmra.mrb[0].mxu0 %v589
        %v1180 = vpop.f32.mrb[0].mxu0
        %v1181 = vadd.f32 %v1068, %v1180
        %v1182 = vpop.f32.mrb[0].mxu0
        %v1183 = vadd.f32 %v1070, %v1182
        %v1184 = vpop.f32.mrb[0].mxu0
        %v1185 = vadd.f32 %v1072, %v1184
        %v1186 = vpop.f32.mrb[0].mxu0
        %v1187 = vadd.f32 %v1074, %v1186
        %1188 = vmatprep.mubr.bf16.mxu0 0
        %1189 = vmatmul.mubr.bf16.gmra.mrb[0].mxu0 %v592
        %v1190 = vpop.f32.mrb[0].mxu0
        %v1191 = vadd.f32 %v1078, %v1190
        %v1192 = vpop.f32.mrb[0].mxu0
        %v1193 = vadd.f32 %v1080, %v1192
        %v1194 = vpop.f32.mrb[0].mxu0
        %v1195 = vadd.f32 %v1082, %v1194
        %v1196 = vpop.f32.mrb[0].mxu0
        %v1197 = vadd.f32 %v1084, %v1196
        %1198 = vmatprep.mubr.bf16.mxu0 0
        %1199 = vmatmul.mubr.bf16.gmra.mrb[0].mxu0 %v595
        %v1200 = vpop.f32.mrb[0].mxu0
        %v1201 = vadd.f32 %v1088, %v1200
        %v1202 = vpop.f32.mrb[0].mxu0
        %v1203 = vadd.f32 %v1090, %v1202
        %v1204 = vpop.f32.mrb[0].mxu0
        %v1205 = vadd.f32 %v1092, %v1204
        %v1206 = vpop.f32.mrb[0].mxu0
        %v1207 = vadd.f32 %v1094, %v1206
        %1208 = vmatprep.mubr.bf16.mxu0 0
        %1209 = vmatmul.mubr.bf16.gmra.mrb[0].mxu0 %v598
        %v1210 = vpop.f32.mrb[0].mxu0
        %v1211 = vadd.f32 %v1098, %v1210
        %v1212 = vpop.f32.mrb[0].mxu0
        %v1213 = vadd.f32 %v1100, %v1212
        %v1214 = vpop.f32.mrb[0].mxu0
        %v1215 = vadd.f32 %v1102, %v1214
        %v1216 = vpop.f32.mrb[0].mxu0
        %v1217 = vadd.f32 %v1104, %v1216
        %1218 = vmatprep.mubr.bf16.mxu0 0
        %1219 = vmatmul.mubr.bf16.gmra.mrb[0].mxu0 %v601
        %v1220 = vpop.f32.mrb[0].mxu0
        %v1221 = vadd.f32 %v1108, %v1220
        %v1222 = vpop.f32.mrb[0].mxu0
        %v1223 = vadd.f32 %v1110, %v1222
        %v1224 = vpop.f32.mrb[0].mxu0
        %v1225 = vadd.f32 %v1112, %v1224
        %v1226 = vpop.f32.mrb[0].mxu0
        %v1227 = vadd.f32 %v1114, %v1226
        %1228 = vmatprep.mubr.bf16.mxu0 0
        %1229 = vmatmul.mubr.bf16.gmra.mrb[0].mxu0 %v604
        %v1230 = vpop.f32.mrb[0].mxu0
        %v1231 = vadd.f32 %v1118, %v1230
        %v1232 = vpop.f32.mrb[0].mxu0
        %v1233 = vadd.f32 %v1120, %v1232
        %v1234 = vpop.f32.mrb[0].mxu0
        %v1235 = vadd.f32 %v1122, %v1234
        %v1236 = vpop.f32.mrb[0].mxu0
        %v1237 = vadd.f32 %v1124, %v1236
        %1238 = vdwg.mxu0
        %1239 = vmatprep.subr.bf16.mxu0 0
        %1240 = vmatpush1.bf16.msra.mxu0 %v871
        %1241 = vmatprep.subr.bf16.mxu0 0
        %1242 = vmatpush1.bf16.msra.mxu0 %v874
        %1243 = vmatprep.subr.bf16.mxu0 0
        %1244 = vmatpush1.bf16.msra.mxu0 %v877
        %1245 = vmatprep.subr.bf16.mxu0 0
        %1246 = vmatpush1.bf16.msra.mxu0 %v880
        %1247 = vmatprep.subr.bf16.mxu0 0
        %1248 = vmatpush1.bf16.msra.mxu0 %v883
        %1249 = vmatprep.subr.bf16.mxu0 0
        %1250 = vmatpush1.bf16.msra.mxu0 %v886
        %1251 = vmatprep.subr.bf16.mxu0 0
        %1252 = vmatpush1.bf16.msra.mxu0 %v889
        %1253 = vmatprep.subr.bf16.mxu0 0
        %1254 = vmatpush1.bf16.msra.mxu0 %v892
        %1255 = vmatprep.subr.bf16.mxu0 0
        %1256 = vmatpush1.bf16.msra.mxu0 %v895
        %1257 = vmatprep.subr.bf16.mxu0 0
        %1258 = vmatpush1.bf16.msra.mxu0 %v898
        %1259 = vmatprep.subr.bf16.mxu0 0
        %1260 = vmatpush1.bf16.msra.mxu0 %v901
        %1261 = vmatprep.subr.bf16.mxu0 0
        %1262 = vmatpush1.bf16.msra.mxu0 %v904
        %1263 = vmatprep.subr.bf16.mxu0 0
        %1264 = vmatpush1.bf16.msra.mxu0 %v907
        %1265 = vmatprep.subr.bf16.mxu0 0
        %1266 = vmatpush1.bf16.msra.mxu0 %v910
        %1267 = vmatprep.subr.bf16.mxu0 0
        %1268 = vmatpush1.bf16.msra.mxu0 %v913
        %1269 = vmatprep.subr.bf16.mxu0 0
        %1270 = vmatpush1.bf16.msra.mxu0 %v916
        %1271 = vmatprep.mubr.bf16.mxu0 %v582
        %1272 = vmatmul.mubr.bf16.gmra.mrb[0].mxu0 %v581
        %v1273 = vpop.f32.mrb[0].mxu0
        %v1274 = vadd.f32 0.0, %v1273
        %v1275 = vpop.f32.mrb[0].mxu0
        %v1276 = vpop.f32.mrb[0].mxu0
        %v1277 = vadd.f32 0.0, %v1276
        %v1278 = vpop.f32.mrb[0].mxu0
        %1279 = vmatprep.mubr.bf16.mxu0 %v585
        %1280 = vmatmul.mubr.bf16.gmra.mrb[0].mxu0 %v584
        %v1281 = vpop.f32.mrb[0].mxu0
        %v1282 = vadd.f32 0.0, %v1281
        %v1283 = vpop.f32.mrb[0].mxu0
        %v1284 = vpop.f32.mrb[0].mxu0
        %v1285 = vadd.f32 0.0, %v1284
        %v1286 = vpop.f32.mrb[0].mxu0
        %1287 = vmatprep.mubr.bf16.mxu0 %v588
        %1288 = vmatmul.mubr.bf16.gmra.mrb[0].mxu0 %v587
        %v1289 = vpop.f32.mrb[0].mxu0
        %v1290 = vadd.f32 0.0, %v1289
        %v1291 = vpop.f32.mrb[0].mxu0
        %v1292 = vpop.f32.mrb[0].mxu0
        %v1293 = vadd.f32 0.0, %v1292
        %v1294 = vpop.f32.mrb[0].mxu0
        %1295 = vmatprep.mubr.bf16.mxu0 %v591
        %1296 = vmatmul.mubr.bf16.gmra.mrb[0].mxu0 %v590
        %v1297 = vpop.f32.mrb[0].mxu0
        %v1298 = vadd.f32 0.0, %v1297
        %v1299 = vpop.f32.mrb[0].mxu0
        %v1300 = vpop.f32.mrb[0].mxu0
        %v1301 = vadd.f32 0.0, %v1300
        %v1302 = vpop.f32.mrb[0].mxu0
        %1303 = vmatprep.mubr.bf16.mxu0 %v594
        %1304 = vmatmul.mubr.bf16.gmra.mrb[0].mxu0 %v593
        %v1305 = vpop.f32.mrb[0].mxu0
        %v1306 = vadd.f32 0.0, %v1305
        %v1307 = vpop.f32.mrb[0].mxu0
        %v1308 = vpop.f32.mrb[0].mxu0
        %v1309 = vadd.f32 0.0, %v1308
        %v1310 = vpop.f32.mrb[0].mxu0
        %1311 = vmatprep.mubr.bf16.mxu0 %v597
        %1312 = vmatmul.mubr.bf16.gmra.mrb[0].mxu0 %v596
        %v1313 = vpop.f32.mrb[0].mxu0
        %v1314 = vadd.f32 0.0, %v1313
        %v1315 = vpop.f32.mrb[0].mxu0
        %v1316 = vpop.f32.mrb[0].mxu0
        %v1317 = vadd.f32 0.0, %v1316
        %v1318 = vpop.f32.mrb[0].mxu0
        %1319 = vmatprep.mubr.bf16.mxu0 %v600
        %1320 = vmatmul.mubr.bf16.gmra.mrb[0].mxu0 %v599
        %v1321 = vpop.f32.mrb[0].mxu0
        %v1322 = vadd.f32 0.0, %v1321
        %v1323 = vpop.f32.mrb[0].mxu0
        %v1324 = vpop.f32.mrb[0].mxu0
        %v1325 = vadd.f32 0.0, %v1324
        %v1326 = vpop.f32.mrb[0].mxu0
        %1327 = vmatprep.mubr.bf16.mxu0 %v603
        %1328 = vmatmul.mubr.bf16.gmra.mrb[0].mxu0 %v602
        %v1329 = vpop.f32.mrb[0].mxu0
        %v1330 = vadd.f32 0.0, %v1329
        %v1331 = vpop.f32.mrb[0].mxu0
        %v1332 = vpop.f32.mrb[0].mxu0
        %v1333 = vadd.f32 0.0, %v1332
        %v1334 = vpop.f32.mrb[0].mxu0
        %1335 = vdwg.mxu0
        %1336 = vmatprep.subr.bf16.mxu0 0
        %1337 = vmatpush1.bf16.msra.mxu0 %v919
        %1338 = vmatprep.subr.bf16.mxu0 0
        %1339 = vmatpush1.bf16.msra.mxu0 %v922
        %1340 = vmatprep.subr.bf16.mxu0 0
        %1341 = vmatpush1.bf16.msra.mxu0 %v925
        %1342 = vmatprep.subr.bf16.mxu0 0
        %1343 = vmatpush1.bf16.msra.mxu0 %v928
        %1344 = vmatprep.subr.bf16.mxu0 0
        %1345 = vmatpush1.bf16.msra.mxu0 %v931
        %1346 = vmatprep.subr.bf16.mxu0 0
        %1347 = vmatpush1.bf16.msra.mxu0 %v934
        %1348 = vmatprep.subr.bf16.mxu0 0
        %1349 = vmatpush1.bf16.msra.mxu0 %v937
        %1350 = vmatprep.subr.bf16.mxu0 0
        %1351 = vmatpush1.bf16.msra.mxu0 %v940
        %1352 = vmatprep.subr.bf16.mxu0 0
        %1353 = vmatpush1.bf16.msra.mxu0 0
        %1354 = vmatprep.subr.bf16.mxu0 0
        %1355 = vmatpush1.bf16.msra.mxu0 0
        %1356 = vmatprep.subr.bf16.mxu0 0
        %1357 = vmatpush1.bf16.msra.mxu0 0
        %1358 = vmatprep.subr.bf16.mxu0 0
        %1359 = vmatpush1.bf16.msra.mxu0 0
        %1360 = vmatprep.subr.bf16.mxu0 0
        %1361 = vmatpush1.bf16.msra.mxu0 0
        %1362 = vmatprep.subr.bf16.mxu0 0
        %1363 = vmatpush1.bf16.msra.mxu0 0
        %1364 = vmatprep.subr.bf16.mxu0 0
        %1365 = vmatpush1.bf16.msra.mxu0 0
        %1366 = vmatprep.subr.bf16.mxu0 0
        %1367 = vmatpush1.bf16.msra.mxu0 0
        %1368 = vmatprep.mubr.bf16.mxu0 0
        %1369 = vmatmul.mubr.bf16.gmra.mrb[0].mxu0 %v583
        %v1370 = vpop.f32.mrb[0].mxu0
        %v1371 = vadd.f32 %v1274, %v1370
        %v1372 = vpop.f32.mrb[0].mxu0
        %v1373 = vpop.f32.mrb[0].mxu0
        %v1374 = vadd.f32 %v1277, %v1373
        %v1375 = vpop.f32.mrb[0].mxu0
        %1376 = vmatprep.mubr.bf16.mxu0 0
        %1377 = vmatmul.mubr.bf16.gmra.mrb[0].mxu0 %v586
        %v1378 = vpop.f32.mrb[0].mxu0
        %v1379 = vadd.f32 %v1282, %v1378
        %v1380 = vpop.f32.mrb[0].mxu0
        %v1381 = vpop.f32.mrb[0].mxu0
        %v1382 = vadd.f32 %v1285, %v1381
        %v1383 = vpop.f32.mrb[0].mxu0
        %1384 = vmatprep.mubr.bf16.mxu0 0
        %1385 = vmatmul.mubr.bf16.gmra.mrb[0].mxu0 %v589
        %v1386 = vpop.f32.mrb[0].mxu0
        %v1387 = vadd.f32 %v1290, %v1386
        %v1388 = vpop.f32.mrb[0].mxu0
        %v1389 = vpop.f32.mrb[0].mxu0
        %v1390 = vadd.f32 %v1293, %v1389
        %v1391 = vpop.f32.mrb[0].mxu0
        %1392 = vmatprep.mubr.bf16.mxu0 0
        %1393 = vmatmul.mubr.bf16.gmra.mrb[0].mxu0 %v592
        %v1394 = vpop.f32.mrb[0].mxu0
        %v1395 = vadd.f32 %v1298, %v1394
        %v1396 = vpop.f32.mrb[0].mxu0
        %v1397 = vpop.f32.mrb[0].mxu0
        %v1398 = vadd.f32 %v1301, %v1397
        %v1399 = vpop.f32.mrb[0].mxu0
        %1400 = vmatprep.mubr.bf16.mxu0 0
        %1401 = vmatmul.mubr.bf16.gmra.mrb[0].mxu0 %v595
        %v1402 = vpop.f32.mrb[0].mxu0
        %v1403 = vadd.f32 %v1306, %v1402
        %v1404 = vpop.f32.mrb[0].mxu0
        %v1405 = vpop.f32.mrb[0].mxu0
        %v1406 = vadd.f32 %v1309, %v1405
        %v1407 = vpop.f32.mrb[0].mxu0
        %1408 = vmatprep.mubr.bf16.mxu0 0
        %1409 = vmatmul.mubr.bf16.gmra.mrb[0].mxu0 %v598
        %v1410 = vpop.f32.mrb[0].mxu0
        %v1411 = vadd.f32 %v1314, %v1410
        %v1412 = vpop.f32.mrb[0].mxu0
        %v1413 = vpop.f32.mrb[0].mxu0
        %v1414 = vadd.f32 %v1317, %v1413
        %v1415 = vpop.f32.mrb[0].mxu0
        %1416 = vmatprep.mubr.bf16.mxu0 0
        %1417 = vmatmul.mubr.bf16.gmra.mrb[0].mxu0 %v601
        %v1418 = vpop.f32.mrb[0].mxu0
        %v1419 = vadd.f32 %v1322, %v1418
        %v1420 = vpop.f32.mrb[0].mxu0
        %v1421 = vpop.f32.mrb[0].mxu0
        %v1422 = vadd.f32 %v1325, %v1421
        %v1423 = vpop.f32.mrb[0].mxu0
        %1424 = vmatprep.mubr.bf16.mxu0 0
        %1425 = vmatmul.mubr.bf16.gmra.mrb[0].mxu0 %v604
        %v1426 = vpop.f32.mrb[0].mxu0
        %v1427 = vadd.f32 %v1330, %v1426
        %v1428 = vpop.f32.mrb[0].mxu0
        %v1429 = vpop.f32.mrb[0].mxu0
        %v1430 = vadd.f32 %v1333, %v1429
        %v1431 = vpop.f32.mrb[0].mxu0
        %1432 = vdwg.mxu0
        %v1433 = vld [vmem:[#allocation7] sm:$0xff]
        %v1434 = vld [vmem:[#allocation7 + $0x8] sm:$0xff]
        %v1435 = vld [vmem:[#allocation7 + $0x10] sm:$0xff]
        %v1436 = vld [vmem:[#allocation7 + $0x18] sm:$0xff]
        %v1437 = vld [vmem:[#allocation7 + $0x20] sm:$0xff]
        %v1438 = vld [vmem:[#allocation7 + $0x28] sm:$0xff]
        %v1439 = vld [vmem:[#allocation7 + $0x30] sm:$0xff]
        %v1440 = vld [vmem:[#allocation7 + $0x38] sm:$0xff]
        %v1441 = vld [vmem:[#allocation7 + $0x40] sm:$0xff]
        %v1442 = vld [vmem:[#allocation7 + $0x48] sm:$0xff]
        %v1443 = vld [vmem:[#allocation7 + $0x50] sm:$0xff]
        %v1444 = vld [vmem:[#allocation7 + $0x58] sm:$0xff]
        %v1445 = vld [vmem:[#allocation7 + $0x60] sm:$0xff]
        %v1446 = vld [vmem:[#allocation7 + $0x68] sm:$0xff]
        %v1447 = vld [vmem:[#allocation7 + $0x70] sm:$0xff]
        %v1448 = vld [vmem:[#allocation7 + $0x78] sm:$0xff]
        %v1449 = vld [vmem:[#allocation7 + $0x80] sm:$0xff]
        %v1450 = vld [vmem:[#allocation7 + $0x88] sm:$0xff]
        %v1451 = vld [vmem:[#allocation7 + $0x90] sm:$0xff]
        %v1452 = vld [vmem:[#allocation7 + $0x98] sm:$0xff]
        %v1453 = vld [vmem:[#allocation7 + $0xa0] sm:$0xff]
        %v1454 = vld [vmem:[#allocation7 + $0xa8] sm:$0xff]
        %v1455 = vld [vmem:[#allocation7 + $0xb0] sm:$0xff]
        %v1456 = vld [vmem:[#allocation7 + $0xb8] sm:$0xff]
        %v1457 = vld [vmem:[#allocation7 + $0xc0] sm:$0xff]
        %v1458 = vld [vmem:[#allocation7 + $0xc8] sm:$0xff]
        %v1459 = vld [vmem:[#allocation7 + $0xd0] sm:$0xff]
        %v1460 = vld [vmem:[#allocation7 + $0xd8] sm:$0xff]
        %v1461 = vld [vmem:[#allocation7 + $0xe0] sm:$0xff]
        %v1462 = vld [vmem:[#allocation7 + $0xe8] sm:$0xff]
        %v1463 = vld [vmem:[#allocation7 + $0xf0] sm:$0xff]
        %v1464 = vld [vmem:[#allocation7 + $0xf8] sm:$0xff]
        %v1465 = vld [vmem:[#allocation7 + $0x100] sm:$0xff]
        %v1466 = vld [vmem:[#allocation7 + $0x108] sm:$0xff]
        %v1467 = vld [vmem:[#allocation7 + $0x110] sm:$0xff]
        %v1468 = vld [vmem:[#allocation7 + $0x118] sm:$0xff]
        %v1469 = vld [vmem:[#allocation7 + $0x120] sm:$0xff]
        %v1470 = vld [vmem:[#allocation7 + $0x128] sm:$0xff]
        %v1471 = vld [vmem:[#allocation7 + $0x130] sm:$0xff]
        %v1472 = vld [vmem:[#allocation7 + $0x138] sm:$0xff]
        %v1473 = vld [vmem:[#allocation7 + $0x140] sm:$0xff]
        %v1474 = vld [vmem:[#allocation7 + $0x148] sm:$0xff]
        %v1475 = vld [vmem:[#allocation7 + $0x150] sm:$0xff]
        %v1476 = vld [vmem:[#allocation7 + $0x158] sm:$0xff]
        %v1477 = vld [vmem:[#allocation7 + $0x160] sm:$0xff]
        %v1478 = vld [vmem:[#allocation7 + $0x168] sm:$0xff]
        %v1479 = vld [vmem:[#allocation7 + $0x170] sm:$0xff]
        %v1480 = vld [vmem:[#allocation7 + $0x178] sm:$0xff]
        %v1481 = vld [vmem:[#allocation7 + $0x180] sm:$0xff]
        %v1482 = vld [vmem:[#allocation7 + $0x188] sm:$0xff]
        %v1483 = vld [vmem:[#allocation7 + $0x190] sm:$0xff]
        %v1484 = vld [vmem:[#allocation7 + $0x198] sm:$0xff]
        %v1485 = vld [vmem:[#allocation7 + $0x1a0] sm:$0xff]
        %v1486 = vld [vmem:[#allocation7 + $0x1a8] sm:$0xff]
        %v1487 = vld [vmem:[#allocation7 + $0x1b0] sm:$0xff]
        %v1488 = vld [vmem:[#allocation7 + $0x1b8] sm:$0xff]
        %v1489 = vld [vmem:[#allocation7 + $0x1c0] sm:$0xff]
        %v1490 = vld [vmem:[#allocation7 + $0x1c8] sm:$0xff]
        %v1491 = vld [vmem:[#allocation7 + $0x1d0] sm:$0xff]
        %v1492 = vld [vmem:[#allocation7 + $0x1d8] sm:$0xff]
        %v1493 = vld [vmem:[#allocation7 + $0x1e0] sm:$0xff]
        %v1494 = vld [vmem:[#allocation7 + $0x1e8] sm:$0xff]
        %v1495 = vld [vmem:[#allocation7 + $0x1f0] sm:$0xff]
        %v1496 = vld [vmem:[#allocation7 + $0x1f8] sm:$0xff]
        %v1497 = vld [vmem:[#allocation7 + $0x200] sm:$0xff]
        %v1498 = vld [vmem:[#allocation7 + $0x208] sm:$0xff]
        %v1499 = vld [vmem:[#allocation7 + $0x210] sm:$0xff]
        %v1500 = vld [vmem:[#allocation7 + $0x218] sm:$0xff]
        %v1501 = vld [vmem:[#allocation7 + $0x220] sm:$0xff]
        %v1502 = vld [vmem:[#allocation7 + $0x228] sm:$0xff]
        %v1503 = vld [vmem:[#allocation7 + $0x230] sm:$0xff]
        %v1504 = vld [vmem:[#allocation7 + $0x238] sm:$0xff]
        %v1505 = vld [vmem:[#allocation7 + $0x240] sm:$0xff]
        %v1506 = vld [vmem:[#allocation7 + $0x248] sm:$0xff]
        %v1507 = vld [vmem:[#allocation7 + $0x250] sm:$0xff]
        %v1508 = vld [vmem:[#allocation7 + $0x258] sm:$0xff]
        %v1509 = vld [vmem:[#allocation7 + $0x260] sm:$0xff]
        %v1510 = vld [vmem:[#allocation7 + $0x268] sm:$0xff]
        %v1511 = vld [vmem:[#allocation7 + $0x270] sm:$0xff]
        %v1512 = vld [vmem:[#allocation7 + $0x278] sm:$0xff]
        %v1513 = vld [vmem:[#allocation7 + $0x280] sm:$0xff]
        %v1514 = vld [vmem:[#allocation7 + $0x288] sm:$0xff]
        %v1515 = vld [vmem:[#allocation7 + $0x290] sm:$0xff]
        %v1516 = vld [vmem:[#allocation7 + $0x298] sm:$0xff]
        %v1517 = vld [vmem:[#allocation7 + $0x2a0] sm:$0xff]
        %v1518 = vld [vmem:[#allocation7 + $0x2a8] sm:$0xff]
        %v1519 = vld [vmem:[#allocation7 + $0x2b0] sm:$0xff]
        %v1520 = vld [vmem:[#allocation7 + $0x2b8] sm:$0xff]
        %v1521 = vld [vmem:[#allocation7 + $0x2c0] sm:$0xff]
        %v1522 = vld [vmem:[#allocation7 + $0x2c8] sm:$0xff]
        %v1523 = vld [vmem:[#allocation7 + $0x2d0] sm:$0xff]
        %v1524 = vld [vmem:[#allocation7 + $0x2d8] sm:$0xff]
        %v1525 = vld [vmem:[#allocation7 + $0x2e0] sm:$0xff]
        %v1526 = vld [vmem:[#allocation7 + $0x2e8] sm:$0xff]
        %v1527 = vld [vmem:[#allocation7 + $0x2f0] sm:$0xff]
        %v1528 = vld [vmem:[#allocation7 + $0x2f8] sm:$0xff]
        %v1529 = vld [vmem:[#allocation7 + $0x300] sm:$0xff]
        %v1530 = vld [vmem:[#allocation7 + $0x308] sm:$0xff]
        %v1531 = vld [vmem:[#allocation7 + $0x310] sm:$0xff]
        %v1532 = vld [vmem:[#allocation7 + $0x318] sm:$0xff]
        %v1533 = vld [vmem:[#allocation7 + $0x320] sm:$0xff]
        %v1534 = vld [vmem:[#allocation7 + $0x328] sm:$0xff]
        %v1535 = vld [vmem:[#allocation7 + $0x330] sm:$0xff]
        %v1536 = vld [vmem:[#allocation7 + $0x338] sm:$0xff]
        %v1537 = vld [vmem:[#allocation7 + $0x340] sm:$0xff]
        %v1538 = vld [vmem:[#allocation7 + $0x348] sm:$0xff]
        %v1539 = vld [vmem:[#allocation7 + $0x350] sm:$0xff]
        %v1540 = vld [vmem:[#allocation7 + $0x358] sm:$0xff]
        %v1541 = vld [vmem:[#allocation7 + $0x360] sm:$0xff]
        %v1542 = vld [vmem:[#allocation7 + $0x368] sm:$0xff]
        %v1543 = vld [vmem:[#allocation7 + $0x370] sm:$0xff]
        %v1544 = vld [vmem:[#allocation7 + $0x378] sm:$0xff]
        %v1545 = vld [vmem:[#allocation7 + $0x380] sm:$0xff]
        %v1546 = vld [vmem:[#allocation7 + $0x388] sm:$0xff]
        %v1547 = vld [vmem:[#allocation7 + $0x390] sm:$0xff]
        %v1548 = vld [vmem:[#allocation7 + $0x398] sm:$0xff]
        %v1549 = vld [vmem:[#allocation7 + $0x3a0] sm:$0xff]
        %v1550 = vld [vmem:[#allocation7 + $0x3a8] sm:$0xff]
        %v1551 = vld [vmem:[#allocation7 + $0x3b0] sm:$0xff]
        %v1552 = vld [vmem:[#allocation7 + $0x3b8] sm:$0xff]
        %v1553 = vld [vmem:[#allocation7 + $0x3c0] sm:$0xff]
        %v1554 = vld [vmem:[#allocation7 + $0x3c8] sm:$0xff]
        %v1555 = vld [vmem:[#allocation7 + $0x3d0] sm:$0xff]
        %v1556 = vld [vmem:[#allocation7 + $0x3d8] sm:$0xff]
        %v1557 = vld [vmem:[#allocation7 + $0x3e0] sm:$0xff]
        %v1558 = vld [vmem:[#allocation7 + $0x3e8] sm:$0xff]
        %v1559 = vld [vmem:[#allocation7 + $0x3f0] sm:$0xff]
        %v1560 = vld [vmem:[#allocation7 + $0x3f8] sm:$0xff]
        %v1561 = vld [vmem:[#allocation7 + $0x400] sm:$0xff]
        %v1562 = vld [vmem:[#allocation7 + $0x408] sm:$0xff]
        %v1563 = vld [vmem:[#allocation7 + $0x410] sm:$0xff]
        %v1564 = vld [vmem:[#allocation7 + $0x418] sm:$0xff]
        %v1565 = vld [vmem:[#allocation7 + $0x420] sm:$0xff]
        %v1566 = vld [vmem:[#allocation7 + $0x428] sm:$0xff]
        %v1567 = vld [vmem:[#allocation7 + $0x430] sm:$0xff]
        %v1568 = vld [vmem:[#allocation7 + $0x438] sm:$0xff]
        %v1569 = vld [vmem:[#allocation7 + $0x440] sm:$0xff]
        %v1570 = vld [vmem:[#allocation7 + $0x448] sm:$0xff]
        %v1571 = vld [vmem:[#allocation7 + $0x450] sm:$0xff]
        %v1572 = vld [vmem:[#allocation7 + $0x458] sm:$0xff]
        %v1573 = vld [vmem:[#allocation7 + $0x460] sm:$0xff]
        %v1574 = vld [vmem:[#allocation7 + $0x468] sm:$0xff]
        %v1575 = vld [vmem:[#allocation7 + $0x470] sm:$0xff]
        %v1576 = vld [vmem:[#allocation7 + $0x478] sm:$0xff]
        %v1641 = vunpack.c.l.b16 %v304
        %v1642 = vunpack.c.h.b16 %v304
        %v1643 = vunpack.c.l.b16 %v305
        %v1644 = vunpack.c.l.b16 %v306
        %v1645 = vunpack.c.h.b16 %v306
        %v1646 = vunpack.c.l.b16 %v307
        %v1647 = vunpack.c.l.b16 %v308
        %v1648 = vunpack.c.h.b16 %v308
        %v1649 = vunpack.c.l.b16 %v309
        %v1650 = vunpack.c.l.b16 %v310
        %v1651 = vunpack.c.h.b16 %v310
        %v1652 = vunpack.c.l.b16 %v311
        %v1653 = vunpack.c.l.b16 %v312
        %v1654 = vunpack.c.h.b16 %v312
        %v1655 = vunpack.c.l.b16 %v313
        %v1656 = vunpack.c.l.b16 %v314
        %v1657 = vunpack.c.h.b16 %v314
        %v1658 = vunpack.c.l.b16 %v315
        %v1659 = vunpack.c.l.b16 %v316
        %v1660 = vunpack.c.h.b16 %v316
        %v1661 = vunpack.c.l.b16 %v317
        %v1662 = vunpack.c.l.b16 %v318
        %v1663 = vunpack.c.h.b16 %v318
        %v1664 = vunpack.c.l.b16 %v319
        %v1665 = vunpack.c.l.b16 %v320
        %v1666 = vunpack.c.h.b16 %v320
        %v1667 = vunpack.c.l.b16 %v321
        %v1668 = vunpack.c.l.b16 %v322
        %v1669 = vunpack.c.h.b16 %v322
        %v1670 = vunpack.c.l.b16 %v323
        %v1671 = vunpack.c.l.b16 %v324
        %v1672 = vunpack.c.h.b16 %v324
        %v1673 = vunpack.c.l.b16 %v325
        %v1674 = vunpack.c.l.b16 %v326
        %v1675 = vunpack.c.h.b16 %v326
        %v1676 = vunpack.c.l.b16 %v327
        %v1677 = vunpack.c.l.b16 %v328
        %v1678 = vunpack.c.h.b16 %v328
        %v1679 = vunpack.c.l.b16 %v329
        %v1680 = vunpack.c.l.b16 %v330
        %v1681 = vunpack.c.h.b16 %v330
        %v1682 = vunpack.c.l.b16 %v331
        %v1683 = vunpack.c.l.b16 %v332
        %v1684 = vunpack.c.h.b16 %v332
        %v1685 = vunpack.c.l.b16 %v333
        %v1686 = vunpack.c.l.b16 %v334
        %v1687 = vunpack.c.h.b16 %v334
        %v1688 = vunpack.c.l.b16 %v335
        %v1689 = vunpack.c.l.b16 %v336
        %v1690 = vunpack.c.h.b16 %v336
        %v1691 = vunpack.c.l.b16 %v337
        %v1692 = vunpack.c.l.b16 %v338
        %v1693 = vunpack.c.h.b16 %v338
        %v1694 = vunpack.c.l.b16 %v339
        %v1695 = vunpack.c.l.b16 %v340
        %v1696 = vunpack.c.h.b16 %v340
        %v1697 = vunpack.c.l.b16 %v341
        %v1698 = vunpack.c.l.b16 %v342
        %v1699 = vunpack.c.h.b16 %v342
        %v1700 = vunpack.c.l.b16 %v343
        %v1701 = vunpack.c.l.b16 %v344
        %v1702 = vunpack.c.h.b16 %v344
        %v1703 = vunpack.c.l.b16 %v345
        %v1704 = vunpack.c.l.b16 %v346
        %v1705 = vunpack.c.h.b16 %v346
        %v1706 = vunpack.c.l.b16 %v347
        %v1707 = vunpack.c.l.b16 %v348
        %v1708 = vunpack.c.h.b16 %v348
        %v1709 = vunpack.c.l.b16 %v349
        %v1710 = vunpack.c.l.b16 %v350
        %v1711 = vunpack.c.h.b16 %v350
        %v1712 = vunpack.c.l.b16 %v351
        %v1713 = vunpack.c.l.b16 %v352
        %v1714 = vunpack.c.h.b16 %v352
        %v1715 = vunpack.c.l.b16 %v353
        %v1716 = vunpack.c.l.b16 %v354
        %v1717 = vunpack.c.h.b16 %v354
        %v1718 = vunpack.c.l.b16 %v355
        %v1719 = vunpack.c.l.b16 %v356
        %v1720 = vunpack.c.h.b16 %v356
        %v1721 = vunpack.c.l.b16 %v357
        %v1722 = vunpack.c.l.b16 %v358
        %v1723 = vunpack.c.h.b16 %v358
        %v1724 = vunpack.c.l.b16 %v359
        %v1725 = vunpack.c.l.b16 %v360
        %v1726 = vunpack.c.h.b16 %v360
        %v1727 = vunpack.c.l.b16 %v361
        %v1728 = vunpack.c.l.b16 %v362
        %v1729 = vunpack.c.h.b16 %v362
        %v1730 = vunpack.c.l.b16 %v363
        %v1731 = vunpack.c.l.b16 %v364
        %v1732 = vunpack.c.h.b16 %v364
        %v1733 = vunpack.c.l.b16 %v365
        %v1734 = vunpack.c.l.b16 %v366
        %v1735 = vunpack.c.h.b16 %v366
        %v1736 = vunpack.c.l.b16 %v367
        %v1737 = vpack.c.b16 %v1644, %v1641
        %v1738 = vpack.c.b16 %v1645, %v1642
        %v1739 = vpack.c.b16 %v1646, %v1643
        %v1740 = vpack.c.b16 %v1650, %v1647
        %v1741 = vpack.c.b16 %v1651, %v1648
        %v1742 = vpack.c.b16 %v1652, %v1649
        %v1743 = vpack.c.b16 %v1656, %v1653
        %v1744 = vpack.c.b16 %v1657, %v1654
        %v1745 = vpack.c.b16 %v1658, %v1655
        %v1746 = vpack.c.b16 %v1662, %v1659
        %v1747 = vpack.c.b16 %v1663, %v1660
        %v1748 = vpack.c.b16 %v1664, %v1661
        %v1749 = vpack.c.b16 %v1668, %v1665
        %v1750 = vpack.c.b16 %v1669, %v1666
        %v1751 = vpack.c.b16 %v1670, %v1667
        %v1752 = vpack.c.b16 %v1674, %v1671
        %v1753 = vpack.c.b16 %v1675, %v1672
        %v1754 = vpack.c.b16 %v1676, %v1673
        %v1755 = vpack.c.b16 %v1680, %v1677
        %v1756 = vpack.c.b16 %v1681, %v1678
        %v1757 = vpack.c.b16 %v1682, %v1679
        %v1758 = vpack.c.b16 %v1686, %v1683
        %v1759 = vpack.c.b16 %v1687, %v1684
        %v1760 = vpack.c.b16 %v1688, %v1685
        %v1761 = vpack.c.b16 %v1692, %v1689
        %v1762 = vpack.c.b16 %v1693, %v1690
        %v1763 = vpack.c.b16 %v1694, %v1691
        %v1764 = vpack.c.b16 %v1698, %v1695
        %v1765 = vpack.c.b16 %v1699, %v1696
        %v1766 = vpack.c.b16 %v1700, %v1697
        %v1767 = vpack.c.b16 %v1704, %v1701
        %v1768 = vpack.c.b16 %v1705, %v1702
        %v1769 = vpack.c.b16 %v1706, %v1703
        %v1770 = vpack.c.b16 %v1710, %v1707
        %v1771 = vpack.c.b16 %v1711, %v1708
        %v1772 = vpack.c.b16 %v1712, %v1709
        %v1773 = vpack.c.b16 %v1716, %v1713
        %v1774 = vpack.c.b16 %v1717, %v1714
        %v1775 = vpack.c.b16 %v1718, %v1715
        %v1776 = vpack.c.b16 %v1722, %v1719
        %v1777 = vpack.c.b16 %v1723, %v1720
        %v1778 = vpack.c.b16 %v1724, %v1721
        %v1779 = vpack.c.b16 %v1728, %v1725
        %v1780 = vpack.c.b16 %v1729, %v1726
        %v1781 = vpack.c.b16 %v1730, %v1727
        %v1782 = vpack.c.b16 %v1734, %v1731
        %v1783 = vpack.c.b16 %v1735, %v1732
        %v1784 = vpack.c.b16 %v1736, %v1733
        %v1977 = vunpack.c.l.b16 %v1433
        %v1978 = vunpack.c.h.b16 %v1433
        %v1979 = vunpack.c.l.b16 %v1434
        %v1980 = vunpack.c.h.b16 %v1434
        %v1981 = vunpack.c.l.b16 %v1435
        %v1982 = vunpack.c.h.b16 %v1435
        %v1983 = vunpack.c.l.b16 %v1436
        %v1984 = vunpack.c.h.b16 %v1436
        %v1985 = vunpack.c.l.b16 %v1437
        %v1986 = vunpack.c.h.b16 %v1437
        %v1987 = vunpack.c.l.b16 %v1438
        %v1988 = vunpack.c.h.b16 %v1438
        %v1989 = vunpack.c.l.b16 %v1439
        %v1990 = vunpack.c.h.b16 %v1439
        %v1991 = vunpack.c.l.b16 %v1440
        %v1992 = vunpack.c.h.b16 %v1440
        %v1993 = vunpack.c.l.b16 %v1441
        %v1994 = vunpack.c.h.b16 %v1441
        %v1995 = vunpack.c.l.b16 %v1442
        %v1996 = vunpack.c.h.b16 %v1442
        %v1997 = vunpack.c.l.b16 %v1443
        %v1998 = vunpack.c.h.b16 %v1443
        %v1999 = vunpack.c.l.b16 %v1444
        %v2000 = vunpack.c.h.b16 %v1444
        %v2001 = vunpack.c.l.b16 %v1445
        %v2002 = vunpack.c.h.b16 %v1445
        %v2003 = vunpack.c.l.b16 %v1446
        %v2004 = vunpack.c.h.b16 %v1446
        %v2005 = vunpack.c.l.b16 %v1447
        %v2006 = vunpack.c.h.b16 %v1447
        %v2007 = vunpack.c.l.b16 %v1448
        %v2008 = vunpack.c.h.b16 %v1448
        %v2009 = vunpack.c.l.b16 %v1449
        %v2010 = vunpack.c.h.b16 %v1449
        %v2011 = vunpack.c.l.b16 %v1450
        %v2012 = vunpack.c.h.b16 %v1450
        %v2013 = vunpack.c.l.b16 %v1451
        %v2014 = vunpack.c.h.b16 %v1451
        %v2015 = vunpack.c.l.b16 %v1452
        %v2016 = vunpack.c.h.b16 %v1452
        %v2017 = vunpack.c.l.b16 %v1453
        %v2018 = vunpack.c.h.b16 %v1453
        %v2019 = vunpack.c.l.b16 %v1454
        %v2020 = vunpack.c.h.b16 %v1454
        %v2021 = vunpack.c.l.b16 %v1455
        %v2022 = vunpack.c.h.b16 %v1455
        %v2023 = vunpack.c.l.b16 %v1456
        %v2024 = vunpack.c.h.b16 %v1456
        %v2025 = vunpack.c.l.b16 %v1457
        %v2026 = vunpack.c.h.b16 %v1457
        %v2027 = vunpack.c.l.b16 %v1458
        %v2028 = vunpack.c.h.b16 %v1458
        %v2029 = vunpack.c.l.b16 %v1459
        %v2030 = vunpack.c.h.b16 %v1459
        %v2031 = vunpack.c.l.b16 %v1460
        %v2032 = vunpack.c.h.b16 %v1460
        %v2033 = vunpack.c.l.b16 %v1461
        %v2034 = vunpack.c.h.b16 %v1461
        %v2035 = vunpack.c.l.b16 %v1462
        %v2036 = vunpack.c.h.b16 %v1462
        %v2037 = vunpack.c.l.b16 %v1463
        %v2038 = vunpack.c.h.b16 %v1463
        %v2039 = vunpack.c.l.b16 %v1464
        %v2040 = vunpack.c.h.b16 %v1464
        %v2041 = vunpack.c.l.b16 %v1465
        %v2042 = vunpack.c.h.b16 %v1465
        %v2043 = vunpack.c.l.b16 %v1466
        %v2044 = vunpack.c.h.b16 %v1466
        %v2045 = vunpack.c.l.b16 %v1467
        %v2046 = vunpack.c.h.b16 %v1467
        %v2047 = vunpack.c.l.b16 %v1468
        %v2048 = vunpack.c.h.b16 %v1468
        %v2049 = vunpack.c.l.b16 %v1469
        %v2050 = vunpack.c.h.b16 %v1469
        %v2051 = vunpack.c.l.b16 %v1470
        %v2052 = vunpack.c.h.b16 %v1470
        %v2053 = vunpack.c.l.b16 %v1471
        %v2054 = vunpack.c.h.b16 %v1471
        %v2055 = vunpack.c.l.b16 %v1472
        %v2056 = vunpack.c.h.b16 %v1472
        %v2057 = vunpack.c.l.b16 %v1473
        %v2058 = vunpack.c.h.b16 %v1473
        %v2059 = vunpack.c.l.b16 %v1474
        %v2060 = vunpack.c.h.b16 %v1474
        %v2061 = vunpack.c.l.b16 %v1475
        %v2062 = vunpack.c.h.b16 %v1475
        %v2063 = vunpack.c.l.b16 %v1476
        %v2064 = vunpack.c.h.b16 %v1476
        %v2065 = vunpack.c.l.b16 %v1477
        %v2066 = vunpack.c.h.b16 %v1477
        %v2067 = vunpack.c.l.b16 %v1478
        %v2068 = vunpack.c.h.b16 %v1478
        %v2069 = vunpack.c.l.b16 %v1479
        %v2070 = vunpack.c.h.b16 %v1479
        %v2071 = vunpack.c.l.b16 %v1480
        %v2072 = vunpack.c.h.b16 %v1480
        %v2073 = vunpack.c.l.b16 %v1481
        %v2074 = vunpack.c.h.b16 %v1481
        %v2075 = vunpack.c.l.b16 %v1482
        %v2076 = vunpack.c.h.b16 %v1482
        %v2077 = vunpack.c.l.b16 %v1483
        %v2078 = vunpack.c.h.b16 %v1483
        %v2079 = vunpack.c.l.b16 %v1484
        %v2080 = vunpack.c.h.b16 %v1484
        %v2081 = vunpack.c.l.b16 %v1485
        %v2082 = vunpack.c.h.b16 %v1485
        %v2083 = vunpack.c.l.b16 %v1486
        %v2084 = vunpack.c.h.b16 %v1486
        %v2085 = vunpack.c.l.b16 %v1487
        %v2086 = vunpack.c.h.b16 %v1487
        %v2087 = vunpack.c.l.b16 %v1488
        %v2088 = vunpack.c.h.b16 %v1488
        %v2089 = vunpack.c.l.b16 %v1489
        %v2090 = vunpack.c.h.b16 %v1489
        %v2091 = vunpack.c.l.b16 %v1490
        %v2092 = vunpack.c.h.b16 %v1490
        %v2093 = vunpack.c.l.b16 %v1491
        %v2094 = vunpack.c.h.b16 %v1491
        %v2095 = vunpack.c.l.b16 %v1492
        %v2096 = vunpack.c.h.b16 %v1492
        %v2097 = vunpack.c.l.b16 %v1493
        %v2098 = vunpack.c.h.b16 %v1493
        %v2099 = vunpack.c.l.b16 %v1494
        %v2100 = vunpack.c.h.b16 %v1494
        %v2101 = vunpack.c.l.b16 %v1495
        %v2102 = vunpack.c.h.b16 %v1495
        %v2103 = vunpack.c.l.b16 %v1496
        %v2104 = vunpack.c.h.b16 %v1496
        %v2105 = vunpack.c.l.b16 %v1497
        %v2106 = vunpack.c.h.b16 %v1497
        %v2107 = vunpack.c.l.b16 %v1498
        %v2108 = vunpack.c.h.b16 %v1498
        %v2109 = vunpack.c.l.b16 %v1499
        %v2110 = vunpack.c.h.b16 %v1499
        %v2111 = vunpack.c.l.b16 %v1500
        %v2112 = vunpack.c.h.b16 %v1500
        %v2113 = vunpack.c.l.b16 %v1501
        %v2114 = vunpack.c.h.b16 %v1501
        %v2115 = vunpack.c.l.b16 %v1502
        %v2116 = vunpack.c.h.b16 %v1502
        %v2117 = vunpack.c.l.b16 %v1503
        %v2118 = vunpack.c.h.b16 %v1503
        %v2119 = vunpack.c.l.b16 %v1504
        %v2120 = vunpack.c.h.b16 %v1504
        %v2121 = vunpack.c.l.b16 %v1505
        %v2122 = vunpack.c.h.b16 %v1505
        %v2123 = vunpack.c.l.b16 %v1506
        %v2124 = vunpack.c.h.b16 %v1506
        %v2125 = vunpack.c.l.b16 %v1507
        %v2126 = vunpack.c.h.b16 %v1507
        %v2127 = vunpack.c.l.b16 %v1508
        %v2128 = vunpack.c.h.b16 %v1508
        %v2129 = vunpack.c.l.b16 %v1509
        %v2130 = vunpack.c.h.b16 %v1509
        %v2131 = vunpack.c.l.b16 %v1510
        %v2132 = vunpack.c.h.b16 %v1510
        %v2133 = vunpack.c.l.b16 %v1511
        %v2134 = vunpack.c.h.b16 %v1511
        %v2135 = vunpack.c.l.b16 %v1512
        %v2136 = vunpack.c.h.b16 %v1512
        %v2137 = vunpack.c.l.b16 %v1513
        %v2138 = vunpack.c.h.b16 %v1513
        %v2139 = vunpack.c.l.b16 %v1514
        %v2140 = vunpack.c.h.b16 %v1514
        %v2141 = vunpack.c.l.b16 %v1515
        %v2142 = vunpack.c.h.b16 %v1515
        %v2143 = vunpack.c.l.b16 %v1516
        %v2144 = vunpack.c.h.b16 %v1516
        %v2145 = vunpack.c.l.b16 %v1517
        %v2146 = vunpack.c.h.b16 %v1517
        %v2147 = vunpack.c.l.b16 %v1518
        %v2148 = vunpack.c.h.b16 %v1518
        %v2149 = vunpack.c.l.b16 %v1519
        %v2150 = vunpack.c.h.b16 %v1519
        %v2151 = vunpack.c.l.b16 %v1520
        %v2152 = vunpack.c.h.b16 %v1520
        %v2153 = vunpack.c.l.b16 %v1521
        %v2154 = vunpack.c.h.b16 %v1521
        %v2155 = vunpack.c.l.b16 %v1522
        %v2156 = vunpack.c.h.b16 %v1522
        %v2157 = vunpack.c.l.b16 %v1523
        %v2158 = vunpack.c.h.b16 %v1523
        %v2159 = vunpack.c.l.b16 %v1524
        %v2160 = vunpack.c.h.b16 %v1524
        %v2161 = vunpack.c.l.b16 %v1525
        %v2162 = vunpack.c.h.b16 %v1525
        %v2163 = vunpack.c.l.b16 %v1526
        %v2164 = vunpack.c.h.b16 %v1526
        %v2165 = vunpack.c.l.b16 %v1527
        %v2166 = vunpack.c.h.b16 %v1527
        %v2167 = vunpack.c.l.b16 %v1528
        %v2168 = vunpack.c.h.b16 %v1528
        %v2169 = vunpack.c.l.b16 %v1529
        %v2170 = vunpack.c.h.b16 %v1529
        %v2171 = vunpack.c.l.b16 %v1530
        %v2172 = vunpack.c.h.b16 %v1530
        %v2173 = vunpack.c.l.b16 %v1531
        %v2174 = vunpack.c.h.b16 %v1531
        %v2175 = vunpack.c.l.b16 %v1532
        %v2176 = vunpack.c.h.b16 %v1532
        %v2177 = vunpack.c.l.b16 %v1533
        %v2178 = vunpack.c.h.b16 %v1533
        %v2179 = vunpack.c.l.b16 %v1534
        %v2180 = vunpack.c.h.b16 %v1534
        %v2181 = vunpack.c.l.b16 %v1535
        %v2182 = vunpack.c.h.b16 %v1535
        %v2183 = vunpack.c.l.b16 %v1536
        %v2184 = vunpack.c.h.b16 %v1536
        %v2185 = vunpack.c.l.b16 %v1537
        %v2186 = vunpack.c.h.b16 %v1537
        %v2187 = vunpack.c.l.b16 %v1538
        %v2188 = vunpack.c.h.b16 %v1538
        %v2189 = vunpack.c.l.b16 %v1539
        %v2190 = vunpack.c.h.b16 %v1539
        %v2191 = vunpack.c.l.b16 %v1540
        %v2192 = vunpack.c.h.b16 %v1540
        %v2193 = vunpack.c.l.b16 %v1541
        %v2194 = vunpack.c.h.b16 %v1541
        %v2195 = vunpack.c.l.b16 %v1542
        %v2196 = vunpack.c.h.b16 %v1542
        %v2197 = vunpack.c.l.b16 %v1543
        %v2198 = vunpack.c.h.b16 %v1543
        %v2199 = vunpack.c.l.b16 %v1544
        %v2200 = vunpack.c.h.b16 %v1544
        %v2201 = vunpack.c.l.b16 %v1545
        %v2202 = vunpack.c.h.b16 %v1545
        %v2203 = vunpack.c.l.b16 %v1546
        %v2204 = vunpack.c.h.b16 %v1546
        %v2205 = vunpack.c.l.b16 %v1547
        %v2206 = vunpack.c.h.b16 %v1547
        %v2207 = vunpack.c.l.b16 %v1548
        %v2208 = vunpack.c.h.b16 %v1548
        %v2209 = vunpack.c.l.b16 %v1549
        %v2210 = vunpack.c.h.b16 %v1549
        %v2211 = vunpack.c.l.b16 %v1550
        %v2212 = vunpack.c.h.b16 %v1550
        %v2213 = vunpack.c.l.b16 %v1551
        %v2214 = vunpack.c.h.b16 %v1551
        %v2215 = vunpack.c.l.b16 %v1552
        %v2216 = vunpack.c.h.b16 %v1552
        %v2217 = vunpack.c.l.b16 %v1553
        %v2218 = vunpack.c.h.b16 %v1553
        %v2219 = vunpack.c.l.b16 %v1554
        %v2220 = vunpack.c.h.b16 %v1554
        %v2221 = vunpack.c.l.b16 %v1555
        %v2222 = vunpack.c.h.b16 %v1555
        %v2223 = vunpack.c.l.b16 %v1556
        %v2224 = vunpack.c.h.b16 %v1556
        %v2225 = vunpack.c.l.b16 %v1557
        %v2226 = vunpack.c.h.b16 %v1557
        %v2227 = vunpack.c.l.b16 %v1558
        %v2228 = vunpack.c.h.b16 %v1558
        %v2229 = vunpack.c.l.b16 %v1559
        %v2230 = vunpack.c.h.b16 %v1559
        %v2231 = vunpack.c.l.b16 %v1560
        %v2232 = vunpack.c.h.b16 %v1560
        %v2233 = vunpack.c.l.b16 %v1561
        %v2234 = vunpack.c.h.b16 %v1561
        %v2235 = vunpack.c.l.b16 %v1562
        %v2236 = vunpack.c.h.b16 %v1562
        %v2237 = vunpack.c.l.b16 %v1563
        %v2238 = vunpack.c.h.b16 %v1563
        %v2239 = vunpack.c.l.b16 %v1564
        %v2240 = vunpack.c.h.b16 %v1564
        %v2241 = vunpack.c.l.b16 %v1565
        %v2242 = vunpack.c.h.b16 %v1565
        %v2243 = vunpack.c.l.b16 %v1566
        %v2244 = vunpack.c.h.b16 %v1566
        %v2245 = vunpack.c.l.b16 %v1567
        %v2246 = vunpack.c.h.b16 %v1567
        %v2247 = vunpack.c.l.b16 %v1568
        %v2248 = vunpack.c.h.b16 %v1568
        %v2249 = vunpack.c.l.b16 %v1569
        %v2250 = vunpack.c.h.b16 %v1569
        %v2251 = vunpack.c.l.b16 %v1570
        %v2252 = vunpack.c.h.b16 %v1570
        %v2253 = vunpack.c.l.b16 %v1571
        %v2254 = vunpack.c.h.b16 %v1571
        %v2255 = vunpack.c.l.b16 %v1572
        %v2256 = vunpack.c.h.b16 %v1572
        %v2257 = vunpack.c.l.b16 %v1573
        %v2258 = vunpack.c.h.b16 %v1573
        %v2259 = vunpack.c.l.b16 %v1574
        %v2260 = vunpack.c.h.b16 %v1574
        %v2261 = vunpack.c.l.b16 %v1575
        %v2262 = vunpack.c.h.b16 %v1575
        %v2263 = vunpack.c.l.b16 %v1576
        %v2264 = vunpack.c.h.b16 %v1576
        %v2265 = vpack.c.b16 %v1983, %v1977
        %v2266 = vpack.c.b16 %v1984, %v1978
        %v2267 = vpack.c.b16 %v1985, %v1979
        %v2268 = vpack.c.b16 %v1986, %v1980
        %v2269 = vpack.c.b16 %v1987, %v1981
        %v2270 = vpack.c.b16 %v1988, %v1982
        %v2271 = vpack.c.b16 %v1995, %v1989
        %v2272 = vpack.c.b16 %v1996, %v1990
        %v2273 = vpack.c.b16 %v1997, %v1991
        %v2274 = vpack.c.b16 %v1998, %v1992
        %v2275 = vpack.c.b16 %v1999, %v1993
        %v2276 = vpack.c.b16 %v2000, %v1994
        %v2277 = vpack.c.b16 %v2007, %v2001
        %v2278 = vpack.c.b16 %v2008, %v2002
        %v2279 = vpack.c.b16 %v2009, %v2003
        %v2280 = vpack.c.b16 %v2010, %v2004
        %v2281 = vpack.c.b16 %v2011, %v2005
        %v2282 = vpack.c.b16 %v2012, %v2006
        %v2283 = vpack.c.b16 %v2019, %v2013
        %v2284 = vpack.c.b16 %v2020, %v2014
        %v2285 = vpack.c.b16 %v2021, %v2015
        %v2286 = vpack.c.b16 %v2022, %v2016
        %v2287 = vpack.c.b16 %v2023, %v2017
        %v2288 = vpack.c.b16 %v2024, %v2018
        %v2289 = vpack.c.b16 %v2031, %v2025
        %v2290 = vpack.c.b16 %v2032, %v2026
        %v2291 = vpack.c.b16 %v2033, %v2027
        %v2292 = vpack.c.b16 %v2034, %v2028
        %v2293 = vpack.c.b16 %v2035, %v2029
        %v2294 = vpack.c.b16 %v2036, %v2030
        %v2295 = vpack.c.b16 %v2043, %v2037
        %v2296 = vpack.c.b16 %v2044, %v2038
        %v2297 = vpack.c.b16 %v2045, %v2039
        %v2298 = vpack.c.b16 %v2046, %v2040
        %v2299 = vpack.c.b16 %v2047, %v2041
        %v2300 = vpack.c.b16 %v2048, %v2042
        %v2301 = vpack.c.b16 %v2055, %v2049
        %v2302 = vpack.c.b16 %v2056, %v2050
        %v2303 = vpack.c.b16 %v2057, %v2051
        %v2304 = vpack.c.b16 %v2058, %v2052
        %v2305 = vpack.c.b16 %v2059, %v2053
        %v2306 = vpack.c.b16 %v2060, %v2054
        %v2307 = vpack.c.b16 %v2067, %v2061
        %v2308 = vpack.c.b16 %v2068, %v2062
        %v2309 = vpack.c.b16 %v2069, %v2063
        %v2310 = vpack.c.b16 %v2070, %v2064
        %v2311 = vpack.c.b16 %v2071, %v2065
        %v2312 = vpack.c.b16 %v2072, %v2066
        %v2313 = vpack.c.b16 %v2079, %v2073
        %v2314 = vpack.c.b16 %v2080, %v2074
        %v2315 = vpack.c.b16 %v2081, %v2075
        %v2316 = vpack.c.b16 %v2082, %v2076
        %v2317 = vpack.c.b16 %v2083, %v2077
        %v2318 = vpack.c.b16 %v2084, %v2078
        %v2319 = vpack.c.b16 %v2091, %v2085
        %v2320 = vpack.c.b16 %v2092, %v2086
        %v2321 = vpack.c.b16 %v2093, %v2087
        %v2322 = vpack.c.b16 %v2094, %v2088
        %v2323 = vpack.c.b16 %v2095, %v2089
        %v2324 = vpack.c.b16 %v2096, %v2090
        %v2325 = vpack.c.b16 %v2103, %v2097
        %v2326 = vpack.c.b16 %v2104, %v2098
        %v2327 = vpack.c.b16 %v2105, %v2099
        %v2328 = vpack.c.b16 %v2106, %v2100
        %v2329 = vpack.c.b16 %v2107, %v2101
        %v2330 = vpack.c.b16 %v2108, %v2102
        %v2331 = vpack.c.b16 %v2115, %v2109
        %v2332 = vpack.c.b16 %v2116, %v2110
        %v2333 = vpack.c.b16 %v2117, %v2111
        %v2334 = vpack.c.b16 %v2118, %v2112
        %v2335 = vpack.c.b16 %v2119, %v2113
        %v2336 = vpack.c.b16 %v2120, %v2114
        %v2337 = vpack.c.b16 %v2127, %v2121
        %v2338 = vpack.c.b16 %v2128, %v2122
        %v2339 = vpack.c.b16 %v2129, %v2123
        %v2340 = vpack.c.b16 %v2130, %v2124
        %v2341 = vpack.c.b16 %v2131, %v2125
        %v2342 = vpack.c.b16 %v2132, %v2126
        %v2343 = vpack.c.b16 %v2139, %v2133
        %v2344 = vpack.c.b16 %v2140, %v2134
        %v2345 = vpack.c.b16 %v2141, %v2135
        %v2346 = vpack.c.b16 %v2142, %v2136
        %v2347 = vpack.c.b16 %v2143, %v2137
        %v2348 = vpack.c.b16 %v2144, %v2138
        %v2349 = vpack.c.b16 %v2151, %v2145
        %v2350 = vpack.c.b16 %v2152, %v2146
        %v2351 = vpack.c.b16 %v2153, %v2147
        %v2352 = vpack.c.b16 %v2154, %v2148
        %v2353 = vpack.c.b16 %v2155, %v2149
        %v2354 = vpack.c.b16 %v2156, %v2150
        %v2355 = vpack.c.b16 %v2163, %v2157
        %v2356 = vpack.c.b16 %v2164, %v2158
        %v2357 = vpack.c.b16 %v2165, %v2159
        %v2358 = vpack.c.b16 %v2166, %v2160
        %v2359 = vpack.c.b16 %v2167, %v2161
        %v2360 = vpack.c.b16 %v2168, %v2162
        %v2361 = vpack.c.b16 %v2175, %v2169
        %v2362 = vpack.c.b16 %v2176, %v2170
        %v2363 = vpack.c.b16 %v2177, %v2171
        %v2364 = vpack.c.b16 %v2178, %v2172
        %v2365 = vpack.c.b16 %v2179, %v2173
        %v2366 = vpack.c.b16 %v2180, %v2174
        %v2367 = vpack.c.b16 %v2187, %v2181
        %v2368 = vpack.c.b16 %v2188, %v2182
        %v2369 = vpack.c.b16 %v2189, %v2183
        %v2370 = vpack.c.b16 %v2190, %v2184
        %v2371 = vpack.c.b16 %v2191, %v2185
        %v2372 = vpack.c.b16 %v2192, %v2186
        %v2373 = vpack.c.b16 %v2199, %v2193
        %v2374 = vpack.c.b16 %v2200, %v2194
        %v2375 = vpack.c.b16 %v2201, %v2195
        %v2376 = vpack.c.b16 %v2202, %v2196
        %v2377 = vpack.c.b16 %v2203, %v2197
        %v2378 = vpack.c.b16 %v2204, %v2198
        %v2379 = vpack.c.b16 %v2211, %v2205
        %v2380 = vpack.c.b16 %v2212, %v2206
        %v2381 = vpack.c.b16 %v2213, %v2207
        %v2382 = vpack.c.b16 %v2214, %v2208
        %v2383 = vpack.c.b16 %v2215, %v2209
        %v2384 = vpack.c.b16 %v2216, %v2210
        %v2385 = vpack.c.b16 %v2223, %v2217
        %v2386 = vpack.c.b16 %v2224, %v2218
        %v2387 = vpack.c.b16 %v2225, %v2219
        %v2388 = vpack.c.b16 %v2226, %v2220
        %v2389 = vpack.c.b16 %v2227, %v2221
        %v2390 = vpack.c.b16 %v2228, %v2222
        %v2391 = vpack.c.b16 %v2235, %v2229
        %v2392 = vpack.c.b16 %v2236, %v2230
        %v2393 = vpack.c.b16 %v2237, %v2231
        %v2394 = vpack.c.b16 %v2238, %v2232
        %v2395 = vpack.c.b16 %v2239, %v2233
        %v2396 = vpack.c.b16 %v2240, %v2234
        %v2397 = vpack.c.b16 %v2247, %v2241
        %v2398 = vpack.c.b16 %v2248, %v2242
        %v2399 = vpack.c.b16 %v2249, %v2243
        %v2400 = vpack.c.b16 %v2250, %v2244
        %v2401 = vpack.c.b16 %v2251, %v2245
        %v2402 = vpack.c.b16 %v2252, %v2246
        %v2403 = vpack.c.b16 %v2259, %v2253
        %v2404 = vpack.c.b16 %v2260, %v2254
        %v2405 = vpack.c.b16 %v2261, %v2255
        %v2406 = vpack.c.b16 %v2262, %v2256
        %v2407 = vpack.c.b16 %v2263, %v2257
        %v2408 = vpack.c.b16 %v2264, %v2258
        %2553 = vmatprep.subr.bf16.mxu0 %v2266
        %2554 = vmatpush1.bf16.msra.mxu0 %v2265
        %2555 = vmatprep.subr.bf16.mxu0 %v2272
        %2556 = vmatpush1.bf16.msra.mxu0 %v2271
        %2557 = vmatprep.subr.bf16.mxu0 %v2278
        %2558 = vmatpush1.bf16.msra.mxu0 %v2277
        %2559 = vmatprep.subr.bf16.mxu0 %v2284
        %2560 = vmatpush1.bf16.msra.mxu0 %v2283
        %2561 = vmatprep.subr.bf16.mxu0 %v2290
        %2562 = vmatpush1.bf16.msra.mxu0 %v2289
        %2563 = vmatprep.subr.bf16.mxu0 %v2296
        %2564 = vmatpush1.bf16.msra.mxu0 %v2295
        %2565 = vmatprep.subr.bf16.mxu0 %v2302
        %2566 = vmatpush1.bf16.msra.mxu0 %v2301
        %2567 = vmatprep.subr.bf16.mxu0 %v2308
        %2568 = vmatpush1.bf16.msra.mxu0 %v2307
        %2569 = vmatprep.subr.bf16.mxu0 %v2314
        %2570 = vmatpush1.bf16.msra.mxu0 %v2313
        %2571 = vmatprep.subr.bf16.mxu0 %v2320
        %2572 = vmatpush1.bf16.msra.mxu0 %v2319
        %2573 = vmatprep.subr.bf16.mxu0 %v2326
        %2574 = vmatpush1.bf16.msra.mxu0 %v2325
        %2575 = vmatprep.subr.bf16.mxu0 %v2332
        %2576 = vmatpush1.bf16.msra.mxu0 %v2331
        %2577 = vmatprep.subr.bf16.mxu0 %v2338
        %2578 = vmatpush1.bf16.msra.mxu0 %v2337
        %2579 = vmatprep.subr.bf16.mxu0 %v2344
        %2580 = vmatpush1.bf16.msra.mxu0 %v2343
        %2581 = vmatprep.subr.bf16.mxu0 %v2350
        %2582 = vmatpush1.bf16.msra.mxu0 %v2349
        %2583 = vmatprep.subr.bf16.mxu0 %v2356
        %2584 = vmatpush1.bf16.msra.mxu0 %v2355
        %2585 = vmatprep.mubr.bf16.mxu0 %v1738
        %2586 = vmatmul.mubr.bf16.gmra.mrb[0].mxu0 %v1737
        %v2587 = vpop.f32.mrb[0].mxu0
        %v2588 = vadd.f32 0.0, %v2587
        %v2589 = vpop.f32.mrb[0].mxu0
        %v2590 = vadd.f32 0.0, %v2589
        %v2591 = vpop.f32.mrb[0].mxu0
        %v2592 = vadd.f32 0.0, %v2591
        %v2593 = vpop.f32.mrb[0].mxu0
        %v2594 = vadd.f32 0.0, %v2593
        %2595 = vmatprep.mubr.bf16.mxu0 %v1741
        %2596 = vmatmul.mubr.bf16.gmra.mrb[0].mxu0 %v1740
        %v2597 = vpop.f32.mrb[0].mxu0
        %v2598 = vadd.f32 0.0, %v2597
        %v2599 = vpop.f32.mrb[0].mxu0
        %v2600 = vadd.f32 0.0, %v2599
        %v2601 = vpop.f32.mrb[0].mxu0
        %v2602 = vadd.f32 0.0, %v2601
        %v2603 = vpop.f32.mrb[0].mxu0
        %v2604 = vadd.f32 0.0, %v2603
        %2605 = vmatprep.mubr.bf16.mxu0 %v1744
        %2606 = vmatmul.mubr.bf16.gmra.mrb[0].mxu0 %v1743
        %v2607 = vpop.f32.mrb[0].mxu0
        %v2608 = vadd.f32 0.0, %v2607
        %v2609 = vpop.f32.mrb[0].mxu0
        %v2610 = vadd.f32 0.0, %v2609
        %v2611 = vpop.f32.mrb[0].mxu0
        %v2612 = vadd.f32 0.0, %v2611
        %v2613 = vpop.f32.mrb[0].mxu0
        %v2614 = vadd.f32 0.0, %v2613
        %2615 = vmatprep.mubr.bf16.mxu0 %v1747
        %2616 = vmatmul.mubr.bf16.gmra.mrb[0].mxu0 %v1746
        %v2617 = vpop.f32.mrb[0].mxu0
        %v2618 = vadd.f32 0.0, %v2617
        %v2619 = vpop.f32.mrb[0].mxu0
        %v2620 = vadd.f32 0.0, %v2619
        %v2621 = vpop.f32.mrb[0].mxu0
        %v2622 = vadd.f32 0.0, %v2621
        %v2623 = vpop.f32.mrb[0].mxu0
        %v2624 = vadd.f32 0.0, %v2623
        %2625 = vmatprep.mubr.bf16.mxu0 %v1750
        %2626 = vmatmul.mubr.bf16.gmra.mrb[0].mxu0 %v1749
        %v2627 = vpop.f32.mrb[0].mxu0
        %v2628 = vadd.f32 0.0, %v2627
        %v2629 = vpop.f32.mrb[0].mxu0
        %v2630 = vadd.f32 0.0, %v2629
        %v2631 = vpop.f32.mrb[0].mxu0
        %v2632 = vadd.f32 0.0, %v2631
        %v2633 = vpop.f32.mrb[0].mxu0
        %v2634 = vadd.f32 0.0, %v2633
        %2635 = vmatprep.mubr.bf16.mxu0 %v1753
        %2636 = vmatmul.mubr.bf16.gmra.mrb[0].mxu0 %v1752
        %v2637 = vpop.f32.mrb[0].mxu0
        %v2638 = vadd.f32 0.0, %v2637
        %v2639 = vpop.f32.mrb[0].mxu0
        %v2640 = vadd.f32 0.0, %v2639
        %v2641 = vpop.f32.mrb[0].mxu0
        %v2642 = vadd.f32 0.0, %v2641
        %v2643 = vpop.f32.mrb[0].mxu0
        %v2644 = vadd.f32 0.0, %v2643
        %2645 = vmatprep.mubr.bf16.mxu0 %v1756
        %2646 = vmatmul.mubr.bf16.gmra.mrb[0].mxu0 %v1755
        %v2647 = vpop.f32.mrb[0].mxu0
        %v2648 = vadd.f32 0.0, %v2647
        %v2649 = vpop.f32.mrb[0].mxu0
        %v2650 = vadd.f32 0.0, %v2649
        %v2651 = vpop.f32.mrb[0].mxu0
        %v2652 = vadd.f32 0.0, %v2651
        %v2653 = vpop.f32.mrb[0].mxu0
        %v2654 = vadd.f32 0.0, %v2653
        %2655 = vmatprep.mubr.bf16.mxu0 %v1759
        %2656 = vmatmul.mubr.bf16.gmra.mrb[0].mxu0 %v1758
        %v2657 = vpop.f32.mrb[0].mxu0
        %v2658 = vadd.f32 0.0, %v2657
        %v2659 = vpop.f32.mrb[0].mxu0
        %v2660 = vadd.f32 0.0, %v2659
        %v2661 = vpop.f32.mrb[0].mxu0
        %v2662 = vadd.f32 0.0, %v2661
        %v2663 = vpop.f32.mrb[0].mxu0
        %v2664 = vadd.f32 0.0, %v2663
        %2665 = vmatprep.mubr.bf16.mxu0 %v1762
        %2666 = vmatmul.mubr.bf16.gmra.mrb[0].mxu0 %v1761
        %v2667 = vpop.f32.mrb[0].mxu0
        %v2668 = vadd.f32 0.0, %v2667
        %v2669 = vpop.f32.mrb[0].mxu0
        %v2670 = vadd.f32 0.0, %v2669
        %v2671 = vpop.f32.mrb[0].mxu0
        %v2672 = vadd.f32 0.0, %v2671
        %v2673 = vpop.f32.mrb[0].mxu0
        %v2674 = vadd.f32 0.0, %v2673
        %2675 = vmatprep.mubr.bf16.mxu0 %v1765
        %2676 = vmatmul.mubr.bf16.gmra.mrb[0].mxu0 %v1764
        %v2677 = vpop.f32.mrb[0].mxu0
        %v2678 = vadd.f32 0.0, %v2677
        %v2679 = vpop.f32.mrb[0].mxu0
        %v2680 = vadd.f32 0.0, %v2679
        %v2681 = vpop.f32.mrb[0].mxu0
        %v2682 = vadd.f32 0.0, %v2681
        %v2683 = vpop.f32.mrb[0].mxu0
        %v2684 = vadd.f32 0.0, %v2683
        %2685 = vmatprep.mubr.bf16.mxu0 %v1768
        %2686 = vmatmul.mubr.bf16.gmra.mrb[0].mxu0 %v1767
        %v2687 = vpop.f32.mrb[0].mxu0
        %v2688 = vadd.f32 0.0, %v2687
        %v2689 = vpop.f32.mrb[0].mxu0
        %v2690 = vadd.f32 0.0, %v2689
        %v2691 = vpop.f32.mrb[0].mxu0
        %v2692 = vadd.f32 0.0, %v2691
        %v2693 = vpop.f32.mrb[0].mxu0
        %v2694 = vadd.f32 0.0, %v2693
        %2695 = vmatprep.mubr.bf16.mxu0 %v1771
        %2696 = vmatmul.mubr.bf16.gmra.mrb[0].mxu0 %v1770
        %v2697 = vpop.f32.mrb[0].mxu0
        %v2698 = vadd.f32 0.0, %v2697
        %v2699 = vpop.f32.mrb[0].mxu0
        %v2700 = vadd.f32 0.0, %v2699
        %v2701 = vpop.f32.mrb[0].mxu0
        %v2702 = vadd.f32 0.0, %v2701
        %v2703 = vpop.f32.mrb[0].mxu0
        %v2704 = vadd.f32 0.0, %v2703
        %2705 = vmatprep.mubr.bf16.mxu0 %v1774
        %2706 = vmatmul.mubr.bf16.gmra.mrb[0].mxu0 %v1773
        %v2707 = vpop.f32.mrb[0].mxu0
        %v2708 = vadd.f32 0.0, %v2707
        %v2709 = vpop.f32.mrb[0].mxu0
        %v2710 = vadd.f32 0.0, %v2709
        %v2711 = vpop.f32.mrb[0].mxu0
        %v2712 = vadd.f32 0.0, %v2711
        %v2713 = vpop.f32.mrb[0].mxu0
        %v2714 = vadd.f32 0.0, %v2713
        %2715 = vmatprep.mubr.bf16.mxu0 %v1777
        %2716 = vmatmul.mubr.bf16.gmra.mrb[0].mxu0 %v1776
        %v2717 = vpop.f32.mrb[0].mxu0
        %v2718 = vadd.f32 0.0, %v2717
        %v2719 = vpop.f32.mrb[0].mxu0
        %v2720 = vadd.f32 0.0, %v2719
        %v2721 = vpop.f32.mrb[0].mxu0
        %v2722 = vadd.f32 0.0, %v2721
        %v2723 = vpop.f32.mrb[0].mxu0
        %v2724 = vadd.f32 0.0, %v2723
        %2725 = vmatprep.mubr.bf16.mxu0 %v1780
        %2726 = vmatmul.mubr.bf16.gmra.mrb[0].mxu0 %v1779
        %v2727 = vpop.f32.mrb[0].mxu0
        %v2728 = vadd.f32 0.0, %v2727
        %v2729 = vpop.f32.mrb[0].mxu0
        %v2730 = vadd.f32 0.0, %v2729
        %v2731 = vpop.f32.mrb[0].mxu0
        %v2732 = vadd.f32 0.0, %v2731
        %v2733 = vpop.f32.mrb[0].mxu0
        %v2734 = vadd.f32 0.0, %v2733
        %2735 = vmatprep.mubr.bf16.mxu0 %v1783
        %2736 = vmatmul.mubr.bf16.gmra.mrb[0].mxu0 %v1782
        %v2737 = vpop.f32.mrb[0].mxu0
        %v2738 = vadd.f32 0.0, %v2737
        %v2739 = vpop.f32.mrb[0].mxu0
        %v2740 = vadd.f32 0.0, %v2739
        %v2741 = vpop.f32.mrb[0].mxu0
        %v2742 = vadd.f32 0.0, %v2741
        %v2743 = vpop.f32.mrb[0].mxu0
        %v2744 = vadd.f32 0.0, %v2743
        %2745 = vdwg.mxu0
        %2746 = vmatprep.subr.bf16.mxu0 %v2362
        %2747 = vmatpush1.bf16.msra.mxu0 %v2361
        %2748 = vmatprep.subr.bf16.mxu0 %v2368
        %2749 = vmatpush1.bf16.msra.mxu0 %v2367
        %2750 = vmatprep.subr.bf16.mxu0 %v2374
        %2751 = vmatpush1.bf16.msra.mxu0 %v2373
        %2752 = vmatprep.subr.bf16.mxu0 %v2380
        %2753 = vmatpush1.bf16.msra.mxu0 %v2379
        %2754 = vmatprep.subr.bf16.mxu0 %v2386
        %2755 = vmatpush1.bf16.msra.mxu0 %v2385
        %2756 = vmatprep.subr.bf16.mxu0 %v2392
        %2757 = vmatpush1.bf16.msra.mxu0 %v2391
        %2758 = vmatprep.subr.bf16.mxu0 %v2398
        %2759 = vmatpush1.bf16.msra.mxu0 %v2397
        %2760 = vmatprep.subr.bf16.mxu0 %v2404
        %2761 = vmatpush1.bf16.msra.mxu0 %v2403
        %2762 = vmatprep.subr.bf16.mxu0 0
        %2763 = vmatpush1.bf16.msra.mxu0 0
        %2764 = vmatprep.subr.bf16.mxu0 0
        %2765 = vmatpush1.bf16.msra.mxu0 0
        %2766 = vmatprep.subr.bf16.mxu0 0
        %2767 = vmatpush1.bf16.msra.mxu0 0
        %2768 = vmatprep.subr.bf16.mxu0 0
        %2769 = vmatpush1.bf16.msra.mxu0 0
        %2770 = vmatprep.subr.bf16.mxu0 0
        %2771 = vmatpush1.bf16.msra.mxu0 0
        %2772 = vmatprep.subr.bf16.mxu0 0
        %2773 = vmatpush1.bf16.msra.mxu0 0
        %2774 = vmatprep.subr.bf16.mxu0 0
        %2775 = vmatpush1.bf16.msra.mxu0 0
        %2776 = vmatprep.subr.bf16.mxu0 0
        %2777 = vmatpush1.bf16.msra.mxu0 0
        %2778 = vmatprep.mubr.bf16.mxu0 0
        %2779 = vmatmul.mubr.bf16.gmra.mrb[0].mxu0 %v1739
        %v2780 = vpop.f32.mrb[0].mxu0
        %v2781 = vadd.f32 %v2588, %v2780
        %v2782 = vpop.f32.mrb[0].mxu0
        %v2783 = vadd.f32 %v2590, %v2782
        %v2784 = vpop.f32.mrb[0].mxu0
        %v2785 = vadd.f32 %v2592, %v2784
        %v2786 = vpop.f32.mrb[0].mxu0
        %v2787 = vadd.f32 %v2594, %v2786
        %2788 = vmatprep.mubr.bf16.mxu0 0
        %2789 = vmatmul.mubr.bf16.gmra.mrb[0].mxu0 %v1742
        %v2790 = vpop.f32.mrb[0].mxu0
        %v2791 = vadd.f32 %v2598, %v2790
        %v2792 = vpop.f32.mrb[0].mxu0
        %v2793 = vadd.f32 %v2600, %v2792
        %v2794 = vpop.f32.mrb[0].mxu0
        %v2795 = vadd.f32 %v2602, %v2794
        %v2796 = vpop.f32.mrb[0].mxu0
        %v2797 = vadd.f32 %v2604, %v2796
        %2798 = vmatprep.mubr.bf16.mxu0 0
        %2799 = vmatmul.mubr.bf16.gmra.mrb[0].mxu0 %v1745
        %v2800 = vpop.f32.mrb[0].mxu0
        %v2801 = vadd.f32 %v2608, %v2800
        %v2802 = vpop.f32.mrb[0].mxu0
        %v2803 = vadd.f32 %v2610, %v2802
        %v2804 = vpop.f32.mrb[0].mxu0
        %v2805 = vadd.f32 %v2612, %v2804
        %v2806 = vpop.f32.mrb[0].mxu0
        %v2807 = vadd.f32 %v2614, %v2806
        %2808 = vmatprep.mubr.bf16.mxu0 0
        %2809 = vmatmul.mubr.bf16.gmra.mrb[0].mxu0 %v1748
        %v2810 = vpop.f32.mrb[0].mxu0
        %v2811 = vadd.f32 %v2618, %v2810
        %v2812 = vpop.f32.mrb[0].mxu0
        %v2813 = vadd.f32 %v2620, %v2812
        %v2814 = vpop.f32.mrb[0].mxu0
        %v2815 = vadd.f32 %v2622, %v2814
        %v2816 = vpop.f32.mrb[0].mxu0
        %v2817 = vadd.f32 %v2624, %v2816
        %2818 = vmatprep.mubr.bf16.mxu0 0
        %2819 = vmatmul.mubr.bf16.gmra.mrb[0].mxu0 %v1751
        %v2820 = vpop.f32.mrb[0].mxu0
        %v2821 = vadd.f32 %v2628, %v2820
        %v2822 = vpop.f32.mrb[0].mxu0
        %v2823 = vadd.f32 %v2630, %v2822
        %v2824 = vpop.f32.mrb[0].mxu0
        %v2825 = vadd.f32 %v2632, %v2824
        %v2826 = vpop.f32.mrb[0].mxu0
        %v2827 = vadd.f32 %v2634, %v2826
        %2828 = vmatprep.mubr.bf16.mxu0 0
        %2829 = vmatmul.mubr.bf16.gmra.mrb[0].mxu0 %v1754
        %v2830 = vpop.f32.mrb[0].mxu0
        %v2831 = vadd.f32 %v2638, %v2830
        %v2832 = vpop.f32.mrb[0].mxu0
        %v2833 = vadd.f32 %v2640, %v2832
        %v2834 = vpop.f32.mrb[0].mxu0
        %v2835 = vadd.f32 %v2642, %v2834
        %v2836 = vpop.f32.mrb[0].mxu0
        %v2837 = vadd.f32 %v2644, %v2836
        %2838 = vmatprep.mubr.bf16.mxu0 0
        %2839 = vmatmul.mubr.bf16.gmra.mrb[0].mxu0 %v1757
        %v2840 = vpop.f32.mrb[0].mxu0
        %v2841 = vadd.f32 %v2648, %v2840
        %v2842 = vpop.f32.mrb[0].mxu0
        %v2843 = vadd.f32 %v2650, %v2842
        %v2844 = vpop.f32.mrb[0].mxu0
        %v2845 = vadd.f32 %v2652, %v2844
        %v2846 = vpop.f32.mrb[0].mxu0
        %v2847 = vadd.f32 %v2654, %v2846
        %2848 = vmatprep.mubr.bf16.mxu0 0
        %2849 = vmatmul.mubr.bf16.gmra.mrb[0].mxu0 %v1760
        %v2850 = vpop.f32.mrb[0].mxu0
        %v2851 = vadd.f32 %v2658, %v2850
        %v2852 = vpop.f32.mrb[0].mxu0
        %v2853 = vadd.f32 %v2660, %v2852
        %v2854 = vpop.f32.mrb[0].mxu0
        %v2855 = vadd.f32 %v2662, %v2854
        %v2856 = vpop.f32.mrb[0].mxu0
        %v2857 = vadd.f32 %v2664, %v2856
        %2858 = vmatprep.mubr.bf16.mxu0 0
        %2859 = vmatmul.mubr.bf16.gmra.mrb[0].mxu0 %v1763
        %v2860 = vpop.f32.mrb[0].mxu0
        %v2861 = vadd.f32 %v2668, %v2860
        %v2862 = vpop.f32.mrb[0].mxu0
        %v2863 = vadd.f32 %v2670, %v2862
        %v2864 = vpop.f32.mrb[0].mxu0
        %v2865 = vadd.f32 %v2672, %v2864
        %v2866 = vpop.f32.mrb[0].mxu0
        %v2867 = vadd.f32 %v2674, %v2866
        %2868 = vmatprep.mubr.bf16.mxu0 0
        %2869 = vmatmul.mubr.bf16.gmra.mrb[0].mxu0 %v1766
        %v2870 = vpop.f32.mrb[0].mxu0
        %v2871 = vadd.f32 %v2678, %v2870
        %v2872 = vpop.f32.mrb[0].mxu0
        %v2873 = vadd.f32 %v2680, %v2872
        %v2874 = vpop.f32.mrb[0].mxu0
        %v2875 = vadd.f32 %v2682, %v2874
        %v2876 = vpop.f32.mrb[0].mxu0
        %v2877 = vadd.f32 %v2684, %v2876
        %2878 = vmatprep.mubr.bf16.mxu0 0
        %2879 = vmatmul.mubr.bf16.gmra.mrb[0].mxu0 %v1769
        %v2880 = vpop.f32.mrb[0].mxu0
        %v2881 = vadd.f32 %v2688, %v2880
        %v2882 = vpop.f32.mrb[0].mxu0
        %v2883 = vadd.f32 %v2690, %v2882
        %v2884 = vpop.f32.mrb[0].mxu0
        %v2885 = vadd.f32 %v2692, %v2884
        %v2886 = vpop.f32.mrb[0].mxu0
        %v2887 = vadd.f32 %v2694, %v2886
        %2888 = vmatprep.mubr.bf16.mxu0 0
        %2889 = vmatmul.mubr.bf16.gmra.mrb[0].mxu0 %v1772
        %v2890 = vpop.f32.mrb[0].mxu0
        %v2891 = vadd.f32 %v2698, %v2890
        %v2892 = vpop.f32.mrb[0].mxu0
        %v2893 = vadd.f32 %v2700, %v2892
        %v2894 = vpop.f32.mrb[0].mxu0
        %v2895 = vadd.f32 %v2702, %v2894
        %v2896 = vpop.f32.mrb[0].mxu0
        %v2897 = vadd.f32 %v2704, %v2896
        %2898 = vmatprep.mubr.bf16.mxu0 0
        %2899 = vmatmul.mubr.bf16.gmra.mrb[0].mxu0 %v1775
        %v2900 = vpop.f32.mrb[0].mxu0
        %v2901 = vadd.f32 %v2708, %v2900
        %v2902 = vpop.f32.mrb[0].mxu0
        %v2903 = vadd.f32 %v2710, %v2902
        %v2904 = vpop.f32.mrb[0].mxu0
        %v2905 = vadd.f32 %v2712, %v2904
        %v2906 = vpop.f32.mrb[0].mxu0
        %v2907 = vadd.f32 %v2714, %v2906
        %2908 = vmatprep.mubr.bf16.mxu0 0
        %2909 = vmatmul.mubr.bf16.gmra.mrb[0].mxu0 %v1778
        %v2910 = vpop.f32.mrb[0].mxu0
        %v2911 = vadd.f32 %v2718, %v2910
        %v2912 = vpop.f32.mrb[0].mxu0
        %v2913 = vadd.f32 %v2720, %v2912
        %v2914 = vpop.f32.mrb[0].mxu0
        %v2915 = vadd.f32 %v2722, %v2914
        %v2916 = vpop.f32.mrb[0].mxu0
        %v2917 = vadd.f32 %v2724, %v2916
        %2918 = vmatprep.mubr.bf16.mxu0 0
        %2919 = vmatmul.mubr.bf16.gmra.mrb[0].mxu0 %v1781
        %v2920 = vpop.f32.mrb[0].mxu0
        %v2921 = vadd.f32 %v2728, %v2920
        %v2922 = vpop.f32.mrb[0].mxu0
        %v2923 = vadd.f32 %v2730, %v2922
        %v2924 = vpop.f32.mrb[0].mxu0
        %v2925 = vadd.f32 %v2732, %v2924
        %v2926 = vpop.f32.mrb[0].mxu0
        %v2927 = vadd.f32 %v2734, %v2926
        %2928 = vmatprep.mubr.bf16.mxu0 0
        %2929 = vmatmul.mubr.bf16.gmra.mrb[0].mxu0 %v1784
        %v2930 = vpop.f32.mrb[0].mxu0
        %v2931 = vadd.f32 %v2738, %v2930
        %v2932 = vpop.f32.mrb[0].mxu0
        %v2933 = vadd.f32 %v2740, %v2932
        %v2934 = vpop.f32.mrb[0].mxu0
        %v2935 = vadd.f32 %v2742, %v2934
        %v2936 = vpop.f32.mrb[0].mxu0
        %v2937 = vadd.f32 %v2744, %v2936
        %2938 = vdwg.mxu0
        %2939 = vmatprep.subr.bf16.mxu0 %v2268
        %2940 = vmatpush1.bf16.msra.mxu0 %v2267
        %2941 = vmatprep.subr.bf16.mxu0 %v2274
        %2942 = vmatpush1.bf16.msra.mxu0 %v2273
        %2943 = vmatprep.subr.bf16.mxu0 %v2280
        %2944 = vmatpush1.bf16.msra.mxu0 %v2279
        %2945 = vmatprep.subr.bf16.mxu0 %v2286
        %2946 = vmatpush1.bf16.msra.mxu0 %v2285
        %2947 = vmatprep.subr.bf16.mxu0 %v2292
        %2948 = vmatpush1.bf16.msra.mxu0 %v2291
        %2949 = vmatprep.subr.bf16.mxu0 %v2298
        %2950 = vmatpush1.bf16.msra.mxu0 %v2297
        %2951 = vmatprep.subr.bf16.mxu0 %v2304
        %2952 = vmatpush1.bf16.msra.mxu0 %v2303
        %2953 = vmatprep.subr.bf16.mxu0 %v2310
        %2954 = vmatpush1.bf16.msra.mxu0 %v2309
        %2955 = vmatprep.subr.bf16.mxu0 %v2316
        %2956 = vmatpush1.bf16.msra.mxu0 %v2315
        %2957 = vmatprep.subr.bf16.mxu0 %v2322
        %2958 = vmatpush1.bf16.msra.mxu0 %v2321
        %2959 = vmatprep.subr.bf16.mxu0 %v2328
        %2960 = vmatpush1.bf16.msra.mxu0 %v2327
        %2961 = vmatprep.subr.bf16.mxu0 %v2334
        %2962 = vmatpush1.bf16.msra.mxu0 %v2333
        %2963 = vmatprep.subr.bf16.mxu0 %v2340
        %2964 = vmatpush1.bf16.msra.mxu0 %v2339
        %2965 = vmatprep.subr.bf16.mxu0 %v2346
        %2966 = vmatpush1.bf16.msra.mxu0 %v2345
        %2967 = vmatprep.subr.bf16.mxu0 %v2352
        %2968 = vmatpush1.bf16.msra.mxu0 %v2351
        %2969 = vmatprep.subr.bf16.mxu0 %v2358
        %2970 = vmatpush1.bf16.msra.mxu0 %v2357
        %2971 = vmatprep.mubr.bf16.mxu0 %v1738
        %2972 = vmatmul.mubr.bf16.gmra.mrb[0].mxu0 %v1737
        %v2973 = vpop.f32.mrb[0].mxu0
        %v2974 = vadd.f32 0.0, %v2973
        %v2975 = vpop.f32.mrb[0].mxu0
        %v2976 = vadd.f32 0.0, %v2975
        %v2977 = vpop.f32.mrb[0].mxu0
        %v2978 = vadd.f32 0.0, %v2977
        %v2979 = vpop.f32.mrb[0].mxu0
        %v2980 = vadd.f32 0.0, %v2979
        %2981 = vmatprep.mubr.bf16.mxu0 %v1741
        %2982 = vmatmul.mubr.bf16.gmra.mrb[0].mxu0 %v1740
        %v2983 = vpop.f32.mrb[0].mxu0
        %v2984 = vadd.f32 0.0, %v2983
        %v2985 = vpop.f32.mrb[0].mxu0
        %v2986 = vadd.f32 0.0, %v2985
        %v2987 = vpop.f32.mrb[0].mxu0
        %v2988 = vadd.f32 0.0, %v2987
        %v2989 = vpop.f32.mrb[0].mxu0
        %v2990 = vadd.f32 0.0, %v2989
        %2991 = vmatprep.mubr.bf16.mxu0 %v1744
        %2992 = vmatmul.mubr.bf16.gmra.mrb[0].mxu0 %v1743
        %v2993 = vpop.f32.mrb[0].mxu0
        %v2994 = vadd.f32 0.0, %v2993
        %v2995 = vpop.f32.mrb[0].mxu0
        %v2996 = vadd.f32 0.0, %v2995
        %v2997 = vpop.f32.mrb[0].mxu0
        %v2998 = vadd.f32 0.0, %v2997
        %v2999 = vpop.f32.mrb[0].mxu0
        %v3000 = vadd.f32 0.0, %v2999
        %3001 = vmatprep.mubr.bf16.mxu0 %v1747
        %3002 = vmatmul.mubr.bf16.gmra.mrb[0].mxu0 %v1746
        %v3003 = vpop.f32.mrb[0].mxu0
        %v3004 = vadd.f32 0.0, %v3003
        %v3005 = vpop.f32.mrb[0].mxu0
        %v3006 = vadd.f32 0.0, %v3005
        %v3007 = vpop.f32.mrb[0].mxu0
        %v3008 = vadd.f32 0.0, %v3007
        %v3009 = vpop.f32.mrb[0].mxu0
        %v3010 = vadd.f32 0.0, %v3009
        %3011 = vmatprep.mubr.bf16.mxu0 %v1750
        %3012 = vmatmul.mubr.bf16.gmra.mrb[0].mxu0 %v1749
        %v3013 = vpop.f32.mrb[0].mxu0
        %v3014 = vadd.f32 0.0, %v3013
        %v3015 = vpop.f32.mrb[0].mxu0
        %v3016 = vadd.f32 0.0, %v3015
        %v3017 = vpop.f32.mrb[0].mxu0
        %v3018 = vadd.f32 0.0, %v3017
        %v3019 = vpop.f32.mrb[0].mxu0
        %v3020 = vadd.f32 0.0, %v3019
        %3021 = vmatprep.mubr.bf16.mxu0 %v1753
        %3022 = vmatmul.mubr.bf16.gmra.mrb[0].mxu0 %v1752
        %v3023 = vpop.f32.mrb[0].mxu0
        %v3024 = vadd.f32 0.0, %v3023
        %v3025 = vpop.f32.mrb[0].mxu0
        %v3026 = vadd.f32 0.0, %v3025
        %v3027 = vpop.f32.mrb[0].mxu0
        %v3028 = vadd.f32 0.0, %v3027
        %v3029 = vpop.f32.mrb[0].mxu0
        %v3030 = vadd.f32 0.0, %v3029
        %3031 = vmatprep.mubr.bf16.mxu0 %v1756
        %3032 = vmatmul.mubr.bf16.gmra.mrb[0].mxu0 %v1755
        %v3033 = vpop.f32.mrb[0].mxu0
        %v3034 = vadd.f32 0.0, %v3033
        %v3035 = vpop.f32.mrb[0].mxu0
        %v3036 = vadd.f32 0.0, %v3035
        %v3037 = vpop.f32.mrb[0].mxu0
        %v3038 = vadd.f32 0.0, %v3037
        %v3039 = vpop.f32.mrb[0].mxu0
        %v3040 = vadd.f32 0.0, %v3039
        %3041 = vmatprep.mubr.bf16.mxu0 %v1759
        %3042 = vmatmul.mubr.bf16.gmra.mrb[0].mxu0 %v1758
        %v3043 = vpop.f32.mrb[0].mxu0
        %v3044 = vadd.f32 0.0, %v3043
        %v3045 = vpop.f32.mrb[0].mxu0
        %v3046 = vadd.f32 0.0, %v3045
        %v3047 = vpop.f32.mrb[0].mxu0
        %v3048 = vadd.f32 0.0, %v3047
        %v3049 = vpop.f32.mrb[0].mxu0
        %v3050 = vadd.f32 0.0, %v3049
        %3051 = vmatprep.mubr.bf16.mxu0 %v1762
        %3052 = vmatmul.mubr.bf16.gmra.mrb[0].mxu0 %v1761
        %v3053 = vpop.f32.mrb[0].mxu0
        %v3054 = vadd.f32 0.0, %v3053
        %v3055 = vpop.f32.mrb[0].mxu0
        %v3056 = vadd.f32 0.0, %v3055
        %v3057 = vpop.f32.mrb[0].mxu0
        %v3058 = vadd.f32 0.0, %v3057
        %v3059 = vpop.f32.mrb[0].mxu0
        %v3060 = vadd.f32 0.0, %v3059
        %3061 = vmatprep.mubr.bf16.mxu0 %v1765
        %3062 = vmatmul.mubr.bf16.gmra.mrb[0].mxu0 %v1764
        %v3063 = vpop.f32.mrb[0].mxu0
        %v3064 = vadd.f32 0.0, %v3063
        %v3065 = vpop.f32.mrb[0].mxu0
        %v3066 = vadd.f32 0.0, %v3065
        %v3067 = vpop.f32.mrb[0].mxu0
        %v3068 = vadd.f32 0.0, %v3067
        %v3069 = vpop.f32.mrb[0].mxu0
        %v3070 = vadd.f32 0.0, %v3069
        %3071 = vmatprep.mubr.bf16.mxu0 %v1768
        %3072 = vmatmul.mubr.bf16.gmra.mrb[0].mxu0 %v1767
        %v3073 = vpop.f32.mrb[0].mxu0
        %v3074 = vadd.f32 0.0, %v3073
        %v3075 = vpop.f32.mrb[0].mxu0
        %v3076 = vadd.f32 0.0, %v3075
        %v3077 = vpop.f32.mrb[0].mxu0
        %v3078 = vadd.f32 0.0, %v3077
        %v3079 = vpop.f32.mrb[0].mxu0
        %v3080 = vadd.f32 0.0, %v3079
        %3081 = vmatprep.mubr.bf16.mxu0 %v1771
        %3082 = vmatmul.mubr.bf16.gmra.mrb[0].mxu0 %v1770
        %v3083 = vpop.f32.mrb[0].mxu0
        %v3084 = vadd.f32 0.0, %v3083
        %v3085 = vpop.f32.mrb[0].mxu0
        %v3086 = vadd.f32 0.0, %v3085
        %v3087 = vpop.f32.mrb[0].mxu0
        %v3088 = vadd.f32 0.0, %v3087
        %v3089 = vpop.f32.mrb[0].mxu0
        %v3090 = vadd.f32 0.0, %v3089
        %3091 = vmatprep.mubr.bf16.mxu0 %v1774
        %3092 = vmatmul.mubr.bf16.gmra.mrb[0].mxu0 %v1773
        %v3093 = vpop.f32.mrb[0].mxu0
        %v3094 = vadd.f32 0.0, %v3093
        %v3095 = vpop.f32.mrb[0].mxu0
        %v3096 = vadd.f32 0.0, %v3095
        %v3097 = vpop.f32.mrb[0].mxu0
        %v3098 = vadd.f32 0.0, %v3097
        %v3099 = vpop.f32.mrb[0].mxu0
        %v3100 = vadd.f32 0.0, %v3099
        %3101 = vmatprep.mubr.bf16.mxu0 %v1777
        %3102 = vmatmul.mubr.bf16.gmra.mrb[0].mxu0 %v1776
        %v3103 = vpop.f32.mrb[0].mxu0
        %v3104 = vadd.f32 0.0, %v3103
        %v3105 = vpop.f32.mrb[0].mxu0
        %v3106 = vadd.f32 0.0, %v3105
        %v3107 = vpop.f32.mrb[0].mxu0
        %v3108 = vadd.f32 0.0, %v3107
        %v3109 = vpop.f32.mrb[0].mxu0
        %v3110 = vadd.f32 0.0, %v3109
        %3111 = vmatprep.mubr.bf16.mxu0 %v1780
        %3112 = vmatmul.mubr.bf16.gmra.mrb[0].mxu0 %v1779
        %v3113 = vpop.f32.mrb[0].mxu0
        %v3114 = vadd.f32 0.0, %v3113
        %v3115 = vpop.f32.mrb[0].mxu0
        %v3116 = vadd.f32 0.0, %v3115
        %v3117 = vpop.f32.mrb[0].mxu0
        %v3118 = vadd.f32 0.0, %v3117
        %v3119 = vpop.f32.mrb[0].mxu0
        %v3120 = vadd.f32 0.0, %v3119
        %3121 = vmatprep.mubr.bf16.mxu0 %v1783
        %3122 = vmatmul.mubr.bf16.gmra.mrb[0].mxu0 %v1782
        %v3123 = vpop.f32.mrb[0].mxu0
        %v3124 = vadd.f32 0.0, %v3123
        %v3125 = vpop.f32.mrb[0].mxu0
        %v3126 = vadd.f32 0.0, %v3125
        %v3127 = vpop.f32.mrb[0].mxu0
        %v3128 = vadd.f32 0.0, %v3127
        %v3129 = vpop.f32.mrb[0].mxu0
        %v3130 = vadd.f32 0.0, %v3129
        %3131 = vdwg.mxu0
        %3132 = vmatprep.subr.bf16.mxu0 %v2364
        %3133 = vmatpush1.bf16.msra.mxu0 %v2363
        %3134 = vmatprep.subr.bf16.mxu0 %v2370
        %3135 = vmatpush1.bf16.msra.mxu0 %v2369
        %3136 = vmatprep.subr.bf16.mxu0 %v2376
        %3137 = vmatpush1.bf16.msra.mxu0 %v2375
        %3138 = vmatprep.subr.bf16.mxu0 %v2382
        %3139 = vmatpush1.bf16.msra.mxu0 %v2381
        %3140 = vmatprep.subr.bf16.mxu0 %v2388
        %3141 = vmatpush1.bf16.msra.mxu0 %v2387
        %3142 = vmatprep.subr.bf16.mxu0 %v2394
        %3143 = vmatpush1.bf16.msra.mxu0 %v2393
        %3144 = vmatprep.subr.bf16.mxu0 %v2400
        %3145 = vmatpush1.bf16.msra.mxu0 %v2399
        %3146 = vmatprep.subr.bf16.mxu0 %v2406
        %3147 = vmatpush1.bf16.msra.mxu0 %v2405
        %3148 = vmatprep.subr.bf16.mxu0 0
        %3149 = vmatpush1.bf16.msra.mxu0 0
        %3150 = vmatprep.subr.bf16.mxu0 0
        %3151 = vmatpush1.bf16.msra.mxu0 0
        %3152 = vmatprep.subr.bf16.mxu0 0
        %3153 = vmatpush1.bf16.msra.mxu0 0
        %3154 = vmatprep.subr.bf16.mxu0 0
        %3155 = vmatpush1.bf16.msra.mxu0 0
        %3156 = vmatprep.subr.bf16.mxu0 0
        %3157 = vmatpush1.bf16.msra.mxu0 0
        %3158 = vmatprep.subr.bf16.mxu0 0
        %3159 = vmatpush1.bf16.msra.mxu0 0
        %3160 = vmatprep.subr.bf16.mxu0 0
        %3161 = vmatpush1.bf16.msra.mxu0 0
        %3162 = vmatprep.subr.bf16.mxu0 0
        %3163 = vmatpush1.bf16.msra.mxu0 0
        %3164 = vmatprep.mubr.bf16.mxu0 0
        %3165 = vmatmul.mubr.bf16.gmra.mrb[0].mxu0 %v1739
        %v3166 = vpop.f32.mrb[0].mxu0
        %v3167 = vadd.f32 %v2974, %v3166
        %v3168 = vpop.f32.mrb[0].mxu0
        %v3169 = vadd.f32 %v2976, %v3168
        %v3170 = vpop.f32.mrb[0].mxu0
        %v3171 = vadd.f32 %v2978, %v3170
        %v3172 = vpop.f32.mrb[0].mxu0
        %v3173 = vadd.f32 %v2980, %v3172
        %3174 = vmatprep.mubr.bf16.mxu0 0
        %3175 = vmatmul.mubr.bf16.gmra.mrb[0].mxu0 %v1742
        %v3176 = vpop.f32.mrb[0].mxu0
        %v3177 = vadd.f32 %v2984, %v3176
        %v3178 = vpop.f32.mrb[0].mxu0
        %v3179 = vadd.f32 %v2986, %v3178
        %v3180 = vpop.f32.mrb[0].mxu0
        %v3181 = vadd.f32 %v2988, %v3180
        %v3182 = vpop.f32.mrb[0].mxu0
        %v3183 = vadd.f32 %v2990, %v3182
        %3184 = vmatprep.mubr.bf16.mxu0 0
        %3185 = vmatmul.mubr.bf16.gmra.mrb[0].mxu0 %v1745
        %v3186 = vpop.f32.mrb[0].mxu0
        %v3187 = vadd.f32 %v2994, %v3186
        %v3188 = vpop.f32.mrb[0].mxu0
        %v3189 = vadd.f32 %v2996, %v3188
        %v3190 = vpop.f32.mrb[0].mxu0
        %v3191 = vadd.f32 %v2998, %v3190
        %v3192 = vpop.f32.mrb[0].mxu0
        %v3193 = vadd.f32 %v3000, %v3192
        %3194 = vmatprep.mubr.bf16.mxu0 0
        %3195 = vmatmul.mubr.bf16.gmra.mrb[0].mxu0 %v1748
        %v3196 = vpop.f32.mrb[0].mxu0
        %v3197 = vadd.f32 %v3004, %v3196
        %v3198 = vpop.f32.mrb[0].mxu0
        %v3199 = vadd.f32 %v3006, %v3198
        %v3200 = vpop.f32.mrb[0].mxu0
        %v3201 = vadd.f32 %v3008, %v3200
        %v3202 = vpop.f32.mrb[0].mxu0
        %v3203 = vadd.f32 %v3010, %v3202
        %3204 = vmatprep.mubr.bf16.mxu0 0
        %3205 = vmatmul.mubr.bf16.gmra.mrb[0].mxu0 %v1751
        %v3206 = vpop.f32.mrb[0].mxu0
        %v3207 = vadd.f32 %v3014, %v3206
        %v3208 = vpop.f32.mrb[0].mxu0
        %v3209 = vadd.f32 %v3016, %v3208
        %v3210 = vpop.f32.mrb[0].mxu0
        %v3211 = vadd.f32 %v3018, %v3210
        %v3212 = vpop.f32.mrb[0].mxu0
        %v3213 = vadd.f32 %v3020, %v3212
        %3214 = vmatprep.mubr.bf16.mxu0 0
        %3215 = vmatmul.mubr.bf16.gmra.mrb[0].mxu0 %v1754
        %v3216 = vpop.f32.mrb[0].mxu0
        %v3217 = vadd.f32 %v3024, %v3216
        %v3218 = vpop.f32.mrb[0].mxu0
        %v3219 = vadd.f32 %v3026, %v3218
        %v3220 = vpop.f32.mrb[0].mxu0
        %v3221 = vadd.f32 %v3028, %v3220
        %v3222 = vpop.f32.mrb[0].mxu0
        %v3223 = vadd.f32 %v3030, %v3222
        %3224 = vmatprep.mubr.bf16.mxu0 0
        %3225 = vmatmul.mubr.bf16.gmra.mrb[0].mxu0 %v1757
        %v3226 = vpop.f32.mrb[0].mxu0
        %v3227 = vadd.f32 %v3034, %v3226
        %v3228 = vpop.f32.mrb[0].mxu0
        %v3229 = vadd.f32 %v3036, %v3228
        %v3230 = vpop.f32.mrb[0].mxu0
        %v3231 = vadd.f32 %v3038, %v3230
        %v3232 = vpop.f32.mrb[0].mxu0
        %v3233 = vadd.f32 %v3040, %v3232
        %3234 = vmatprep.mubr.bf16.mxu0 0
        %3235 = vmatmul.mubr.bf16.gmra.mrb[0].mxu0 %v1760
        %v3236 = vpop.f32.mrb[0].mxu0
        %v3237 = vadd.f32 %v3044, %v3236
        %v3238 = vpop.f32.mrb[0].mxu0
        %v3239 = vadd.f32 %v3046, %v3238
        %v3240 = vpop.f32.mrb[0].mxu0
        %v3241 = vadd.f32 %v3048, %v3240
        %v3242 = vpop.f32.mrb[0].mxu0
        %v3243 = vadd.f32 %v3050, %v3242
        %3244 = vmatprep.mubr.bf16.mxu0 0
        %3245 = vmatmul.mubr.bf16.gmra.mrb[0].mxu0 %v1763
        %v3246 = vpop.f32.mrb[0].mxu0
        %v3247 = vadd.f32 %v3054, %v3246
        %v3248 = vpop.f32.mrb[0].mxu0
        %v3249 = vadd.f32 %v3056, %v3248
        %v3250 = vpop.f32.mrb[0].mxu0
        %v3251 = vadd.f32 %v3058, %v3250
        %v3252 = vpop.f32.mrb[0].mxu0
        %v3253 = vadd.f32 %v3060, %v3252
        %3254 = vmatprep.mubr.bf16.mxu0 0
        %3255 = vmatmul.mubr.bf16.gmra.mrb[0].mxu0 %v1766
        %v3256 = vpop.f32.mrb[0].mxu0
        %v3257 = vadd.f32 %v3064, %v3256
        %v3258 = vpop.f32.mrb[0].mxu0
        %v3259 = vadd.f32 %v3066, %v3258
        %v3260 = vpop.f32.mrb[0].mxu0
        %v3261 = vadd.f32 %v3068, %v3260
        %v3262 = vpop.f32.mrb[0].mxu0
        %v3263 = vadd.f32 %v3070, %v3262
        %3264 = vmatprep.mubr.bf16.mxu0 0
        %3265 = vmatmul.mubr.bf16.gmra.mrb[0].mxu0 %v1769
        %v3266 = vpop.f32.mrb[0].mxu0
        %v3267 = vadd.f32 %v3074, %v3266
        %v3268 = vpop.f32.mrb[0].mxu0
        %v3269 = vadd.f32 %v3076, %v3268
        %v3270 = vpop.f32.mrb[0].mxu0
        %v3271 = vadd.f32 %v3078, %v3270
        %v3272 = vpop.f32.mrb[0].mxu0
        %v3273 = vadd.f32 %v3080, %v3272
        %3274 = vmatprep.mubr.bf16.mxu0 0
        %3275 = vmatmul.mubr.bf16.gmra.mrb[0].mxu0 %v1772
        %v3276 = vpop.f32.mrb[0].mxu0
        %v3277 = vadd.f32 %v3084, %v3276
        %v3278 = vpop.f32.mrb[0].mxu0
        %v3279 = vadd.f32 %v3086, %v3278
        %v3280 = vpop.f32.mrb[0].mxu0
        %v3281 = vadd.f32 %v3088, %v3280
        %v3282 = vpop.f32.mrb[0].mxu0
        %v3283 = vadd.f32 %v3090, %v3282
        %3284 = vmatprep.mubr.bf16.mxu0 0
        %3285 = vmatmul.mubr.bf16.gmra.mrb[0].mxu0 %v1775
        %v3286 = vpop.f32.mrb[0].mxu0
        %v3287 = vadd.f32 %v3094, %v3286
        %v3288 = vpop.f32.mrb[0].mxu0
        %v3289 = vadd.f32 %v3096, %v3288
        %v3290 = vpop.f32.mrb[0].mxu0
        %v3291 = vadd.f32 %v3098, %v3290
        %v3292 = vpop.f32.mrb[0].mxu0
        %v3293 = vadd.f32 %v3100, %v3292
        %3294 = vmatprep.mubr.bf16.mxu0 0
        %3295 = vmatmul.mubr.bf16.gmra.mrb[0].mxu0 %v1778
        %v3296 = vpop.f32.mrb[0].mxu0
        %v3297 = vadd.f32 %v3104, %v3296
        %v3298 = vpop.f32.mrb[0].mxu0
        %v3299 = vadd.f32 %v3106, %v3298
        %v3300 = vpop.f32.mrb[0].mxu0
        %v3301 = vadd.f32 %v3108, %v3300
        %v3302 = vpop.f32.mrb[0].mxu0
        %v3303 = vadd.f32 %v3110, %v3302
        %3304 = vmatprep.mubr.bf16.mxu0 0
        %3305 = vmatmul.mubr.bf16.gmra.mrb[0].mxu0 %v1781
        %v3306 = vpop.f32.mrb[0].mxu0
        %v3307 = vadd.f32 %v3114, %v3306
        %v3308 = vpop.f32.mrb[0].mxu0
        %v3309 = vadd.f32 %v3116, %v3308
        %v3310 = vpop.f32.mrb[0].mxu0
        %v3311 = vadd.f32 %v3118, %v3310
        %v3312 = vpop.f32.mrb[0].mxu0
        %v3313 = vadd.f32 %v3120, %v3312
        %3314 = vmatprep.mubr.bf16.mxu0 0
        %3315 = vmatmul.mubr.bf16.gmra.mrb[0].mxu0 %v1784
        %v3316 = vpop.f32.mrb[0].mxu0
        %v3317 = vadd.f32 %v3124, %v3316
        %v3318 = vpop.f32.mrb[0].mxu0
        %v3319 = vadd.f32 %v3126, %v3318
        %v3320 = vpop.f32.mrb[0].mxu0
        %v3321 = vadd.f32 %v3128, %v3320
        %v3322 = vpop.f32.mrb[0].mxu0
        %v3323 = vadd.f32 %v3130, %v3322
        %3324 = vdwg.mxu0
        %3325 = vmatprep.subr.bf16.mxu0 %v2270
        %3326 = vmatpush1.bf16.msra.mxu0 %v2269
        %3327 = vmatprep.subr.bf16.mxu0 %v2276
        %3328 = vmatpush1.bf16.msra.mxu0 %v2275
        %3329 = vmatprep.subr.bf16.mxu0 %v2282
        %3330 = vmatpush1.bf16.msra.mxu0 %v2281
        %3331 = vmatprep.subr.bf16.mxu0 %v2288
        %3332 = vmatpush1.bf16.msra.mxu0 %v2287
        %3333 = vmatprep.subr.bf16.mxu0 %v2294
        %3334 = vmatpush1.bf16.msra.mxu0 %v2293
        %3335 = vmatprep.subr.bf16.mxu0 %v2300
        %3336 = vmatpush1.bf16.msra.mxu0 %v2299
        %3337 = vmatprep.subr.bf16.mxu0 %v2306
        %3338 = vmatpush1.bf16.msra.mxu0 %v2305
        %3339 = vmatprep.subr.bf16.mxu0 %v2312
        %3340 = vmatpush1.bf16.msra.mxu0 %v2311
        %3341 = vmatprep.subr.bf16.mxu0 %v2318
        %3342 = vmatpush1.bf16.msra.mxu0 %v2317
        %3343 = vmatprep.subr.bf16.mxu0 %v2324
        %3344 = vmatpush1.bf16.msra.mxu0 %v2323
        %3345 = vmatprep.subr.bf16.mxu0 %v2330
        %3346 = vmatpush1.bf16.msra.mxu0 %v2329
        %3347 = vmatprep.subr.bf16.mxu0 %v2336
        %3348 = vmatpush1.bf16.msra.mxu0 %v2335
        %3349 = vmatprep.subr.bf16.mxu0 %v2342
        %3350 = vmatpush1.bf16.msra.mxu0 %v2341
        %3351 = vmatprep.subr.bf16.mxu0 %v2348
        %3352 = vmatpush1.bf16.msra.mxu0 %v2347
        %3353 = vmatprep.subr.bf16.mxu0 %v2354
        %3354 = vmatpush1.bf16.msra.mxu0 %v2353
        %3355 = vmatprep.subr.bf16.mxu0 %v2360
        %3356 = vmatpush1.bf16.msra.mxu0 %v2359
        %3357 = vmatprep.mubr.bf16.mxu0 %v1738
        %3358 = vmatmul.mubr.bf16.gmra.mrb[0].mxu0 %v1737
        %v3359 = vpop.f32.mrb[0].mxu0
        %v3360 = vadd.f32 0.0, %v3359
        %v3361 = vpop.f32.mrb[0].mxu0
        %v3362 = vadd.f32 0.0, %v3361
        %v3363 = vpop.f32.mrb[0].mxu0
        %v3364 = vadd.f32 0.0, %v3363
        %v3365 = vpop.f32.mrb[0].mxu0
        %v3366 = vadd.f32 0.0, %v3365
        %3367 = vmatprep.mubr.bf16.mxu0 %v1741
        %3368 = vmatmul.mubr.bf16.gmra.mrb[0].mxu0 %v1740
        %v3369 = vpop.f32.mrb[0].mxu0
        %v3370 = vadd.f32 0.0, %v3369
        %v3371 = vpop.f32.mrb[0].mxu0
        %v3372 = vadd.f32 0.0, %v3371
        %v3373 = vpop.f32.mrb[0].mxu0
        %v3374 = vadd.f32 0.0, %v3373
        %v3375 = vpop.f32.mrb[0].mxu0
        %v3376 = vadd.f32 0.0, %v3375
        %3377 = vmatprep.mubr.bf16.mxu0 %v1744
        %3378 = vmatmul.mubr.bf16.gmra.mrb[0].mxu0 %v1743
        %v3379 = vpop.f32.mrb[0].mxu0
        %v3380 = vadd.f32 0.0, %v3379
        %v3381 = vpop.f32.mrb[0].mxu0
        %v3382 = vadd.f32 0.0, %v3381
        %v3383 = vpop.f32.mrb[0].mxu0
        %v3384 = vadd.f32 0.0, %v3383
        %v3385 = vpop.f32.mrb[0].mxu0
        %v3386 = vadd.f32 0.0, %v3385
        %3387 = vmatprep.mubr.bf16.mxu0 %v1747
        %3388 = vmatmul.mubr.bf16.gmra.mrb[0].mxu0 %v1746
        %v3389 = vpop.f32.mrb[0].mxu0
        %v3390 = vadd.f32 0.0, %v3389
        %v3391 = vpop.f32.mrb[0].mxu0
        %v3392 = vadd.f32 0.0, %v3391
        %v3393 = vpop.f32.mrb[0].mxu0
        %v3394 = vadd.f32 0.0, %v3393
        %v3395 = vpop.f32.mrb[0].mxu0
        %v3396 = vadd.f32 0.0, %v3395
        %3397 = vmatprep.mubr.bf16.mxu0 %v1750
        %3398 = vmatmul.mubr.bf16.gmra.mrb[0].mxu0 %v1749
        %v3399 = vpop.f32.mrb[0].mxu0
        %v3400 = vadd.f32 0.0, %v3399
        %v3401 = vpop.f32.mrb[0].mxu0
        %v3402 = vadd.f32 0.0, %v3401
        %v3403 = vpop.f32.mrb[0].mxu0
        %v3404 = vadd.f32 0.0, %v3403
        %v3405 = vpop.f32.mrb[0].mxu0
        %v3406 = vadd.f32 0.0, %v3405
        %3407 = vmatprep.mubr.bf16.mxu0 %v1753
        %3408 = vmatmul.mubr.bf16.gmra.mrb[0].mxu0 %v1752
        %v3409 = vpop.f32.mrb[0].mxu0
        %v3410 = vadd.f32 0.0, %v3409
        %v3411 = vpop.f32.mrb[0].mxu0
        %v3412 = vadd.f32 0.0, %v3411
        %v3413 = vpop.f32.mrb[0].mxu0
        %v3414 = vadd.f32 0.0, %v3413
        %v3415 = vpop.f32.mrb[0].mxu0
        %v3416 = vadd.f32 0.0, %v3415
        %3417 = vmatprep.mubr.bf16.mxu0 %v1756
        %3418 = vmatmul.mubr.bf16.gmra.mrb[0].mxu0 %v1755
        %v3419 = vpop.f32.mrb[0].mxu0
        %v3420 = vadd.f32 0.0, %v3419
        %v3421 = vpop.f32.mrb[0].mxu0
        %v3422 = vadd.f32 0.0, %v3421
        %v3423 = vpop.f32.mrb[0].mxu0
        %v3424 = vadd.f32 0.0, %v3423
        %v3425 = vpop.f32.mrb[0].mxu0
        %v3426 = vadd.f32 0.0, %v3425
        %3427 = vmatprep.mubr.bf16.mxu0 %v1759
        %3428 = vmatmul.mubr.bf16.gmra.mrb[0].mxu0 %v1758
        %v3429 = vpop.f32.mrb[0].mxu0
        %v3430 = vadd.f32 0.0, %v3429
        %v3431 = vpop.f32.mrb[0].mxu0
        %v3432 = vadd.f32 0.0, %v3431
        %v3433 = vpop.f32.mrb[0].mxu0
        %v3434 = vadd.f32 0.0, %v3433
        %v3435 = vpop.f32.mrb[0].mxu0
        %v3436 = vadd.f32 0.0, %v3435
        %3437 = vmatprep.mubr.bf16.mxu0 %v1762
        %3438 = vmatmul.mubr.bf16.gmra.mrb[0].mxu0 %v1761
        %v3439 = vpop.f32.mrb[0].mxu0
        %v3440 = vadd.f32 0.0, %v3439
        %v3441 = vpop.f32.mrb[0].mxu0
        %v3442 = vadd.f32 0.0, %v3441
        %v3443 = vpop.f32.mrb[0].mxu0
        %v3444 = vadd.f32 0.0, %v3443
        %v3445 = vpop.f32.mrb[0].mxu0
        %v3446 = vadd.f32 0.0, %v3445
        %3447 = vmatprep.mubr.bf16.mxu0 %v1765
        %3448 = vmatmul.mubr.bf16.gmra.mrb[0].mxu0 %v1764
        %v3449 = vpop.f32.mrb[0].mxu0
        %v3450 = vadd.f32 0.0, %v3449
        %v3451 = vpop.f32.mrb[0].mxu0
        %v3452 = vadd.f32 0.0, %v3451
        %v3453 = vpop.f32.mrb[0].mxu0
        %v3454 = vadd.f32 0.0, %v3453
        %v3455 = vpop.f32.mrb[0].mxu0
        %v3456 = vadd.f32 0.0, %v3455
        %3457 = vmatprep.mubr.bf16.mxu0 %v1768
        %3458 = vmatmul.mubr.bf16.gmra.mrb[0].mxu0 %v1767
        %v3459 = vpop.f32.mrb[0].mxu0
        %v3460 = vadd.f32 0.0, %v3459
        %v3461 = vpop.f32.mrb[0].mxu0
        %v3462 = vadd.f32 0.0, %v3461
        %v3463 = vpop.f32.mrb[0].mxu0
        %v3464 = vadd.f32 0.0, %v3463
        %v3465 = vpop.f32.mrb[0].mxu0
        %v3466 = vadd.f32 0.0, %v3465
        %3467 = vmatprep.mubr.bf16.mxu0 %v1771
        %3468 = vmatmul.mubr.bf16.gmra.mrb[0].mxu0 %v1770
        %v3469 = vpop.f32.mrb[0].mxu0
        %v3470 = vadd.f32 0.0, %v3469
        %v3471 = vpop.f32.mrb[0].mxu0
        %v3472 = vadd.f32 0.0, %v3471
        %v3473 = vpop.f32.mrb[0].mxu0
        %v3474 = vadd.f32 0.0, %v3473
        %v3475 = vpop.f32.mrb[0].mxu0
        %v3476 = vadd.f32 0.0, %v3475
        %3477 = vmatprep.mubr.bf16.mxu0 %v1774
        %3478 = vmatmul.mubr.bf16.gmra.mrb[0].mxu0 %v1773
        %v3479 = vpop.f32.mrb[0].mxu0
        %v3480 = vadd.f32 0.0, %v3479
        %v3481 = vpop.f32.mrb[0].mxu0
        %v3482 = vadd.f32 0.0, %v3481
        %v3483 = vpop.f32.mrb[0].mxu0
        %v3484 = vadd.f32 0.0, %v3483
        %v3485 = vpop.f32.mrb[0].mxu0
        %v3486 = vadd.f32 0.0, %v3485
        %3487 = vmatprep.mubr.bf16.mxu0 %v1777
        %3488 = vmatmul.mubr.bf16.gmra.mrb[0].mxu0 %v1776
        %v3489 = vpop.f32.mrb[0].mxu0
        %v3490 = vadd.f32 0.0, %v3489
        %v3491 = vpop.f32.mrb[0].mxu0
        %v3492 = vadd.f32 0.0, %v3491
        %v3493 = vpop.f32.mrb[0].mxu0
        %v3494 = vadd.f32 0.0, %v3493
        %v3495 = vpop.f32.mrb[0].mxu0
        %v3496 = vadd.f32 0.0, %v3495
        %3497 = vmatprep.mubr.bf16.mxu0 %v1780
        %3498 = vmatmul.mubr.bf16.gmra.mrb[0].mxu0 %v1779
        %v3499 = vpop.f32.mrb[0].mxu0
        %v3500 = vadd.f32 0.0, %v3499
        %v3501 = vpop.f32.mrb[0].mxu0
        %v3502 = vadd.f32 0.0, %v3501
        %v3503 = vpop.f32.mrb[0].mxu0
        %v3504 = vadd.f32 0.0, %v3503
        %v3505 = vpop.f32.mrb[0].mxu0
        %v3506 = vadd.f32 0.0, %v3505
        %3507 = vmatprep.mubr.bf16.mxu0 %v1783
        %3508 = vmatmul.mubr.bf16.gmra.mrb[0].mxu0 %v1782
        %v3509 = vpop.f32.mrb[0].mxu0
        %v3510 = vadd.f32 0.0, %v3509
        %v3511 = vpop.f32.mrb[0].mxu0
        %v3512 = vadd.f32 0.0, %v3511
        %v3513 = vpop.f32.mrb[0].mxu0
        %v3514 = vadd.f32 0.0, %v3513
        %v3515 = vpop.f32.mrb[0].mxu0
        %v3516 = vadd.f32 0.0, %v3515
        %3517 = vdwg.mxu0
        %3518 = vmatprep.subr.bf16.mxu0 %v2366
        %3519 = vmatpush1.bf16.msra.mxu0 %v2365
        %3520 = vmatprep.subr.bf16.mxu0 %v2372
        %3521 = vmatpush1.bf16.msra.mxu0 %v2371
        %3522 = vmatprep.subr.bf16.mxu0 %v2378
        %3523 = vmatpush1.bf16.msra.mxu0 %v2377
        %3524 = vmatprep.subr.bf16.mxu0 %v2384
        %3525 = vmatpush1.bf16.msra.mxu0 %v2383
        %3526 = vmatprep.subr.bf16.mxu0 %v2390
        %3527 = vmatpush1.bf16.msra.mxu0 %v2389
        %3528 = vmatprep.subr.bf16.mxu0 %v2396
        %3529 = vmatpush1.bf16.msra.mxu0 %v2395
        %3530 = vmatprep.subr.bf16.mxu0 %v2402
        %3531 = vmatpush1.bf16.msra.mxu0 %v2401
        %3532 = vmatprep.subr.bf16.mxu0 %v2408
        %3533 = vmatpush1.bf16.msra.mxu0 %v2407
        %3534 = vmatprep.subr.bf16.mxu0 0
        %3535 = vmatpush1.bf16.msra.mxu0 0
        %3536 = vmatprep.subr.bf16.mxu0 0
        %3537 = vmatpush1.bf16.msra.mxu0 0
        %3538 = vmatprep.subr.bf16.mxu0 0
        %3539 = vmatpush1.bf16.msra.mxu0 0
        %3540 = vmatprep.subr.bf16.mxu0 0
        %3541 = vmatpush1.bf16.msra.mxu0 0
        %3542 = vmatprep.subr.bf16.mxu0 0
        %3543 = vmatpush1.bf16.msra.mxu0 0
        %3544 = vmatprep.subr.bf16.mxu0 0
        %3545 = vmatpush1.bf16.msra.mxu0 0
        %3546 = vmatprep.subr.bf16.mxu0 0
        %3547 = vmatpush1.bf16.msra.mxu0 0
        %3548 = vmatprep.subr.bf16.mxu0 0
        %3549 = vmatpush1.bf16.msra.mxu0 0
        %3550 = vmatprep.mubr.bf16.mxu0 0
        %3551 = vmatmul.mubr.bf16.gmra.mrb[0].mxu0 %v1739
        %v3552 = vpop.f32.mrb[0].mxu0
        %v3553 = vadd.f32 %v3360, %v3552
        %v3554 = vpop.f32.mrb[0].mxu0
        %v3555 = vadd.f32 %v3362, %v3554
        %v3556 = vpop.f32.mrb[0].mxu0
        %v3557 = vadd.f32 %v3364, %v3556
        %v3558 = vpop.f32.mrb[0].mxu0
        %v3559 = vadd.f32 %v3366, %v3558
        %3560 = vmatprep.mubr.bf16.mxu0 0
        %3561 = vmatmul.mubr.bf16.gmra.mrb[0].mxu0 %v1742
        %v3562 = vpop.f32.mrb[0].mxu0
        %v3563 = vadd.f32 %v3370, %v3562
        %v3564 = vpop.f32.mrb[0].mxu0
        %v3565 = vadd.f32 %v3372, %v3564
        %v3566 = vpop.f32.mrb[0].mxu0
        %v3567 = vadd.f32 %v3374, %v3566
        %v3568 = vpop.f32.mrb[0].mxu0
        %v3569 = vadd.f32 %v3376, %v3568
        %3570 = vmatprep.mubr.bf16.mxu0 0
        %3571 = vmatmul.mubr.bf16.gmra.mrb[0].mxu0 %v1745
        %v3572 = vpop.f32.mrb[0].mxu0
        %v3573 = vadd.f32 %v3380, %v3572
        %v3574 = vpop.f32.mrb[0].mxu0
        %v3575 = vadd.f32 %v3382, %v3574
        %v3576 = vpop.f32.mrb[0].mxu0
        %v3577 = vadd.f32 %v3384, %v3576
        %v3578 = vpop.f32.mrb[0].mxu0
        %v3579 = vadd.f32 %v3386, %v3578
        %3580 = vmatprep.mubr.bf16.mxu0 0
        %3581 = vmatmul.mubr.bf16.gmra.mrb[0].mxu0 %v1748
        %v3582 = vpop.f32.mrb[0].mxu0
        %v3583 = vadd.f32 %v3390, %v3582
        %v3584 = vpop.f32.mrb[0].mxu0
        %v3585 = vadd.f32 %v3392, %v3584
        %v3586 = vpop.f32.mrb[0].mxu0
        %v3587 = vadd.f32 %v3394, %v3586
        %v3588 = vpop.f32.mrb[0].mxu0
        %v3589 = vadd.f32 %v3396, %v3588
        %3590 = vmatprep.mubr.bf16.mxu0 0
        %3591 = vmatmul.mubr.bf16.gmra.mrb[0].mxu0 %v1751
        %v3592 = vpop.f32.mrb[0].mxu0
        %v3593 = vadd.f32 %v3400, %v3592
        %v3594 = vpop.f32.mrb[0].mxu0
        %v3595 = vadd.f32 %v3402, %v3594
        %v3596 = vpop.f32.mrb[0].mxu0
        %v3597 = vadd.f32 %v3404, %v3596
        %v3598 = vpop.f32.mrb[0].mxu0
        %v3599 = vadd.f32 %v3406, %v3598
        %3600 = vmatprep.mubr.bf16.mxu0 0
        %3601 = vmatmul.mubr.bf16.gmra.mrb[0].mxu0 %v1754
        %v3602 = vpop.f32.mrb[0].mxu0
        %v3603 = vadd.f32 %v3410, %v3602
        %v3604 = vpop.f32.mrb[0].mxu0
        %v3605 = vadd.f32 %v3412, %v3604
        %v3606 = vpop.f32.mrb[0].mxu0
        %v3607 = vadd.f32 %v3414, %v3606
        %v3608 = vpop.f32.mrb[0].mxu0
        %v3609 = vadd.f32 %v3416, %v3608
        %3610 = vmatprep.mubr.bf16.mxu0 0
        %3611 = vmatmul.mubr.bf16.gmra.mrb[0].mxu0 %v1757
        %v3612 = vpop.f32.mrb[0].mxu0
        %v3613 = vadd.f32 %v3420, %v3612
        %v3614 = vpop.f32.mrb[0].mxu0
        %v3615 = vadd.f32 %v3422, %v3614
        %v3616 = vpop.f32.mrb[0].mxu0
        %v3617 = vadd.f32 %v3424, %v3616
        %v3618 = vpop.f32.mrb[0].mxu0
        %v3619 = vadd.f32 %v3426, %v3618
        %3620 = vmatprep.mubr.bf16.mxu0 0
        %3621 = vmatmul.mubr.bf16.gmra.mrb[0].mxu0 %v1760
        %v3622 = vpop.f32.mrb[0].mxu0
        %v3623 = vadd.f32 %v3430, %v3622
        %v3624 = vpop.f32.mrb[0].mxu0
        %v3625 = vadd.f32 %v3432, %v3624
        %v3626 = vpop.f32.mrb[0].mxu0
        %v3627 = vadd.f32 %v3434, %v3626
        %v3628 = vpop.f32.mrb[0].mxu0
        %v3629 = vadd.f32 %v3436, %v3628
        %3630 = vmatprep.mubr.bf16.mxu0 0
        %3631 = vmatmul.mubr.bf16.gmra.mrb[0].mxu0 %v1763
        %v3632 = vpop.f32.mrb[0].mxu0
        %v3633 = vadd.f32 %v3440, %v3632
        %v3634 = vpop.f32.mrb[0].mxu0
        %v3635 = vadd.f32 %v3442, %v3634
        %v3636 = vpop.f32.mrb[0].mxu0
        %v3637 = vadd.f32 %v3444, %v3636
        %v3638 = vpop.f32.mrb[0].mxu0
        %v3639 = vadd.f32 %v3446, %v3638
        %3640 = vmatprep.mubr.bf16.mxu0 0
        %3641 = vmatmul.mubr.bf16.gmra.mrb[0].mxu0 %v1766
        %v3642 = vpop.f32.mrb[0].mxu0
        %v3643 = vadd.f32 %v3450, %v3642
        %v3644 = vpop.f32.mrb[0].mxu0
        %v3645 = vadd.f32 %v3452, %v3644
        %v3646 = vpop.f32.mrb[0].mxu0
        %v3647 = vadd.f32 %v3454, %v3646
        %v3648 = vpop.f32.mrb[0].mxu0
        %v3649 = vadd.f32 %v3456, %v3648
        %3650 = vmatprep.mubr.bf16.mxu0 0
        %3651 = vmatmul.mubr.bf16.gmra.mrb[0].mxu0 %v1769
        %v3652 = vpop.f32.mrb[0].mxu0
        %v3653 = vadd.f32 %v3460, %v3652
        %v3654 = vpop.f32.mrb[0].mxu0
        %v3655 = vadd.f32 %v3462, %v3654
        %v3656 = vpop.f32.mrb[0].mxu0
        %v3657 = vadd.f32 %v3464, %v3656
        %v3658 = vpop.f32.mrb[0].mxu0
        %v3659 = vadd.f32 %v3466, %v3658
        %3660 = vmatprep.mubr.bf16.mxu0 0
        %3661 = vmatmul.mubr.bf16.gmra.mrb[0].mxu0 %v1772
        %v3662 = vpop.f32.mrb[0].mxu0
        %v3663 = vadd.f32 %v3470, %v3662
        %v3664 = vpop.f32.mrb[0].mxu0
        %v3665 = vadd.f32 %v3472, %v3664
        %v3666 = vpop.f32.mrb[0].mxu0
        %v3667 = vadd.f32 %v3474, %v3666
        %v3668 = vpop.f32.mrb[0].mxu0
        %v3669 = vadd.f32 %v3476, %v3668
        %3670 = vmatprep.mubr.bf16.mxu0 0
        %3671 = vmatmul.mubr.bf16.gmra.mrb[0].mxu0 %v1775
        %v3672 = vpop.f32.mrb[0].mxu0
        %v3673 = vadd.f32 %v3480, %v3672
        %v3674 = vpop.f32.mrb[0].mxu0
        %v3675 = vadd.f32 %v3482, %v3674
        %v3676 = vpop.f32.mrb[0].mxu0
        %v3677 = vadd.f32 %v3484, %v3676
        %v3678 = vpop.f32.mrb[0].mxu0
        %v3679 = vadd.f32 %v3486, %v3678
        %3680 = vmatprep.mubr.bf16.mxu0 0
        %3681 = vmatmul.mubr.bf16.gmra.mrb[0].mxu0 %v1778
        %v3682 = vpop.f32.mrb[0].mxu0
        %v3683 = vadd.f32 %v3490, %v3682
        %v3684 = vpop.f32.mrb[0].mxu0
        %v3685 = vadd.f32 %v3492, %v3684
        %v3686 = vpop.f32.mrb[0].mxu0
        %v3687 = vadd.f32 %v3494, %v3686
        %v3688 = vpop.f32.mrb[0].mxu0
        %v3689 = vadd.f32 %v3496, %v3688
        %3690 = vmatprep.mubr.bf16.mxu0 0
        %3691 = vmatmul.mubr.bf16.gmra.mrb[0].mxu0 %v1781
        %v3692 = vpop.f32.mrb[0].mxu0
        %v3693 = vadd.f32 %v3500, %v3692
        %v3694 = vpop.f32.mrb[0].mxu0
        %v3695 = vadd.f32 %v3502, %v3694
        %v3696 = vpop.f32.mrb[0].mxu0
        %v3697 = vadd.f32 %v3504, %v3696
        %v3698 = vpop.f32.mrb[0].mxu0
        %v3699 = vadd.f32 %v3506, %v3698
        %3700 = vmatprep.mubr.bf16.mxu0 0
        %3701 = vmatmul.mubr.bf16.gmra.mrb[0].mxu0 %v1784
        %v3702 = vpop.f32.mrb[0].mxu0
        %v3703 = vadd.f32 %v3510, %v3702
        %v3704 = vpop.f32.mrb[0].mxu0
        %v3705 = vadd.f32 %v3512, %v3704
        %v3706 = vpop.f32.mrb[0].mxu0
        %v3707 = vadd.f32 %v3514, %v3706
        %v3708 = vpop.f32.mrb[0].mxu0
        %v3709 = vadd.f32 %v3516, %v3708
        %3710 = vdwg.mxu0
        %v3711 = vpack.c.bf16 %v1165, %v1161
        %v3712 = vpack.c.bf16 %v1167, %v1163
        %v3713 = vpack.c.bf16 %v1374, %v1371
        %v3714 = vpack.c.bf16 %v1175, %v1171
        %v3715 = vpack.c.bf16 %v1177, %v1173
        %v3716 = vpack.c.bf16 %v1382, %v1379
        %v3717 = vpack.c.bf16 %v1185, %v1181
        %v3718 = vpack.c.bf16 %v1187, %v1183
        %v3719 = vpack.c.bf16 %v1390, %v1387
        %v3720 = vpack.c.bf16 %v1195, %v1191
        %v3721 = vpack.c.bf16 %v1197, %v1193
        %v3722 = vpack.c.bf16 %v1398, %v1395
        %v3723 = vpack.c.bf16 %v1205, %v1201
        %v3724 = vpack.c.bf16 %v1207, %v1203
        %v3725 = vpack.c.bf16 %v1406, %v1403
        %v3726 = vpack.c.bf16 %v1215, %v1211
        %v3727 = vpack.c.bf16 %v1217, %v1213
        %v3728 = vpack.c.bf16 %v1414, %v1411
        %v3729 = vpack.c.bf16 %v1225, %v1221
        %v3730 = vpack.c.bf16 %v1227, %v1223
        %v3731 = vpack.c.bf16 %v1422, %v1419
        %v3732 = vpack.c.bf16 %v1235, %v1231
        %v3733 = vpack.c.bf16 %v1237, %v1233
        %v3734 = vpack.c.bf16 %v1430, %v1427
        %v3735 = vpack.c.bf16 %v2785, %v2781
        %v3736 = vpack.c.bf16 %v2787, %v2783
        %v3737 = vpack.c.bf16 %v3171, %v3167
        %v3738 = vpack.c.bf16 %v2795, %v2791
        %v3739 = vpack.c.bf16 %v2797, %v2793
        %v3740 = vpack.c.bf16 %v3181, %v3177
        %v3741 = vpack.c.bf16 %v2805, %v2801
        %v3742 = vpack.c.bf16 %v2807, %v2803
        %v3743 = vpack.c.bf16 %v3191, %v3187
        %v3744 = vpack.c.bf16 %v2815, %v2811
        %v3745 = vpack.c.bf16 %v2817, %v2813
        %v3746 = vpack.c.bf16 %v3201, %v3197
        %v3747 = vpack.c.bf16 %v2825, %v2821
        %v3748 = vpack.c.bf16 %v2827, %v2823
        %v3749 = vpack.c.bf16 %v3211, %v3207
        %v3750 = vpack.c.bf16 %v2835, %v2831
        %v3751 = vpack.c.bf16 %v2837, %v2833
        %v3752 = vpack.c.bf16 %v3221, %v3217
        %v3753 = vpack.c.bf16 %v2845, %v2841
        %v3754 = vpack.c.bf16 %v2847, %v2843
        %v3755 = vpack.c.bf16 %v3231, %v3227
        %v3756 = vpack.c.bf16 %v2855, %v2851
        %v3757 = vpack.c.bf16 %v2857, %v2853
        %v3758 = vpack.c.bf16 %v3241, %v3237
        %v3759 = vpack.c.bf16 %v2865, %v2861
        %v3760 = vpack.c.bf16 %v2867, %v2863
        %v3761 = vpack.c.bf16 %v3251, %v3247
        %v3762 = vpack.c.bf16 %v2875, %v2871
        %v3763 = vpack.c.bf16 %v2877, %v2873
        %v3764 = vpack.c.bf16 %v3261, %v3257
        %v3765 = vpack.c.bf16 %v2885, %v2881
        %v3766 = vpack.c.bf16 %v2887, %v2883
        %v3767 = vpack.c.bf16 %v3271, %v3267
        %v3768 = vpack.c.bf16 %v2895, %v2891
        %v3769 = vpack.c.bf16 %v2897, %v2893
        %v3770 = vpack.c.bf16 %v3281, %v3277
        %v3771 = vpack.c.bf16 %v2905, %v2901
        %v3772 = vpack.c.bf16 %v2907, %v2903
        %v3773 = vpack.c.bf16 %v3291, %v3287
        %v3774 = vpack.c.bf16 %v2915, %v2911
        %v3775 = vpack.c.bf16 %v2917, %v2913
        %v3776 = vpack.c.bf16 %v3301, %v3297
        %v3777 = vpack.c.bf16 %v2925, %v2921
        %v3778 = vpack.c.bf16 %v2927, %v2923
        %v3779 = vpack.c.bf16 %v3311, %v3307
        %v3780 = vpack.c.bf16 %v2935, %v2931
        %v3781 = vpack.c.bf16 %v2937, %v2933
        %v3782 = vpack.c.bf16 %v3321, %v3317
        %v3783 = vpack.c.bf16 %v3173, %v3169
        %v3784 = vpack.c.bf16 %v3557, %v3553
        %v3785 = vpack.c.bf16 %v3559, %v3555
        %v3786 = vpack.c.bf16 %v3183, %v3179
        %v3787 = vpack.c.bf16 %v3567, %v3563
        %v3788 = vpack.c.bf16 %v3569, %v3565
        %v3789 = vpack.c.bf16 %v3193, %v3189
        %v3790 = vpack.c.bf16 %v3577, %v3573
        %v3791 = vpack.c.bf16 %v3579, %v3575
        %v3792 = vpack.c.bf16 %v3203, %v3199
        %v3793 = vpack.c.bf16 %v3587, %v3583
        %v3794 = vpack.c.bf16 %v3589, %v3585
        %v3795 = vpack.c.bf16 %v3213, %v3209
        %v3796 = vpack.c.bf16 %v3597, %v3593
        %v3797 = vpack.c.bf16 %v3599, %v3595
        %v3798 = vpack.c.bf16 %v3223, %v3219
        %v3799 = vpack.c.bf16 %v3607, %v3603
        %v3800 = vpack.c.bf16 %v3609, %v3605
        %v3801 = vpack.c.bf16 %v3233, %v3229
        %v3802 = vpack.c.bf16 %v3617, %v3613
        %v3803 = vpack.c.bf16 %v3619, %v3615
        %v3804 = vpack.c.bf16 %v3243, %v3239
        %v3805 = vpack.c.bf16 %v3627, %v3623
        %v3806 = vpack.c.bf16 %v3629, %v3625
        %v3807 = vpack.c.bf16 %v3253, %v3249
        %v3808 = vpack.c.bf16 %v3637, %v3633
        %v3809 = vpack.c.bf16 %v3639, %v3635
        %v3810 = vpack.c.bf16 %v3263, %v3259
        %v3811 = vpack.c.bf16 %v3647, %v3643
        %v3812 = vpack.c.bf16 %v3649, %v3645
        %v3813 = vpack.c.bf16 %v3273, %v3269
        %v3814 = vpack.c.bf16 %v3657, %v3653
        %v3815 = vpack.c.bf16 %v3659, %v3655
        %v3816 = vpack.c.bf16 %v3283, %v3279
        %v3817 = vpack.c.bf16 %v3667, %v3663
        %v3818 = vpack.c.bf16 %v3669, %v3665
        %v3819 = vpack.c.bf16 %v3293, %v3289
        %v3820 = vpack.c.bf16 %v3677, %v3673
        %v3821 = vpack.c.bf16 %v3679, %v3675
        %v3822 = vpack.c.bf16 %v3303, %v3299
        %v3823 = vpack.c.bf16 %v3687, %v3683
        %v3824 = vpack.c.bf16 %v3689, %v3685
        %v3825 = vpack.c.bf16 %v3313, %v3309
        %v3826 = vpack.c.bf16 %v3697, %v3693
        %v3827 = vpack.c.bf16 %v3699, %v3695
        %v3828 = vpack.c.bf16 %v3323, %v3319
        %v3829 = vpack.c.bf16 %v3707, %v3703
        %v3830 = vpack.c.bf16 %v3709, %v3705
        %v3831 = vlaneseq
        %v3832 = vshrl.u32 %v3831, 7
        %v3833 = vadd.s32 %v3832, 8
        %v3834 = vadd.s32 %v3832, 16
        %v3835 = vadd.s32 %v3832, 24
        %v3836 = vadd.s32 %v3832, 32
        %v3837 = vadd.s32 %v3832, 40
        %v3838 = vadd.s32 %v3832, 48
        %v3839 = vadd.s32 %v3832, 56
        %v3840 = vadd.s32 %v3832, 64
        %v3841 = vadd.s32 %v3832, 72
        %v3842 = vadd.s32 %v3832, 80
        %v3843 = vadd.s32 %v3832, 88
        %v3844 = vadd.s32 %v3832, 96
        %v3845 = vadd.s32 %v3832, 104
        %v3846 = vadd.s32 %v3832, 112
        %v3847 = vadd.s32 %v3832, 120
        %v3848 = vstv %s303
        %v3849 = vadd.s32 %v3848, %v3832
        %v3850 = vadd.s32 %v3848, %v3833
        %v3851 = vadd.s32 %v3848, %v3834
        %v3852 = vadd.s32 %v3848, %v3835
        %v3853 = vadd.s32 %v3848, %v3836
        %v3854 = vadd.s32 %v3848, %v3837
        %v3855 = vadd.s32 %v3848, %v3838
        %v3856 = vadd.s32 %v3848, %v3839
        %v3857 = vadd.s32 %v3848, %v3840
        %v3858 = vadd.s32 %v3848, %v3841
        %v3859 = vadd.s32 %v3848, %v3842
        %v3860 = vadd.s32 %v3848, %v3843
        %v3861 = vadd.s32 %v3848, %v3844
        %v3862 = vadd.s32 %v3848, %v3845
        %v3863 = vadd.s32 %v3848, %v3846
        %v3864 = vadd.s32 %v3848, %v3847
        %v3865 = vlaneseq
        %v3866 = vand.u32 %v3865, 127
        %v3867 = vadd.s32 %v3866, 128
        %vm3868 = vcmp.le.s32.totalorder %v3866, %v3849
        %vm3869 = vcmp.le.s32.totalorder %v3867, %v3849
        %vm3870 = vcmp.le.s32.totalorder %v3866, %v3850
        %vm3871 = vcmp.le.s32.totalorder %v3867, %v3850
        %vm3872 = vcmp.le.s32.totalorder %v3866, %v3851
        %vm3873 = vcmp.le.s32.totalorder %v3867, %v3851
        %vm3874 = vcmp.le.s32.totalorder %v3866, %v3852
        %vm3875 = vcmp.le.s32.totalorder %v3867, %v3852
        %vm3876 = vcmp.le.s32.totalorder %v3866, %v3853
        %vm3877 = vcmp.le.s32.totalorder %v3867, %v3853
        %vm3878 = vcmp.le.s32.totalorder %v3866, %v3854
        %vm3879 = vcmp.le.s32.totalorder %v3867, %v3854
        %vm3880 = vcmp.le.s32.totalorder %v3866, %v3855
        %vm3881 = vcmp.le.s32.totalorder %v3867, %v3855
        %vm3882 = vcmp.le.s32.totalorder %v3866, %v3856
        %vm3883 = vcmp.le.s32.totalorder %v3867, %v3856
        %vm3884 = vcmp.le.s32.totalorder %v3866, %v3857
        %vm3885 = vcmp.le.s32.totalorder %v3867, %v3857
        %vm3886 = vcmp.le.s32.totalorder %v3866, %v3858
        %vm3887 = vcmp.le.s32.totalorder %v3867, %v3858
        %vm3888 = vcmp.le.s32.totalorder %v3866, %v3859
        %vm3889 = vcmp.le.s32.totalorder %v3867, %v3859
        %vm3890 = vcmp.le.s32.totalorder %v3866, %v3860
        %vm3891 = vcmp.le.s32.totalorder %v3867, %v3860
        %vm3892 = vcmp.le.s32.totalorder %v3866, %v3861
        %vm3893 = vcmp.le.s32.totalorder %v3867, %v3861
        %vm3894 = vcmp.le.s32.totalorder %v3866, %v3862
        %vm3895 = vcmp.le.s32.totalorder %v3867, %v3862
        %vm3896 = vcmp.le.s32.totalorder %v3866, %v3863
        %vm3897 = vcmp.le.s32.totalorder %v3867, %v3863
        %vm3898 = vcmp.le.s32.totalorder %v3866, %v3864
        %vm3899 = vcmp.le.s32.totalorder %v3867, %v3864
        %v3900 = vsel %vm3868, 0.0, -1e+30
        %v3901 = vsel %vm3869, 0.0, -1e+30
        %v3902 = vsel %vm3870, 0.0, -1e+30
        %v3903 = vsel %vm3871, 0.0, -1e+30
        %v3904 = vsel %vm3872, 0.0, -1e+30
        %v3905 = vsel %vm3873, 0.0, -1e+30
        %v3906 = vsel %vm3874, 0.0, -1e+30
        %v3907 = vsel %vm3875, 0.0, -1e+30
        %v3908 = vsel %vm3876, 0.0, -1e+30
        %v3909 = vsel %vm3877, 0.0, -1e+30
        %v3910 = vsel %vm3878, 0.0, -1e+30
        %v3911 = vsel %vm3879, 0.0, -1e+30
        %v3912 = vsel %vm3880, 0.0, -1e+30
        %v3913 = vsel %vm3881, 0.0, -1e+30
        %v3914 = vsel %vm3882, 0.0, -1e+30
        %v3915 = vsel %vm3883, 0.0, -1e+30
        %v3916 = vsel %vm3884, 0.0, -1e+30
        %v3917 = vsel %vm3885, 0.0, -1e+30
        %v3918 = vsel %vm3886, 0.0, -1e+30
        %v3919 = vsel %vm3887, 0.0, -1e+30
        %v3920 = vsel %vm3888, 0.0, -1e+30
        %v3921 = vsel %vm3889, 0.0, -1e+30
        %v3922 = vsel %vm3890, 0.0, -1e+30
        %v3923 = vsel %vm3891, 0.0, -1e+30
        %v3924 = vsel %vm3892, 0.0, -1e+30
        %v3925 = vsel %vm3893, 0.0, -1e+30
        %v3926 = vsel %vm3894, 0.0, -1e+30
        %v3927 = vsel %vm3895, 0.0, -1e+30
        %v3928 = vsel %vm3896, 0.0, -1e+30
        %v3929 = vsel %vm3897, 0.0, -1e+30
        %v3930 = vsel %vm3898, 0.0, -1e+30
        %v3931 = vsel %vm3899, 0.0, -1e+30
        %vm3932 = vcmask 523264
        %v3934 = vsel %vm3932, %v3711, 0
        %v3937 = vsel %vm3932, %v3714, 0
        %v3940 = vsel %vm3932, %v3717, 0
        %v3943 = vsel %vm3932, %v3720, 0
        %v3946 = vsel %vm3932, %v3723, 0
        %v3949 = vsel %vm3932, %v3726, 0
        %v3952 = vsel %vm3932, %v3729, 0
        %v3955 = vsel %vm3932, %v3732, 0
        %v3958 = vsel %vm3932, %v3735, 0
        %v3961 = vsel %vm3932, %v3738, 0
        %v3964 = vsel %vm3932, %v3741, 0
        %v3967 = vsel %vm3932, %v3744, 0
        %v3970 = vsel %vm3932, %v3747, 0
        %v3973 = vsel %vm3932, %v3750, 0
        %v3976 = vsel %vm3932, %v3753, 0
        %v3979 = vsel %vm3932, %v3756, 0
        %v3982 = vsel %vm3932, %v3759, 0
        %v3985 = vsel %vm3932, %v3762, 0
        %v3988 = vsel %vm3932, %v3765, 0
        %v3991 = vsel %vm3932, %v3768, 0
        %v3994 = vsel %vm3932, %v3771, 0
        %v3997 = vsel %vm3932, %v3774, 0
        %v4000 = vsel %vm3932, %v3777, 0
        %v4003 = vsel %vm3932, %v3780, 0
        %4005 = vmatprep.subr.bf16.mxu0 0
        %4006 = vmatpush1.bf16.xpose.msra.mxu0 %v3958
        %4007 = vmatprep.subr.bf16.mxu0 0
        %4008 = vmatpush1.bf16.xpose.msra.mxu0 %v3961
        %4009 = vmatprep.subr.bf16.mxu0 0
        %4010 = vmatpush1.bf16.xpose.msra.mxu0 %v3964
        %4011 = vmatprep.subr.bf16.mxu0 0
        %4012 = vmatpush1.bf16.xpose.msra.mxu0 %v3967
        %4013 = vmatprep.subr.bf16.mxu0 0
        %4014 = vmatpush1.bf16.xpose.msra.mxu0 %v3970
        %4015 = vmatprep.subr.bf16.mxu0 0
        %4016 = vmatpush1.bf16.xpose.msra.mxu0 %v3973
        %4017 = vmatprep.subr.bf16.mxu0 0
        %4018 = vmatpush1.bf16.xpose.msra.mxu0 %v3976
        %4019 = vmatprep.subr.bf16.mxu0 0
        %4020 = vmatpush1.bf16.xpose.msra.mxu0 %v3979
        %4021 = vmatprep.subr.bf16.mxu0 0
        %4022 = vmatpush1.bf16.xpose.msra.mxu0 %v3982
        %4023 = vmatprep.subr.bf16.mxu0 0
        %4024 = vmatpush1.bf16.xpose.msra.mxu0 %v3985
        %4025 = vmatprep.subr.bf16.mxu0 0
        %4026 = vmatpush1.bf16.xpose.msra.mxu0 %v3988
        %4027 = vmatprep.subr.bf16.mxu0 0
        %4028 = vmatpush1.bf16.xpose.msra.mxu0 %v3991
        %4029 = vmatprep.subr.bf16.mxu0 0
        %4030 = vmatpush1.bf16.xpose.msra.mxu0 %v3994
        %4031 = vmatprep.subr.bf16.mxu0 0
        %4032 = vmatpush1.bf16.xpose.msra.mxu0 %v3997
        %4033 = vmatprep.subr.bf16.mxu0 0
        %4034 = vmatpush1.bf16.xpose.msra.mxu0 %v4000
        %4035 = vmatprep.subr.bf16.mxu0 0
        %4036 = vmatpush1.bf16.xpose.msra.mxu0 %v4003
        %4037 = vmatprep.mubr.bf16.mxu0 0
        %4038 = vmatmul.mubr.bf16.gmra.mrb[0].mxu0 %v3934
        %v4039 = vpop.f32.mrb[0].mxu0
        %v4040 = vadd.f32 0.0, %v4039
        %v4041 = vpop.f32.mrb[0].mxu0
        %v4042 = vadd.f32 0.0, %v4041
        %v4043 = vpop.f32.mrb[0].mxu0
        %v4044 = vadd.f32 0.0, %v4043
        %v4045 = vpop.f32.mrb[0].mxu0
        %v4046 = vadd.f32 0.0, %v4045
        %4047 = vmatprep.mubr.bf16.mxu0 0
        %4048 = vmatmul.mubr.bf16.gmra.mrb[0].mxu0 %v3937
        %v4049 = vpop.f32.mrb[0].mxu0
        %v4050 = vadd.f32 0.0, %v4049
        %v4051 = vpop.f32.mrb[0].mxu0
        %v4052 = vadd.f32 0.0, %v4051
        %v4053 = vpop.f32.mrb[0].mxu0
        %v4054 = vadd.f32 0.0, %v4053
        %v4055 = vpop.f32.mrb[0].mxu0
        %v4056 = vadd.f32 0.0, %v4055
        %4057 = vmatprep.mubr.bf16.mxu0 0
        %4058 = vmatmul.mubr.bf16.gmra.mrb[0].mxu0 %v3940
        %v4059 = vpop.f32.mrb[0].mxu0
        %v4060 = vadd.f32 0.0, %v4059
        %v4061 = vpop.f32.mrb[0].mxu0
        %v4062 = vadd.f32 0.0, %v4061
        %v4063 = vpop.f32.mrb[0].mxu0
        %v4064 = vadd.f32 0.0, %v4063
        %v4065 = vpop.f32.mrb[0].mxu0
        %v4066 = vadd.f32 0.0, %v4065
        %4067 = vmatprep.mubr.bf16.mxu0 0
        %4068 = vmatmul.mubr.bf16.gmra.mrb[0].mxu0 %v3943
        %v4069 = vpop.f32.mrb[0].mxu0
        %v4070 = vadd.f32 0.0, %v4069
        %v4071 = vpop.f32.mrb[0].mxu0
        %v4072 = vadd.f32 0.0, %v4071
        %v4073 = vpop.f32.mrb[0].mxu0
        %v4074 = vadd.f32 0.0, %v4073
        %v4075 = vpop.f32.mrb[0].mxu0
        %v4076 = vadd.f32 0.0, %v4075
        %4077 = vmatprep.mubr.bf16.mxu0 0
        %4078 = vmatmul.mubr.bf16.gmra.mrb[0].mxu0 %v3946
        %v4079 = vpop.f32.mrb[0].mxu0
        %v4080 = vadd.f32 0.0, %v4079
        %v4081 = vpop.f32.mrb[0].mxu0
        %v4082 = vadd.f32 0.0, %v4081
        %v4083 = vpop.f32.mrb[0].mxu0
        %v4084 = vadd.f32 0.0, %v4083
        %v4085 = vpop.f32.mrb[0].mxu0
        %v4086 = vadd.f32 0.0, %v4085
        %4087 = vmatprep.mubr.bf16.mxu0 0
        %4088 = vmatmul.mubr.bf16.gmra.mrb[0].mxu0 %v3949
        %v4089 = vpop.f32.mrb[0].mxu0
        %v4090 = vadd.f32 0.0, %v4089
        %v4091 = vpop.f32.mrb[0].mxu0
        %v4092 = vadd.f32 0.0, %v4091
        %v4093 = vpop.f32.mrb[0].mxu0
        %v4094 = vadd.f32 0.0, %v4093
        %v4095 = vpop.f32.mrb[0].mxu0
        %v4096 = vadd.f32 0.0, %v4095
        %4097 = vmatprep.mubr.bf16.mxu0 0
        %4098 = vmatmul.mubr.bf16.gmra.mrb[0].mxu0 %v3952
        %v4099 = vpop.f32.mrb[0].mxu0
        %v4100 = vadd.f32 0.0, %v4099
        %v4101 = vpop.f32.mrb[0].mxu0
        %v4102 = vadd.f32 0.0, %v4101
        %v4103 = vpop.f32.mrb[0].mxu0
        %v4104 = vadd.f32 0.0, %v4103
        %v4105 = vpop.f32.mrb[0].mxu0
        %v4106 = vadd.f32 0.0, %v4105
        %4107 = vmatprep.mubr.bf16.mxu0 0
        %4108 = vmatmul.mubr.bf16.gmra.mrb[0].mxu0 %v3955
        %v4109 = vpop.f32.mrb[0].mxu0
        %v4110 = vadd.f32 0.0, %v4109
        %v4111 = vpop.f32.mrb[0].mxu0
        %v4112 = vadd.f32 0.0, %v4111
        %v4113 = vpop.f32.mrb[0].mxu0
        %v4114 = vadd.f32 0.0, %v4113
        %v4115 = vpop.f32.mrb[0].mxu0
        %v4116 = vadd.f32 0.0, %v4115
        %4117 = vdwg.mxu0
        %v4118 = vmul.f32 %v4040, 0.05103104
        %v4119 = vmul.f32 %v4042, 0.05103104
        %v4120 = vmul.f32 %v4044, 0.05103104
        %v4121 = vmul.f32 %v4046, 0.05103104
        %v4122 = vmul.f32 %v4050, 0.05103104
        %v4123 = vmul.f32 %v4052, 0.05103104
        %v4124 = vmul.f32 %v4054, 0.05103104
        %v4125 = vmul.f32 %v4056, 0.05103104
        %v4126 = vmul.f32 %v4060, 0.05103104
        %v4127 = vmul.f32 %v4062, 0.05103104
        %v4128 = vmul.f32 %v4064, 0.05103104
        %v4129 = vmul.f32 %v4066, 0.05103104
        %v4130 = vmul.f32 %v4070, 0.05103104
        %v4131 = vmul.f32 %v4072, 0.05103104
        %v4132 = vmul.f32 %v4074, 0.05103104
        %v4133 = vmul.f32 %v4076, 0.05103104
        %v4134 = vmul.f32 %v4080, 0.05103104
        %v4135 = vmul.f32 %v4082, 0.05103104
        %v4136 = vmul.f32 %v4084, 0.05103104
        %v4137 = vmul.f32 %v4086, 0.05103104
        %v4138 = vmul.f32 %v4090, 0.05103104
        %v4139 = vmul.f32 %v4092, 0.05103104
        %v4140 = vmul.f32 %v4094, 0.05103104
        %v4141 = vmul.f32 %v4096, 0.05103104
        %v4142 = vmul.f32 %v4100, 0.05103104
        %v4143 = vmul.f32 %v4102, 0.05103104
        %v4144 = vmul.f32 %v4104, 0.05103104
        %v4145 = vmul.f32 %v4106, 0.05103104
        %v4146 = vmul.f32 %v4110, 0.05103104
        %v4147 = vmul.f32 %v4112, 0.05103104
        %v4148 = vmul.f32 %v4114, 0.05103104
        %v4149 = vmul.f32 %v4116, 0.05103104
        %v4150 = vadd.f32 %v4118, %v3900
        %v4151 = vadd.f32 %v4119, %v3901
        %v4152 = vadd.f32 %v4120, %v3902
        %v4153 = vadd.f32 %v4121, %v3903
        %v4154 = vadd.f32 %v4122, %v3904
        %v4155 = vadd.f32 %v4123, %v3905
        %v4156 = vadd.f32 %v4124, %v3906
        %v4157 = vadd.f32 %v4125, %v3907
        %v4158 = vadd.f32 %v4126, %v3908
        %v4159 = vadd.f32 %v4127, %v3909
        %v4160 = vadd.f32 %v4128, %v3910
        %v4161 = vadd.f32 %v4129, %v3911
        %v4162 = vadd.f32 %v4130, %v3912
        %v4163 = vadd.f32 %v4131, %v3913
        %v4164 = vadd.f32 %v4132, %v3914
        %v4165 = vadd.f32 %v4133, %v3915
        %v4166 = vadd.f32 %v4134, %v3916
        %v4167 = vadd.f32 %v4135, %v3917
        %v4168 = vadd.f32 %v4136, %v3918
        %v4169 = vadd.f32 %v4137, %v3919
        %v4170 = vadd.f32 %v4138, %v3920
        %v4171 = vadd.f32 %v4139, %v3921
        %v4172 = vadd.f32 %v4140, %v3922
        %v4173 = vadd.f32 %v4141, %v3923
        %v4174 = vadd.f32 %v4142, %v3924
        %v4175 = vadd.f32 %v4143, %v3925
        %v4176 = vadd.f32 %v4144, %v3926
        %v4177 = vadd.f32 %v4145, %v3927
        %v4178 = vadd.f32 %v4146, %v3928
        %v4179 = vadd.f32 %v4147, %v3929
        %v4180 = vadd.f32 %v4148, %v3930
        %v4181 = vadd.f32 %v4149, %v3931
        %v4182 = vmax.f32 %v4150, %v4151
        %4183 = vmax.xlane.f32.xlu0 %v4182
        %v4184 = vpop.xlane.xlu0 %4183
        %v4185 = vmax.f32 %v4152, %v4153
        %4186 = vmax.xlane.f32.xlu0 %v4185
        %v4187 = vpop.xlane.xlu0 %4186
        %v4188 = vmax.f32 %v4154, %v4155
        %4189 = vmax.xlane.f32.xlu0 %v4188
        %v4190 = vpop.xlane.xlu0 %4189
        %v4191 = vmax.f32 %v4156, %v4157
        %4192 = vmax.xlane.f32.xlu0 %v4191
        %v4193 = vpop.xlane.xlu0 %4192
        %v4194 = vmax.f32 %v4158, %v4159
        %4195 = vmax.xlane.f32.xlu0 %v4194
        %v4196 = vpop.xlane.xlu0 %4195
        %v4197 = vmax.f32 %v4160, %v4161
        %4198 = vmax.xlane.f32.xlu0 %v4197
        %v4199 = vpop.xlane.xlu0 %4198
        %v4200 = vmax.f32 %v4162, %v4163
        %4201 = vmax.xlane.f32.xlu0 %v4200
        %v4202 = vpop.xlane.xlu0 %4201
        %v4203 = vmax.f32 %v4164, %v4165
        %4204 = vmax.xlane.f32.xlu0 %v4203
        %v4205 = vpop.xlane.xlu0 %4204
        %v4206 = vmax.f32 %v4166, %v4167
        %4207 = vmax.xlane.f32.xlu0 %v4206
        %v4208 = vpop.xlane.xlu0 %4207
        %v4209 = vmax.f32 %v4168, %v4169
        %4210 = vmax.xlane.f32.xlu0 %v4209
        %v4211 = vpop.xlane.xlu0 %4210
        %v4212 = vmax.f32 %v4170, %v4171
        %4213 = vmax.xlane.f32.xlu0 %v4212
        %v4214 = vpop.xlane.xlu0 %4213
        %v4215 = vmax.f32 %v4172, %v4173
        %4216 = vmax.xlane.f32.xlu0 %v4215
        %v4217 = vpop.xlane.xlu0 %4216
        %v4218 = vmax.f32 %v4174, %v4175
        %4219 = vmax.xlane.f32.xlu0 %v4218
        %v4220 = vpop.xlane.xlu0 %4219
        %v4221 = vmax.f32 %v4176, %v4177
        %4222 = vmax.xlane.f32.xlu0 %v4221
        %v4223 = vpop.xlane.xlu0 %4222
        %v4224 = vmax.f32 %v4178, %v4179
        %4225 = vmax.xlane.f32.xlu0 %v4224
        %v4226 = vpop.xlane.xlu0 %4225
        %v4227 = vmax.f32 %v4180, %v4181
        %4228 = vmax.xlane.f32.xlu0 %v4227
        %v4229 = vpop.xlane.xlu0 %4228
        %v4230 = vsub.f32 %v4150, %v4184
        %v4231 = vsub.f32 %v4151, %v4184
        %v4232 = vsub.f32 %v4152, %v4187
        %v4233 = vsub.f32 %v4153, %v4187
        %v4234 = vsub.f32 %v4154, %v4190
        %v4235 = vsub.f32 %v4155, %v4190
        %v4236 = vsub.f32 %v4156, %v4193
        %v4237 = vsub.f32 %v4157, %v4193
        %v4238 = vsub.f32 %v4158, %v4196
        %v4239 = vsub.f32 %v4159, %v4196
        %v4240 = vsub.f32 %v4160, %v4199
        %v4241 = vsub.f32 %v4161, %v4199
        %v4242 = vsub.f32 %v4162, %v4202
        %v4243 = vsub.f32 %v4163, %v4202
        %v4244 = vsub.f32 %v4164, %v4205
        %v4245 = vsub.f32 %v4165, %v4205
        %v4246 = vsub.f32 %v4166, %v4208
        %v4247 = vsub.f32 %v4167, %v4208
        %v4248 = vsub.f32 %v4168, %v4211
        %v4249 = vsub.f32 %v4169, %v4211
        %v4250 = vsub.f32 %v4170, %v4214
        %v4251 = vsub.f32 %v4171, %v4214
        %v4252 = vsub.f32 %v4172, %v4217
        %v4253 = vsub.f32 %v4173, %v4217
        %v4254 = vsub.f32 %v4174, %v4220
        %v4255 = vsub.f32 %v4175, %v4220
        %v4256 = vsub.f32 %v4176, %v4223
        %v4257 = vsub.f32 %v4177, %v4223
        %v4258 = vsub.f32 %v4178, %v4226
        %v4259 = vsub.f32 %v4179, %v4226
        %v4260 = vsub.f32 %v4180, %v4229
        %v4261 = vsub.f32 %v4181, %v4229
        %v4262 = vmul.f32 %v4230, 1.442695
        %v4263 = vpow.pop %v4262
        %v4264 = vmul.f32 %v4231, 1.442695
        %v4265 = vpow.pop %v4264
        %v4266 = vmul.f32 %v4232, 1.442695
        %v4267 = vpow.pop %v4266
        %v4268 = vmul.f32 %v4233, 1.442695
        %v4269 = vpow.pop %v4268
        %v4270 = vmul.f32 %v4234, 1.442695
        %v4271 = vpow.pop %v4270
        %v4272 = vmul.f32 %v4235, 1.442695
        %v4273 = vpow.pop %v4272
        %v4274 = vmul.f32 %v4236, 1.442695
        %v4275 = vpow.pop %v4274
        %v4276 = vmul.f32 %v4237, 1.442695
        %v4277 = vpow.pop %v4276
        %v4278 = vmul.f32 %v4238, 1.442695
        %v4279 = vpow.pop %v4278
        %v4280 = vmul.f32 %v4239, 1.442695
        %v4281 = vpow.pop %v4280
        %v4282 = vmul.f32 %v4240, 1.442695
        %v4283 = vpow.pop %v4282
        %v4284 = vmul.f32 %v4241, 1.442695
        %v4285 = vpow.pop %v4284
        %v4286 = vmul.f32 %v4242, 1.442695
        %v4287 = vpow.pop %v4286
        %v4288 = vmul.f32 %v4243, 1.442695
        %v4289 = vpow.pop %v4288
        %v4290 = vmul.f32 %v4244, 1.442695
        %v4291 = vpow.pop %v4290
        %v4292 = vmul.f32 %v4245, 1.442695
        %v4293 = vpow.pop %v4292
        %v4294 = vmul.f32 %v4246, 1.442695
        %v4295 = vpow.pop %v4294
        %v4296 = vmul.f32 %v4247, 1.442695
        %v4297 = vpow.pop %v4296
        %v4298 = vmul.f32 %v4248, 1.442695
        %v4299 = vpow.pop %v4298
        %v4300 = vmul.f32 %v4249, 1.442695
        %v4301 = vpow.pop %v4300
        %v4302 = vmul.f32 %v4250, 1.442695
        %v4303 = vpow.pop %v4302
        %v4304 = vmul.f32 %v4251, 1.442695
        %v4305 = vpow.pop %v4304
        %v4306 = vmul.f32 %v4252, 1.442695
        %v4307 = vpow.pop %v4306
        %v4308 = vmul.f32 %v4253, 1.442695
        %v4309 = vpow.pop %v4308
        %v4310 = vmul.f32 %v4254, 1.442695
        %v4311 = vpow.pop %v4310
        %v4312 = vmul.f32 %v4255, 1.442695
        %v4313 = vpow.pop %v4312
        %v4314 = vmul.f32 %v4256, 1.442695
        %v4315 = vpow.pop %v4314
        %v4316 = vmul.f32 %v4257, 1.442695
        %v4317 = vpow.pop %v4316
        %v4318 = vmul.f32 %v4258, 1.442695
        %v4319 = vpow.pop %v4318
        %v4320 = vmul.f32 %v4259, 1.442695
        %v4321 = vpow.pop %v4320
        %v4322 = vmul.f32 %v4260, 1.442695
        %v4323 = vpow.pop %v4322
        %v4324 = vmul.f32 %v4261, 1.442695
        %v4325 = vpow.pop %v4324
        %v4326 = vadd.f32 %v4263, %v4265
        %4327 = vadd.xlane.f32.xlu0 %v4326
        %v4328 = vpop.xlane.xlu0 %4327
        %v4329 = vadd.f32 %v4267, %v4269
        %4330 = vadd.xlane.f32.xlu0 %v4329
        %v4331 = vpop.xlane.xlu0 %4330
        %v4332 = vadd.f32 %v4271, %v4273
        %4333 = vadd.xlane.f32.xlu0 %v4332
        %v4334 = vpop.xlane.xlu0 %4333
        %v4335 = vadd.f32 %v4275, %v4277
        %4336 = vadd.xlane.f32.xlu0 %v4335
        %v4337 = vpop.xlane.xlu0 %4336
        %v4338 = vadd.f32 %v4279, %v4281
        %4339 = vadd.xlane.f32.xlu0 %v4338
        %v4340 = vpop.xlane.xlu0 %4339
        %v4341 = vadd.f32 %v4283, %v4285
        %4342 = vadd.xlane.f32.xlu0 %v4341
        %v4343 = vpop.xlane.xlu0 %4342
        %v4344 = vadd.f32 %v4287, %v4289
        %4345 = vadd.xlane.f32.xlu0 %v4344
        %v4346 = vpop.xlane.xlu0 %4345
        %v4347 = vadd.f32 %v4291, %v4293
        %4348 = vadd.xlane.f32.xlu0 %v4347
        %v4349 = vpop.xlane.xlu0 %4348
        %v4350 = vadd.f32 %v4295, %v4297
        %4351 = vadd.xlane.f32.xlu0 %v4350
        %v4352 = vpop.xlane.xlu0 %4351
        %v4353 = vadd.f32 %v4299, %v4301
        %4354 = vadd.xlane.f32.xlu0 %v4353
        %v4355 = vpop.xlane.xlu0 %4354
        %v4356 = vadd.f32 %v4303, %v4305
        %4357 = vadd.xlane.f32.xlu0 %v4356
        %v4358 = vpop.xlane.xlu0 %4357
        %v4359 = vadd.f32 %v4307, %v4309
        %4360 = vadd.xlane.f32.xlu0 %v4359
        %v4361 = vpop.xlane.xlu0 %4360
        %v4362 = vadd.f32 %v4311, %v4313
        %4363 = vadd.xlane.f32.xlu0 %v4362
        %v4364 = vpop.xlane.xlu0 %4363
        %v4365 = vadd.f32 %v4315, %v4317
        %4366 = vadd.xlane.f32.xlu0 %v4365
        %v4367 = vpop.xlane.xlu0 %4366
        %v4368 = vadd.f32 %v4319, %v4321
        %4369 = vadd.xlane.f32.xlu0 %v4368
        %v4370 = vpop.xlane.xlu0 %4369
        %v4371 = vadd.f32 %v4323, %v4325
        %4372 = vadd.xlane.f32.xlu0 %v4371
        %v4373 = vpop.xlane.xlu0 %4372
        %v4374 = vpack.c.bf16 %v4267, %v4263
        %v4375 = vpack.c.bf16 %v4269, %v4265
        %v4376 = vpack.c.bf16 %v4275, %v4271
        %v4377 = vpack.c.bf16 %v4277, %v4273
        %v4378 = vpack.c.bf16 %v4283, %v4279
        %v4379 = vpack.c.bf16 %v4285, %v4281
        %v4380 = vpack.c.bf16 %v4291, %v4287
        %v4381 = vpack.c.bf16 %v4293, %v4289
        %v4382 = vpack.c.bf16 %v4299, %v4295
        %v4383 = vpack.c.bf16 %v4301, %v4297
        %v4384 = vpack.c.bf16 %v4307, %v4303
        %v4385 = vpack.c.bf16 %v4309, %v4305
        %v4386 = vpack.c.bf16 %v4315, %v4311
        %v4387 = vpack.c.bf16 %v4317, %v4313
        %v4388 = vpack.c.bf16 %v4323, %v4319
        %v4389 = vpack.c.bf16 %v4325, %v4321
        %4390 = vmatprep.subr.bf16.mxu0 0
        %4391 = vmatpush1.bf16.msra.mxu0 %v3783
        %4392 = vmatprep.subr.bf16.mxu0 0
        %4393 = vmatpush1.bf16.msra.mxu0 %v3786
        %4394 = vmatprep.subr.bf16.mxu0 0
        %4395 = vmatpush1.bf16.msra.mxu0 %v3789
        %4396 = vmatprep.subr.bf16.mxu0 0
        %4397 = vmatpush1.bf16.msra.mxu0 %v3792
        %4398 = vmatprep.subr.bf16.mxu0 0
        %4399 = vmatpush1.bf16.msra.mxu0 %v3795
        %4400 = vmatprep.subr.bf16.mxu0 0
        %4401 = vmatpush1.bf16.msra.mxu0 %v3798
        %4402 = vmatprep.subr.bf16.mxu0 0
        %4403 = vmatpush1.bf16.msra.mxu0 %v3801
        %4404 = vmatprep.subr.bf16.mxu0 0
        %4405 = vmatpush1.bf16.msra.mxu0 %v3804
        %4406 = vmatprep.subr.bf16.mxu0 0
        %4407 = vmatpush1.bf16.msra.mxu0 %v3807
        %4408 = vmatprep.subr.bf16.mxu0 0
        %4409 = vmatpush1.bf16.msra.mxu0 %v3810
        %4410 = vmatprep.subr.bf16.mxu0 0
        %4411 = vmatpush1.bf16.msra.mxu0 %v3813
        %4412 = vmatprep.subr.bf16.mxu0 0
        %4413 = vmatpush1.bf16.msra.mxu0 %v3816
        %4414 = vmatprep.subr.bf16.mxu0 0
        %4415 = vmatpush1.bf16.msra.mxu0 %v3819
        %4416 = vmatprep.subr.bf16.mxu0 0
        %4417 = vmatpush1.bf16.msra.mxu0 %v3822
        %4418 = vmatprep.subr.bf16.mxu0 0
        %4419 = vmatpush1.bf16.msra.mxu0 %v3825
        %4420 = vmatprep.subr.bf16.mxu0 0
        %4421 = vmatpush1.bf16.msra.mxu0 %v3828
        %4422 = vmatprep.mubr.bf16.mxu0 %v4375
        %4423 = vmatmul.mubr.bf16.gmra.mrb[0].mxu0 %v4374
        %v4424 = vpop.f32.mrb[0].mxu0
        %v4425 = vadd.f32 0.0, %v4424
        %v4426 = vpop.f32.mrb[0].mxu0
        %v4427 = vpop.f32.mrb[0].mxu0
        %v4428 = vadd.f32 0.0, %v4427
        %v4429 = vpop.f32.mrb[0].mxu0
        %4430 = vmatprep.mubr.bf16.mxu0 %v4377
        %4431 = vmatmul.mubr.bf16.gmra.mrb[0].mxu0 %v4376
        %v4432 = vpop.f32.mrb[0].mxu0
        %v4433 = vadd.f32 0.0, %v4432
        %v4434 = vpop.f32.mrb[0].mxu0
        %v4435 = vpop.f32.mrb[0].mxu0
        %v4436 = vadd.f32 0.0, %v4435
        %v4437 = vpop.f32.mrb[0].mxu0
        %4438 = vmatprep.mubr.bf16.mxu0 %v4379
        %4439 = vmatmul.mubr.bf16.gmra.mrb[0].mxu0 %v4378
        %v4440 = vpop.f32.mrb[0].mxu0
        %v4441 = vadd.f32 0.0, %v4440
        %v4442 = vpop.f32.mrb[0].mxu0
        %v4443 = vpop.f32.mrb[0].mxu0
        %v4444 = vadd.f32 0.0, %v4443
        %v4445 = vpop.f32.mrb[0].mxu0
        %4446 = vmatprep.mubr.bf16.mxu0 %v4381
        %4447 = vmatmul.mubr.bf16.gmra.mrb[0].mxu0 %v4380
        %v4448 = vpop.f32.mrb[0].mxu0
        %v4449 = vadd.f32 0.0, %v4448
        %v4450 = vpop.f32.mrb[0].mxu0
        %v4451 = vpop.f32.mrb[0].mxu0
        %v4452 = vadd.f32 0.0, %v4451
        %v4453 = vpop.f32.mrb[0].mxu0
        %4454 = vmatprep.mubr.bf16.mxu0 %v4383
        %4455 = vmatmul.mubr.bf16.gmra.mrb[0].mxu0 %v4382
        %v4456 = vpop.f32.mrb[0].mxu0
        %v4457 = vadd.f32 0.0, %v4456
        %v4458 = vpop.f32.mrb[0].mxu0
        %v4459 = vpop.f32.mrb[0].mxu0
        %v4460 = vadd.f32 0.0, %v4459
        %v4461 = vpop.f32.mrb[0].mxu0
        %4462 = vmatprep.mubr.bf16.mxu0 %v4385
        %4463 = vmatmul.mubr.bf16.gmra.mrb[0].mxu0 %v4384
        %v4464 = vpop.f32.mrb[0].mxu0
        %v4465 = vadd.f32 0.0, %v4464
        %v4466 = vpop.f32.mrb[0].mxu0
        %v4467 = vpop.f32.mrb[0].mxu0
        %v4468 = vadd.f32 0.0, %v4467
        %v4469 = vpop.f32.mrb[0].mxu0
        %4470 = vmatprep.mubr.bf16.mxu0 %v4387
        %4471 = vmatmul.mubr.bf16.gmra.mrb[0].mxu0 %v4386
        %v4472 = vpop.f32.mrb[0].mxu0
        %v4473 = vadd.f32 0.0, %v4472
        %v4474 = vpop.f32.mrb[0].mxu0
        %v4475 = vpop.f32.mrb[0].mxu0
        %v4476 = vadd.f32 0.0, %v4475
        %v4477 = vpop.f32.mrb[0].mxu0
        %4478 = vmatprep.mubr.bf16.mxu0 %v4389
        %4479 = vmatmul.mubr.bf16.gmra.mrb[0].mxu0 %v4388
        %v4480 = vpop.f32.mrb[0].mxu0
        %v4481 = vadd.f32 0.0, %v4480
        %v4482 = vpop.f32.mrb[0].mxu0
        %v4483 = vpop.f32.mrb[0].mxu0
        %v4484 = vadd.f32 0.0, %v4483
        %v4485 = vpop.f32.mrb[0].mxu0
        %4486 = vdwg.mxu0
        %v4487 = vrcp.pop %v4328
        %v4488 = vrcp.pop %v4331
        %v4489 = vrcp.pop %v4334
        %v4490 = vrcp.pop %v4337
        %v4491 = vrcp.pop %v4340
        %v4492 = vrcp.pop %v4343
        %v4493 = vrcp.pop %v4346
        %v4494 = vrcp.pop %v4349
        %v4495 = vrcp.pop %v4352
        %v4496 = vrcp.pop %v4355
        %v4497 = vrcp.pop %v4358
        %v4498 = vrcp.pop %v4361
        %v4499 = vrcp.pop %v4364
        %v4500 = vrcp.pop %v4367
        %v4501 = vrcp.pop %v4370
        %v4502 = vrcp.pop %v4373
        %v4503 = vmul.f32 %v4425, %v4487
        %v4504 = vmul.f32 %v4428, %v4488
        %v4505 = vmul.f32 %v4433, %v4489
        %v4506 = vmul.f32 %v4436, %v4490
        %v4507 = vmul.f32 %v4441, %v4491
        %v4508 = vmul.f32 %v4444, %v4492
        %v4509 = vmul.f32 %v4449, %v4493
        %v4510 = vmul.f32 %v4452, %v4494
        %v4511 = vmul.f32 %v4457, %v4495
        %v4512 = vmul.f32 %v4460, %v4496
        %v4513 = vmul.f32 %v4465, %v4497
        %v4514 = vmul.f32 %v4468, %v4498
        %v4515 = vmul.f32 %v4473, %v4499
        %v4516 = vmul.f32 %v4476, %v4500
        %v4517 = vmul.f32 %v4481, %v4501
        %v4518 = vmul.f32 %v4484, %v4502
        %4527 = vrot.lane.b32.xlu0 %v3711, 64
        %v4528 = vpop.permute.xlu0 %4527
        %4529 = vrot.lane.b32.xlu0 %v3714, 64
        %v4530 = vpop.permute.xlu0 %4529
        %4531 = vrot.lane.b32.xlu0 %v3717, 64
        %v4532 = vpop.permute.xlu0 %4531
        %4533 = vrot.lane.b32.xlu0 %v3720, 64
        %v4534 = vpop.permute.xlu0 %4533
        %4535 = vrot.lane.b32.xlu0 %v3723, 64
        %v4536 = vpop.permute.xlu0 %4535
        %4537 = vrot.lane.b32.xlu0 %v3726, 64
        %v4538 = vpop.permute.xlu0 %4537
        %4539 = vrot.lane.b32.xlu0 %v3729, 64
        %v4540 = vpop.permute.xlu0 %4539
        %4541 = vrot.lane.b32.xlu0 %v3732, 64
        %v4542 = vpop.permute.xlu0 %4541
        %4559 = vrot.lane.b32.xlu0 %v3735, 64
        %v4560 = vpop.permute.xlu0 %4559
        %4561 = vrot.lane.b32.xlu0 %v3738, 64
        %v4562 = vpop.permute.xlu0 %4561
        %4563 = vrot.lane.b32.xlu0 %v3741, 64
        %v4564 = vpop.permute.xlu0 %4563
        %4565 = vrot.lane.b32.xlu0 %v3744, 64
        %v4566 = vpop.permute.xlu0 %4565
        %4567 = vrot.lane.b32.xlu0 %v3747, 64
        %v4568 = vpop.permute.xlu0 %4567
        %4569 = vrot.lane.b32.xlu0 %v3750, 64
        %v4570 = vpop.permute.xlu0 %4569
        %4571 = vrot.lane.b32.xlu0 %v3753, 64
        %v4572 = vpop.permute.xlu0 %4571
        %4573 = vrot.lane.b32.xlu0 %v3756, 64
        %v4574 = vpop.permute.xlu0 %4573
        %4575 = vrot.lane.b32.xlu0 %v3759, 64
        %v4576 = vpop.permute.xlu0 %4575
        %4577 = vrot.lane.b32.xlu0 %v3762, 64
        %v4578 = vpop.permute.xlu0 %4577
        %4579 = vrot.lane.b32.xlu0 %v3765, 64
        %v4580 = vpop.permute.xlu0 %4579
        %4581 = vrot.lane.b32.xlu0 %v3768, 64
        %v4582 = vpop.permute.xlu0 %4581
        %4583 = vrot.lane.b32.xlu0 %v3771, 64
        %v4584 = vpop.permute.xlu0 %4583
        %4585 = vrot.lane.b32.xlu0 %v3774, 64
        %v4586 = vpop.permute.xlu0 %4585
        %4587 = vrot.lane.b32.xlu0 %v3777, 64
        %v4588 = vpop.permute.xlu0 %4587
        %4589 = vrot.lane.b32.xlu0 %v3780, 64
        %v4590 = vpop.permute.xlu0 %4589
        %v4592 = vsel %vm3932, %v4528, 0
        %v4595 = vsel %vm3932, %v4530, 0
        %v4598 = vsel %vm3932, %v4532, 0
        %v4601 = vsel %vm3932, %v4534, 0
        %v4604 = vsel %vm3932, %v4536, 0
        %v4607 = vsel %vm3932, %v4538, 0
        %v4610 = vsel %vm3932, %v4540, 0
        %v4613 = vsel %vm3932, %v4542, 0
        %v4616 = vsel %vm3932, %v4560, 0
        %v4619 = vsel %vm3932, %v4562, 0
        %v4622 = vsel %vm3932, %v4564, 0
        %v4625 = vsel %vm3932, %v4566, 0
        %v4628 = vsel %vm3932, %v4568, 0
        %v4631 = vsel %vm3932, %v4570, 0
        %v4634 = vsel %vm3932, %v4572, 0
        %v4637 = vsel %vm3932, %v4574, 0
        %v4640 = vsel %vm3932, %v4576, 0
        %v4643 = vsel %vm3932, %v4578, 0
        %v4646 = vsel %vm3932, %v4580, 0
        %v4649 = vsel %vm3932, %v4582, 0
        %v4652 = vsel %vm3932, %v4584, 0
        %v4655 = vsel %vm3932, %v4586, 0
        %v4658 = vsel %vm3932, %v4588, 0
        %v4661 = vsel %vm3932, %v4590, 0
        %4663 = vmatprep.subr.bf16.mxu0 0
        %4664 = vmatpush1.bf16.xpose.msra.mxu0 %v4616
        %4665 = vmatprep.subr.bf16.mxu0 0
        %4666 = vmatpush1.bf16.xpose.msra.mxu0 %v4619
        %4667 = vmatprep.subr.bf16.mxu0 0
        %4668 = vmatpush1.bf16.xpose.msra.mxu0 %v4622
        %4669 = vmatprep.subr.bf16.mxu0 0
        %4670 = vmatpush1.bf16.xpose.msra.mxu0 %v4625
        %4671 = vmatprep.subr.bf16.mxu0 0
        %4672 = vmatpush1.bf16.xpose.msra.mxu0 %v4628
        %4673 = vmatprep.subr.bf16.mxu0 0
        %4674 = vmatpush1.bf16.xpose.msra.mxu0 %v4631
        %4675 = vmatprep.subr.bf16.mxu0 0
        %4676 = vmatpush1.bf16.xpose.msra.mxu0 %v4634
        %4677 = vmatprep.subr.bf16.mxu0 0
        %4678 = vmatpush1.bf16.xpose.msra.mxu0 %v4637
        %4679 = vmatprep.subr.bf16.mxu0 0
        %4680 = vmatpush1.bf16.xpose.msra.mxu0 %v4640
        %4681 = vmatprep.subr.bf16.mxu0 0
        %4682 = vmatpush1.bf16.xpose.msra.mxu0 %v4643
        %4683 = vmatprep.subr.bf16.mxu0 0
        %4684 = vmatpush1.bf16.xpose.msra.mxu0 %v4646
        %4685 = vmatprep.subr.bf16.mxu0 0
        %4686 = vmatpush1.bf16.xpose.msra.mxu0 %v4649
        %4687 = vmatprep.subr.bf16.mxu0 0
        %4688 = vmatpush1.bf16.xpose.msra.mxu0 %v4652
        %4689 = vmatprep.subr.bf16.mxu0 0
        %4690 = vmatpush1.bf16.xpose.msra.mxu0 %v4655
        %4691 = vmatprep.subr.bf16.mxu0 0
        %4692 = vmatpush1.bf16.xpose.msra.mxu0 %v4658
        %4693 = vmatprep.subr.bf16.mxu0 0
        %4694 = vmatpush1.bf16.xpose.msra.mxu0 %v4661
        %4695 = vmatprep.mubr.bf16.mxu0 0
        %4696 = vmatmul.mubr.bf16.gmra.mrb[0].mxu0 %v4592
        %v4697 = vpop.f32.mrb[0].mxu0
        %v4698 = vadd.f32 0.0, %v4697
        %v4699 = vpop.f32.mrb[0].mxu0
        %v4700 = vadd.f32 0.0, %v4699
        %v4701 = vpop.f32.mrb[0].mxu0
        %v4702 = vadd.f32 0.0, %v4701
        %v4703 = vpop.f32.mrb[0].mxu0
        %v4704 = vadd.f32 0.0, %v4703
        %4705 = vmatprep.mubr.bf16.mxu0 0
        %4706 = vmatmul.mubr.bf16.gmra.mrb[0].mxu0 %v4595
        %v4707 = vpop.f32.mrb[0].mxu0
        %v4708 = vadd.f32 0.0, %v4707
        %v4709 = vpop.f32.mrb[0].mxu0
        %v4710 = vadd.f32 0.0, %v4709
        %v4711 = vpop.f32.mrb[0].mxu0
        %v4712 = vadd.f32 0.0, %v4711
        %v4713 = vpop.f32.mrb[0].mxu0
        %v4714 = vadd.f32 0.0, %v4713
        %4715 = vmatprep.mubr.bf16.mxu0 0
        %4716 = vmatmul.mubr.bf16.gmra.mrb[0].mxu0 %v4598
        %v4717 = vpop.f32.mrb[0].mxu0
        %v4718 = vadd.f32 0.0, %v4717
        %v4719 = vpop.f32.mrb[0].mxu0
        %v4720 = vadd.f32 0.0, %v4719
        %v4721 = vpop.f32.mrb[0].mxu0
        %v4722 = vadd.f32 0.0, %v4721
        %v4723 = vpop.f32.mrb[0].mxu0
        %v4724 = vadd.f32 0.0, %v4723
        %4725 = vmatprep.mubr.bf16.mxu0 0
        %4726 = vmatmul.mubr.bf16.gmra.mrb[0].mxu0 %v4601
        %v4727 = vpop.f32.mrb[0].mxu0
        %v4728 = vadd.f32 0.0, %v4727
        %v4729 = vpop.f32.mrb[0].mxu0
        %v4730 = vadd.f32 0.0, %v4729
        %v4731 = vpop.f32.mrb[0].mxu0
        %v4732 = vadd.f32 0.0, %v4731
        %v4733 = vpop.f32.mrb[0].mxu0
        %v4734 = vadd.f32 0.0, %v4733
        %4735 = vmatprep.mubr.bf16.mxu0 0
        %4736 = vmatmul.mubr.bf16.gmra.mrb[0].mxu0 %v4604
        %v4737 = vpop.f32.mrb[0].mxu0
        %v4738 = vadd.f32 0.0, %v4737
        %v4739 = vpop.f32.mrb[0].mxu0
        %v4740 = vadd.f32 0.0, %v4739
        %v4741 = vpop.f32.mrb[0].mxu0
        %v4742 = vadd.f32 0.0, %v4741
        %v4743 = vpop.f32.mrb[0].mxu0
        %v4744 = vadd.f32 0.0, %v4743
        %4745 = vmatprep.mubr.bf16.mxu0 0
        %4746 = vmatmul.mubr.bf16.gmra.mrb[0].mxu0 %v4607
        %v4747 = vpop.f32.mrb[0].mxu0
        %v4748 = vadd.f32 0.0, %v4747
        %v4749 = vpop.f32.mrb[0].mxu0
        %v4750 = vadd.f32 0.0, %v4749
        %v4751 = vpop.f32.mrb[0].mxu0
        %v4752 = vadd.f32 0.0, %v4751
        %v4753 = vpop.f32.mrb[0].mxu0
        %v4754 = vadd.f32 0.0, %v4753
        %4755 = vmatprep.mubr.bf16.mxu0 0
        %4756 = vmatmul.mubr.bf16.gmra.mrb[0].mxu0 %v4610
        %v4757 = vpop.f32.mrb[0].mxu0
        %v4758 = vadd.f32 0.0, %v4757
        %v4759 = vpop.f32.mrb[0].mxu0
        %v4760 = vadd.f32 0.0, %v4759
        %v4761 = vpop.f32.mrb[0].mxu0
        %v4762 = vadd.f32 0.0, %v4761
        %v4763 = vpop.f32.mrb[0].mxu0
        %v4764 = vadd.f32 0.0, %v4763
        %4765 = vmatprep.mubr.bf16.mxu0 0
        %4766 = vmatmul.mubr.bf16.gmra.mrb[0].mxu0 %v4613
        %v4767 = vpop.f32.mrb[0].mxu0
        %v4768 = vadd.f32 0.0, %v4767
        %v4769 = vpop.f32.mrb[0].mxu0
        %v4770 = vadd.f32 0.0, %v4769
        %v4771 = vpop.f32.mrb[0].mxu0
        %v4772 = vadd.f32 0.0, %v4771
        %v4773 = vpop.f32.mrb[0].mxu0
        %v4774 = vadd.f32 0.0, %v4773
        %4775 = vdwg.mxu0
        %v4776 = vmul.f32 %v4698, 0.05103104
        %v4777 = vmul.f32 %v4700, 0.05103104
        %v4778 = vmul.f32 %v4702, 0.05103104
        %v4779 = vmul.f32 %v4704, 0.05103104
        %v4780 = vmul.f32 %v4708, 0.05103104
        %v4781 = vmul.f32 %v4710, 0.05103104
        %v4782 = vmul.f32 %v4712, 0.05103104
        %v4783 = vmul.f32 %v4714, 0.05103104
        %v4784 = vmul.f32 %v4718, 0.05103104
        %v4785 = vmul.f32 %v4720, 0.05103104
        %v4786 = vmul.f32 %v4722, 0.05103104
        %v4787 = vmul.f32 %v4724, 0.05103104
        %v4788 = vmul.f32 %v4728, 0.05103104
        %v4789 = vmul.f32 %v4730, 0.05103104
        %v4790 = vmul.f32 %v4732, 0.05103104
        %v4791 = vmul.f32 %v4734, 0.05103104
        %v4792 = vmul.f32 %v4738, 0.05103104
        %v4793 = vmul.f32 %v4740, 0.05103104
        %v4794 = vmul.f32 %v4742, 0.05103104
        %v4795 = vmul.f32 %v4744, 0.05103104
        %v4796 = vmul.f32 %v4748, 0.05103104
        %v4797 = vmul.f32 %v4750, 0.05103104
        %v4798 = vmul.f32 %v4752, 0.05103104
        %v4799 = vmul.f32 %v4754, 0.05103104
        %v4800 = vmul.f32 %v4758, 0.05103104
        %v4801 = vmul.f32 %v4760, 0.05103104
        %v4802 = vmul.f32 %v4762, 0.05103104
        %v4803 = vmul.f32 %v4764, 0.05103104
        %v4804 = vmul.f32 %v4768, 0.05103104
        %v4805 = vmul.f32 %v4770, 0.05103104
        %v4806 = vmul.f32 %v4772, 0.05103104
        %v4807 = vmul.f32 %v4774, 0.05103104
        %v4808 = vadd.f32 %v4776, %v3900
        %v4809 = vadd.f32 %v4777, %v3901
        %v4810 = vadd.f32 %v4778, %v3902
        %v4811 = vadd.f32 %v4779, %v3903
        %v4812 = vadd.f32 %v4780, %v3904
        %v4813 = vadd.f32 %v4781, %v3905
        %v4814 = vadd.f32 %v4782, %v3906
        %v4815 = vadd.f32 %v4783, %v3907
        %v4816 = vadd.f32 %v4784, %v3908
        %v4817 = vadd.f32 %v4785, %v3909
        %v4818 = vadd.f32 %v4786, %v3910
        %v4819 = vadd.f32 %v4787, %v3911
        %v4820 = vadd.f32 %v4788, %v3912
        %v4821 = vadd.f32 %v4789, %v3913
        %v4822 = vadd.f32 %v4790, %v3914
        %v4823 = vadd.f32 %v4791, %v3915
        %v4824 = vadd.f32 %v4792, %v3916
        %v4825 = vadd.f32 %v4793, %v3917
        %v4826 = vadd.f32 %v4794, %v3918
        %v4827 = vadd.f32 %v4795, %v3919
        %v4828 = vadd.f32 %v4796, %v3920
        %v4829 = vadd.f32 %v4797, %v3921
        %v4830 = vadd.f32 %v4798, %v3922
        %v4831 = vadd.f32 %v4799, %v3923
        %v4832 = vadd.f32 %v4800, %v3924
        %v4833 = vadd.f32 %v4801, %v3925
        %v4834 = vadd.f32 %v4802, %v3926
        %v4835 = vadd.f32 %v4803, %v3927
        %v4836 = vadd.f32 %v4804, %v3928
        %v4837 = vadd.f32 %v4805, %v3929
        %v4838 = vadd.f32 %v4806, %v3930
        %v4839 = vadd.f32 %v4807, %v3931
        %v4840 = vmax.f32 %v4808, %v4809
        %4841 = vmax.xlane.f32.xlu0 %v4840
        %v4842 = vpop.xlane.xlu0 %4841
        %v4843 = vmax.f32 %v4810, %v4811
        %4844 = vmax.xlane.f32.xlu0 %v4843
        %v4845 = vpop.xlane.xlu0 %4844
        %v4846 = vmax.f32 %v4812, %v4813
        %4847 = vmax.xlane.f32.xlu0 %v4846
        %v4848 = vpop.xlane.xlu0 %4847
        %v4849 = vmax.f32 %v4814, %v4815
        %4850 = vmax.xlane.f32.xlu0 %v4849
        %v4851 = vpop.xlane.xlu0 %4850
        %v4852 = vmax.f32 %v4816, %v4817
        %4853 = vmax.xlane.f32.xlu0 %v4852
        %v4854 = vpop.xlane.xlu0 %4853
        %v4855 = vmax.f32 %v4818, %v4819
        %4856 = vmax.xlane.f32.xlu0 %v4855
        %v4857 = vpop.xlane.xlu0 %4856
        %v4858 = vmax.f32 %v4820, %v4821
        %4859 = vmax.xlane.f32.xlu0 %v4858
        %v4860 = vpop.xlane.xlu0 %4859
        %v4861 = vmax.f32 %v4822, %v4823
        %4862 = vmax.xlane.f32.xlu0 %v4861
        %v4863 = vpop.xlane.xlu0 %4862
        %v4864 = vmax.f32 %v4824, %v4825
        %4865 = vmax.xlane.f32.xlu0 %v4864
        %v4866 = vpop.xlane.xlu0 %4865
        %v4867 = vmax.f32 %v4826, %v4827
        %4868 = vmax.xlane.f32.xlu0 %v4867
        %v4869 = vpop.xlane.xlu0 %4868
        %v4870 = vmax.f32 %v4828, %v4829
        %4871 = vmax.xlane.f32.xlu0 %v4870
        %v4872 = vpop.xlane.xlu0 %4871
        %v4873 = vmax.f32 %v4830, %v4831
        %4874 = vmax.xlane.f32.xlu0 %v4873
        %v4875 = vpop.xlane.xlu0 %4874
        %v4876 = vmax.f32 %v4832, %v4833
        %4877 = vmax.xlane.f32.xlu0 %v4876
        %v4878 = vpop.xlane.xlu0 %4877
        %v4879 = vmax.f32 %v4834, %v4835
        %4880 = vmax.xlane.f32.xlu0 %v4879
        %v4881 = vpop.xlane.xlu0 %4880
        %v4882 = vmax.f32 %v4836, %v4837
        %4883 = vmax.xlane.f32.xlu0 %v4882
        %v4884 = vpop.xlane.xlu0 %4883
        %v4885 = vmax.f32 %v4838, %v4839
        %4886 = vmax.xlane.f32.xlu0 %v4885
        %v4887 = vpop.xlane.xlu0 %4886
        %v4888 = vsub.f32 %v4808, %v4842
        %v4889 = vsub.f32 %v4809, %v4842
        %v4890 = vsub.f32 %v4810, %v4845
        %v4891 = vsub.f32 %v4811, %v4845
        %v4892 = vsub.f32 %v4812, %v4848
        %v4893 = vsub.f32 %v4813, %v4848
        %v4894 = vsub.f32 %v4814, %v4851
        %v4895 = vsub.f32 %v4815, %v4851
        %v4896 = vsub.f32 %v4816, %v4854
        %v4897 = vsub.f32 %v4817, %v4854
        %v4898 = vsub.f32 %v4818, %v4857
        %v4899 = vsub.f32 %v4819, %v4857
        %v4900 = vsub.f32 %v4820, %v4860
        %v4901 = vsub.f32 %v4821, %v4860
        %v4902 = vsub.f32 %v4822, %v4863
        %v4903 = vsub.f32 %v4823, %v4863
        %v4904 = vsub.f32 %v4824, %v4866
        %v4905 = vsub.f32 %v4825, %v4866
        %v4906 = vsub.f32 %v4826, %v4869
        %v4907 = vsub.f32 %v4827, %v4869
        %v4908 = vsub.f32 %v4828, %v4872
        %v4909 = vsub.f32 %v4829, %v4872
        %v4910 = vsub.f32 %v4830, %v4875
        %v4911 = vsub.f32 %v4831, %v4875
        %v4912 = vsub.f32 %v4832, %v4878
        %v4913 = vsub.f32 %v4833, %v4878
        %v4914 = vsub.f32 %v4834, %v4881
        %v4915 = vsub.f32 %v4835, %v4881
        %v4916 = vsub.f32 %v4836, %v4884
        %v4917 = vsub.f32 %v4837, %v4884
        %v4918 = vsub.f32 %v4838, %v4887
        %v4919 = vsub.f32 %v4839, %v4887
        %v4920 = vmul.f32 %v4888, 1.442695
        %v4921 = vpow.pop %v4920
        %v4922 = vmul.f32 %v4889, 1.442695
        %v4923 = vpow.pop %v4922
        %v4924 = vmul.f32 %v4890, 1.442695
        %v4925 = vpow.pop %v4924
        %v4926 = vmul.f32 %v4891, 1.442695
        %v4927 = vpow.pop %v4926
        %v4928 = vmul.f32 %v4892, 1.442695
        %v4929 = vpow.pop %v4928
        %v4930 = vmul.f32 %v4893, 1.442695
        %v4931 = vpow.pop %v4930
        %v4932 = vmul.f32 %v4894, 1.442695
        %v4933 = vpow.pop %v4932
        %v4934 = vmul.f32 %v4895, 1.442695
        %v4935 = vpow.pop %v4934
        %v4936 = vmul.f32 %v4896, 1.442695
        %v4937 = vpow.pop %v4936
        %v4938 = vmul.f32 %v4897, 1.442695
        %v4939 = vpow.pop %v4938
        %v4940 = vmul.f32 %v4898, 1.442695
        %v4941 = vpow.pop %v4940
        %v4942 = vmul.f32 %v4899, 1.442695
        %v4943 = vpow.pop %v4942
        %v4944 = vmul.f32 %v4900, 1.442695
        %v4945 = vpow.pop %v4944
        %v4946 = vmul.f32 %v4901, 1.442695
        %v4947 = vpow.pop %v4946
        %v4948 = vmul.f32 %v4902, 1.442695
        %v4949 = vpow.pop %v4948
        %v4950 = vmul.f32 %v4903, 1.442695
        %v4951 = vpow.pop %v4950
        %v4952 = vmul.f32 %v4904, 1.442695
        %v4953 = vpow.pop %v4952
        %v4954 = vmul.f32 %v4905, 1.442695
        %v4955 = vpow.pop %v4954
        %v4956 = vmul.f32 %v4906, 1.442695
        %v4957 = vpow.pop %v4956
        %v4958 = vmul.f32 %v4907, 1.442695
        %v4959 = vpow.pop %v4958
        %v4960 = vmul.f32 %v4908, 1.442695
        %v4961 = vpow.pop %v4960
        %v4962 = vmul.f32 %v4909, 1.442695
        %v4963 = vpow.pop %v4962
        %v4964 = vmul.f32 %v4910, 1.442695
        %v4965 = vpow.pop %v4964
        %v4966 = vmul.f32 %v4911, 1.442695
        %v4967 = vpow.pop %v4966
        %v4968 = vmul.f32 %v4912, 1.442695
        %v4969 = vpow.pop %v4968
        %v4970 = vmul.f32 %v4913, 1.442695
        %v4971 = vpow.pop %v4970
        %v4972 = vmul.f32 %v4914, 1.442695
        %v4973 = vpow.pop %v4972
        %v4974 = vmul.f32 %v4915, 1.442695
        %v4975 = vpow.pop %v4974
        %v4976 = vmul.f32 %v4916, 1.442695
        %v4977 = vpow.pop %v4976
        %v4978 = vmul.f32 %v4917, 1.442695
        %v4979 = vpow.pop %v4978
        %v4980 = vmul.f32 %v4918, 1.442695
        %v4981 = vpow.pop %v4980
        %v4982 = vmul.f32 %v4919, 1.442695
        %v4983 = vpow.pop %v4982
        %v4984 = vadd.f32 %v4921, %v4923
        %4985 = vadd.xlane.f32.xlu0 %v4984
        %v4986 = vpop.xlane.xlu0 %4985
        %v4987 = vadd.f32 %v4925, %v4927
        %4988 = vadd.xlane.f32.xlu0 %v4987
        %v4989 = vpop.xlane.xlu0 %4988
        %v4990 = vadd.f32 %v4929, %v4931
        %4991 = vadd.xlane.f32.xlu0 %v4990
        %v4992 = vpop.xlane.xlu0 %4991
        %v4993 = vadd.f32 %v4933, %v4935
        %4994 = vadd.xlane.f32.xlu0 %v4993
        %v4995 = vpop.xlane.xlu0 %4994
        %v4996 = vadd.f32 %v4937, %v4939
        %4997 = vadd.xlane.f32.xlu0 %v4996
        %v4998 = vpop.xlane.xlu0 %4997
        %v4999 = vadd.f32 %v4941, %v4943
        %5000 = vadd.xlane.f32.xlu0 %v4999
        %v5001 = vpop.xlane.xlu0 %5000
        %v5002 = vadd.f32 %v4945, %v4947
        %5003 = vadd.xlane.f32.xlu0 %v5002
        %v5004 = vpop.xlane.xlu0 %5003
        %v5005 = vadd.f32 %v4949, %v4951
        %5006 = vadd.xlane.f32.xlu0 %v5005
        %v5007 = vpop.xlane.xlu0 %5006
        %v5008 = vadd.f32 %v4953, %v4955
        %5009 = vadd.xlane.f32.xlu0 %v5008
        %v5010 = vpop.xlane.xlu0 %5009
        %v5011 = vadd.f32 %v4957, %v4959
        %5012 = vadd.xlane.f32.xlu0 %v5011
        %v5013 = vpop.xlane.xlu0 %5012
        %v5014 = vadd.f32 %v4961, %v4963
        %5015 = vadd.xlane.f32.xlu0 %v5014
        %v5016 = vpop.xlane.xlu0 %5015
        %v5017 = vadd.f32 %v4965, %v4967
        %5018 = vadd.xlane.f32.xlu0 %v5017
        %v5019 = vpop.xlane.xlu0 %5018
        %v5020 = vadd.f32 %v4969, %v4971
        %5021 = vadd.xlane.f32.xlu0 %v5020
        %v5022 = vpop.xlane.xlu0 %5021
        %v5023 = vadd.f32 %v4973, %v4975
        %5024 = vadd.xlane.f32.xlu0 %v5023
        %v5025 = vpop.xlane.xlu0 %5024
        %v5026 = vadd.f32 %v4977, %v4979
        %5027 = vadd.xlane.f32.xlu0 %v5026
        %v5028 = vpop.xlane.xlu0 %5027
        %v5029 = vadd.f32 %v4981, %v4983
        %5030 = vadd.xlane.f32.xlu0 %v5029
        %v5031 = vpop.xlane.xlu0 %5030
        %v5032 = vpack.c.bf16 %v4925, %v4921
        %v5033 = vpack.c.bf16 %v4927, %v4923
        %v5034 = vpack.c.bf16 %v4933, %v4929
        %v5035 = vpack.c.bf16 %v4935, %v4931
        %v5036 = vpack.c.bf16 %v4941, %v4937
        %v5037 = vpack.c.bf16 %v4943, %v4939
        %v5038 = vpack.c.bf16 %v4949, %v4945
        %v5039 = vpack.c.bf16 %v4951, %v4947
        %v5040 = vpack.c.bf16 %v4957, %v4953
        %v5041 = vpack.c.bf16 %v4959, %v4955
        %v5042 = vpack.c.bf16 %v4965, %v4961
        %v5043 = vpack.c.bf16 %v4967, %v4963
        %v5044 = vpack.c.bf16 %v4973, %v4969
        %v5045 = vpack.c.bf16 %v4975, %v4971
        %v5046 = vpack.c.bf16 %v4981, %v4977
        %v5047 = vpack.c.bf16 %v4983, %v4979
        %5064 = vrot.lane.b32.xlu0 %v3783, 64
        %v5065 = vpop.permute.xlu0 %5064
        %5066 = vrot.lane.b32.xlu0 %v3786, 64
        %v5067 = vpop.permute.xlu0 %5066
        %5068 = vrot.lane.b32.xlu0 %v3789, 64
        %v5069 = vpop.permute.xlu0 %5068
        %5070 = vrot.lane.b32.xlu0 %v3792, 64
        %v5071 = vpop.permute.xlu0 %5070
        %5072 = vrot.lane.b32.xlu0 %v3795, 64
        %v5073 = vpop.permute.xlu0 %5072
        %5074 = vrot.lane.b32.xlu0 %v3798, 64
        %v5075 = vpop.permute.xlu0 %5074
        %5076 = vrot.lane.b32.xlu0 %v3801, 64
        %v5077 = vpop.permute.xlu0 %5076
        %5078 = vrot.lane.b32.xlu0 %v3804, 64
        %v5079 = vpop.permute.xlu0 %5078
        %5080 = vrot.lane.b32.xlu0 %v3807, 64
        %v5081 = vpop.permute.xlu0 %5080
        %5082 = vrot.lane.b32.xlu0 %v3810, 64
        %v5083 = vpop.permute.xlu0 %5082
        %5084 = vrot.lane.b32.xlu0 %v3813, 64
        %v5085 = vpop.permute.xlu0 %5084
        %5086 = vrot.lane.b32.xlu0 %v3816, 64
        %v5087 = vpop.permute.xlu0 %5086
        %5088 = vrot.lane.b32.xlu0 %v3819, 64
        %v5089 = vpop.permute.xlu0 %5088
        %5090 = vrot.lane.b32.xlu0 %v3822, 64
        %v5091 = vpop.permute.xlu0 %5090
        %5092 = vrot.lane.b32.xlu0 %v3825, 64
        %v5093 = vpop.permute.xlu0 %5092
        %5094 = vrot.lane.b32.xlu0 %v3828, 64
        %v5095 = vpop.permute.xlu0 %5094
        %5112 = vmatprep.subr.bf16.mxu0 0
        %5113 = vmatpush1.bf16.msra.mxu0 %v5065
        %5114 = vmatprep.subr.bf16.mxu0 0
        %5115 = vmatpush1.bf16.msra.mxu0 %v5067
        %5116 = vmatprep.subr.bf16.mxu0 0
        %5117 = vmatpush1.bf16.msra.mxu0 %v5069
        %5118 = vmatprep.subr.bf16.mxu0 0
        %5119 = vmatpush1.bf16.msra.mxu0 %v5071
        %5120 = vmatprep.subr.bf16.mxu0 0
        %5121 = vmatpush1.bf16.msra.mxu0 %v5073
        %5122 = vmatprep.subr.bf16.mxu0 0
        %5123 = vmatpush1.bf16.msra.mxu0 %v5075
        %5124 = vmatprep.subr.bf16.mxu0 0
        %5125 = vmatpush1.bf16.msra.mxu0 %v5077
        %5126 = vmatprep.subr.bf16.mxu0 0
        %5127 = vmatpush1.bf16.msra.mxu0 %v5079
        %5128 = vmatprep.subr.bf16.mxu0 0
        %5129 = vmatpush1.bf16.msra.mxu0 %v5081
        %5130 = vmatprep.subr.bf16.mxu0 0
        %5131 = vmatpush1.bf16.msra.mxu0 %v5083
        %5132 = vmatprep.subr.bf16.mxu0 0
        %5133 = vmatpush1.bf16.msra.mxu0 %v5085
        %5134 = vmatprep.subr.bf16.mxu0 0
        %5135 = vmatpush1.bf16.msra.mxu0 %v5087
        %5136 = vmatprep.subr.bf16.mxu0 0
        %5137 = vmatpush1.bf16.msra.mxu0 %v5089
        %5138 = vmatprep.subr.bf16.mxu0 0
        %5139 = vmatpush1.bf16.msra.mxu0 %v5091
        %5140 = vmatprep.subr.bf16.mxu0 0
        %5141 = vmatpush1.bf16.msra.mxu0 %v5093
        %5142 = vmatprep.subr.bf16.mxu0 0
        %5143 = vmatpush1.bf16.msra.mxu0 %v5095
        %5144 = vmatprep.mubr.bf16.mxu0 %v5033
        %5145 = vmatmul.mubr.bf16.gmra.mrb[0].mxu0 %v5032
        %v5146 = vpop.f32.mrb[0].mxu0
        %v5147 = vadd.f32 0.0, %v5146
        %v5148 = vpop.f32.mrb[0].mxu0
        %v5149 = vpop.f32.mrb[0].mxu0
        %v5150 = vadd.f32 0.0, %v5149
        %v5151 = vpop.f32.mrb[0].mxu0
        %5152 = vmatprep.mubr.bf16.mxu0 %v5035
        %5153 = vmatmul.mubr.bf16.gmra.mrb[0].mxu0 %v5034
        %v5154 = vpop.f32.mrb[0].mxu0
        %v5155 = vadd.f32 0.0, %v5154
        %v5156 = vpop.f32.mrb[0].mxu0
        %v5157 = vpop.f32.mrb[0].mxu0
        %v5158 = vadd.f32 0.0, %v5157
        %v5159 = vpop.f32.mrb[0].mxu0
        %5160 = vmatprep.mubr.bf16.mxu0 %v5037
        %5161 = vmatmul.mubr.bf16.gmra.mrb[0].mxu0 %v5036
        %v5162 = vpop.f32.mrb[0].mxu0
        %v5163 = vadd.f32 0.0, %v5162
        %v5164 = vpop.f32.mrb[0].mxu0
        %v5165 = vpop.f32.mrb[0].mxu0
        %v5166 = vadd.f32 0.0, %v5165
        %v5167 = vpop.f32.mrb[0].mxu0
        %5168 = vmatprep.mubr.bf16.mxu0 %v5039
        %5169 = vmatmul.mubr.bf16.gmra.mrb[0].mxu0 %v5038
        %v5170 = vpop.f32.mrb[0].mxu0
        %v5171 = vadd.f32 0.0, %v5170
        %v5172 = vpop.f32.mrb[0].mxu0
        %v5173 = vpop.f32.mrb[0].mxu0
        %v5174 = vadd.f32 0.0, %v5173
        %v5175 = vpop.f32.mrb[0].mxu0
        %5176 = vmatprep.mubr.bf16.mxu0 %v5041
        %5177 = vmatmul.mubr.bf16.gmra.mrb[0].mxu0 %v5040
        %v5178 = vpop.f32.mrb[0].mxu0
        %v5179 = vadd.f32 0.0, %v5178
        %v5180 = vpop.f32.mrb[0].mxu0
        %v5181 = vpop.f32.mrb[0].mxu0
        %v5182 = vadd.f32 0.0, %v5181
        %v5183 = vpop.f32.mrb[0].mxu0
        %5184 = vmatprep.mubr.bf16.mxu0 %v5043
        %5185 = vmatmul.mubr.bf16.gmra.mrb[0].mxu0 %v5042
        %v5186 = vpop.f32.mrb[0].mxu0
        %v5187 = vadd.f32 0.0, %v5186
        %v5188 = vpop.f32.mrb[0].mxu0
        %v5189 = vpop.f32.mrb[0].mxu0
        %v5190 = vadd.f32 0.0, %v5189
        %v5191 = vpop.f32.mrb[0].mxu0
        %5192 = vmatprep.mubr.bf16.mxu0 %v5045
        %5193 = vmatmul.mubr.bf16.gmra.mrb[0].mxu0 %v5044
        %v5194 = vpop.f32.mrb[0].mxu0
        %v5195 = vadd.f32 0.0, %v5194
        %v5196 = vpop.f32.mrb[0].mxu0
        %v5197 = vpop.f32.mrb[0].mxu0
        %v5198 = vadd.f32 0.0, %v5197
        %v5199 = vpop.f32.mrb[0].mxu0
        %5200 = vmatprep.mubr.bf16.mxu0 %v5047
        %5201 = vmatmul.mubr.bf16.gmra.mrb[0].mxu0 %v5046
        %v5202 = vpop.f32.mrb[0].mxu0
        %v5203 = vadd.f32 0.0, %v5202
        %v5204 = vpop.f32.mrb[0].mxu0
        %v5205 = vpop.f32.mrb[0].mxu0
        %v5206 = vadd.f32 0.0, %v5205
        %v5207 = vpop.f32.mrb[0].mxu0
        %5208 = vdwg.mxu0
        %v5209 = vrcp.pop %v4986
        %v5210 = vrcp.pop %v4989
        %v5211 = vrcp.pop %v4992
        %v5212 = vrcp.pop %v4995
        %v5213 = vrcp.pop %v4998
        %v5214 = vrcp.pop %v5001
        %v5215 = vrcp.pop %v5004
        %v5216 = vrcp.pop %v5007
        %v5217 = vrcp.pop %v5010
        %v5218 = vrcp.pop %v5013
        %v5219 = vrcp.pop %v5016
        %v5220 = vrcp.pop %v5019
        %v5221 = vrcp.pop %v5022
        %v5222 = vrcp.pop %v5025
        %v5223 = vrcp.pop %v5028
        %v5224 = vrcp.pop %v5031
        %v5225 = vmul.f32 %v5147, %v5209
        %v5226 = vmul.f32 %v5150, %v5210
        %v5227 = vmul.f32 %v5155, %v5211
        %v5228 = vmul.f32 %v5158, %v5212
        %v5229 = vmul.f32 %v5163, %v5213
        %v5230 = vmul.f32 %v5166, %v5214
        %v5231 = vmul.f32 %v5171, %v5215
        %v5232 = vmul.f32 %v5174, %v5216
        %v5233 = vmul.f32 %v5179, %v5217
        %v5234 = vmul.f32 %v5182, %v5218
        %v5235 = vmul.f32 %v5187, %v5219
        %v5236 = vmul.f32 %v5190, %v5220
        %v5237 = vmul.f32 %v5195, %v5221
        %v5238 = vmul.f32 %v5198, %v5222
        %v5239 = vmul.f32 %v5203, %v5223
        %v5240 = vmul.f32 %v5206, %v5224
        %v5242 = vsel %vm3932, %v3712, 0
        %v5245 = vsel %vm3932, %v3715, 0
        %v5248 = vsel %vm3932, %v3718, 0
        %v5251 = vsel %vm3932, %v3721, 0
        %v5254 = vsel %vm3932, %v3724, 0
        %v5257 = vsel %vm3932, %v3727, 0
        %v5260 = vsel %vm3932, %v3730, 0
        %v5263 = vsel %vm3932, %v3733, 0
        %v5266 = vsel %vm3932, %v3736, 0
        %v5269 = vsel %vm3932, %v3739, 0
        %v5272 = vsel %vm3932, %v3742, 0
        %v5275 = vsel %vm3932, %v3745, 0
        %v5278 = vsel %vm3932, %v3748, 0
        %v5281 = vsel %vm3932, %v3751, 0
        %v5284 = vsel %vm3932, %v3754, 0
        %v5287 = vsel %vm3932, %v3757, 0
        %v5290 = vsel %vm3932, %v3760, 0
        %v5293 = vsel %vm3932, %v3763, 0
        %v5296 = vsel %vm3932, %v3766, 0
        %v5299 = vsel %vm3932, %v3769, 0
        %v5302 = vsel %vm3932, %v3772, 0
        %v5305 = vsel %vm3932, %v3775, 0
        %v5308 = vsel %vm3932, %v3778, 0
        %v5311 = vsel %vm3932, %v3781, 0
        %5313 = vmatprep.subr.bf16.mxu0 0
        %5314 = vmatpush1.bf16.xpose.msra.mxu0 %v5266
        %5315 = vmatprep.subr.bf16.mxu0 0
        %5316 = vmatpush1.bf16.xpose.msra.mxu0 %v5269
        %5317 = vmatprep.subr.bf16.mxu0 0
        %5318 = vmatpush1.bf16.xpose.msra.mxu0 %v5272
        %5319 = vmatprep.subr.bf16.mxu0 0
        %5320 = vmatpush1.bf16.xpose.msra.mxu0 %v5275
        %5321 = vmatprep.subr.bf16.mxu0 0
        %5322 = vmatpush1.bf16.xpose.msra.mxu0 %v5278
        %5323 = vmatprep.subr.bf16.mxu0 0
        %5324 = vmatpush1.bf16.xpose.msra.mxu0 %v5281
        %5325 = vmatprep.subr.bf16.mxu0 0
        %5326 = vmatpush1.bf16.xpose.msra.mxu0 %v5284
        %5327 = vmatprep.subr.bf16.mxu0 0
        %5328 = vmatpush1.bf16.xpose.msra.mxu0 %v5287
        %5329 = vmatprep.subr.bf16.mxu0 0
        %5330 = vmatpush1.bf16.xpose.msra.mxu0 %v5290
        %5331 = vmatprep.subr.bf16.mxu0 0
        %5332 = vmatpush1.bf16.xpose.msra.mxu0 %v5293
        %5333 = vmatprep.subr.bf16.mxu0 0
        %5334 = vmatpush1.bf16.xpose.msra.mxu0 %v5296
        %5335 = vmatprep.subr.bf16.mxu0 0
        %5336 = vmatpush1.bf16.xpose.msra.mxu0 %v5299
        %5337 = vmatprep.subr.bf16.mxu0 0
        %5338 = vmatpush1.bf16.xpose.msra.mxu0 %v5302
        %5339 = vmatprep.subr.bf16.mxu0 0
        %5340 = vmatpush1.bf16.xpose.msra.mxu0 %v5305
        %5341 = vmatprep.subr.bf16.mxu0 0
        %5342 = vmatpush1.bf16.xpose.msra.mxu0 %v5308
        %5343 = vmatprep.subr.bf16.mxu0 0
        %5344 = vmatpush1.bf16.xpose.msra.mxu0 %v5311
        %5345 = vmatprep.mubr.bf16.mxu0 0
        %5346 = vmatmul.mubr.bf16.gmra.mrb[0].mxu0 %v5242
        %v5347 = vpop.f32.mrb[0].mxu0
        %v5348 = vadd.f32 0.0, %v5347
        %v5349 = vpop.f32.mrb[0].mxu0
        %v5350 = vadd.f32 0.0, %v5349
        %v5351 = vpop.f32.mrb[0].mxu0
        %v5352 = vadd.f32 0.0, %v5351
        %v5353 = vpop.f32.mrb[0].mxu0
        %v5354 = vadd.f32 0.0, %v5353
        %5355 = vmatprep.mubr.bf16.mxu0 0
        %5356 = vmatmul.mubr.bf16.gmra.mrb[0].mxu0 %v5245
        %v5357 = vpop.f32.mrb[0].mxu0
        %v5358 = vadd.f32 0.0, %v5357
        %v5359 = vpop.f32.mrb[0].mxu0
        %v5360 = vadd.f32 0.0, %v5359
        %v5361 = vpop.f32.mrb[0].mxu0
        %v5362 = vadd.f32 0.0, %v5361
        %v5363 = vpop.f32.mrb[0].mxu0
        %v5364 = vadd.f32 0.0, %v5363
        %5365 = vmatprep.mubr.bf16.mxu0 0
        %5366 = vmatmul.mubr.bf16.gmra.mrb[0].mxu0 %v5248
        %v5367 = vpop.f32.mrb[0].mxu0
        %v5368 = vadd.f32 0.0, %v5367
        %v5369 = vpop.f32.mrb[0].mxu0
        %v5370 = vadd.f32 0.0, %v5369
        %v5371 = vpop.f32.mrb[0].mxu0
        %v5372 = vadd.f32 0.0, %v5371
        %v5373 = vpop.f32.mrb[0].mxu0
        %v5374 = vadd.f32 0.0, %v5373
        %5375 = vmatprep.mubr.bf16.mxu0 0
        %5376 = vmatmul.mubr.bf16.gmra.mrb[0].mxu0 %v5251
        %v5377 = vpop.f32.mrb[0].mxu0
        %v5378 = vadd.f32 0.0, %v5377
        %v5379 = vpop.f32.mrb[0].mxu0
        %v5380 = vadd.f32 0.0, %v5379
        %v5381 = vpop.f32.mrb[0].mxu0
        %v5382 = vadd.f32 0.0, %v5381
        %v5383 = vpop.f32.mrb[0].mxu0
        %v5384 = vadd.f32 0.0, %v5383
        %5385 = vmatprep.mubr.bf16.mxu0 0
        %5386 = vmatmul.mubr.bf16.gmra.mrb[0].mxu0 %v5254
        %v5387 = vpop.f32.mrb[0].mxu0
        %v5388 = vadd.f32 0.0, %v5387
        %v5389 = vpop.f32.mrb[0].mxu0
        %v5390 = vadd.f32 0.0, %v5389
        %v5391 = vpop.f32.mrb[0].mxu0
        %v5392 = vadd.f32 0.0, %v5391
        %v5393 = vpop.f32.mrb[0].mxu0
        %v5394 = vadd.f32 0.0, %v5393
        %5395 = vmatprep.mubr.bf16.mxu0 0
        %5396 = vmatmul.mubr.bf16.gmra.mrb[0].mxu0 %v5257
        %v5397 = vpop.f32.mrb[0].mxu0
        %v5398 = vadd.f32 0.0, %v5397
        %v5399 = vpop.f32.mrb[0].mxu0
        %v5400 = vadd.f32 0.0, %v5399
        %v5401 = vpop.f32.mrb[0].mxu0
        %v5402 = vadd.f32 0.0, %v5401
        %v5403 = vpop.f32.mrb[0].mxu0
        %v5404 = vadd.f32 0.0, %v5403
        %5405 = vmatprep.mubr.bf16.mxu0 0
        %5406 = vmatmul.mubr.bf16.gmra.mrb[0].mxu0 %v5260
        %v5407 = vpop.f32.mrb[0].mxu0
        %v5408 = vadd.f32 0.0, %v5407
        %v5409 = vpop.f32.mrb[0].mxu0
        %v5410 = vadd.f32 0.0, %v5409
        %v5411 = vpop.f32.mrb[0].mxu0
        %v5412 = vadd.f32 0.0, %v5411
        %v5413 = vpop.f32.mrb[0].mxu0
        %v5414 = vadd.f32 0.0, %v5413
        %5415 = vmatprep.mubr.bf16.mxu0 0
        %5416 = vmatmul.mubr.bf16.gmra.mrb[0].mxu0 %v5263
        %v5417 = vpop.f32.mrb[0].mxu0
        %v5418 = vadd.f32 0.0, %v5417
        %v5419 = vpop.f32.mrb[0].mxu0
        %v5420 = vadd.f32 0.0, %v5419
        %v5421 = vpop.f32.mrb[0].mxu0
        %v5422 = vadd.f32 0.0, %v5421
        %v5423 = vpop.f32.mrb[0].mxu0
        %v5424 = vadd.f32 0.0, %v5423
        %5425 = vdwg.mxu0
        %v5426 = vmul.f32 %v5348, 0.05103104
        %v5427 = vmul.f32 %v5350, 0.05103104
        %v5428 = vmul.f32 %v5352, 0.05103104
        %v5429 = vmul.f32 %v5354, 0.05103104
        %v5430 = vmul.f32 %v5358, 0.05103104
        %v5431 = vmul.f32 %v5360, 0.05103104
        %v5432 = vmul.f32 %v5362, 0.05103104
        %v5433 = vmul.f32 %v5364, 0.05103104
        %v5434 = vmul.f32 %v5368, 0.05103104
        %v5435 = vmul.f32 %v5370, 0.05103104
        %v5436 = vmul.f32 %v5372, 0.05103104
        %v5437 = vmul.f32 %v5374, 0.05103104
        %v5438 = vmul.f32 %v5378, 0.05103104
        %v5439 = vmul.f32 %v5380, 0.05103104
        %v5440 = vmul.f32 %v5382, 0.05103104
        %v5441 = vmul.f32 %v5384, 0.05103104
        %v5442 = vmul.f32 %v5388, 0.05103104
        %v5443 = vmul.f32 %v5390, 0.05103104
        %v5444 = vmul.f32 %v5392, 0.05103104
        %v5445 = vmul.f32 %v5394, 0.05103104
        %v5446 = vmul.f32 %v5398, 0.05103104
        %v5447 = vmul.f32 %v5400, 0.05103104
        %v5448 = vmul.f32 %v5402, 0.05103104
        %v5449 = vmul.f32 %v5404, 0.05103104
        %v5450 = vmul.f32 %v5408, 0.05103104
        %v5451 = vmul.f32 %v5410, 0.05103104
        %v5452 = vmul.f32 %v5412, 0.05103104
        %v5453 = vmul.f32 %v5414, 0.05103104
        %v5454 = vmul.f32 %v5418, 0.05103104
        %v5455 = vmul.f32 %v5420, 0.05103104
        %v5456 = vmul.f32 %v5422, 0.05103104
        %v5457 = vmul.f32 %v5424, 0.05103104
        %v5458 = vadd.f32 %v5426, %v3900
        %v5459 = vadd.f32 %v5427, %v3901
        %v5460 = vadd.f32 %v5428, %v3902
        %v5461 = vadd.f32 %v5429, %v3903
        %v5462 = vadd.f32 %v5430, %v3904
        %v5463 = vadd.f32 %v5431, %v3905
        %v5464 = vadd.f32 %v5432, %v3906
        %v5465 = vadd.f32 %v5433, %v3907
        %v5466 = vadd.f32 %v5434, %v3908
        %v5467 = vadd.f32 %v5435, %v3909
        %v5468 = vadd.f32 %v5436, %v3910
        %v5469 = vadd.f32 %v5437, %v3911
        %v5470 = vadd.f32 %v5438, %v3912
        %v5471 = vadd.f32 %v5439, %v3913
        %v5472 = vadd.f32 %v5440, %v3914
        %v5473 = vadd.f32 %v5441, %v3915
        %v5474 = vadd.f32 %v5442, %v3916
        %v5475 = vadd.f32 %v5443, %v3917
        %v5476 = vadd.f32 %v5444, %v3918
        %v5477 = vadd.f32 %v5445, %v3919
        %v5478 = vadd.f32 %v5446, %v3920
        %v5479 = vadd.f32 %v5447, %v3921
        %v5480 = vadd.f32 %v5448, %v3922
        %v5481 = vadd.f32 %v5449, %v3923
        %v5482 = vadd.f32 %v5450, %v3924
        %v5483 = vadd.f32 %v5451, %v3925
        %v5484 = vadd.f32 %v5452, %v3926
        %v5485 = vadd.f32 %v5453, %v3927
        %v5486 = vadd.f32 %v5454, %v3928
        %v5487 = vadd.f32 %v5455, %v3929
        %v5488 = vadd.f32 %v5456, %v3930
        %v5489 = vadd.f32 %v5457, %v3931
        %v5490 = vmax.f32 %v5458, %v5459
        %5491 = vmax.xlane.f32.xlu0 %v5490
        %v5492 = vpop.xlane.xlu0 %5491
        %v5493 = vmax.f32 %v5460, %v5461
        %5494 = vmax.xlane.f32.xlu0 %v5493
        %v5495 = vpop.xlane.xlu0 %5494
        %v5496 = vmax.f32 %v5462, %v5463
        %5497 = vmax.xlane.f32.xlu0 %v5496
        %v5498 = vpop.xlane.xlu0 %5497
        %v5499 = vmax.f32 %v5464, %v5465
        %5500 = vmax.xlane.f32.xlu0 %v5499
        %v5501 = vpop.xlane.xlu0 %5500
        %v5502 = vmax.f32 %v5466, %v5467
        %5503 = vmax.xlane.f32.xlu0 %v5502
        %v5504 = vpop.xlane.xlu0 %5503
        %v5505 = vmax.f32 %v5468, %v5469
        %5506 = vmax.xlane.f32.xlu0 %v5505
        %v5507 = vpop.xlane.xlu0 %5506
        %v5508 = vmax.f32 %v5470, %v5471
        %5509 = vmax.xlane.f32.xlu0 %v5508
        %v5510 = vpop.xlane.xlu0 %5509
        %v5511 = vmax.f32 %v5472, %v5473
        %5512 = vmax.xlane.f32.xlu0 %v5511
        %v5513 = vpop.xlane.xlu0 %5512
        %v5514 = vmax.f32 %v5474, %v5475
        %5515 = vmax.xlane.f32.xlu0 %v5514
        %v5516 = vpop.xlane.xlu0 %5515
        %v5517 = vmax.f32 %v5476, %v5477
        %5518 = vmax.xlane.f32.xlu0 %v5517
        %v5519 = vpop.xlane.xlu0 %5518
        %v5520 = vmax.f32 %v5478, %v5479
        %5521 = vmax.xlane.f32.xlu0 %v5520
        %v5522 = vpop.xlane.xlu0 %5521
        %v5523 = vmax.f32 %v5480, %v5481
        %5524 = vmax.xlane.f32.xlu0 %v5523
        %v5525 = vpop.xlane.xlu0 %5524
        %v5526 = vmax.f32 %v5482, %v5483
        %5527 = vmax.xlane.f32.xlu0 %v5526
        %v5528 = vpop.xlane.xlu0 %5527
        %v5529 = vmax.f32 %v5484, %v5485
        %5530 = vmax.xlane.f32.xlu0 %v5529
        %v5531 = vpop.xlane.xlu0 %5530
        %v5532 = vmax.f32 %v5486, %v5487
        %5533 = vmax.xlane.f32.xlu0 %v5532
        %v5534 = vpop.xlane.xlu0 %5533
        %v5535 = vmax.f32 %v5488, %v5489
        %5536 = vmax.xlane.f32.xlu0 %v5535
        %v5537 = vpop.xlane.xlu0 %5536
        %v5538 = vsub.f32 %v5458, %v5492
        %v5539 = vsub.f32 %v5459, %v5492
        %v5540 = vsub.f32 %v5460, %v5495
        %v5541 = vsub.f32 %v5461, %v5495
        %v5542 = vsub.f32 %v5462, %v5498
        %v5543 = vsub.f32 %v5463, %v5498
        %v5544 = vsub.f32 %v5464, %v5501
        %v5545 = vsub.f32 %v5465, %v5501
        %v5546 = vsub.f32 %v5466, %v5504
        %v5547 = vsub.f32 %v5467, %v5504
        %v5548 = vsub.f32 %v5468, %v5507
        %v5549 = vsub.f32 %v5469, %v5507
        %v5550 = vsub.f32 %v5470, %v5510
        %v5551 = vsub.f32 %v5471, %v5510
        %v5552 = vsub.f32 %v5472, %v5513
        %v5553 = vsub.f32 %v5473, %v5513
        %v5554 = vsub.f32 %v5474, %v5516
        %v5555 = vsub.f32 %v5475, %v5516
        %v5556 = vsub.f32 %v5476, %v5519
        %v5557 = vsub.f32 %v5477, %v5519
        %v5558 = vsub.f32 %v5478, %v5522
        %v5559 = vsub.f32 %v5479, %v5522
        %v5560 = vsub.f32 %v5480, %v5525
        %v5561 = vsub.f32 %v5481, %v5525
        %v5562 = vsub.f32 %v5482, %v5528
        %v5563 = vsub.f32 %v5483, %v5528
        %v5564 = vsub.f32 %v5484, %v5531
        %v5565 = vsub.f32 %v5485, %v5531
        %v5566 = vsub.f32 %v5486, %v5534
        %v5567 = vsub.f32 %v5487, %v5534
        %v5568 = vsub.f32 %v5488, %v5537
        %v5569 = vsub.f32 %v5489, %v5537
        %v5570 = vmul.f32 %v5538, 1.442695
        %v5571 = vpow.pop %v5570
        %v5572 = vmul.f32 %v5539, 1.442695
        %v5573 = vpow.pop %v5572
        %v5574 = vmul.f32 %v5540, 1.442695
        %v5575 = vpow.pop %v5574
        %v5576 = vmul.f32 %v5541, 1.442695
        %v5577 = vpow.pop %v5576
        %v5578 = vmul.f32 %v5542, 1.442695
        %v5579 = vpow.pop %v5578
        %v5580 = vmul.f32 %v5543, 1.442695
        %v5581 = vpow.pop %v5580
        %v5582 = vmul.f32 %v5544, 1.442695
        %v5583 = vpow.pop %v5582
        %v5584 = vmul.f32 %v5545, 1.442695
        %v5585 = vpow.pop %v5584
        %v5586 = vmul.f32 %v5546, 1.442695
        %v5587 = vpow.pop %v5586
        %v5588 = vmul.f32 %v5547, 1.442695
        %v5589 = vpow.pop %v5588
        %v5590 = vmul.f32 %v5548, 1.442695
        %v5591 = vpow.pop %v5590
        %v5592 = vmul.f32 %v5549, 1.442695
        %v5593 = vpow.pop %v5592
        %v5594 = vmul.f32 %v5550, 1.442695
        %v5595 = vpow.pop %v5594
        %v5596 = vmul.f32 %v5551, 1.442695
        %v5597 = vpow.pop %v5596
        %v5598 = vmul.f32 %v5552, 1.442695
        %v5599 = vpow.pop %v5598
        %v5600 = vmul.f32 %v5553, 1.442695
        %v5601 = vpow.pop %v5600
        %v5602 = vmul.f32 %v5554, 1.442695
        %v5603 = vpow.pop %v5602
        %v5604 = vmul.f32 %v5555, 1.442695
        %v5605 = vpow.pop %v5604
        %v5606 = vmul.f32 %v5556, 1.442695
        %v5607 = vpow.pop %v5606
        %v5608 = vmul.f32 %v5557, 1.442695
        %v5609 = vpow.pop %v5608
        %v5610 = vmul.f32 %v5558, 1.442695
        %v5611 = vpow.pop %v5610
        %v5612 = vmul.f32 %v5559, 1.442695
        %v5613 = vpow.pop %v5612
        %v5614 = vmul.f32 %v5560, 1.442695
        %v5615 = vpow.pop %v5614
        %v5616 = vmul.f32 %v5561, 1.442695
        %v5617 = vpow.pop %v5616
        %v5618 = vmul.f32 %v5562, 1.442695
        %v5619 = vpow.pop %v5618
        %v5620 = vmul.f32 %v5563, 1.442695
        %v5621 = vpow.pop %v5620
        %v5622 = vmul.f32 %v5564, 1.442695
        %v5623 = vpow.pop %v5622
        %v5624 = vmul.f32 %v5565, 1.442695
        %v5625 = vpow.pop %v5624
        %v5626 = vmul.f32 %v5566, 1.442695
        %v5627 = vpow.pop %v5626
        %v5628 = vmul.f32 %v5567, 1.442695
        %v5629 = vpow.pop %v5628
        %v5630 = vmul.f32 %v5568, 1.442695
        %v5631 = vpow.pop %v5630
        %v5632 = vmul.f32 %v5569, 1.442695
        %v5633 = vpow.pop %v5632
        %v5634 = vadd.f32 %v5571, %v5573
        %5635 = vadd.xlane.f32.xlu0 %v5634
        %v5636 = vpop.xlane.xlu0 %5635
        %v5637 = vadd.f32 %v5575, %v5577
        %5638 = vadd.xlane.f32.xlu0 %v5637
        %v5639 = vpop.xlane.xlu0 %5638
        %v5640 = vadd.f32 %v5579, %v5581
        %5641 = vadd.xlane.f32.xlu0 %v5640
        %v5642 = vpop.xlane.xlu0 %5641
        %v5643 = vadd.f32 %v5583, %v5585
        %5644 = vadd.xlane.f32.xlu0 %v5643
        %v5645 = vpop.xlane.xlu0 %5644
        %v5646 = vadd.f32 %v5587, %v5589
        %5647 = vadd.xlane.f32.xlu0 %v5646
        %v5648 = vpop.xlane.xlu0 %5647
        %v5649 = vadd.f32 %v5591, %v5593
        %5650 = vadd.xlane.f32.xlu0 %v5649
        %v5651 = vpop.xlane.xlu0 %5650
        %v5652 = vadd.f32 %v5595, %v5597
        %5653 = vadd.xlane.f32.xlu0 %v5652
        %v5654 = vpop.xlane.xlu0 %5653
        %v5655 = vadd.f32 %v5599, %v5601
        %5656 = vadd.xlane.f32.xlu0 %v5655
        %v5657 = vpop.xlane.xlu0 %5656
        %v5658 = vadd.f32 %v5603, %v5605
        %5659 = vadd.xlane.f32.xlu0 %v5658
        %v5660 = vpop.xlane.xlu0 %5659
        %v5661 = vadd.f32 %v5607, %v5609
        %5662 = vadd.xlane.f32.xlu0 %v5661
        %v5663 = vpop.xlane.xlu0 %5662
        %v5664 = vadd.f32 %v5611, %v5613
        %5665 = vadd.xlane.f32.xlu0 %v5664
        %v5666 = vpop.xlane.xlu0 %5665
        %v5667 = vadd.f32 %v5615, %v5617
        %5668 = vadd.xlane.f32.xlu0 %v5667
        %v5669 = vpop.xlane.xlu0 %5668
        %v5670 = vadd.f32 %v5619, %v5621
        %5671 = vadd.xlane.f32.xlu0 %v5670
        %v5672 = vpop.xlane.xlu0 %5671
        %v5673 = vadd.f32 %v5623, %v5625
        %5674 = vadd.xlane.f32.xlu0 %v5673
        %v5675 = vpop.xlane.xlu0 %5674
        %v5676 = vadd.f32 %v5627, %v5629
        %5677 = vadd.xlane.f32.xlu0 %v5676
        %v5678 = vpop.xlane.xlu0 %5677
        %v5679 = vadd.f32 %v5631, %v5633
        %5680 = vadd.xlane.f32.xlu0 %v5679
        %v5681 = vpop.xlane.xlu0 %5680
        %v5682 = vpack.c.bf16 %v5575, %v5571
        %v5683 = vpack.c.bf16 %v5577, %v5573
        %v5684 = vpack.c.bf16 %v5583, %v5579
        %v5685 = vpack.c.bf16 %v5585, %v5581
        %v5686 = vpack.c.bf16 %v5591, %v5587
        %v5687 = vpack.c.bf16 %v5593, %v5589
        %v5688 = vpack.c.bf16 %v5599, %v5595
        %v5689 = vpack.c.bf16 %v5601, %v5597
        %v5690 = vpack.c.bf16 %v5607, %v5603
        %v5691 = vpack.c.bf16 %v5609, %v5605
        %v5692 = vpack.c.bf16 %v5615, %v5611
        %v5693 = vpack.c.bf16 %v5617, %v5613
        %v5694 = vpack.c.bf16 %v5623, %v5619
        %v5695 = vpack.c.bf16 %v5625, %v5621
        %v5696 = vpack.c.bf16 %v5631, %v5627
        %v5697 = vpack.c.bf16 %v5633, %v5629
        %5698 = vmatprep.subr.bf16.mxu0 0
        %5699 = vmatpush1.bf16.msra.mxu0 %v3784
        %5700 = vmatprep.subr.bf16.mxu0 0
        %5701 = vmatpush1.bf16.msra.mxu0 %v3787
        %5702 = vmatprep.subr.bf16.mxu0 0
        %5703 = vmatpush1.bf16.msra.mxu0 %v3790
        %5704 = vmatprep.subr.bf16.mxu0 0
        %5705 = vmatpush1.bf16.msra.mxu0 %v3793
        %5706 = vmatprep.subr.bf16.mxu0 0
        %5707 = vmatpush1.bf16.msra.mxu0 %v3796
        %5708 = vmatprep.subr.bf16.mxu0 0
        %5709 = vmatpush1.bf16.msra.mxu0 %v3799
        %5710 = vmatprep.subr.bf16.mxu0 0
        %5711 = vmatpush1.bf16.msra.mxu0 %v3802
        %5712 = vmatprep.subr.bf16.mxu0 0
        %5713 = vmatpush1.bf16.msra.mxu0 %v3805
        %5714 = vmatprep.subr.bf16.mxu0 0
        %5715 = vmatpush1.bf16.msra.mxu0 %v3808
        %5716 = vmatprep.subr.bf16.mxu0 0
        %5717 = vmatpush1.bf16.msra.mxu0 %v3811
        %5718 = vmatprep.subr.bf16.mxu0 0
        %5719 = vmatpush1.bf16.msra.mxu0 %v3814
        %5720 = vmatprep.subr.bf16.mxu0 0
        %5721 = vmatpush1.bf16.msra.mxu0 %v3817
        %5722 = vmatprep.subr.bf16.mxu0 0
        %5723 = vmatpush1.bf16.msra.mxu0 %v3820
        %5724 = vmatprep.subr.bf16.mxu0 0
        %5725 = vmatpush1.bf16.msra.mxu0 %v3823
        %5726 = vmatprep.subr.bf16.mxu0 0
        %5727 = vmatpush1.bf16.msra.mxu0 %v3826
        %5728 = vmatprep.subr.bf16.mxu0 0
        %5729 = vmatpush1.bf16.msra.mxu0 %v3829
        %5730 = vmatprep.mubr.bf16.mxu0 %v5683
        %5731 = vmatmul.mubr.bf16.gmra.mrb[0].mxu0 %v5682
        %v5732 = vpop.f32.mrb[0].mxu0
        %v5733 = vadd.f32 0.0, %v5732
        %v5734 = vpop.f32.mrb[0].mxu0
        %v5735 = vpop.f32.mrb[0].mxu0
        %v5736 = vadd.f32 0.0, %v5735
        %v5737 = vpop.f32.mrb[0].mxu0
        %5738 = vmatprep.mubr.bf16.mxu0 %v5685
        %5739 = vmatmul.mubr.bf16.gmra.mrb[0].mxu0 %v5684
        %v5740 = vpop.f32.mrb[0].mxu0
        %v5741 = vadd.f32 0.0, %v5740
        %v5742 = vpop.f32.mrb[0].mxu0
        %v5743 = vpop.f32.mrb[0].mxu0
        %v5744 = vadd.f32 0.0, %v5743
        %v5745 = vpop.f32.mrb[0].mxu0
        %5746 = vmatprep.mubr.bf16.mxu0 %v5687
        %5747 = vmatmul.mubr.bf16.gmra.mrb[0].mxu0 %v5686
        %v5748 = vpop.f32.mrb[0].mxu0
        %v5749 = vadd.f32 0.0, %v5748
        %v5750 = vpop.f32.mrb[0].mxu0
        %v5751 = vpop.f32.mrb[0].mxu0
        %v5752 = vadd.f32 0.0, %v5751
        %v5753 = vpop.f32.mrb[0].mxu0
        %5754 = vmatprep.mubr.bf16.mxu0 %v5689
        %5755 = vmatmul.mubr.bf16.gmra.mrb[0].mxu0 %v5688
        %v5756 = vpop.f32.mrb[0].mxu0
        %v5757 = vadd.f32 0.0, %v5756
        %v5758 = vpop.f32.mrb[0].mxu0
        %v5759 = vpop.f32.mrb[0].mxu0
        %v5760 = vadd.f32 0.0, %v5759
        %v5761 = vpop.f32.mrb[0].mxu0
        %5762 = vmatprep.mubr.bf16.mxu0 %v5691
        %5763 = vmatmul.mubr.bf16.gmra.mrb[0].mxu0 %v5690
        %v5764 = vpop.f32.mrb[0].mxu0
        %v5765 = vadd.f32 0.0, %v5764
        %v5766 = vpop.f32.mrb[0].mxu0
        %v5767 = vpop.f32.mrb[0].mxu0
        %v5768 = vadd.f32 0.0, %v5767
        %v5769 = vpop.f32.mrb[0].mxu0
        %5770 = vmatprep.mubr.bf16.mxu0 %v5693
        %5771 = vmatmul.mubr.bf16.gmra.mrb[0].mxu0 %v5692
        %v5772 = vpop.f32.mrb[0].mxu0
        %v5773 = vadd.f32 0.0, %v5772
        %v5774 = vpop.f32.mrb[0].mxu0
        %v5775 = vpop.f32.mrb[0].mxu0
        %v5776 = vadd.f32 0.0, %v5775
        %v5777 = vpop.f32.mrb[0].mxu0
        %5778 = vmatprep.mubr.bf16.mxu0 %v5695
        %5779 = vmatmul.mubr.bf16.gmra.mrb[0].mxu0 %v5694
        %v5780 = vpop.f32.mrb[0].mxu0
        %v5781 = vadd.f32 0.0, %v5780
        %v5782 = vpop.f32.mrb[0].mxu0
        %v5783 = vpop.f32.mrb[0].mxu0
        %v5784 = vadd.f32 0.0, %v5783
        %v5785 = vpop.f32.mrb[0].mxu0
        %5786 = vmatprep.mubr.bf16.mxu0 %v5697
        %5787 = vmatmul.mubr.bf16.gmra.mrb[0].mxu0 %v5696
        %v5788 = vpop.f32.mrb[0].mxu0
        %v5789 = vadd.f32 0.0, %v5788
        %v5790 = vpop.f32.mrb[0].mxu0
        %v5791 = vpop.f32.mrb[0].mxu0
        %v5792 = vadd.f32 0.0, %v5791
        %v5793 = vpop.f32.mrb[0].mxu0
        %5794 = vdwg.mxu0
        %v5795 = vrcp.pop %v5636
        %v5796 = vrcp.pop %v5639
        %v5797 = vrcp.pop %v5642
        %v5798 = vrcp.pop %v5645
        %v5799 = vrcp.pop %v5648
        %v5800 = vrcp.pop %v5651
        %v5801 = vrcp.pop %v5654
        %v5802 = vrcp.pop %v5657
        %v5803 = vrcp.pop %v5660
        %v5804 = vrcp.pop %v5663
        %v5805 = vrcp.pop %v5666
        %v5806 = vrcp.pop %v5669
        %v5807 = vrcp.pop %v5672
        %v5808 = vrcp.pop %v5675
        %v5809 = vrcp.pop %v5678
        %v5810 = vrcp.pop %v5681
        %v5811 = vmul.f32 %v5733, %v5795
        %v5812 = vmul.f32 %v5736, %v5796
        %v5813 = vmul.f32 %v5741, %v5797
        %v5814 = vmul.f32 %v5744, %v5798
        %v5815 = vmul.f32 %v5749, %v5799
        %v5816 = vmul.f32 %v5752, %v5800
        %v5817 = vmul.f32 %v5757, %v5801
        %v5818 = vmul.f32 %v5760, %v5802
        %v5819 = vmul.f32 %v5765, %v5803
        %v5820 = vmul.f32 %v5768, %v5804
        %v5821 = vmul.f32 %v5773, %v5805
        %v5822 = vmul.f32 %v5776, %v5806
        %v5823 = vmul.f32 %v5781, %v5807
        %v5824 = vmul.f32 %v5784, %v5808
        %v5825 = vmul.f32 %v5789, %v5809
        %v5826 = vmul.f32 %v5792, %v5810
        %5835 = vrot.lane.b32.xlu0 %v3712, 64
        %v5836 = vpop.permute.xlu0 %5835
        %5837 = vrot.lane.b32.xlu0 %v3715, 64
        %v5838 = vpop.permute.xlu0 %5837
        %5839 = vrot.lane.b32.xlu0 %v3718, 64
        %v5840 = vpop.permute.xlu0 %5839
        %5841 = vrot.lane.b32.xlu0 %v3721, 64
        %v5842 = vpop.permute.xlu0 %5841
        %5843 = vrot.lane.b32.xlu0 %v3724, 64
        %v5844 = vpop.permute.xlu0 %5843
        %5845 = vrot.lane.b32.xlu0 %v3727, 64
        %v5846 = vpop.permute.xlu0 %5845
        %5847 = vrot.lane.b32.xlu0 %v3730, 64
        %v5848 = vpop.permute.xlu0 %5847
        %5849 = vrot.lane.b32.xlu0 %v3733, 64
        %v5850 = vpop.permute.xlu0 %5849
        %5867 = vrot.lane.b32.xlu0 %v3736, 64
        %v5868 = vpop.permute.xlu0 %5867
        %5869 = vrot.lane.b32.xlu0 %v3739, 64
        %v5870 = vpop.permute.xlu0 %5869
        %5871 = vrot.lane.b32.xlu0 %v3742, 64
        %v5872 = vpop.permute.xlu0 %5871
        %5873 = vrot.lane.b32.xlu0 %v3745, 64
        %v5874 = vpop.permute.xlu0 %5873
        %5875 = vrot.lane.b32.xlu0 %v3748, 64
        %v5876 = vpop.permute.xlu0 %5875
        %5877 = vrot.lane.b32.xlu0 %v3751, 64
        %v5878 = vpop.permute.xlu0 %5877
        %5879 = vrot.lane.b32.xlu0 %v3754, 64
        %v5880 = vpop.permute.xlu0 %5879
        %5881 = vrot.lane.b32.xlu0 %v3757, 64
        %v5882 = vpop.permute.xlu0 %5881
        %5883 = vrot.lane.b32.xlu0 %v3760, 64
        %v5884 = vpop.permute.xlu0 %5883
        %5885 = vrot.lane.b32.xlu0 %v3763, 64
        %v5886 = vpop.permute.xlu0 %5885
        %5887 = vrot.lane.b32.xlu0 %v3766, 64
        %v5888 = vpop.permute.xlu0 %5887
        %5889 = vrot.lane.b32.xlu0 %v3769, 64
        %v5890 = vpop.permute.xlu0 %5889
        %5891 = vrot.lane.b32.xlu0 %v3772, 64
        %v5892 = vpop.permute.xlu0 %5891
        %5893 = vrot.lane.b32.xlu0 %v3775, 64
        %v5894 = vpop.permute.xlu0 %5893
        %5895 = vrot.lane.b32.xlu0 %v3778, 64
        %v5896 = vpop.permute.xlu0 %5895
        %5897 = vrot.lane.b32.xlu0 %v3781, 64
        %v5898 = vpop.permute.xlu0 %5897
        %v5900 = vsel %vm3932, %v5836, 0
        %v5903 = vsel %vm3932, %v5838, 0
        %v5906 = vsel %vm3932, %v5840, 0
        %v5909 = vsel %vm3932, %v5842, 0
        %v5912 = vsel %vm3932, %v5844, 0
        %v5915 = vsel %vm3932, %v5846, 0
        %v5918 = vsel %vm3932, %v5848, 0
        %v5921 = vsel %vm3932, %v5850, 0
        %v5924 = vsel %vm3932, %v5868, 0
        %v5927 = vsel %vm3932, %v5870, 0
        %v5930 = vsel %vm3932, %v5872, 0
        %v5933 = vsel %vm3932, %v5874, 0
        %v5936 = vsel %vm3932, %v5876, 0
        %v5939 = vsel %vm3932, %v5878, 0
        %v5942 = vsel %vm3932, %v5880, 0
        %v5945 = vsel %vm3932, %v5882, 0
        %v5948 = vsel %vm3932, %v5884, 0
        %v5951 = vsel %vm3932, %v5886, 0
        %v5954 = vsel %vm3932, %v5888, 0
        %v5957 = vsel %vm3932, %v5890, 0
        %v5960 = vsel %vm3932, %v5892, 0
        %v5963 = vsel %vm3932, %v5894, 0
        %v5966 = vsel %vm3932, %v5896, 0
        %v5969 = vsel %vm3932, %v5898, 0
        %5971 = vmatprep.subr.bf16.mxu0 0
        %5972 = vmatpush1.bf16.xpose.msra.mxu0 %v5924
        %5973 = vmatprep.subr.bf16.mxu0 0
        %5974 = vmatpush1.bf16.xpose.msra.mxu0 %v5927
        %5975 = vmatprep.subr.bf16.mxu0 0
        %5976 = vmatpush1.bf16.xpose.msra.mxu0 %v5930
        %5977 = vmatprep.subr.bf16.mxu0 0
        %5978 = vmatpush1.bf16.xpose.msra.mxu0 %v5933
        %5979 = vmatprep.subr.bf16.mxu0 0
        %5980 = vmatpush1.bf16.xpose.msra.mxu0 %v5936
        %5981 = vmatprep.subr.bf16.mxu0 0
        %5982 = vmatpush1.bf16.xpose.msra.mxu0 %v5939
        %5983 = vmatprep.subr.bf16.mxu0 0
        %5984 = vmatpush1.bf16.xpose.msra.mxu0 %v5942
        %5985 = vmatprep.subr.bf16.mxu0 0
        %5986 = vmatpush1.bf16.xpose.msra.mxu0 %v5945
        %5987 = vmatprep.subr.bf16.mxu0 0
        %5988 = vmatpush1.bf16.xpose.msra.mxu0 %v5948
        %5989 = vmatprep.subr.bf16.mxu0 0
        %5990 = vmatpush1.bf16.xpose.msra.mxu0 %v5951
        %5991 = vmatprep.subr.bf16.mxu0 0
        %5992 = vmatpush1.bf16.xpose.msra.mxu0 %v5954
        %5993 = vmatprep.subr.bf16.mxu0 0
        %5994 = vmatpush1.bf16.xpose.msra.mxu0 %v5957
        %5995 = vmatprep.subr.bf16.mxu0 0
        %5996 = vmatpush1.bf16.xpose.msra.mxu0 %v5960
        %5997 = vmatprep.subr.bf16.mxu0 0
        %5998 = vmatpush1.bf16.xpose.msra.mxu0 %v5963
        %5999 = vmatprep.subr.bf16.mxu0 0
        %6000 = vmatpush1.bf16.xpose.msra.mxu0 %v5966
        %6001 = vmatprep.subr.bf16.mxu0 0
        %6002 = vmatpush1.bf16.xpose.msra.mxu0 %v5969
        %6003 = vmatprep.mubr.bf16.mxu0 0
        %6004 = vmatmul.mubr.bf16.gmra.mrb[0].mxu0 %v5900
        %v6005 = vpop.f32.mrb[0].mxu0
        %v6006 = vadd.f32 0.0, %v6005
        %v6007 = vpop.f32.mrb[0].mxu0
        %v6008 = vadd.f32 0.0, %v6007
        %v6009 = vpop.f32.mrb[0].mxu0
        %v6010 = vadd.f32 0.0, %v6009
        %v6011 = vpop.f32.mrb[0].mxu0
        %v6012 = vadd.f32 0.0, %v6011
        %6013 = vmatprep.mubr.bf16.mxu0 0
        %6014 = vmatmul.mubr.bf16.gmra.mrb[0].mxu0 %v5903
        %v6015 = vpop.f32.mrb[0].mxu0
        %v6016 = vadd.f32 0.0, %v6015
        %v6017 = vpop.f32.mrb[0].mxu0
        %v6018 = vadd.f32 0.0, %v6017
        %v6019 = vpop.f32.mrb[0].mxu0
        %v6020 = vadd.f32 0.0, %v6019
        %v6021 = vpop.f32.mrb[0].mxu0
        %v6022 = vadd.f32 0.0, %v6021
        %6023 = vmatprep.mubr.bf16.mxu0 0
        %6024 = vmatmul.mubr.bf16.gmra.mrb[0].mxu0 %v5906
        %v6025 = vpop.f32.mrb[0].mxu0
        %v6026 = vadd.f32 0.0, %v6025
        %v6027 = vpop.f32.mrb[0].mxu0
        %v6028 = vadd.f32 0.0, %v6027
        %v6029 = vpop.f32.mrb[0].mxu0
        %v6030 = vadd.f32 0.0, %v6029
        %v6031 = vpop.f32.mrb[0].mxu0
        %v6032 = vadd.f32 0.0, %v6031
        %6033 = vmatprep.mubr.bf16.mxu0 0
        %6034 = vmatmul.mubr.bf16.gmra.mrb[0].mxu0 %v5909
        %v6035 = vpop.f32.mrb[0].mxu0
        %v6036 = vadd.f32 0.0, %v6035
        %v6037 = vpop.f32.mrb[0].mxu0
        %v6038 = vadd.f32 0.0, %v6037
        %v6039 = vpop.f32.mrb[0].mxu0
        %v6040 = vadd.f32 0.0, %v6039
        %v6041 = vpop.f32.mrb[0].mxu0
        %v6042 = vadd.f32 0.0, %v6041
        %6043 = vmatprep.mubr.bf16.mxu0 0
        %6044 = vmatmul.mubr.bf16.gmra.mrb[0].mxu0 %v5912
        %v6045 = vpop.f32.mrb[0].mxu0
        %v6046 = vadd.f32 0.0, %v6045
        %v6047 = vpop.f32.mrb[0].mxu0
        %v6048 = vadd.f32 0.0, %v6047
        %v6049 = vpop.f32.mrb[0].mxu0
        %v6050 = vadd.f32 0.0, %v6049
        %v6051 = vpop.f32.mrb[0].mxu0
        %v6052 = vadd.f32 0.0, %v6051
        %6053 = vmatprep.mubr.bf16.mxu0 0
        %6054 = vmatmul.mubr.bf16.gmra.mrb[0].mxu0 %v5915
        %v6055 = vpop.f32.mrb[0].mxu0
        %v6056 = vadd.f32 0.0, %v6055
        %v6057 = vpop.f32.mrb[0].mxu0
        %v6058 = vadd.f32 0.0, %v6057
        %v6059 = vpop.f32.mrb[0].mxu0
        %v6060 = vadd.f32 0.0, %v6059
        %v6061 = vpop.f32.mrb[0].mxu0
        %v6062 = vadd.f32 0.0, %v6061
        %6063 = vmatprep.mubr.bf16.mxu0 0
        %6064 = vmatmul.mubr.bf16.gmra.mrb[0].mxu0 %v5918
        %v6065 = vpop.f32.mrb[0].mxu0
        %v6066 = vadd.f32 0.0, %v6065
        %v6067 = vpop.f32.mrb[0].mxu0
        %v6068 = vadd.f32 0.0, %v6067
        %v6069 = vpop.f32.mrb[0].mxu0
        %v6070 = vadd.f32 0.0, %v6069
        %v6071 = vpop.f32.mrb[0].mxu0
        %v6072 = vadd.f32 0.0, %v6071
        %6073 = vmatprep.mubr.bf16.mxu0 0
        %6074 = vmatmul.mubr.bf16.gmra.mrb[0].mxu0 %v5921
        %v6075 = vpop.f32.mrb[0].mxu0
        %v6076 = vadd.f32 0.0, %v6075
        %v6077 = vpop.f32.mrb[0].mxu0
        %v6078 = vadd.f32 0.0, %v6077
        %v6079 = vpop.f32.mrb[0].mxu0
        %v6080 = vadd.f32 0.0, %v6079
        %v6081 = vpop.f32.mrb[0].mxu0
        %v6082 = vadd.f32 0.0, %v6081
        %6083 = vdwg.mxu0
        %v6084 = vmul.f32 %v6006, 0.05103104
        %v6085 = vmul.f32 %v6008, 0.05103104
        %v6086 = vmul.f32 %v6010, 0.05103104
        %v6087 = vmul.f32 %v6012, 0.05103104
        %v6088 = vmul.f32 %v6016, 0.05103104
        %v6089 = vmul.f32 %v6018, 0.05103104
        %v6090 = vmul.f32 %v6020, 0.05103104
        %v6091 = vmul.f32 %v6022, 0.05103104
        %v6092 = vmul.f32 %v6026, 0.05103104
        %v6093 = vmul.f32 %v6028, 0.05103104
        %v6094 = vmul.f32 %v6030, 0.05103104
        %v6095 = vmul.f32 %v6032, 0.05103104
        %v6096 = vmul.f32 %v6036, 0.05103104
        %v6097 = vmul.f32 %v6038, 0.05103104
        %v6098 = vmul.f32 %v6040, 0.05103104
        %v6099 = vmul.f32 %v6042, 0.05103104
        %v6100 = vmul.f32 %v6046, 0.05103104
        %v6101 = vmul.f32 %v6048, 0.05103104
        %v6102 = vmul.f32 %v6050, 0.05103104
        %v6103 = vmul.f32 %v6052, 0.05103104
        %v6104 = vmul.f32 %v6056, 0.05103104
        %v6105 = vmul.f32 %v6058, 0.05103104
        %v6106 = vmul.f32 %v6060, 0.05103104
        %v6107 = vmul.f32 %v6062, 0.05103104
        %v6108 = vmul.f32 %v6066, 0.05103104
        %v6109 = vmul.f32 %v6068, 0.05103104
        %v6110 = vmul.f32 %v6070, 0.05103104
        %v6111 = vmul.f32 %v6072, 0.05103104
        %v6112 = vmul.f32 %v6076, 0.05103104
        %v6113 = vmul.f32 %v6078, 0.05103104
        %v6114 = vmul.f32 %v6080, 0.05103104
        %v6115 = vmul.f32 %v6082, 0.05103104
        %v6116 = vadd.f32 %v6084, %v3900
        %v6117 = vadd.f32 %v6085, %v3901
        %v6118 = vadd.f32 %v6086, %v3902
        %v6119 = vadd.f32 %v6087, %v3903
        %v6120 = vadd.f32 %v6088, %v3904
        %v6121 = vadd.f32 %v6089, %v3905
        %v6122 = vadd.f32 %v6090, %v3906
        %v6123 = vadd.f32 %v6091, %v3907
        %v6124 = vadd.f32 %v6092, %v3908
        %v6125 = vadd.f32 %v6093, %v3909
        %v6126 = vadd.f32 %v6094, %v3910
        %v6127 = vadd.f32 %v6095, %v3911
        %v6128 = vadd.f32 %v6096, %v3912
        %v6129 = vadd.f32 %v6097, %v3913
        %v6130 = vadd.f32 %v6098, %v3914
        %v6131 = vadd.f32 %v6099, %v3915
        %v6132 = vadd.f32 %v6100, %v3916
        %v6133 = vadd.f32 %v6101, %v3917
        %v6134 = vadd.f32 %v6102, %v3918
        %v6135 = vadd.f32 %v6103, %v3919
        %v6136 = vadd.f32 %v6104, %v3920
        %v6137 = vadd.f32 %v6105, %v3921
        %v6138 = vadd.f32 %v6106, %v3922
        %v6139 = vadd.f32 %v6107, %v3923
        %v6140 = vadd.f32 %v6108, %v3924
        %v6141 = vadd.f32 %v6109, %v3925
        %v6142 = vadd.f32 %v6110, %v3926
        %v6143 = vadd.f32 %v6111, %v3927
        %v6144 = vadd.f32 %v6112, %v3928
        %v6145 = vadd.f32 %v6113, %v3929
        %v6146 = vadd.f32 %v6114, %v3930
        %v6147 = vadd.f32 %v6115, %v3931
        %v6148 = vmax.f32 %v6116, %v6117
        %6149 = vmax.xlane.f32.xlu0 %v6148
        %v6150 = vpop.xlane.xlu0 %6149
        %v6151 = vmax.f32 %v6118, %v6119
        %6152 = vmax.xlane.f32.xlu0 %v6151
        %v6153 = vpop.xlane.xlu0 %6152
        %v6154 = vmax.f32 %v6120, %v6121
        %6155 = vmax.xlane.f32.xlu0 %v6154
        %v6156 = vpop.xlane.xlu0 %6155
        %v6157 = vmax.f32 %v6122, %v6123
        %6158 = vmax.xlane.f32.xlu0 %v6157
        %v6159 = vpop.xlane.xlu0 %6158
        %v6160 = vmax.f32 %v6124, %v6125
        %6161 = vmax.xlane.f32.xlu0 %v6160
        %v6162 = vpop.xlane.xlu0 %6161
        %v6163 = vmax.f32 %v6126, %v6127
        %6164 = vmax.xlane.f32.xlu0 %v6163
        %v6165 = vpop.xlane.xlu0 %6164
        %v6166 = vmax.f32 %v6128, %v6129
        %6167 = vmax.xlane.f32.xlu0 %v6166
        %v6168 = vpop.xlane.xlu0 %6167
        %v6169 = vmax.f32 %v6130, %v6131
        %6170 = vmax.xlane.f32.xlu0 %v6169
        %v6171 = vpop.xlane.xlu0 %6170
        %v6172 = vmax.f32 %v6132, %v6133
        %6173 = vmax.xlane.f32.xlu0 %v6172
        %v6174 = vpop.xlane.xlu0 %6173
        %v6175 = vmax.f32 %v6134, %v6135
        %6176 = vmax.xlane.f32.xlu0 %v6175
        %v6177 = vpop.xlane.xlu0 %6176
        %v6178 = vmax.f32 %v6136, %v6137
        %6179 = vmax.xlane.f32.xlu0 %v6178
        %v6180 = vpop.xlane.xlu0 %6179
        %v6181 = vmax.f32 %v6138, %v6139
        %6182 = vmax.xlane.f32.xlu0 %v6181
        %v6183 = vpop.xlane.xlu0 %6182
        %v6184 = vmax.f32 %v6140, %v6141
        %6185 = vmax.xlane.f32.xlu0 %v6184
        %v6186 = vpop.xlane.xlu0 %6185
        %v6187 = vmax.f32 %v6142, %v6143
        %6188 = vmax.xlane.f32.xlu0 %v6187
        %v6189 = vpop.xlane.xlu0 %6188
        %v6190 = vmax.f32 %v6144, %v6145
        %6191 = vmax.xlane.f32.xlu0 %v6190
        %v6192 = vpop.xlane.xlu0 %6191
        %v6193 = vmax.f32 %v6146, %v6147
        %6194 = vmax.xlane.f32.xlu0 %v6193
        %v6195 = vpop.xlane.xlu0 %6194
        %v6196 = vsub.f32 %v6116, %v6150
        %v6197 = vsub.f32 %v6117, %v6150
        %v6198 = vsub.f32 %v6118, %v6153
        %v6199 = vsub.f32 %v6119, %v6153
        %v6200 = vsub.f32 %v6120, %v6156
        %v6201 = vsub.f32 %v6121, %v6156
        %v6202 = vsub.f32 %v6122, %v6159
        %v6203 = vsub.f32 %v6123, %v6159
        %v6204 = vsub.f32 %v6124, %v6162
        %v6205 = vsub.f32 %v6125, %v6162
        %v6206 = vsub.f32 %v6126, %v6165
        %v6207 = vsub.f32 %v6127, %v6165
        %v6208 = vsub.f32 %v6128, %v6168
        %v6209 = vsub.f32 %v6129, %v6168
        %v6210 = vsub.f32 %v6130, %v6171
        %v6211 = vsub.f32 %v6131, %v6171
        %v6212 = vsub.f32 %v6132, %v6174
        %v6213 = vsub.f32 %v6133, %v6174
        %v6214 = vsub.f32 %v6134, %v6177
        %v6215 = vsub.f32 %v6135, %v6177
        %v6216 = vsub.f32 %v6136, %v6180
        %v6217 = vsub.f32 %v6137, %v6180
        %v6218 = vsub.f32 %v6138, %v6183
        %v6219 = vsub.f32 %v6139, %v6183
        %v6220 = vsub.f32 %v6140, %v6186
        %v6221 = vsub.f32 %v6141, %v6186
        %v6222 = vsub.f32 %v6142, %v6189
        %v6223 = vsub.f32 %v6143, %v6189
        %v6224 = vsub.f32 %v6144, %v6192
        %v6225 = vsub.f32 %v6145, %v6192
        %v6226 = vsub.f32 %v6146, %v6195
        %v6227 = vsub.f32 %v6147, %v6195
        %v6228 = vmul.f32 %v6196, 1.442695
        %v6229 = vpow.pop %v6228
        %v6230 = vmul.f32 %v6197, 1.442695
        %v6231 = vpow.pop %v6230
        %v6232 = vmul.f32 %v6198, 1.442695
        %v6233 = vpow.pop %v6232
        %v6234 = vmul.f32 %v6199, 1.442695
        %v6235 = vpow.pop %v6234
        %v6236 = vmul.f32 %v6200, 1.442695
        %v6237 = vpow.pop %v6236
        %v6238 = vmul.f32 %v6201, 1.442695
        %v6239 = vpow.pop %v6238
        %v6240 = vmul.f32 %v6202, 1.442695
        %v6241 = vpow.pop %v6240
        %v6242 = vmul.f32 %v6203, 1.442695
        %v6243 = vpow.pop %v6242
        %v6244 = vmul.f32 %v6204, 1.442695
        %v6245 = vpow.pop %v6244
        %v6246 = vmul.f32 %v6205, 1.442695
        %v6247 = vpow.pop %v6246
        %v6248 = vmul.f32 %v6206, 1.442695
        %v6249 = vpow.pop %v6248
        %v6250 = vmul.f32 %v6207, 1.442695
        %v6251 = vpow.pop %v6250
        %v6252 = vmul.f32 %v6208, 1.442695
        %v6253 = vpow.pop %v6252
        %v6254 = vmul.f32 %v6209, 1.442695
        %v6255 = vpow.pop %v6254
        %v6256 = vmul.f32 %v6210, 1.442695
        %v6257 = vpow.pop %v6256
        %v6258 = vmul.f32 %v6211, 1.442695
        %v6259 = vpow.pop %v6258
        %v6260 = vmul.f32 %v6212, 1.442695
        %v6261 = vpow.pop %v6260
        %v6262 = vmul.f32 %v6213, 1.442695
        %v6263 = vpow.pop %v6262
        %v6264 = vmul.f32 %v6214, 1.442695
        %v6265 = vpow.pop %v6264
        %v6266 = vmul.f32 %v6215, 1.442695
        %v6267 = vpow.pop %v6266
        %v6268 = vmul.f32 %v6216, 1.442695
        %v6269 = vpow.pop %v6268
        %v6270 = vmul.f32 %v6217, 1.442695
        %v6271 = vpow.pop %v6270
        %v6272 = vmul.f32 %v6218, 1.442695
        %v6273 = vpow.pop %v6272
        %v6274 = vmul.f32 %v6219, 1.442695
        %v6275 = vpow.pop %v6274
        %v6276 = vmul.f32 %v6220, 1.442695
        %v6277 = vpow.pop %v6276
        %v6278 = vmul.f32 %v6221, 1.442695
        %v6279 = vpow.pop %v6278
        %v6280 = vmul.f32 %v6222, 1.442695
        %v6281 = vpow.pop %v6280
        %v6282 = vmul.f32 %v6223, 1.442695
        %v6283 = vpow.pop %v6282
        %v6284 = vmul.f32 %v6224, 1.442695
        %v6285 = vpow.pop %v6284
        %v6286 = vmul.f32 %v6225, 1.442695
        %v6287 = vpow.pop %v6286
        %v6288 = vmul.f32 %v6226, 1.442695
        %v6289 = vpow.pop %v6288
        %v6290 = vmul.f32 %v6227, 1.442695
        %v6291 = vpow.pop %v6290
        %v6292 = vadd.f32 %v6229, %v6231
        %6293 = vadd.xlane.f32.xlu0 %v6292
        %v6294 = vpop.xlane.xlu0 %6293
        %v6295 = vadd.f32 %v6233, %v6235
        %6296 = vadd.xlane.f32.xlu0 %v6295
        %v6297 = vpop.xlane.xlu0 %6296
        %v6298 = vadd.f32 %v6237, %v6239
        %6299 = vadd.xlane.f32.xlu0 %v6298
        %v6300 = vpop.xlane.xlu0 %6299
        %v6301 = vadd.f32 %v6241, %v6243
        %6302 = vadd.xlane.f32.xlu0 %v6301
        %v6303 = vpop.xlane.xlu0 %6302
        %v6304 = vadd.f32 %v6245, %v6247
        %6305 = vadd.xlane.f32.xlu0 %v6304
        %v6306 = vpop.xlane.xlu0 %6305
        %v6307 = vadd.f32 %v6249, %v6251
        %6308 = vadd.xlane.f32.xlu0 %v6307
        %v6309 = vpop.xlane.xlu0 %6308
        %v6310 = vadd.f32 %v6253, %v6255
        %6311 = vadd.xlane.f32.xlu0 %v6310
        %v6312 = vpop.xlane.xlu0 %6311
        %v6313 = vadd.f32 %v6257, %v6259
        %6314 = vadd.xlane.f32.xlu0 %v6313
        %v6315 = vpop.xlane.xlu0 %6314
        %v6316 = vadd.f32 %v6261, %v6263
        %6317 = vadd.xlane.f32.xlu0 %v6316
        %v6318 = vpop.xlane.xlu0 %6317
        %v6319 = vadd.f32 %v6265, %v6267
        %6320 = vadd.xlane.f32.xlu0 %v6319
        %v6321 = vpop.xlane.xlu0 %6320
        %v6322 = vadd.f32 %v6269, %v6271
        %6323 = vadd.xlane.f32.xlu0 %v6322
        %v6324 = vpop.xlane.xlu0 %6323
        %v6325 = vadd.f32 %v6273, %v6275
        %6326 = vadd.xlane.f32.xlu0 %v6325
        %v6327 = vpop.xlane.xlu0 %6326
        %v6328 = vadd.f32 %v6277, %v6279
        %6329 = vadd.xlane.f32.xlu0 %v6328
        %v6330 = vpop.xlane.xlu0 %6329
        %v6331 = vadd.f32 %v6281, %v6283
        %6332 = vadd.xlane.f32.xlu0 %v6331
        %v6333 = vpop.xlane.xlu0 %6332
        %v6334 = vadd.f32 %v6285, %v6287
        %6335 = vadd.xlane.f32.xlu0 %v6334
        %v6336 = vpop.xlane.xlu0 %6335
        %v6337 = vadd.f32 %v6289, %v6291
        %6338 = vadd.xlane.f32.xlu0 %v6337
        %v6339 = vpop.xlane.xlu0 %6338
        %v6340 = vpack.c.bf16 %v6233, %v6229
        %v6341 = vpack.c.bf16 %v6235, %v6231
        %v6342 = vpack.c.bf16 %v6241, %v6237
        %v6343 = vpack.c.bf16 %v6243, %v6239
        %v6344 = vpack.c.bf16 %v6249, %v6245
        %v6345 = vpack.c.bf16 %v6251, %v6247
        %v6346 = vpack.c.bf16 %v6257, %v6253
        %v6347 = vpack.c.bf16 %v6259, %v6255
        %v6348 = vpack.c.bf16 %v6265, %v6261
        %v6349 = vpack.c.bf16 %v6267, %v6263
        %v6350 = vpack.c.bf16 %v6273, %v6269
        %v6351 = vpack.c.bf16 %v6275, %v6271
        %v6352 = vpack.c.bf16 %v6281, %v6277
        %v6353 = vpack.c.bf16 %v6283, %v6279
        %v6354 = vpack.c.bf16 %v6289, %v6285
        %v6355 = vpack.c.bf16 %v6291, %v6287
        %6372 = vrot.lane.b32.xlu0 %v3784, 64
        %v6373 = vpop.permute.xlu0 %6372
        %6374 = vrot.lane.b32.xlu0 %v3787, 64
        %v6375 = vpop.permute.xlu0 %6374
        %6376 = vrot.lane.b32.xlu0 %v3790, 64
        %v6377 = vpop.permute.xlu0 %6376
        %6378 = vrot.lane.b32.xlu0 %v3793, 64
        %v6379 = vpop.permute.xlu0 %6378
        %6380 = vrot.lane.b32.xlu0 %v3796, 64
        %v6381 = vpop.permute.xlu0 %6380
        %6382 = vrot.lane.b32.xlu0 %v3799, 64
        %v6383 = vpop.permute.xlu0 %6382
        %6384 = vrot.lane.b32.xlu0 %v3802, 64
        %v6385 = vpop.permute.xlu0 %6384
        %6386 = vrot.lane.b32.xlu0 %v3805, 64
        %v6387 = vpop.permute.xlu0 %6386
        %6388 = vrot.lane.b32.xlu0 %v3808, 64
        %v6389 = vpop.permute.xlu0 %6388
        %6390 = vrot.lane.b32.xlu0 %v3811, 64
        %v6391 = vpop.permute.xlu0 %6390
        %6392 = vrot.lane.b32.xlu0 %v3814, 64
        %v6393 = vpop.permute.xlu0 %6392
        %6394 = vrot.lane.b32.xlu0 %v3817, 64
        %v6395 = vpop.permute.xlu0 %6394
        %6396 = vrot.lane.b32.xlu0 %v3820, 64
        %v6397 = vpop.permute.xlu0 %6396
        %6398 = vrot.lane.b32.xlu0 %v3823, 64
        %v6399 = vpop.permute.xlu0 %6398
        %6400 = vrot.lane.b32.xlu0 %v3826, 64
        %v6401 = vpop.permute.xlu0 %6400
        %6402 = vrot.lane.b32.xlu0 %v3829, 64
        %v6403 = vpop.permute.xlu0 %6402
        %6420 = vmatprep.subr.bf16.mxu0 0
        %6421 = vmatpush1.bf16.msra.mxu0 %v6373
        %6422 = vmatprep.subr.bf16.mxu0 0
        %6423 = vmatpush1.bf16.msra.mxu0 %v6375
        %6424 = vmatprep.subr.bf16.mxu0 0
        %6425 = vmatpush1.bf16.msra.mxu0 %v6377
        %6426 = vmatprep.subr.bf16.mxu0 0
        %6427 = vmatpush1.bf16.msra.mxu0 %v6379
        %6428 = vmatprep.subr.bf16.mxu0 0
        %6429 = vmatpush1.bf16.msra.mxu0 %v6381
        %6430 = vmatprep.subr.bf16.mxu0 0
        %6431 = vmatpush1.bf16.msra.mxu0 %v6383
        %6432 = vmatprep.subr.bf16.mxu0 0
        %6433 = vmatpush1.bf16.msra.mxu0 %v6385
        %6434 = vmatprep.subr.bf16.mxu0 0
        %6435 = vmatpush1.bf16.msra.mxu0 %v6387
        %6436 = vmatprep.subr.bf16.mxu0 0
        %6437 = vmatpush1.bf16.msra.mxu0 %v6389
        %6438 = vmatprep.subr.bf16.mxu0 0
        %6439 = vmatpush1.bf16.msra.mxu0 %v6391
        %6440 = vmatprep.subr.bf16.mxu0 0
        %6441 = vmatpush1.bf16.msra.mxu0 %v6393
        %6442 = vmatprep.subr.bf16.mxu0 0
        %6443 = vmatpush1.bf16.msra.mxu0 %v6395
        %6444 = vmatprep.subr.bf16.mxu0 0
        %6445 = vmatpush1.bf16.msra.mxu0 %v6397
        %6446 = vmatprep.subr.bf16.mxu0 0
        %6447 = vmatpush1.bf16.msra.mxu0 %v6399
        %6448 = vmatprep.subr.bf16.mxu0 0
        %6449 = vmatpush1.bf16.msra.mxu0 %v6401
        %6450 = vmatprep.subr.bf16.mxu0 0
        %6451 = vmatpush1.bf16.msra.mxu0 %v6403
        %6452 = vmatprep.mubr.bf16.mxu0 %v6341
        %6453 = vmatmul.mubr.bf16.gmra.mrb[0].mxu0 %v6340
        %v6454 = vpop.f32.mrb[0].mxu0
        %v6455 = vadd.f32 0.0, %v6454
        %v6456 = vpop.f32.mrb[0].mxu0
        %v6457 = vpop.f32.mrb[0].mxu0
        %v6458 = vadd.f32 0.0, %v6457
        %v6459 = vpop.f32.mrb[0].mxu0
        %6460 = vmatprep.mubr.bf16.mxu0 %v6343
        %6461 = vmatmul.mubr.bf16.gmra.mrb[0].mxu0 %v6342
        %v6462 = vpop.f32.mrb[0].mxu0
        %v6463 = vadd.f32 0.0, %v6462
        %v6464 = vpop.f32.mrb[0].mxu0
        %v6465 = vpop.f32.mrb[0].mxu0
        %v6466 = vadd.f32 0.0, %v6465
        %v6467 = vpop.f32.mrb[0].mxu0
        %6468 = vmatprep.mubr.bf16.mxu0 %v6345
        %6469 = vmatmul.mubr.bf16.gmra.mrb[0].mxu0 %v6344
        %v6470 = vpop.f32.mrb[0].mxu0
        %v6471 = vadd.f32 0.0, %v6470
        %v6472 = vpop.f32.mrb[0].mxu0
        %v6473 = vpop.f32.mrb[0].mxu0
        %v6474 = vadd.f32 0.0, %v6473
        %v6475 = vpop.f32.mrb[0].mxu0
        %6476 = vmatprep.mubr.bf16.mxu0 %v6347
        %6477 = vmatmul.mubr.bf16.gmra.mrb[0].mxu0 %v6346
        %v6478 = vpop.f32.mrb[0].mxu0
        %v6479 = vadd.f32 0.0, %v6478
        %v6480 = vpop.f32.mrb[0].mxu0
        %v6481 = vpop.f32.mrb[0].mxu0
        %v6482 = vadd.f32 0.0, %v6481
        %v6483 = vpop.f32.mrb[0].mxu0
        %6484 = vmatprep.mubr.bf16.mxu0 %v6349
        %6485 = vmatmul.mubr.bf16.gmra.mrb[0].mxu0 %v6348
        %v6486 = vpop.f32.mrb[0].mxu0
        %v6487 = vadd.f32 0.0, %v6486
        %v6488 = vpop.f32.mrb[0].mxu0
        %v6489 = vpop.f32.mrb[0].mxu0
        %v6490 = vadd.f32 0.0, %v6489
        %v6491 = vpop.f32.mrb[0].mxu0
        %6492 = vmatprep.mubr.bf16.mxu0 %v6351
        %6493 = vmatmul.mubr.bf16.gmra.mrb[0].mxu0 %v6350
        %v6494 = vpop.f32.mrb[0].mxu0
        %v6495 = vadd.f32 0.0, %v6494
        %v6496 = vpop.f32.mrb[0].mxu0
        %v6497 = vpop.f32.mrb[0].mxu0
        %v6498 = vadd.f32 0.0, %v6497
        %v6499 = vpop.f32.mrb[0].mxu0
        %6500 = vmatprep.mubr.bf16.mxu0 %v6353
        %6501 = vmatmul.mubr.bf16.gmra.mrb[0].mxu0 %v6352
        %v6502 = vpop.f32.mrb[0].mxu0
        %v6503 = vadd.f32 0.0, %v6502
        %v6504 = vpop.f32.mrb[0].mxu0
        %v6505 = vpop.f32.mrb[0].mxu0
        %v6506 = vadd.f32 0.0, %v6505
        %v6507 = vpop.f32.mrb[0].mxu0
        %6508 = vmatprep.mubr.bf16.mxu0 %v6355
        %6509 = vmatmul.mubr.bf16.gmra.mrb[0].mxu0 %v6354
        %v6510 = vpop.f32.mrb[0].mxu0
        %v6511 = vadd.f32 0.0, %v6510
        %v6512 = vpop.f32.mrb[0].mxu0
        %v6513 = vpop.f32.mrb[0].mxu0
        %v6514 = vadd.f32 0.0, %v6513
        %v6515 = vpop.f32.mrb[0].mxu0
        %6516 = vdwg.mxu0
        %v6517 = vrcp.pop %v6294
        %v6518 = vrcp.pop %v6297
        %v6519 = vrcp.pop %v6300
        %v6520 = vrcp.pop %v6303
        %v6521 = vrcp.pop %v6306
        %v6522 = vrcp.pop %v6309
        %v6523 = vrcp.pop %v6312
        %v6524 = vrcp.pop %v6315
        %v6525 = vrcp.pop %v6318
        %v6526 = vrcp.pop %v6321
        %v6527 = vrcp.pop %v6324
        %v6528 = vrcp.pop %v6327
        %v6529 = vrcp.pop %v6330
        %v6530 = vrcp.pop %v6333
        %v6531 = vrcp.pop %v6336
        %v6532 = vrcp.pop %v6339
        %v6533 = vmul.f32 %v6455, %v6517
        %v6534 = vmul.f32 %v6458, %v6518
        %v6535 = vmul.f32 %v6463, %v6519
        %v6536 = vmul.f32 %v6466, %v6520
        %v6537 = vmul.f32 %v6471, %v6521
        %v6538 = vmul.f32 %v6474, %v6522
        %v6539 = vmul.f32 %v6479, %v6523
        %v6540 = vmul.f32 %v6482, %v6524
        %v6541 = vmul.f32 %v6487, %v6525
        %v6542 = vmul.f32 %v6490, %v6526
        %v6543 = vmul.f32 %v6495, %v6527
        %v6544 = vmul.f32 %v6498, %v6528
        %v6545 = vmul.f32 %v6503, %v6529
        %v6546 = vmul.f32 %v6506, %v6530
        %v6547 = vmul.f32 %v6511, %v6531
        %v6548 = vmul.f32 %v6514, %v6532
        %v6550 = vsel %vm3932, %v3713, 0
        %v6553 = vsel %vm3932, %v3716, 0
        %v6556 = vsel %vm3932, %v3719, 0
        %v6559 = vsel %vm3932, %v3722, 0
        %v6562 = vsel %vm3932, %v3725, 0
        %v6565 = vsel %vm3932, %v3728, 0
        %v6568 = vsel %vm3932, %v3731, 0
        %v6571 = vsel %vm3932, %v3734, 0
        %v6574 = vsel %vm3932, %v3737, 0
        %v6577 = vsel %vm3932, %v3740, 0
        %v6580 = vsel %vm3932, %v3743, 0
        %v6583 = vsel %vm3932, %v3746, 0
        %v6586 = vsel %vm3932, %v3749, 0
        %v6589 = vsel %vm3932, %v3752, 0
        %v6592 = vsel %vm3932, %v3755, 0
        %v6595 = vsel %vm3932, %v3758, 0
        %v6598 = vsel %vm3932, %v3761, 0
        %v6601 = vsel %vm3932, %v3764, 0
        %v6604 = vsel %vm3932, %v3767, 0
        %v6607 = vsel %vm3932, %v3770, 0
        %v6610 = vsel %vm3932, %v3773, 0
        %v6613 = vsel %vm3932, %v3776, 0
        %v6616 = vsel %vm3932, %v3779, 0
        %v6619 = vsel %vm3932, %v3782, 0
        %6621 = vmatprep.subr.bf16.mxu0 0
        %6622 = vmatpush1.bf16.xpose.msra.mxu0 %v6574
        %6623 = vmatprep.subr.bf16.mxu0 0
        %6624 = vmatpush1.bf16.xpose.msra.mxu0 %v6577
        %6625 = vmatprep.subr.bf16.mxu0 0
        %6626 = vmatpush1.bf16.xpose.msra.mxu0 %v6580
        %6627 = vmatprep.subr.bf16.mxu0 0
        %6628 = vmatpush1.bf16.xpose.msra.mxu0 %v6583
        %6629 = vmatprep.subr.bf16.mxu0 0
        %6630 = vmatpush1.bf16.xpose.msra.mxu0 %v6586
        %6631 = vmatprep.subr.bf16.mxu0 0
        %6632 = vmatpush1.bf16.xpose.msra.mxu0 %v6589
        %6633 = vmatprep.subr.bf16.mxu0 0
        %6634 = vmatpush1.bf16.xpose.msra.mxu0 %v6592
        %6635 = vmatprep.subr.bf16.mxu0 0
        %6636 = vmatpush1.bf16.xpose.msra.mxu0 %v6595
        %6637 = vmatprep.subr.bf16.mxu0 0
        %6638 = vmatpush1.bf16.xpose.msra.mxu0 %v6598
        %6639 = vmatprep.subr.bf16.mxu0 0
        %6640 = vmatpush1.bf16.xpose.msra.mxu0 %v6601
        %6641 = vmatprep.subr.bf16.mxu0 0
        %6642 = vmatpush1.bf16.xpose.msra.mxu0 %v6604
        %6643 = vmatprep.subr.bf16.mxu0 0
        %6644 = vmatpush1.bf16.xpose.msra.mxu0 %v6607
        %6645 = vmatprep.subr.bf16.mxu0 0
        %6646 = vmatpush1.bf16.xpose.msra.mxu0 %v6610
        %6647 = vmatprep.subr.bf16.mxu0 0
        %6648 = vmatpush1.bf16.xpose.msra.mxu0 %v6613
        %6649 = vmatprep.subr.bf16.mxu0 0
        %6650 = vmatpush1.bf16.xpose.msra.mxu0 %v6616
        %6651 = vmatprep.subr.bf16.mxu0 0
        %6652 = vmatpush1.bf16.xpose.msra.mxu0 %v6619
        %6653 = vmatprep.mubr.bf16.mxu0 0
        %6654 = vmatmul.mubr.bf16.gmra.mrb[0].mxu0 %v6550
        %v6655 = vpop.f32.mrb[0].mxu0
        %v6656 = vadd.f32 0.0, %v6655
        %v6657 = vpop.f32.mrb[0].mxu0
        %v6658 = vadd.f32 0.0, %v6657
        %v6659 = vpop.f32.mrb[0].mxu0
        %v6660 = vadd.f32 0.0, %v6659
        %v6661 = vpop.f32.mrb[0].mxu0
        %v6662 = vadd.f32 0.0, %v6661
        %6663 = vmatprep.mubr.bf16.mxu0 0
        %6664 = vmatmul.mubr.bf16.gmra.mrb[0].mxu0 %v6553
        %v6665 = vpop.f32.mrb[0].mxu0
        %v6666 = vadd.f32 0.0, %v6665
        %v6667 = vpop.f32.mrb[0].mxu0
        %v6668 = vadd.f32 0.0, %v6667
        %v6669 = vpop.f32.mrb[0].mxu0
        %v6670 = vadd.f32 0.0, %v6669
        %v6671 = vpop.f32.mrb[0].mxu0
        %v6672 = vadd.f32 0.0, %v6671
        %6673 = vmatprep.mubr.bf16.mxu0 0
        %6674 = vmatmul.mubr.bf16.gmra.mrb[0].mxu0 %v6556
        %v6675 = vpop.f32.mrb[0].mxu0
        %v6676 = vadd.f32 0.0, %v6675
        %v6677 = vpop.f32.mrb[0].mxu0
        %v6678 = vadd.f32 0.0, %v6677
        %v6679 = vpop.f32.mrb[0].mxu0
        %v6680 = vadd.f32 0.0, %v6679
        %v6681 = vpop.f32.mrb[0].mxu0
        %v6682 = vadd.f32 0.0, %v6681
        %6683 = vmatprep.mubr.bf16.mxu0 0
        %6684 = vmatmul.mubr.bf16.gmra.mrb[0].mxu0 %v6559
        %v6685 = vpop.f32.mrb[0].mxu0
        %v6686 = vadd.f32 0.0, %v6685
        %v6687 = vpop.f32.mrb[0].mxu0
        %v6688 = vadd.f32 0.0, %v6687
        %v6689 = vpop.f32.mrb[0].mxu0
        %v6690 = vadd.f32 0.0, %v6689
        %v6691 = vpop.f32.mrb[0].mxu0
        %v6692 = vadd.f32 0.0, %v6691
        %6693 = vmatprep.mubr.bf16.mxu0 0
        %6694 = vmatmul.mubr.bf16.gmra.mrb[0].mxu0 %v6562
        %v6695 = vpop.f32.mrb[0].mxu0
        %v6696 = vadd.f32 0.0, %v6695
        %v6697 = vpop.f32.mrb[0].mxu0
        %v6698 = vadd.f32 0.0, %v6697
        %v6699 = vpop.f32.mrb[0].mxu0
        %v6700 = vadd.f32 0.0, %v6699
        %v6701 = vpop.f32.mrb[0].mxu0
        %v6702 = vadd.f32 0.0, %v6701
        %6703 = vmatprep.mubr.bf16.mxu0 0
        %6704 = vmatmul.mubr.bf16.gmra.mrb[0].mxu0 %v6565
        %v6705 = vpop.f32.mrb[0].mxu0
        %v6706 = vadd.f32 0.0, %v6705
        %v6707 = vpop.f32.mrb[0].mxu0
        %v6708 = vadd.f32 0.0, %v6707
        %v6709 = vpop.f32.mrb[0].mxu0
        %v6710 = vadd.f32 0.0, %v6709
        %v6711 = vpop.f32.mrb[0].mxu0
        %v6712 = vadd.f32 0.0, %v6711
        %6713 = vmatprep.mubr.bf16.mxu0 0
        %6714 = vmatmul.mubr.bf16.gmra.mrb[0].mxu0 %v6568
        %v6715 = vpop.f32.mrb[0].mxu0
        %v6716 = vadd.f32 0.0, %v6715
        %v6717 = vpop.f32.mrb[0].mxu0
        %v6718 = vadd.f32 0.0, %v6717
        %v6719 = vpop.f32.mrb[0].mxu0
        %v6720 = vadd.f32 0.0, %v6719
        %v6721 = vpop.f32.mrb[0].mxu0
        %v6722 = vadd.f32 0.0, %v6721
        %6723 = vmatprep.mubr.bf16.mxu0 0
        %6724 = vmatmul.mubr.bf16.gmra.mrb[0].mxu0 %v6571
        %v6725 = vpop.f32.mrb[0].mxu0
        %v6726 = vadd.f32 0.0, %v6725
        %v6727 = vpop.f32.mrb[0].mxu0
        %v6728 = vadd.f32 0.0, %v6727
        %v6729 = vpop.f32.mrb[0].mxu0
        %v6730 = vadd.f32 0.0, %v6729
        %v6731 = vpop.f32.mrb[0].mxu0
        %v6732 = vadd.f32 0.0, %v6731
        %6733 = vdwg.mxu0
        %v6734 = vmul.f32 %v6656, 0.05103104
        %v6735 = vmul.f32 %v6658, 0.05103104
        %v6736 = vmul.f32 %v6660, 0.05103104
        %v6737 = vmul.f32 %v6662, 0.05103104
        %v6738 = vmul.f32 %v6666, 0.05103104
        %v6739 = vmul.f32 %v6668, 0.05103104
        %v6740 = vmul.f32 %v6670, 0.05103104
        %v6741 = vmul.f32 %v6672, 0.05103104
        %v6742 = vmul.f32 %v6676, 0.05103104
        %v6743 = vmul.f32 %v6678, 0.05103104
        %v6744 = vmul.f32 %v6680, 0.05103104
        %v6745 = vmul.f32 %v6682, 0.05103104
        %v6746 = vmul.f32 %v6686, 0.05103104
        %v6747 = vmul.f32 %v6688, 0.05103104
        %v6748 = vmul.f32 %v6690, 0.05103104
        %v6749 = vmul.f32 %v6692, 0.05103104
        %v6750 = vmul.f32 %v6696, 0.05103104
        %v6751 = vmul.f32 %v6698, 0.05103104
        %v6752 = vmul.f32 %v6700, 0.05103104
        %v6753 = vmul.f32 %v6702, 0.05103104
        %v6754 = vmul.f32 %v6706, 0.05103104
        %v6755 = vmul.f32 %v6708, 0.05103104
        %v6756 = vmul.f32 %v6710, 0.05103104
        %v6757 = vmul.f32 %v6712, 0.05103104
        %v6758 = vmul.f32 %v6716, 0.05103104
        %v6759 = vmul.f32 %v6718, 0.05103104
        %v6760 = vmul.f32 %v6720, 0.05103104
        %v6761 = vmul.f32 %v6722, 0.05103104
        %v6762 = vmul.f32 %v6726, 0.05103104
        %v6763 = vmul.f32 %v6728, 0.05103104
        %v6764 = vmul.f32 %v6730, 0.05103104
        %v6765 = vmul.f32 %v6732, 0.05103104
        %v6766 = vadd.f32 %v6734, %v3900
        %v6767 = vadd.f32 %v6735, %v3901
        %v6768 = vadd.f32 %v6736, %v3902
        %v6769 = vadd.f32 %v6737, %v3903
        %v6770 = vadd.f32 %v6738, %v3904
        %v6771 = vadd.f32 %v6739, %v3905
        %v6772 = vadd.f32 %v6740, %v3906
        %v6773 = vadd.f32 %v6741, %v3907
        %v6774 = vadd.f32 %v6742, %v3908
        %v6775 = vadd.f32 %v6743, %v3909
        %v6776 = vadd.f32 %v6744, %v3910
        %v6777 = vadd.f32 %v6745, %v3911
        %v6778 = vadd.f32 %v6746, %v3912
        %v6779 = vadd.f32 %v6747, %v3913
        %v6780 = vadd.f32 %v6748, %v3914
        %v6781 = vadd.f32 %v6749, %v3915
        %v6782 = vadd.f32 %v6750, %v3916
        %v6783 = vadd.f32 %v6751, %v3917
        %v6784 = vadd.f32 %v6752, %v3918
        %v6785 = vadd.f32 %v6753, %v3919
        %v6786 = vadd.f32 %v6754, %v3920
        %v6787 = vadd.f32 %v6755, %v3921
        %v6788 = vadd.f32 %v6756, %v3922
        %v6789 = vadd.f32 %v6757, %v3923
        %v6790 = vadd.f32 %v6758, %v3924
        %v6791 = vadd.f32 %v6759, %v3925
        %v6792 = vadd.f32 %v6760, %v3926
        %v6793 = vadd.f32 %v6761, %v3927
        %v6794 = vadd.f32 %v6762, %v3928
        %v6795 = vadd.f32 %v6763, %v3929
        %v6796 = vadd.f32 %v6764, %v3930
        %v6797 = vadd.f32 %v6765, %v3931
        %v6798 = vmax.f32 %v6766, %v6767
        %6799 = vmax.xlane.f32.xlu0 %v6798
        %v6800 = vpop.xlane.xlu0 %6799
        %v6801 = vmax.f32 %v6768, %v6769
        %6802 = vmax.xlane.f32.xlu0 %v6801
        %v6803 = vpop.xlane.xlu0 %6802
        %v6804 = vmax.f32 %v6770, %v6771
        %6805 = vmax.xlane.f32.xlu0 %v6804
        %v6806 = vpop.xlane.xlu0 %6805
        %v6807 = vmax.f32 %v6772, %v6773
        %6808 = vmax.xlane.f32.xlu0 %v6807
        %v6809 = vpop.xlane.xlu0 %6808
        %v6810 = vmax.f32 %v6774, %v6775
        %6811 = vmax.xlane.f32.xlu0 %v6810
        %v6812 = vpop.xlane.xlu0 %6811
        %v6813 = vmax.f32 %v6776, %v6777
        %6814 = vmax.xlane.f32.xlu0 %v6813
        %v6815 = vpop.xlane.xlu0 %6814
        %v6816 = vmax.f32 %v6778, %v6779
        %6817 = vmax.xlane.f32.xlu0 %v6816
        %v6818 = vpop.xlane.xlu0 %6817
        %v6819 = vmax.f32 %v6780, %v6781
        %6820 = vmax.xlane.f32.xlu0 %v6819
        %v6821 = vpop.xlane.xlu0 %6820
        %v6822 = vmax.f32 %v6782, %v6783
        %6823 = vmax.xlane.f32.xlu0 %v6822
        %v6824 = vpop.xlane.xlu0 %6823
        %v6825 = vmax.f32 %v6784, %v6785
        %6826 = vmax.xlane.f32.xlu0 %v6825
        %v6827 = vpop.xlane.xlu0 %6826
        %v6828 = vmax.f32 %v6786, %v6787
        %6829 = vmax.xlane.f32.xlu0 %v6828
        %v6830 = vpop.xlane.xlu0 %6829
        %v6831 = vmax.f32 %v6788, %v6789
        %6832 = vmax.xlane.f32.xlu0 %v6831
        %v6833 = vpop.xlane.xlu0 %6832
        %v6834 = vmax.f32 %v6790, %v6791
        %6835 = vmax.xlane.f32.xlu0 %v6834
        %v6836 = vpop.xlane.xlu0 %6835
        %v6837 = vmax.f32 %v6792, %v6793
        %6838 = vmax.xlane.f32.xlu0 %v6837
        %v6839 = vpop.xlane.xlu0 %6838
        %v6840 = vmax.f32 %v6794, %v6795
        %6841 = vmax.xlane.f32.xlu0 %v6840
        %v6842 = vpop.xlane.xlu0 %6841
        %v6843 = vmax.f32 %v6796, %v6797
        %6844 = vmax.xlane.f32.xlu0 %v6843
        %v6845 = vpop.xlane.xlu0 %6844
        %v6846 = vsub.f32 %v6766, %v6800
        %v6847 = vsub.f32 %v6767, %v6800
        %v6848 = vsub.f32 %v6768, %v6803
        %v6849 = vsub.f32 %v6769, %v6803
        %v6850 = vsub.f32 %v6770, %v6806
        %v6851 = vsub.f32 %v6771, %v6806
        %v6852 = vsub.f32 %v6772, %v6809
        %v6853 = vsub.f32 %v6773, %v6809
        %v6854 = vsub.f32 %v6774, %v6812
        %v6855 = vsub.f32 %v6775, %v6812
        %v6856 = vsub.f32 %v6776, %v6815
        %v6857 = vsub.f32 %v6777, %v6815
        %v6858 = vsub.f32 %v6778, %v6818
        %v6859 = vsub.f32 %v6779, %v6818
        %v6860 = vsub.f32 %v6780, %v6821
        %v6861 = vsub.f32 %v6781, %v6821
        %v6862 = vsub.f32 %v6782, %v6824
        %v6863 = vsub.f32 %v6783, %v6824
        %v6864 = vsub.f32 %v6784, %v6827
        %v6865 = vsub.f32 %v6785, %v6827
        %v6866 = vsub.f32 %v6786, %v6830
        %v6867 = vsub.f32 %v6787, %v6830
        %v6868 = vsub.f32 %v6788, %v6833
        %v6869 = vsub.f32 %v6789, %v6833
        %v6870 = vsub.f32 %v6790, %v6836
        %v6871 = vsub.f32 %v6791, %v6836
        %v6872 = vsub.f32 %v6792, %v6839
        %v6873 = vsub.f32 %v6793, %v6839
        %v6874 = vsub.f32 %v6794, %v6842
        %v6875 = vsub.f32 %v6795, %v6842
        %v6876 = vsub.f32 %v6796, %v6845
        %v6877 = vsub.f32 %v6797, %v6845
        %v6878 = vmul.f32 %v6846, 1.442695
        %v6879 = vpow.pop %v6878
        %v6880 = vmul.f32 %v6847, 1.442695
        %v6881 = vpow.pop %v6880
        %v6882 = vmul.f32 %v6848, 1.442695
        %v6883 = vpow.pop %v6882
        %v6884 = vmul.f32 %v6849, 1.442695
        %v6885 = vpow.pop %v6884
        %v6886 = vmul.f32 %v6850, 1.442695
        %v6887 = vpow.pop %v6886
        %v6888 = vmul.f32 %v6851, 1.442695
        %v6889 = vpow.pop %v6888
        %v6890 = vmul.f32 %v6852, 1.442695
        %v6891 = vpow.pop %v6890
        %v6892 = vmul.f32 %v6853, 1.442695
        %v6893 = vpow.pop %v6892
        %v6894 = vmul.f32 %v6854, 1.442695
        %v6895 = vpow.pop %v6894
        %v6896 = vmul.f32 %v6855, 1.442695
        %v6897 = vpow.pop %v6896
        %v6898 = vmul.f32 %v6856, 1.442695
        %v6899 = vpow.pop %v6898
        %v6900 = vmul.f32 %v6857, 1.442695
        %v6901 = vpow.pop %v6900
        %v6902 = vmul.f32 %v6858, 1.442695
        %v6903 = vpow.pop %v6902
        %v6904 = vmul.f32 %v6859, 1.442695
        %v6905 = vpow.pop %v6904
        %v6906 = vmul.f32 %v6860, 1.442695
        %v6907 = vpow.pop %v6906
        %v6908 = vmul.f32 %v6861, 1.442695
        %v6909 = vpow.pop %v6908
        %v6910 = vmul.f32 %v6862, 1.442695
        %v6911 = vpow.pop %v6910
        %v6912 = vmul.f32 %v6863, 1.442695
        %v6913 = vpow.pop %v6912
        %v6914 = vmul.f32 %v6864, 1.442695
        %v6915 = vpow.pop %v6914
        %v6916 = vmul.f32 %v6865, 1.442695
        %v6917 = vpow.pop %v6916
        %v6918 = vmul.f32 %v6866, 1.442695
        %v6919 = vpow.pop %v6918
        %v6920 = vmul.f32 %v6867, 1.442695
        %v6921 = vpow.pop %v6920
        %v6922 = vmul.f32 %v6868, 1.442695
        %v6923 = vpow.pop %v6922
        %v6924 = vmul.f32 %v6869, 1.442695
        %v6925 = vpow.pop %v6924
        %v6926 = vmul.f32 %v6870, 1.442695
        %v6927 = vpow.pop %v6926
        %v6928 = vmul.f32 %v6871, 1.442695
        %v6929 = vpow.pop %v6928
        %v6930 = vmul.f32 %v6872, 1.442695
        %v6931 = vpow.pop %v6930
        %v6932 = vmul.f32 %v6873, 1.442695
        %v6933 = vpow.pop %v6932
        %v6934 = vmul.f32 %v6874, 1.442695
        %v6935 = vpow.pop %v6934
        %v6936 = vmul.f32 %v6875, 1.442695
        %v6937 = vpow.pop %v6936
        %v6938 = vmul.f32 %v6876, 1.442695
        %v6939 = vpow.pop %v6938
        %v6940 = vmul.f32 %v6877, 1.442695
        %v6941 = vpow.pop %v6940
        %v6942 = vadd.f32 %v6879, %v6881
        %6943 = vadd.xlane.f32.xlu0 %v6942
        %v6944 = vpop.xlane.xlu0 %6943
        %v6945 = vadd.f32 %v6883, %v6885
        %6946 = vadd.xlane.f32.xlu0 %v6945
        %v6947 = vpop.xlane.xlu0 %6946
        %v6948 = vadd.f32 %v6887, %v6889
        %6949 = vadd.xlane.f32.xlu0 %v6948
        %v6950 = vpop.xlane.xlu0 %6949
        %v6951 = vadd.f32 %v6891, %v6893
        %6952 = vadd.xlane.f32.xlu0 %v6951
        %v6953 = vpop.xlane.xlu0 %6952
        %v6954 = vadd.f32 %v6895, %v6897
        %6955 = vadd.xlane.f32.xlu0 %v6954
        %v6956 = vpop.xlane.xlu0 %6955
        %v6957 = vadd.f32 %v6899, %v6901
        %6958 = vadd.xlane.f32.xlu0 %v6957
        %v6959 = vpop.xlane.xlu0 %6958
        %v6960 = vadd.f32 %v6903, %v6905
        %6961 = vadd.xlane.f32.xlu0 %v6960
        %v6962 = vpop.xlane.xlu0 %6961
        %v6963 = vadd.f32 %v6907, %v6909
        %6964 = vadd.xlane.f32.xlu0 %v6963
        %v6965 = vpop.xlane.xlu0 %6964
        %v6966 = vadd.f32 %v6911, %v6913
        %6967 = vadd.xlane.f32.xlu0 %v6966
        %v6968 = vpop.xlane.xlu0 %6967
        %v6969 = vadd.f32 %v6915, %v6917
        %6970 = vadd.xlane.f32.xlu0 %v6969
        %v6971 = vpop.xlane.xlu0 %6970
        %v6972 = vadd.f32 %v6919, %v6921
        %6973 = vadd.xlane.f32.xlu0 %v6972
        %v6974 = vpop.xlane.xlu0 %6973
        %v6975 = vadd.f32 %v6923, %v6925
        %6976 = vadd.xlane.f32.xlu0 %v6975
        %v6977 = vpop.xlane.xlu0 %6976
        %v6978 = vadd.f32 %v6927, %v6929
        %6979 = vadd.xlane.f32.xlu0 %v6978
        %v6980 = vpop.xlane.xlu0 %6979
        %v6981 = vadd.f32 %v6931, %v6933
        %6982 = vadd.xlane.f32.xlu0 %v6981
        %v6983 = vpop.xlane.xlu0 %6982
        %v6984 = vadd.f32 %v6935, %v6937
        %6985 = vadd.xlane.f32.xlu0 %v6984
        %v6986 = vpop.xlane.xlu0 %6985
        %v6987 = vadd.f32 %v6939, %v6941
        %6988 = vadd.xlane.f32.xlu0 %v6987
        %v6989 = vpop.xlane.xlu0 %6988
        %v6990 = vpack.c.bf16 %v6883, %v6879
        %v6991 = vpack.c.bf16 %v6885, %v6881
        %v6992 = vpack.c.bf16 %v6891, %v6887
        %v6993 = vpack.c.bf16 %v6893, %v6889
        %v6994 = vpack.c.bf16 %v6899, %v6895
        %v6995 = vpack.c.bf16 %v6901, %v6897
        %v6996 = vpack.c.bf16 %v6907, %v6903
        %v6997 = vpack.c.bf16 %v6909, %v6905
        %v6998 = vpack.c.bf16 %v6915, %v6911
        %v6999 = vpack.c.bf16 %v6917, %v6913
        %v7000 = vpack.c.bf16 %v6923, %v6919
        %v7001 = vpack.c.bf16 %v6925, %v6921
        %v7002 = vpack.c.bf16 %v6931, %v6927
        %v7003 = vpack.c.bf16 %v6933, %v6929
        %v7004 = vpack.c.bf16 %v6939, %v6935
        %v7005 = vpack.c.bf16 %v6941, %v6937
        %7006 = vmatprep.subr.bf16.mxu0 0
        %7007 = vmatpush1.bf16.msra.mxu0 %v3785
        %7008 = vmatprep.subr.bf16.mxu0 0
        %7009 = vmatpush1.bf16.msra.mxu0 %v3788
        %7010 = vmatprep.subr.bf16.mxu0 0
        %7011 = vmatpush1.bf16.msra.mxu0 %v3791
        %7012 = vmatprep.subr.bf16.mxu0 0
        %7013 = vmatpush1.bf16.msra.mxu0 %v3794
        %7014 = vmatprep.subr.bf16.mxu0 0
        %7015 = vmatpush1.bf16.msra.mxu0 %v3797
        %7016 = vmatprep.subr.bf16.mxu0 0
        %7017 = vmatpush1.bf16.msra.mxu0 %v3800
        %7018 = vmatprep.subr.bf16.mxu0 0
        %7019 = vmatpush1.bf16.msra.mxu0 %v3803
        %7020 = vmatprep.subr.bf16.mxu0 0
        %7021 = vmatpush1.bf16.msra.mxu0 %v3806
        %7022 = vmatprep.subr.bf16.mxu0 0
        %7023 = vmatpush1.bf16.msra.mxu0 %v3809
        %7024 = vmatprep.subr.bf16.mxu0 0
        %7025 = vmatpush1.bf16.msra.mxu0 %v3812
        %7026 = vmatprep.subr.bf16.mxu0 0
        %7027 = vmatpush1.bf16.msra.mxu0 %v3815
        %7028 = vmatprep.subr.bf16.mxu0 0
        %7029 = vmatpush1.bf16.msra.mxu0 %v3818
        %7030 = vmatprep.subr.bf16.mxu0 0
        %7031 = vmatpush1.bf16.msra.mxu0 %v3821
        %7032 = vmatprep.subr.bf16.mxu0 0
        %7033 = vmatpush1.bf16.msra.mxu0 %v3824
        %7034 = vmatprep.subr.bf16.mxu0 0
        %7035 = vmatpush1.bf16.msra.mxu0 %v3827
        %7036 = vmatprep.subr.bf16.mxu0 0
        %7037 = vmatpush1.bf16.msra.mxu0 %v3830
        %7038 = vmatprep.mubr.bf16.mxu0 %v6991
        %7039 = vmatmul.mubr.bf16.gmra.mrb[0].mxu0 %v6990
        %v7040 = vpop.f32.mrb[0].mxu0
        %v7041 = vadd.f32 0.0, %v7040
        %v7042 = vpop.f32.mrb[0].mxu0
        %v7043 = vpop.f32.mrb[0].mxu0
        %v7044 = vadd.f32 0.0, %v7043
        %v7045 = vpop.f32.mrb[0].mxu0
        %7046 = vmatprep.mubr.bf16.mxu0 %v6993
        %7047 = vmatmul.mubr.bf16.gmra.mrb[0].mxu0 %v6992
        %v7048 = vpop.f32.mrb[0].mxu0
        %v7049 = vadd.f32 0.0, %v7048
        %v7050 = vpop.f32.mrb[0].mxu0
        %v7051 = vpop.f32.mrb[0].mxu0
        %v7052 = vadd.f32 0.0, %v7051
        %v7053 = vpop.f32.mrb[0].mxu0
        %7054 = vmatprep.mubr.bf16.mxu0 %v6995
        %7055 = vmatmul.mubr.bf16.gmra.mrb[0].mxu0 %v6994
        %v7056 = vpop.f32.mrb[0].mxu0
        %v7057 = vadd.f32 0.0, %v7056
        %v7058 = vpop.f32.mrb[0].mxu0
        %v7059 = vpop.f32.mrb[0].mxu0
        %v7060 = vadd.f32 0.0, %v7059
        %v7061 = vpop.f32.mrb[0].mxu0
        %7062 = vmatprep.mubr.bf16.mxu0 %v6997
        %7063 = vmatmul.mubr.bf16.gmra.mrb[0].mxu0 %v6996
        %v7064 = vpop.f32.mrb[0].mxu0
        %v7065 = vadd.f32 0.0, %v7064
        %v7066 = vpop.f32.mrb[0].mxu0
        %v7067 = vpop.f32.mrb[0].mxu0
        %v7068 = vadd.f32 0.0, %v7067
        %v7069 = vpop.f32.mrb[0].mxu0
        %7070 = vmatprep.mubr.bf16.mxu0 %v6999
        %7071 = vmatmul.mubr.bf16.gmra.mrb[0].mxu0 %v6998
        %v7072 = vpop.f32.mrb[0].mxu0
        %v7073 = vadd.f32 0.0, %v7072
        %v7074 = vpop.f32.mrb[0].mxu0
        %v7075 = vpop.f32.mrb[0].mxu0
        %v7076 = vadd.f32 0.0, %v7075
        %v7077 = vpop.f32.mrb[0].mxu0
        %7078 = vmatprep.mubr.bf16.mxu0 %v7001
        %7079 = vmatmul.mubr.bf16.gmra.mrb[0].mxu0 %v7000
        %v7080 = vpop.f32.mrb[0].mxu0
        %v7081 = vadd.f32 0.0, %v7080
        %v7082 = vpop.f32.mrb[0].mxu0
        %v7083 = vpop.f32.mrb[0].mxu0
        %v7084 = vadd.f32 0.0, %v7083
        %v7085 = vpop.f32.mrb[0].mxu0
        %7086 = vmatprep.mubr.bf16.mxu0 %v7003
        %7087 = vmatmul.mubr.bf16.gmra.mrb[0].mxu0 %v7002
        %v7088 = vpop.f32.mrb[0].mxu0
        %v7089 = vadd.f32 0.0, %v7088
        %v7090 = vpop.f32.mrb[0].mxu0
        %v7091 = vpop.f32.mrb[0].mxu0
        %v7092 = vadd.f32 0.0, %v7091
        %v7093 = vpop.f32.mrb[0].mxu0
        %7094 = vmatprep.mubr.bf16.mxu0 %v7005
        %7095 = vmatmul.mubr.bf16.gmra.mrb[0].mxu0 %v7004
        %v7096 = vpop.f32.mrb[0].mxu0
        %v7097 = vadd.f32 0.0, %v7096
        %v7098 = vpop.f32.mrb[0].mxu0
        %v7099 = vpop.f32.mrb[0].mxu0
        %v7100 = vadd.f32 0.0, %v7099
        %v7101 = vpop.f32.mrb[0].mxu0
        %7102 = vdwg.mxu0
        %v7103 = vrcp.pop %v6944
        %v7104 = vrcp.pop %v6947
        %v7105 = vrcp.pop %v6950
        %v7106 = vrcp.pop %v6953
        %v7107 = vrcp.pop %v6956
        %v7108 = vrcp.pop %v6959
        %v7109 = vrcp.pop %v6962
        %v7110 = vrcp.pop %v6965
        %v7111 = vrcp.pop %v6968
        %v7112 = vrcp.pop %v6971
        %v7113 = vrcp.pop %v6974
        %v7114 = vrcp.pop %v6977
        %v7115 = vrcp.pop %v6980
        %v7116 = vrcp.pop %v6983
        %v7117 = vrcp.pop %v6986
        %v7118 = vrcp.pop %v6989
        %v7119 = vmul.f32 %v7041, %v7103
        %v7120 = vmul.f32 %v7044, %v7104
        %v7121 = vmul.f32 %v7049, %v7105
        %v7122 = vmul.f32 %v7052, %v7106
        %v7123 = vmul.f32 %v7057, %v7107
        %v7124 = vmul.f32 %v7060, %v7108
        %v7125 = vmul.f32 %v7065, %v7109
        %v7126 = vmul.f32 %v7068, %v7110
        %v7127 = vmul.f32 %v7073, %v7111
        %v7128 = vmul.f32 %v7076, %v7112
        %v7129 = vmul.f32 %v7081, %v7113
        %v7130 = vmul.f32 %v7084, %v7114
        %v7131 = vmul.f32 %v7089, %v7115
        %v7132 = vmul.f32 %v7092, %v7116
        %v7133 = vmul.f32 %v7097, %v7117
        %v7134 = vmul.f32 %v7100, %v7118
        %7143 = vrot.lane.b32.xlu0 %v3713, 64
        %v7144 = vpop.permute.xlu0 %7143
        %7145 = vrot.lane.b32.xlu0 %v3716, 64
        %v7146 = vpop.permute.xlu0 %7145
        %7147 = vrot.lane.b32.xlu0 %v3719, 64
        %v7148 = vpop.permute.xlu0 %7147
        %7149 = vrot.lane.b32.xlu0 %v3722, 64
        %v7150 = vpop.permute.xlu0 %7149
        %7151 = vrot.lane.b32.xlu0 %v3725, 64
        %v7152 = vpop.permute.xlu0 %7151
        %7153 = vrot.lane.b32.xlu0 %v3728, 64
        %v7154 = vpop.permute.xlu0 %7153
        %7155 = vrot.lane.b32.xlu0 %v3731, 64
        %v7156 = vpop.permute.xlu0 %7155
        %7157 = vrot.lane.b32.xlu0 %v3734, 64
        %v7158 = vpop.permute.xlu0 %7157
        %7175 = vrot.lane.b32.xlu0 %v3737, 64
        %v7176 = vpop.permute.xlu0 %7175
        %7177 = vrot.lane.b32.xlu0 %v3740, 64
        %v7178 = vpop.permute.xlu0 %7177
        %7179 = vrot.lane.b32.xlu0 %v3743, 64
        %v7180 = vpop.permute.xlu0 %7179
        %7181 = vrot.lane.b32.xlu0 %v3746, 64
        %v7182 = vpop.permute.xlu0 %7181
        %7183 = vrot.lane.b32.xlu0 %v3749, 64
        %v7184 = vpop.permute.xlu0 %7183
        %7185 = vrot.lane.b32.xlu0 %v3752, 64
        %v7186 = vpop.permute.xlu0 %7185
        %7187 = vrot.lane.b32.xlu0 %v3755, 64
        %v7188 = vpop.permute.xlu0 %7187
        %7189 = vrot.lane.b32.xlu0 %v3758, 64
        %v7190 = vpop.permute.xlu0 %7189
        %7191 = vrot.lane.b32.xlu0 %v3761, 64
        %v7192 = vpop.permute.xlu0 %7191
        %7193 = vrot.lane.b32.xlu0 %v3764, 64
        %v7194 = vpop.permute.xlu0 %7193
        %7195 = vrot.lane.b32.xlu0 %v3767, 64
        %v7196 = vpop.permute.xlu0 %7195
        %7197 = vrot.lane.b32.xlu0 %v3770, 64
        %v7198 = vpop.permute.xlu0 %7197
        %7199 = vrot.lane.b32.xlu0 %v3773, 64
        %v7200 = vpop.permute.xlu0 %7199
        %7201 = vrot.lane.b32.xlu0 %v3776, 64
        %v7202 = vpop.permute.xlu0 %7201
        %7203 = vrot.lane.b32.xlu0 %v3779, 64
        %v7204 = vpop.permute.xlu0 %7203
        %7205 = vrot.lane.b32.xlu0 %v3782, 64
        %v7206 = vpop.permute.xlu0 %7205
        %v7208 = vsel %vm3932, %v7144, 0
        %v7211 = vsel %vm3932, %v7146, 0
        %v7214 = vsel %vm3932, %v7148, 0
        %v7217 = vsel %vm3932, %v7150, 0
        %v7220 = vsel %vm3932, %v7152, 0
        %v7223 = vsel %vm3932, %v7154, 0
        %v7226 = vsel %vm3932, %v7156, 0
        %v7229 = vsel %vm3932, %v7158, 0
        %v7232 = vsel %vm3932, %v7176, 0
        %v7235 = vsel %vm3932, %v7178, 0
        %v7238 = vsel %vm3932, %v7180, 0
        %v7241 = vsel %vm3932, %v7182, 0
        %v7244 = vsel %vm3932, %v7184, 0
        %v7247 = vsel %vm3932, %v7186, 0
        %v7250 = vsel %vm3932, %v7188, 0
        %v7253 = vsel %vm3932, %v7190, 0
        %v7256 = vsel %vm3932, %v7192, 0
        %v7259 = vsel %vm3932, %v7194, 0
        %v7262 = vsel %vm3932, %v7196, 0
        %v7265 = vsel %vm3932, %v7198, 0
        %v7268 = vsel %vm3932, %v7200, 0
        %v7271 = vsel %vm3932, %v7202, 0
        %v7274 = vsel %vm3932, %v7204, 0
        %v7277 = vsel %vm3932, %v7206, 0
        %7279 = vmatprep.subr.bf16.mxu0 0
        %7280 = vmatpush1.bf16.xpose.msra.mxu0 %v7232
        %7281 = vmatprep.subr.bf16.mxu0 0
        %7282 = vmatpush1.bf16.xpose.msra.mxu0 %v7235
        %7283 = vmatprep.subr.bf16.mxu0 0
        %7284 = vmatpush1.bf16.xpose.msra.mxu0 %v7238
        %7285 = vmatprep.subr.bf16.mxu0 0
        %7286 = vmatpush1.bf16.xpose.msra.mxu0 %v7241
        %7287 = vmatprep.subr.bf16.mxu0 0
        %7288 = vmatpush1.bf16.xpose.msra.mxu0 %v7244
        %7289 = vmatprep.subr.bf16.mxu0 0
        %7290 = vmatpush1.bf16.xpose.msra.mxu0 %v7247
        %7291 = vmatprep.subr.bf16.mxu0 0
        %7292 = vmatpush1.bf16.xpose.msra.mxu0 %v7250
        %7293 = vmatprep.subr.bf16.mxu0 0
        %7294 = vmatpush1.bf16.xpose.msra.mxu0 %v7253
        %7295 = vmatprep.subr.bf16.mxu0 0
        %7296 = vmatpush1.bf16.xpose.msra.mxu0 %v7256
        %7297 = vmatprep.subr.bf16.mxu0 0
        %7298 = vmatpush1.bf16.xpose.msra.mxu0 %v7259
        %7299 = vmatprep.subr.bf16.mxu0 0
        %7300 = vmatpush1.bf16.xpose.msra.mxu0 %v7262
        %7301 = vmatprep.subr.bf16.mxu0 0
        %7302 = vmatpush1.bf16.xpose.msra.mxu0 %v7265
        %7303 = vmatprep.subr.bf16.mxu0 0
        %7304 = vmatpush1.bf16.xpose.msra.mxu0 %v7268
        %7305 = vmatprep.subr.bf16.mxu0 0
        %7306 = vmatpush1.bf16.xpose.msra.mxu0 %v7271
        %7307 = vmatprep.subr.bf16.mxu0 0
        %7308 = vmatpush1.bf16.xpose.msra.mxu0 %v7274
        %7309 = vmatprep.subr.bf16.mxu0 0
        %7310 = vmatpush1.bf16.xpose.msra.mxu0 %v7277
        %7311 = vmatprep.mubr.bf16.mxu0 0
        %7312 = vmatmul.mubr.bf16.gmra.mrb[0].mxu0 %v7208
        %v7313 = vpop.f32.mrb[0].mxu0
        %v7314 = vadd.f32 0.0, %v7313
        %v7315 = vpop.f32.mrb[0].mxu0
        %v7316 = vadd.f32 0.0, %v7315
        %v7317 = vpop.f32.mrb[0].mxu0
        %v7318 = vadd.f32 0.0, %v7317
        %v7319 = vpop.f32.mrb[0].mxu0
        %v7320 = vadd.f32 0.0, %v7319
        %7321 = vmatprep.mubr.bf16.mxu0 0
        %7322 = vmatmul.mubr.bf16.gmra.mrb[0].mxu0 %v7211
        %v7323 = vpop.f32.mrb[0].mxu0
        %v7324 = vadd.f32 0.0, %v7323
        %v7325 = vpop.f32.mrb[0].mxu0
        %v7326 = vadd.f32 0.0, %v7325
        %v7327 = vpop.f32.mrb[0].mxu0
        %v7328 = vadd.f32 0.0, %v7327
        %v7329 = vpop.f32.mrb[0].mxu0
        %v7330 = vadd.f32 0.0, %v7329
        %7331 = vmatprep.mubr.bf16.mxu0 0
        %7332 = vmatmul.mubr.bf16.gmra.mrb[0].mxu0 %v7214
        %v7333 = vpop.f32.mrb[0].mxu0
        %v7334 = vadd.f32 0.0, %v7333
        %v7335 = vpop.f32.mrb[0].mxu0
        %v7336 = vadd.f32 0.0, %v7335
        %v7337 = vpop.f32.mrb[0].mxu0
        %v7338 = vadd.f32 0.0, %v7337
        %v7339 = vpop.f32.mrb[0].mxu0
        %v7340 = vadd.f32 0.0, %v7339
        %7341 = vmatprep.mubr.bf16.mxu0 0
        %7342 = vmatmul.mubr.bf16.gmra.mrb[0].mxu0 %v7217
        %v7343 = vpop.f32.mrb[0].mxu0
        %v7344 = vadd.f32 0.0, %v7343
        %v7345 = vpop.f32.mrb[0].mxu0
        %v7346 = vadd.f32 0.0, %v7345
        %v7347 = vpop.f32.mrb[0].mxu0
        %v7348 = vadd.f32 0.0, %v7347
        %v7349 = vpop.f32.mrb[0].mxu0
        %v7350 = vadd.f32 0.0, %v7349
        %7351 = vmatprep.mubr.bf16.mxu0 0
        %7352 = vmatmul.mubr.bf16.gmra.mrb[0].mxu0 %v7220
        %v7353 = vpop.f32.mrb[0].mxu0
        %v7354 = vadd.f32 0.0, %v7353
        %v7355 = vpop.f32.mrb[0].mxu0
        %v7356 = vadd.f32 0.0, %v7355
        %v7357 = vpop.f32.mrb[0].mxu0
        %v7358 = vadd.f32 0.0, %v7357
        %v7359 = vpop.f32.mrb[0].mxu0
        %v7360 = vadd.f32 0.0, %v7359
        %7361 = vmatprep.mubr.bf16.mxu0 0
        %7362 = vmatmul.mubr.bf16.gmra.mrb[0].mxu0 %v7223
        %v7363 = vpop.f32.mrb[0].mxu0
        %v7364 = vadd.f32 0.0, %v7363
        %v7365 = vpop.f32.mrb[0].mxu0
        %v7366 = vadd.f32 0.0, %v7365
        %v7367 = vpop.f32.mrb[0].mxu0
        %v7368 = vadd.f32 0.0, %v7367
        %v7369 = vpop.f32.mrb[0].mxu0
        %v7370 = vadd.f32 0.0, %v7369
        %7371 = vmatprep.mubr.bf16.mxu0 0
        %7372 = vmatmul.mubr.bf16.gmra.mrb[0].mxu0 %v7226
        %v7373 = vpop.f32.mrb[0].mxu0
        %v7374 = vadd.f32 0.0, %v7373
        %v7375 = vpop.f32.mrb[0].mxu0
        %v7376 = vadd.f32 0.0, %v7375
        %v7377 = vpop.f32.mrb[0].mxu0
        %v7378 = vadd.f32 0.0, %v7377
        %v7379 = vpop.f32.mrb[0].mxu0
        %v7380 = vadd.f32 0.0, %v7379
        %7381 = vmatprep.mubr.bf16.mxu0 0
        %7382 = vmatmul.mubr.bf16.gmra.mrb[0].mxu0 %v7229
        %v7383 = vpop.f32.mrb[0].mxu0
        %v7384 = vadd.f32 0.0, %v7383
        %v7385 = vpop.f32.mrb[0].mxu0
        %v7386 = vadd.f32 0.0, %v7385
        %v7387 = vpop.f32.mrb[0].mxu0
        %v7388 = vadd.f32 0.0, %v7387
        %v7389 = vpop.f32.mrb[0].mxu0
        %v7390 = vadd.f32 0.0, %v7389
        %7391 = vdwg.mxu0
        %v7392 = vmul.f32 %v7314, 0.05103104
        %v7393 = vmul.f32 %v7316, 0.05103104
        %v7394 = vmul.f32 %v7318, 0.05103104
        %v7395 = vmul.f32 %v7320, 0.05103104
        %v7396 = vmul.f32 %v7324, 0.05103104
        %v7397 = vmul.f32 %v7326, 0.05103104
        %v7398 = vmul.f32 %v7328, 0.05103104
        %v7399 = vmul.f32 %v7330, 0.05103104
        %v7400 = vmul.f32 %v7334, 0.05103104
        %v7401 = vmul.f32 %v7336, 0.05103104
        %v7402 = vmul.f32 %v7338, 0.05103104
        %v7403 = vmul.f32 %v7340, 0.05103104
        %v7404 = vmul.f32 %v7344, 0.05103104
        %v7405 = vmul.f32 %v7346, 0.05103104
        %v7406 = vmul.f32 %v7348, 0.05103104
        %v7407 = vmul.f32 %v7350, 0.05103104
        %v7408 = vmul.f32 %v7354, 0.05103104
        %v7409 = vmul.f32 %v7356, 0.05103104
        %v7410 = vmul.f32 %v7358, 0.05103104
        %v7411 = vmul.f32 %v7360, 0.05103104
        %v7412 = vmul.f32 %v7364, 0.05103104
        %v7413 = vmul.f32 %v7366, 0.05103104
        %v7414 = vmul.f32 %v7368, 0.05103104
        %v7415 = vmul.f32 %v7370, 0.05103104
        %v7416 = vmul.f32 %v7374, 0.05103104
        %v7417 = vmul.f32 %v7376, 0.05103104
        %v7418 = vmul.f32 %v7378, 0.05103104
        %v7419 = vmul.f32 %v7380, 0.05103104
        %v7420 = vmul.f32 %v7384, 0.05103104
        %v7421 = vmul.f32 %v7386, 0.05103104
        %v7422 = vmul.f32 %v7388, 0.05103104
        %v7423 = vmul.f32 %v7390, 0.05103104
        %v7424 = vadd.f32 %v7392, %v3900
        %v7425 = vadd.f32 %v7393, %v3901
        %v7426 = vadd.f32 %v7394, %v3902
        %v7427 = vadd.f32 %v7395, %v3903
        %v7428 = vadd.f32 %v7396, %v3904
        %v7429 = vadd.f32 %v7397, %v3905
        %v7430 = vadd.f32 %v7398, %v3906
        %v7431 = vadd.f32 %v7399, %v3907
        %v7432 = vadd.f32 %v7400, %v3908
        %v7433 = vadd.f32 %v7401, %v3909
        %v7434 = vadd.f32 %v7402, %v3910
        %v7435 = vadd.f32 %v7403, %v3911
        %v7436 = vadd.f32 %v7404, %v3912
        %v7437 = vadd.f32 %v7405, %v3913
        %v7438 = vadd.f32 %v7406, %v3914
        %v7439 = vadd.f32 %v7407, %v3915
        %v7440 = vadd.f32 %v7408, %v3916
        %v7441 = vadd.f32 %v7409, %v3917
        %v7442 = vadd.f32 %v7410, %v3918
        %v7443 = vadd.f32 %v7411, %v3919
        %v7444 = vadd.f32 %v7412, %v3920
        %v7445 = vadd.f32 %v7413, %v3921
        %v7446 = vadd.f32 %v7414, %v3922
        %v7447 = vadd.f32 %v7415, %v3923
        %v7448 = vadd.f32 %v7416, %v3924
        %v7449 = vadd.f32 %v7417, %v3925
        %v7450 = vadd.f32 %v7418, %v3926
        %v7451 = vadd.f32 %v7419, %v3927
        %v7452 = vadd.f32 %v7420, %v3928
        %v7453 = vadd.f32 %v7421, %v3929
        %v7454 = vadd.f32 %v7422, %v3930
        %v7455 = vadd.f32 %v7423, %v3931
        %v7456 = vmax.f32 %v7424, %v7425
        %7457 = vmax.xlane.f32.xlu0 %v7456
        %v7458 = vpop.xlane.xlu0 %7457
        %v7459 = vmax.f32 %v7426, %v7427
        %7460 = vmax.xlane.f32.xlu0 %v7459
        %v7461 = vpop.xlane.xlu0 %7460
        %v7462 = vmax.f32 %v7428, %v7429
        %7463 = vmax.xlane.f32.xlu0 %v7462
        %v7464 = vpop.xlane.xlu0 %7463
        %v7465 = vmax.f32 %v7430, %v7431
        %7466 = vmax.xlane.f32.xlu0 %v7465
        %v7467 = vpop.xlane.xlu0 %7466
        %v7468 = vmax.f32 %v7432, %v7433
        %7469 = vmax.xlane.f32.xlu0 %v7468
        %v7470 = vpop.xlane.xlu0 %7469
        %v7471 = vmax.f32 %v7434, %v7435
        %7472 = vmax.xlane.f32.xlu0 %v7471
        %v7473 = vpop.xlane.xlu0 %7472
        %v7474 = vmax.f32 %v7436, %v7437
        %7475 = vmax.xlane.f32.xlu0 %v7474
        %v7476 = vpop.xlane.xlu0 %7475
        %v7477 = vmax.f32 %v7438, %v7439
        %7478 = vmax.xlane.f32.xlu0 %v7477
        %v7479 = vpop.xlane.xlu0 %7478
        %v7480 = vmax.f32 %v7440, %v7441
        %7481 = vmax.xlane.f32.xlu0 %v7480
        %v7482 = vpop.xlane.xlu0 %7481
        %v7483 = vmax.f32 %v7442, %v7443
        %7484 = vmax.xlane.f32.xlu0 %v7483
        %v7485 = vpop.xlane.xlu0 %7484
        %v7486 = vmax.f32 %v7444, %v7445
        %7487 = vmax.xlane.f32.xlu0 %v7486
        %v7488 = vpop.xlane.xlu0 %7487
        %v7489 = vmax.f32 %v7446, %v7447
        %7490 = vmax.xlane.f32.xlu0 %v7489
        %v7491 = vpop.xlane.xlu0 %7490
        %v7492 = vmax.f32 %v7448, %v7449
        %7493 = vmax.xlane.f32.xlu0 %v7492
        %v7494 = vpop.xlane.xlu0 %7493
        %v7495 = vmax.f32 %v7450, %v7451
        %7496 = vmax.xlane.f32.xlu0 %v7495
        %v7497 = vpop.xlane.xlu0 %7496
        %v7498 = vmax.f32 %v7452, %v7453
        %7499 = vmax.xlane.f32.xlu0 %v7498
        %v7500 = vpop.xlane.xlu0 %7499
        %v7501 = vmax.f32 %v7454, %v7455
        %7502 = vmax.xlane.f32.xlu0 %v7501
        %v7503 = vpop.xlane.xlu0 %7502
        %v7504 = vsub.f32 %v7424, %v7458
        %v7505 = vsub.f32 %v7425, %v7458
        %v7506 = vsub.f32 %v7426, %v7461
        %v7507 = vsub.f32 %v7427, %v7461
        %v7508 = vsub.f32 %v7428, %v7464
        %v7509 = vsub.f32 %v7429, %v7464
        %v7510 = vsub.f32 %v7430, %v7467
        %v7511 = vsub.f32 %v7431, %v7467
        %v7512 = vsub.f32 %v7432, %v7470
        %v7513 = vsub.f32 %v7433, %v7470
        %v7514 = vsub.f32 %v7434, %v7473
        %v7515 = vsub.f32 %v7435, %v7473
        %v7516 = vsub.f32 %v7436, %v7476
        %v7517 = vsub.f32 %v7437, %v7476
        %v7518 = vsub.f32 %v7438, %v7479
        %v7519 = vsub.f32 %v7439, %v7479
        %v7520 = vsub.f32 %v7440, %v7482
        %v7521 = vsub.f32 %v7441, %v7482
        %v7522 = vsub.f32 %v7442, %v7485
        %v7523 = vsub.f32 %v7443, %v7485
        %v7524 = vsub.f32 %v7444, %v7488
        %v7525 = vsub.f32 %v7445, %v7488
        %v7526 = vsub.f32 %v7446, %v7491
        %v7527 = vsub.f32 %v7447, %v7491
        %v7528 = vsub.f32 %v7448, %v7494
        %v7529 = vsub.f32 %v7449, %v7494
        %v7530 = vsub.f32 %v7450, %v7497
        %v7531 = vsub.f32 %v7451, %v7497
        %v7532 = vsub.f32 %v7452, %v7500
        %v7533 = vsub.f32 %v7453, %v7500
        %v7534 = vsub.f32 %v7454, %v7503
        %v7535 = vsub.f32 %v7455, %v7503
        %v7536 = vmul.f32 %v7504, 1.442695
        %v7537 = vpow.pop %v7536
        %v7538 = vmul.f32 %v7505, 1.442695
        %v7539 = vpow.pop %v7538
        %v7540 = vmul.f32 %v7506, 1.442695
        %v7541 = vpow.pop %v7540
        %v7542 = vmul.f32 %v7507, 1.442695
        %v7543 = vpow.pop %v7542
        %v7544 = vmul.f32 %v7508, 1.442695
        %v7545 = vpow.pop %v7544
        %v7546 = vmul.f32 %v7509, 1.442695
        %v7547 = vpow.pop %v7546
        %v7548 = vmul.f32 %v7510, 1.442695
        %v7549 = vpow.pop %v7548
        %v7550 = vmul.f32 %v7511, 1.442695
        %v7551 = vpow.pop %v7550
        %v7552 = vmul.f32 %v7512, 1.442695
        %v7553 = vpow.pop %v7552
        %v7554 = vmul.f32 %v7513, 1.442695
        %v7555 = vpow.pop %v7554
        %v7556 = vmul.f32 %v7514, 1.442695
        %v7557 = vpow.pop %v7556
        %v7558 = vmul.f32 %v7515, 1.442695
        %v7559 = vpow.pop %v7558
        %v7560 = vmul.f32 %v7516, 1.442695
        %v7561 = vpow.pop %v7560
        %v7562 = vmul.f32 %v7517, 1.442695
        %v7563 = vpow.pop %v7562
        %v7564 = vmul.f32 %v7518, 1.442695
        %v7565 = vpow.pop %v7564
        %v7566 = vmul.f32 %v7519, 1.442695
        %v7567 = vpow.pop %v7566
        %v7568 = vmul.f32 %v7520, 1.442695
        %v7569 = vpow.pop %v7568
        %v7570 = vmul.f32 %v7521, 1.442695
        %v7571 = vpow.pop %v7570
        %v7572 = vmul.f32 %v7522, 1.442695
        %v7573 = vpow.pop %v7572
        %v7574 = vmul.f32 %v7523, 1.442695
        %v7575 = vpow.pop %v7574
        %v7576 = vmul.f32 %v7524, 1.442695
        %v7577 = vpow.pop %v7576
        %v7578 = vmul.f32 %v7525, 1.442695
        %v7579 = vpow.pop %v7578
        %v7580 = vmul.f32 %v7526, 1.442695
        %v7581 = vpow.pop %v7580
        %v7582 = vmul.f32 %v7527, 1.442695
        %v7583 = vpow.pop %v7582
        %v7584 = vmul.f32 %v7528, 1.442695
        %v7585 = vpow.pop %v7584
        %v7586 = vmul.f32 %v7529, 1.442695
        %v7587 = vpow.pop %v7586
        %v7588 = vmul.f32 %v7530, 1.442695
        %v7589 = vpow.pop %v7588
        %v7590 = vmul.f32 %v7531, 1.442695
        %v7591 = vpow.pop %v7590
        %v7592 = vmul.f32 %v7532, 1.442695
        %v7593 = vpow.pop %v7592
        %v7594 = vmul.f32 %v7533, 1.442695
        %v7595 = vpow.pop %v7594
        %v7596 = vmul.f32 %v7534, 1.442695
        %v7597 = vpow.pop %v7596
        %v7598 = vmul.f32 %v7535, 1.442695
        %v7599 = vpow.pop %v7598
        %v7600 = vadd.f32 %v7537, %v7539
        %7601 = vadd.xlane.f32.xlu0 %v7600
        %v7602 = vpop.xlane.xlu0 %7601
        %v7603 = vadd.f32 %v7541, %v7543
        %7604 = vadd.xlane.f32.xlu0 %v7603
        %v7605 = vpop.xlane.xlu0 %7604
        %v7606 = vadd.f32 %v7545, %v7547
        %7607 = vadd.xlane.f32.xlu0 %v7606
        %v7608 = vpop.xlane.xlu0 %7607
        %v7609 = vadd.f32 %v7549, %v7551
        %7610 = vadd.xlane.f32.xlu0 %v7609
        %v7611 = vpop.xlane.xlu0 %7610
        %v7612 = vadd.f32 %v7553, %v7555
        %7613 = vadd.xlane.f32.xlu0 %v7612
        %v7614 = vpop.xlane.xlu0 %7613
        %v7615 = vadd.f32 %v7557, %v7559
        %7616 = vadd.xlane.f32.xlu0 %v7615
        %v7617 = vpop.xlane.xlu0 %7616
        %v7618 = vadd.f32 %v7561, %v7563
        %7619 = vadd.xlane.f32.xlu0 %v7618
        %v7620 = vpop.xlane.xlu0 %7619
        %v7621 = vadd.f32 %v7565, %v7567
        %7622 = vadd.xlane.f32.xlu0 %v7621
        %v7623 = vpop.xlane.xlu0 %7622
        %v7624 = vadd.f32 %v7569, %v7571
        %7625 = vadd.xlane.f32.xlu0 %v7624
        %v7626 = vpop.xlane.xlu0 %7625
        %v7627 = vadd.f32 %v7573, %v7575
        %7628 = vadd.xlane.f32.xlu0 %v7627
        %v7629 = vpop.xlane.xlu0 %7628
        %v7630 = vadd.f32 %v7577, %v7579
        %7631 = vadd.xlane.f32.xlu0 %v7630
        %v7632 = vpop.xlane.xlu0 %7631
        %v7633 = vadd.f32 %v7581, %v7583
        %7634 = vadd.xlane.f32.xlu0 %v7633
        %v7635 = vpop.xlane.xlu0 %7634
        %v7636 = vadd.f32 %v7585, %v7587
        %7637 = vadd.xlane.f32.xlu0 %v7636
        %v7638 = vpop.xlane.xlu0 %7637
        %v7639 = vadd.f32 %v7589, %v7591
        %7640 = vadd.xlane.f32.xlu0 %v7639
        %v7641 = vpop.xlane.xlu0 %7640
        %v7642 = vadd.f32 %v7593, %v7595
        %7643 = vadd.xlane.f32.xlu0 %v7642
        %v7644 = vpop.xlane.xlu0 %7643
        %v7645 = vadd.f32 %v7597, %v7599
        %7646 = vadd.xlane.f32.xlu0 %v7645
        %v7647 = vpop.xlane.xlu0 %7646
        %v7648 = vpack.c.bf16 %v7541, %v7537
        %v7649 = vpack.c.bf16 %v7543, %v7539
        %v7650 = vpack.c.bf16 %v7549, %v7545
        %v7651 = vpack.c.bf16 %v7551, %v7547
        %v7652 = vpack.c.bf16 %v7557, %v7553
        %v7653 = vpack.c.bf16 %v7559, %v7555
        %v7654 = vpack.c.bf16 %v7565, %v7561
        %v7655 = vpack.c.bf16 %v7567, %v7563
        %v7656 = vpack.c.bf16 %v7573, %v7569
        %v7657 = vpack.c.bf16 %v7575, %v7571
        %v7658 = vpack.c.bf16 %v7581, %v7577
        %v7659 = vpack.c.bf16 %v7583, %v7579
        %v7660 = vpack.c.bf16 %v7589, %v7585
        %v7661 = vpack.c.bf16 %v7591, %v7587
        %v7662 = vpack.c.bf16 %v7597, %v7593
        %v7663 = vpack.c.bf16 %v7599, %v7595
        %7680 = vrot.lane.b32.xlu0 %v3785, 64
        %v7681 = vpop.permute.xlu0 %7680
        %7682 = vrot.lane.b32.xlu0 %v3788, 64
        %v7683 = vpop.permute.xlu0 %7682
        %7684 = vrot.lane.b32.xlu0 %v3791, 64
        %v7685 = vpop.permute.xlu0 %7684
        %7686 = vrot.lane.b32.xlu0 %v3794, 64
        %v7687 = vpop.permute.xlu0 %7686
        %7688 = vrot.lane.b32.xlu0 %v3797, 64
        %v7689 = vpop.permute.xlu0 %7688
        %7690 = vrot.lane.b32.xlu0 %v3800, 64
        %v7691 = vpop.permute.xlu0 %7690
        %7692 = vrot.lane.b32.xlu0 %v3803, 64
        %v7693 = vpop.permute.xlu0 %7692
        %7694 = vrot.lane.b32.xlu0 %v3806, 64
        %v7695 = vpop.permute.xlu0 %7694
        %7696 = vrot.lane.b32.xlu0 %v3809, 64
        %v7697 = vpop.permute.xlu0 %7696
        %7698 = vrot.lane.b32.xlu0 %v3812, 64
        %v7699 = vpop.permute.xlu0 %7698
        %7700 = vrot.lane.b32.xlu0 %v3815, 64
        %v7701 = vpop.permute.xlu0 %7700
        %7702 = vrot.lane.b32.xlu0 %v3818, 64
        %v7703 = vpop.permute.xlu0 %7702
        %7704 = vrot.lane.b32.xlu0 %v3821, 64
        %v7705 = vpop.permute.xlu0 %7704
        %7706 = vrot.lane.b32.xlu0 %v3824, 64
        %v7707 = vpop.permute.xlu0 %7706
        %7708 = vrot.lane.b32.xlu0 %v3827, 64
        %v7709 = vpop.permute.xlu0 %7708
        %7710 = vrot.lane.b32.xlu0 %v3830, 64
        %v7711 = vpop.permute.xlu0 %7710
        %7728 = vmatprep.subr.bf16.mxu0 0
        %7729 = vmatpush1.bf16.msra.mxu0 %v7681
        %7730 = vmatprep.subr.bf16.mxu0 0
        %7731 = vmatpush1.bf16.msra.mxu0 %v7683
        %7732 = vmatprep.subr.bf16.mxu0 0
        %7733 = vmatpush1.bf16.msra.mxu0 %v7685
        %7734 = vmatprep.subr.bf16.mxu0 0
        %7735 = vmatpush1.bf16.msra.mxu0 %v7687
        %7736 = vmatprep.subr.bf16.mxu0 0
        %7737 = vmatpush1.bf16.msra.mxu0 %v7689
        %7738 = vmatprep.subr.bf16.mxu0 0
        %7739 = vmatpush1.bf16.msra.mxu0 %v7691
        %7740 = vmatprep.subr.bf16.mxu0 0
        %7741 = vmatpush1.bf16.msra.mxu0 %v7693
        %7742 = vmatprep.subr.bf16.mxu0 0
        %7743 = vmatpush1.bf16.msra.mxu0 %v7695
        %7744 = vmatprep.subr.bf16.mxu0 0
        %7745 = vmatpush1.bf16.msra.mxu0 %v7697
        %7746 = vmatprep.subr.bf16.mxu0 0
        %7747 = vmatpush1.bf16.msra.mxu0 %v7699
        %7748 = vmatprep.subr.bf16.mxu0 0
        %7749 = vmatpush1.bf16.msra.mxu0 %v7701
        %7750 = vmatprep.subr.bf16.mxu0 0
        %7751 = vmatpush1.bf16.msra.mxu0 %v7703
        %7752 = vmatprep.subr.bf16.mxu0 0
        %7753 = vmatpush1.bf16.msra.mxu0 %v7705
        %7754 = vmatprep.subr.bf16.mxu0 0
        %7755 = vmatpush1.bf16.msra.mxu0 %v7707
        %7756 = vmatprep.subr.bf16.mxu0 0
        %7757 = vmatpush1.bf16.msra.mxu0 %v7709
        %7758 = vmatprep.subr.bf16.mxu0 0
        %7759 = vmatpush1.bf16.msra.mxu0 %v7711
        %7760 = vmatprep.mubr.bf16.mxu0 %v7649
        %7761 = vmatmul.mubr.bf16.gmra.mrb[0].mxu0 %v7648
        %v7762 = vpop.f32.mrb[0].mxu0
        %v7763 = vadd.f32 0.0, %v7762
        %v7764 = vpop.f32.mrb[0].mxu0
        %v7765 = vpop.f32.mrb[0].mxu0
        %v7766 = vadd.f32 0.0, %v7765
        %v7767 = vpop.f32.mrb[0].mxu0
        %7768 = vmatprep.mubr.bf16.mxu0 %v7651
        %7769 = vmatmul.mubr.bf16.gmra.mrb[0].mxu0 %v7650
        %v7770 = vpop.f32.mrb[0].mxu0
        %v7771 = vadd.f32 0.0, %v7770
        %v7772 = vpop.f32.mrb[0].mxu0
        %v7773 = vpop.f32.mrb[0].mxu0
        %v7774 = vadd.f32 0.0, %v7773
        %v7775 = vpop.f32.mrb[0].mxu0
        %7776 = vmatprep.mubr.bf16.mxu0 %v7653
        %7777 = vmatmul.mubr.bf16.gmra.mrb[0].mxu0 %v7652
        %v7778 = vpop.f32.mrb[0].mxu0
        %v7779 = vadd.f32 0.0, %v7778
        %v7780 = vpop.f32.mrb[0].mxu0
        %v7781 = vpop.f32.mrb[0].mxu0
        %v7782 = vadd.f32 0.0, %v7781
        %v7783 = vpop.f32.mrb[0].mxu0
        %7784 = vmatprep.mubr.bf16.mxu0 %v7655
        %7785 = vmatmul.mubr.bf16.gmra.mrb[0].mxu0 %v7654
        %v7786 = vpop.f32.mrb[0].mxu0
        %v7787 = vadd.f32 0.0, %v7786
        %v7788 = vpop.f32.mrb[0].mxu0
        %v7789 = vpop.f32.mrb[0].mxu0
        %v7790 = vadd.f32 0.0, %v7789
        %v7791 = vpop.f32.mrb[0].mxu0
        %7792 = vmatprep.mubr.bf16.mxu0 %v7657
        %7793 = vmatmul.mubr.bf16.gmra.mrb[0].mxu0 %v7656
        %v7794 = vpop.f32.mrb[0].mxu0
        %v7795 = vadd.f32 0.0, %v7794
        %v7796 = vpop.f32.mrb[0].mxu0
        %v7797 = vpop.f32.mrb[0].mxu0
        %v7798 = vadd.f32 0.0, %v7797
        %v7799 = vpop.f32.mrb[0].mxu0
        %7800 = vmatprep.mubr.bf16.mxu0 %v7659
        %7801 = vmatmul.mubr.bf16.gmra.mrb[0].mxu0 %v7658
        %v7802 = vpop.f32.mrb[0].mxu0
        %v7803 = vadd.f32 0.0, %v7802
        %v7804 = vpop.f32.mrb[0].mxu0
        %v7805 = vpop.f32.mrb[0].mxu0
        %v7806 = vadd.f32 0.0, %v7805
        %v7807 = vpop.f32.mrb[0].mxu0
        %7808 = vmatprep.mubr.bf16.mxu0 %v7661
        %7809 = vmatmul.mubr.bf16.gmra.mrb[0].mxu0 %v7660
        %v7810 = vpop.f32.mrb[0].mxu0
        %v7811 = vadd.f32 0.0, %v7810
        %v7812 = vpop.f32.mrb[0].mxu0
        %v7813 = vpop.f32.mrb[0].mxu0
        %v7814 = vadd.f32 0.0, %v7813
        %v7815 = vpop.f32.mrb[0].mxu0
        %7816 = vmatprep.mubr.bf16.mxu0 %v7663
        %7817 = vmatmul.mubr.bf16.gmra.mrb[0].mxu0 %v7662
        %v7818 = vpop.f32.mrb[0].mxu0
        %v7819 = vadd.f32 0.0, %v7818
        %v7820 = vpop.f32.mrb[0].mxu0
        %v7821 = vpop.f32.mrb[0].mxu0
        %v7822 = vadd.f32 0.0, %v7821
        %v7823 = vpop.f32.mrb[0].mxu0
        %7824 = vdwg.mxu0
        %v7825 = vrcp.pop %v7602
        %v7826 = vrcp.pop %v7605
        %v7827 = vrcp.pop %v7608
        %v7828 = vrcp.pop %v7611
        %v7829 = vrcp.pop %v7614
        %v7830 = vrcp.pop %v7617
        %v7831 = vrcp.pop %v7620
        %v7832 = vrcp.pop %v7623
        %v7833 = vrcp.pop %v7626
        %v7834 = vrcp.pop %v7629
        %v7835 = vrcp.pop %v7632
        %v7836 = vrcp.pop %v7635
        %v7837 = vrcp.pop %v7638
        %v7838 = vrcp.pop %v7641
        %v7839 = vrcp.pop %v7644
        %v7840 = vrcp.pop %v7647
        %v7841 = vmul.f32 %v7763, %v7825
        %v7842 = vmul.f32 %v7766, %v7826
        %v7843 = vmul.f32 %v7771, %v7827
        %v7844 = vmul.f32 %v7774, %v7828
        %v7845 = vmul.f32 %v7779, %v7829
        %v7846 = vmul.f32 %v7782, %v7830
        %v7847 = vmul.f32 %v7787, %v7831
        %v7848 = vmul.f32 %v7790, %v7832
        %v7849 = vmul.f32 %v7795, %v7833
        %v7850 = vmul.f32 %v7798, %v7834
        %v7851 = vmul.f32 %v7803, %v7835
        %v7852 = vmul.f32 %v7806, %v7836
        %v7853 = vmul.f32 %v7811, %v7837
        %v7854 = vmul.f32 %v7814, %v7838
        %v7855 = vmul.f32 %v7819, %v7839
        %v7856 = vmul.f32 %v7822, %v7840
        %7873 = vrot.lane.b32.xlu0 %v5225, 64
        %v7874 = vpop.permute.xlu0 %7873
        %7875 = vrot.lane.b32.xlu0 %v5226, 64
        %v7876 = vpop.permute.xlu0 %7875
        %7877 = vrot.lane.b32.xlu0 %v5227, 64
        %v7878 = vpop.permute.xlu0 %7877
        %7879 = vrot.lane.b32.xlu0 %v5228, 64
        %v7880 = vpop.permute.xlu0 %7879
        %7881 = vrot.lane.b32.xlu0 %v5229, 64
        %v7882 = vpop.permute.xlu0 %7881
        %7883 = vrot.lane.b32.xlu0 %v5230, 64
        %v7884 = vpop.permute.xlu0 %7883
        %7885 = vrot.lane.b32.xlu0 %v5231, 64
        %v7886 = vpop.permute.xlu0 %7885
        %7887 = vrot.lane.b32.xlu0 %v5232, 64
        %v7888 = vpop.permute.xlu0 %7887
        %7889 = vrot.lane.b32.xlu0 %v5233, 64
        %v7890 = vpop.permute.xlu0 %7889
        %7891 = vrot.lane.b32.xlu0 %v5234, 64
        %v7892 = vpop.permute.xlu0 %7891
        %7893 = vrot.lane.b32.xlu0 %v5235, 64
        %v7894 = vpop.permute.xlu0 %7893
        %7895 = vrot.lane.b32.xlu0 %v5236, 64
        %v7896 = vpop.permute.xlu0 %7895
        %7897 = vrot.lane.b32.xlu0 %v5237, 64
        %v7898 = vpop.permute.xlu0 %7897
        %7899 = vrot.lane.b32.xlu0 %v5238, 64
        %v7900 = vpop.permute.xlu0 %7899
        %7901 = vrot.lane.b32.xlu0 %v5239, 64
        %v7902 = vpop.permute.xlu0 %7901
        %7903 = vrot.lane.b32.xlu0 %v5240, 64
        %v7904 = vpop.permute.xlu0 %7903
        %7937 = vrot.lane.b32.xlu0 %v6533, 64
        %v7938 = vpop.permute.xlu0 %7937
        %7939 = vrot.lane.b32.xlu0 %v6534, 64
        %v7940 = vpop.permute.xlu0 %7939
        %7941 = vrot.lane.b32.xlu0 %v6535, 64
        %v7942 = vpop.permute.xlu0 %7941
        %7943 = vrot.lane.b32.xlu0 %v6536, 64
        %v7944 = vpop.permute.xlu0 %7943
        %7945 = vrot.lane.b32.xlu0 %v6537, 64
        %v7946 = vpop.permute.xlu0 %7945
        %7947 = vrot.lane.b32.xlu0 %v6538, 64
        %v7948 = vpop.permute.xlu0 %7947
        %7949 = vrot.lane.b32.xlu0 %v6539, 64
        %v7950 = vpop.permute.xlu0 %7949
        %7951 = vrot.lane.b32.xlu0 %v6540, 64
        %v7952 = vpop.permute.xlu0 %7951
        %7953 = vrot.lane.b32.xlu0 %v6541, 64
        %v7954 = vpop.permute.xlu0 %7953
        %7955 = vrot.lane.b32.xlu0 %v6542, 64
        %v7956 = vpop.permute.xlu0 %7955
        %7957 = vrot.lane.b32.xlu0 %v6543, 64
        %v7958 = vpop.permute.xlu0 %7957
        %7959 = vrot.lane.b32.xlu0 %v6544, 64
        %v7960 = vpop.permute.xlu0 %7959
        %7961 = vrot.lane.b32.xlu0 %v6545, 64
        %v7962 = vpop.permute.xlu0 %7961
        %7963 = vrot.lane.b32.xlu0 %v6546, 64
        %v7964 = vpop.permute.xlu0 %7963
        %7965 = vrot.lane.b32.xlu0 %v6547, 64
        %v7966 = vpop.permute.xlu0 %7965
        %7967 = vrot.lane.b32.xlu0 %v6548, 64
        %v7968 = vpop.permute.xlu0 %7967
        %8001 = vrot.lane.b32.xlu0 %v7841, 64
        %v8002 = vpop.permute.xlu0 %8001
        %8003 = vrot.lane.b32.xlu0 %v7842, 64
        %v8004 = vpop.permute.xlu0 %8003
        %8005 = vrot.lane.b32.xlu0 %v7843, 64
        %v8006 = vpop.permute.xlu0 %8005
        %8007 = vrot.lane.b32.xlu0 %v7844, 64
        %v8008 = vpop.permute.xlu0 %8007
        %8009 = vrot.lane.b32.xlu0 %v7845, 64
        %v8010 = vpop.permute.xlu0 %8009
        %8011 = vrot.lane.b32.xlu0 %v7846, 64
        %v8012 = vpop.permute.xlu0 %8011
        %8013 = vrot.lane.b32.xlu0 %v7847, 64
        %v8014 = vpop.permute.xlu0 %8013
        %8015 = vrot.lane.b32.xlu0 %v7848, 64
        %v8016 = vpop.permute.xlu0 %8015
        %8017 = vrot.lane.b32.xlu0 %v7849, 64
        %v8018 = vpop.permute.xlu0 %8017
        %8019 = vrot.lane.b32.xlu0 %v7850, 64
        %v8020 = vpop.permute.xlu0 %8019
        %8021 = vrot.lane.b32.xlu0 %v7851, 64
        %v8022 = vpop.permute.xlu0 %8021
        %8023 = vrot.lane.b32.xlu0 %v7852, 64
        %v8024 = vpop.permute.xlu0 %8023
        %8025 = vrot.lane.b32.xlu0 %v7853, 64
        %v8026 = vpop.permute.xlu0 %8025
        %8027 = vrot.lane.b32.xlu0 %v7854, 64
        %v8028 = vpop.permute.xlu0 %8027
        %8029 = vrot.lane.b32.xlu0 %v7855, 64
        %v8030 = vpop.permute.xlu0 %8029
        %8031 = vrot.lane.b32.xlu0 %v7856, 64
        %v8032 = vpop.permute.xlu0 %8031
        %v8049 = vsel %vm3932, %v4503, %v7874
        %v8050 = vsel %vm3932, %v4504, %v7876
        %v8051 = vsel %vm3932, %v4505, %v7878
        %v8052 = vsel %vm3932, %v4506, %v7880
        %v8053 = vsel %vm3932, %v4507, %v7882
        %v8054 = vsel %vm3932, %v4508, %v7884
        %v8055 = vsel %vm3932, %v4509, %v7886
        %v8056 = vsel %vm3932, %v4510, %v7888
        %v8057 = vsel %vm3932, %v4511, %v7890
        %v8058 = vsel %vm3932, %v4512, %v7892
        %v8059 = vsel %vm3932, %v4513, %v7894
        %v8060 = vsel %vm3932, %v4514, %v7896
        %v8061 = vsel %vm3932, %v4515, %v7898
        %v8062 = vsel %vm3932, %v4516, %v7900
        %v8063 = vsel %vm3932, %v4517, %v7902
        %v8064 = vsel %vm3932, %v4518, %v7904
        %v8065 = vsel %vm3932, %v5811, %v7938
        %v8066 = vsel %vm3932, %v5812, %v7940
        %v8067 = vsel %vm3932, %v5813, %v7942
        %v8068 = vsel %vm3932, %v5814, %v7944
        %v8069 = vsel %vm3932, %v5815, %v7946
        %v8070 = vsel %vm3932, %v5816, %v7948
        %v8071 = vsel %vm3932, %v5817, %v7950
        %v8072 = vsel %vm3932, %v5818, %v7952
        %v8073 = vsel %vm3932, %v5819, %v7954
        %v8074 = vsel %vm3932, %v5820, %v7956
        %v8075 = vsel %vm3932, %v5821, %v7958
        %v8076 = vsel %vm3932, %v5822, %v7960
        %v8077 = vsel %vm3932, %v5823, %v7962
        %v8078 = vsel %vm3932, %v5824, %v7964
        %v8079 = vsel %vm3932, %v5825, %v7966
        %v8080 = vsel %vm3932, %v5826, %v7968
        %v8081 = vsel %vm3932, %v7119, %v8002
        %v8082 = vsel %vm3932, %v7120, %v8004
        %v8083 = vsel %vm3932, %v7121, %v8006
        %v8084 = vsel %vm3932, %v7122, %v8008
        %v8085 = vsel %vm3932, %v7123, %v8010
        %v8086 = vsel %vm3932, %v7124, %v8012
        %v8087 = vsel %vm3932, %v7125, %v8014
        %v8088 = vsel %vm3932, %v7126, %v8016
        %v8089 = vsel %vm3932, %v7127, %v8018
        %v8090 = vsel %vm3932, %v7128, %v8020
        %v8091 = vsel %vm3932, %v7129, %v8022
        %v8092 = vsel %vm3932, %v7130, %v8024
        %v8093 = vsel %vm3932, %v7131, %v8026
        %v8094 = vsel %vm3932, %v7132, %v8028
        %v8095 = vsel %vm3932, %v7133, %v8030
        %v8096 = vsel %vm3932, %v7134, %v8032
        %v8097 = vpack.c.bf16 %v8050, %v8049
        %v8098 = vpack.c.bf16 %v8066, %v8065
        %v8099 = vpack.c.bf16 %v8082, %v8081
        %v8100 = vpack.c.bf16 %v8052, %v8051
        %v8101 = vpack.c.bf16 %v8068, %v8067
        %v8102 = vpack.c.bf16 %v8084, %v8083
        %v8103 = vpack.c.bf16 %v8054, %v8053
        %v8104 = vpack.c.bf16 %v8070, %v8069
        %v8105 = vpack.c.bf16 %v8086, %v8085
        %v8106 = vpack.c.bf16 %v8056, %v8055
        %v8107 = vpack.c.bf16 %v8072, %v8071
        %v8108 = vpack.c.bf16 %v8088, %v8087
        %v8109 = vpack.c.bf16 %v8058, %v8057
        %v8110 = vpack.c.bf16 %v8074, %v8073
        %v8111 = vpack.c.bf16 %v8090, %v8089
        %v8112 = vpack.c.bf16 %v8060, %v8059
        %v8113 = vpack.c.bf16 %v8076, %v8075
        %v8114 = vpack.c.bf16 %v8092, %v8091
        %v8115 = vpack.c.bf16 %v8062, %v8061
        %v8116 = vpack.c.bf16 %v8078, %v8077
        %v8117 = vpack.c.bf16 %v8094, %v8093
        %v8118 = vpack.c.bf16 %v8064, %v8063
        %v8119 = vpack.c.bf16 %v8080, %v8079
        %v8120 = vpack.c.bf16 %v8096, %v8095
        %v8121 = vld [vmem:[#allocation8] sm:$0xff]
        %v8122 = vld [vmem:[#allocation8 + $0x8] sm:$0xf]
        %v8123 = vld [vmem:[#allocation8 + $0xc] sm:$0xff]
        %v8124 = vld [vmem:[#allocation8 + $0x14] sm:$0xf]
        %v8125 = vld [vmem:[#allocation8 + $0x18] sm:$0xff]
        %v8126 = vld [vmem:[#allocation8 + $0x20] sm:$0xf]
        %v8127 = vld [vmem:[#allocation8 + $0x24] sm:$0xff]
        %v8128 = vld [vmem:[#allocation8 + $0x2c] sm:$0xf]
        %v8129 = vld [vmem:[#allocation8 + $0x30] sm:$0xff]
        %v8130 = vld [vmem:[#allocation8 + $0x38] sm:$0xf]
        %v8131 = vld [vmem:[#allocation8 + $0x3c] sm:$0xff]
        %v8132 = vld [vmem:[#allocation8 + $0x44] sm:$0xf]
        %v8133 = vld [vmem:[#allocation8 + $0x48] sm:$0xff]
        %v8134 = vld [vmem:[#allocation8 + $0x50] sm:$0xf]
        %v8135 = vld [vmem:[#allocation8 + $0x54] sm:$0xff]
        %v8136 = vld [vmem:[#allocation8 + $0x5c] sm:$0xf]
        %v8137 = vld [vmem:[#allocation8 + $0x60] sm:$0xff]
        %v8138 = vld [vmem:[#allocation8 + $0x68] sm:$0xf]
        %v8139 = vld [vmem:[#allocation8 + $0x6c] sm:$0xff]
        %v8140 = vld [vmem:[#allocation8 + $0x74] sm:$0xf]
        %v8141 = vld [vmem:[#allocation8 + $0x78] sm:$0xff]
        %v8142 = vld [vmem:[#allocation8 + $0x80] sm:$0xf]
        %v8143 = vld [vmem:[#allocation8 + $0x84] sm:$0xff]
        %v8144 = vld [vmem:[#allocation8 + $0x8c] sm:$0xf]
        %v8145 = vld [vmem:[#allocation8 + $0x90] sm:$0xff]
        %v8146 = vld [vmem:[#allocation8 + $0x98] sm:$0xf]
        %v8147 = vld [vmem:[#allocation8 + $0x9c] sm:$0xff]
        %v8148 = vld [vmem:[#allocation8 + $0xa4] sm:$0xf]
        %v8149 = vld [vmem:[#allocation8 + $0xa8] sm:$0xff]
        %v8150 = vld [vmem:[#allocation8 + $0xb0] sm:$0xf]
        %v8151 = vld [vmem:[#allocation8 + $0xb4] sm:$0xff]
        %v8152 = vld [vmem:[#allocation8 + $0xbc] sm:$0xf]
        %v8153 = vld [vmem:[#allocation8 + $0xc0] sm:$0xff]
        %v8154 = vld [vmem:[#allocation8 + $0xc8] sm:$0xf]
        %v8155 = vld [vmem:[#allocation8 + $0xcc] sm:$0xff]
        %v8156 = vld [vmem:[#allocation8 + $0xd4] sm:$0xf]
        %v8157 = vld [vmem:[#allocation8 + $0xd8] sm:$0xff]
        %v8158 = vld [vmem:[#allocation8 + $0xe0] sm:$0xf]
        %v8159 = vld [vmem:[#allocation8 + $0xe4] sm:$0xff]
        %v8160 = vld [vmem:[#allocation8 + $0xec] sm:$0xf]
        %v8161 = vld [vmem:[#allocation8 + $0xf0] sm:$0xff]
        %v8162 = vld [vmem:[#allocation8 + $0xf8] sm:$0xf]
        %v8163 = vld [vmem:[#allocation8 + $0xfc] sm:$0xff]
        %v8164 = vld [vmem:[#allocation8 + $0x104] sm:$0xf]
        %v8165 = vld [vmem:[#allocation8 + $0x108] sm:$0xff]
        %v8166 = vld [vmem:[#allocation8 + $0x110] sm:$0xf]
        %v8167 = vld [vmem:[#allocation8 + $0x114] sm:$0xff]
        %v8168 = vld [vmem:[#allocation8 + $0x11c] sm:$0xf]
        %v8169 = vld [vmem:[#allocation8 + $0x120] sm:$0xff]
        %v8170 = vld [vmem:[#allocation8 + $0x128] sm:$0xf]
        %v8171 = vld [vmem:[#allocation8 + $0x12c] sm:$0xff]
        %v8172 = vld [vmem:[#allocation8 + $0x134] sm:$0xf]
        %v8173 = vld [vmem:[#allocation8 + $0x138] sm:$0xff]
        %v8174 = vld [vmem:[#allocation8 + $0x140] sm:$0xf]
        %v8175 = vld [vmem:[#allocation8 + $0x144] sm:$0xff]
        %v8176 = vld [vmem:[#allocation8 + $0x14c] sm:$0xf]
        %v8177 = vld [vmem:[#allocation8 + $0x150] sm:$0xff]
        %v8178 = vld [vmem:[#allocation8 + $0x158] sm:$0xf]
        %v8179 = vld [vmem:[#allocation8 + $0x15c] sm:$0xff]
        %v8180 = vld [vmem:[#allocation8 + $0x164] sm:$0xf]
        %v8181 = vld [vmem:[#allocation8 + $0x168] sm:$0xff]
        %v8182 = vld [vmem:[#allocation8 + $0x170] sm:$0xf]
        %v8183 = vld [vmem:[#allocation8 + $0x174] sm:$0xff]
        %v8184 = vld [vmem:[#allocation8 + $0x17c] sm:$0xf]
        %v8185 = vld [vmem:[#allocation8 + $0x180] sm:$0xff]
        %v8186 = vld [vmem:[#allocation8 + $0x188] sm:$0xf]
        %v8187 = vld [vmem:[#allocation8 + $0x18c] sm:$0xff]
        %v8188 = vld [vmem:[#allocation8 + $0x194] sm:$0xf]
        %v8189 = vld [vmem:[#allocation8 + $0x198] sm:$0xff]
        %v8190 = vld [vmem:[#allocation8 + $0x1a0] sm:$0xf]
        %v8191 = vld [vmem:[#allocation8 + $0x1a4] sm:$0xff]
        %v8192 = vld [vmem:[#allocation8 + $0x1ac] sm:$0xf]
        %v8193 = vld [vmem:[#allocation8 + $0x1b0] sm:$0xff]
        %v8194 = vld [vmem:[#allocation8 + $0x1b8] sm:$0xf]
        %v8195 = vld [vmem:[#allocation8 + $0x1bc] sm:$0xff]
        %v8196 = vld [vmem:[#allocation8 + $0x1c4] sm:$0xf]
        %v8197 = vld [vmem:[#allocation8 + $0x1c8] sm:$0xff]
        %v8198 = vld [vmem:[#allocation8 + $0x1d0] sm:$0xf]
        %v8199 = vld [vmem:[#allocation8 + $0x1d4] sm:$0xff]
        %v8200 = vld [vmem:[#allocation8 + $0x1dc] sm:$0xf]
        %v8201 = vld [vmem:[#allocation8 + $0x1e0] sm:$0xff]
        %v8202 = vld [vmem:[#allocation8 + $0x1e8] sm:$0xf]
        %v8203 = vld [vmem:[#allocation8 + $0x1ec] sm:$0xff]
        %v8204 = vld [vmem:[#allocation8 + $0x1f4] sm:$0xf]
        %v8205 = vld [vmem:[#allocation8 + $0x1f8] sm:$0xff]
        %v8206 = vld [vmem:[#allocation8 + $0x200] sm:$0xf]
        %v8207 = vld [vmem:[#allocation8 + $0x204] sm:$0xff]
        %v8208 = vld [vmem:[#allocation8 + $0x20c] sm:$0xf]
        %v8209 = vld [vmem:[#allocation8 + $0x210] sm:$0xff]
        %v8210 = vld [vmem:[#allocation8 + $0x218] sm:$0xf]
        %v8211 = vld [vmem:[#allocation8 + $0x21c] sm:$0xff]
        %v8212 = vld [vmem:[#allocation8 + $0x224] sm:$0xf]
        %v8213 = vld [vmem:[#allocation8 + $0x228] sm:$0xff]
        %v8214 = vld [vmem:[#allocation8 + $0x230] sm:$0xf]
        %v8215 = vld [vmem:[#allocation8 + $0x234] sm:$0xff]
        %v8216 = vld [vmem:[#allocation8 + $0x23c] sm:$0xf]
        %v8217 = vld [vmem:[%s4] sm:$0x7]
        %v8219 = vlaneseq
        %v8220 = vshrl.u32 %v8219, 7
        %v8221 = vsub.s32 0, %v8220
        %v8222 = vrot.slane %v8217, %v8221
        %v8223 = vlaneseq
        %v8224 = vshrl.u32 %v8223, 7
        %v8225 = vsub.s32 1, %v8224
        %v8226 = vrot.slane %v8217, %v8225
        %v8227 = vlaneseq
        %v8228 = vshrl.u32 %v8227, 7
        %v8229 = vsub.s32 2, %v8228
        %v8230 = vrot.slane %v8217, %v8229
        %v8330 = vunpack.c.l.b16 %v8121
        %v8331 = vunpack.c.h.b16 %v8121
        %v8332 = vunpack.c.l.b16 %v8122
        %v8333 = vunpack.c.l.b16 %v8123
        %v8334 = vunpack.c.h.b16 %v8123
        %v8335 = vunpack.c.l.b16 %v8124
        %v8336 = vunpack.c.l.b16 %v8125
        %v8337 = vunpack.c.h.b16 %v8125
        %v8338 = vunpack.c.l.b16 %v8126
        %v8339 = vunpack.c.l.b16 %v8127
        %v8340 = vunpack.c.h.b16 %v8127
        %v8341 = vunpack.c.l.b16 %v8128
        %v8342 = vunpack.c.l.b16 %v8129
        %v8343 = vunpack.c.h.b16 %v8129
        %v8344 = vunpack.c.l.b16 %v8130
        %v8345 = vunpack.c.l.b16 %v8131
        %v8346 = vunpack.c.h.b16 %v8131
        %v8347 = vunpack.c.l.b16 %v8132
        %v8348 = vunpack.c.l.b16 %v8133
        %v8349 = vunpack.c.h.b16 %v8133
        %v8350 = vunpack.c.l.b16 %v8134
        %v8351 = vunpack.c.l.b16 %v8135
        %v8352 = vunpack.c.h.b16 %v8135
        %v8353 = vunpack.c.l.b16 %v8136
        %v8354 = vunpack.c.l.b16 %v8137
        %v8355 = vunpack.c.h.b16 %v8137
        %v8356 = vunpack.c.l.b16 %v8138
        %v8357 = vunpack.c.l.b16 %v8139
        %v8358 = vunpack.c.h.b16 %v8139
        %v8359 = vunpack.c.l.b16 %v8140
        %v8360 = vunpack.c.l.b16 %v8141
        %v8361 = vunpack.c.h.b16 %v8141
        %v8362 = vunpack.c.l.b16 %v8142
        %v8363 = vunpack.c.l.b16 %v8143
        %v8364 = vunpack.c.h.b16 %v8143
        %v8365 = vunpack.c.l.b16 %v8144
        %v8366 = vunpack.c.l.b16 %v8145
        %v8367 = vunpack.c.h.b16 %v8145
        %v8368 = vunpack.c.l.b16 %v8146
        %v8369 = vunpack.c.l.b16 %v8147
        %v8370 = vunpack.c.h.b16 %v8147
        %v8371 = vunpack.c.l.b16 %v8148
        %v8372 = vunpack.c.l.b16 %v8149
        %v8373 = vunpack.c.h.b16 %v8149
        %v8374 = vunpack.c.l.b16 %v8150
        %v8375 = vunpack.c.l.b16 %v8151
        %v8376 = vunpack.c.h.b16 %v8151
        %v8377 = vunpack.c.l.b16 %v8152
        %v8378 = vunpack.c.l.b16 %v8153
        %v8379 = vunpack.c.h.b16 %v8153
        %v8380 = vunpack.c.l.b16 %v8154
        %v8381 = vunpack.c.l.b16 %v8155
        %v8382 = vunpack.c.h.b16 %v8155
        %v8383 = vunpack.c.l.b16 %v8156
        %v8384 = vunpack.c.l.b16 %v8157
        %v8385 = vunpack.c.h.b16 %v8157
        %v8386 = vunpack.c.l.b16 %v8158
        %v8387 = vunpack.c.l.b16 %v8159
        %v8388 = vunpack.c.h.b16 %v8159
        %v8389 = vunpack.c.l.b16 %v8160
        %v8390 = vunpack.c.l.b16 %v8161
        %v8391 = vunpack.c.h.b16 %v8161
        %v8392 = vunpack.c.l.b16 %v8162
        %v8393 = vunpack.c.l.b16 %v8163
        %v8394 = vunpack.c.h.b16 %v8163
        %v8395 = vunpack.c.l.b16 %v8164
        %v8396 = vunpack.c.l.b16 %v8165
        %v8397 = vunpack.c.h.b16 %v8165
        %v8398 = vunpack.c.l.b16 %v8166
        %v8399 = vunpack.c.l.b16 %v8167
        %v8400 = vunpack.c.h.b16 %v8167
        %v8401 = vunpack.c.l.b16 %v8168
        %v8402 = vunpack.c.l.b16 %v8169
        %v8403 = vunpack.c.h.b16 %v8169
        %v8404 = vunpack.c.l.b16 %v8170
        %v8405 = vunpack.c.l.b16 %v8171
        %v8406 = vunpack.c.h.b16 %v8171
        %v8407 = vunpack.c.l.b16 %v8172
        %v8408 = vunpack.c.l.b16 %v8173
        %v8409 = vunpack.c.h.b16 %v8173
        %v8410 = vunpack.c.l.b16 %v8174
        %v8411 = vunpack.c.l.b16 %v8175
        %v8412 = vunpack.c.h.b16 %v8175
        %v8413 = vunpack.c.l.b16 %v8176
        %v8414 = vunpack.c.l.b16 %v8177
        %v8415 = vunpack.c.h.b16 %v8177
        %v8416 = vunpack.c.l.b16 %v8178
        %v8417 = vunpack.c.l.b16 %v8179
        %v8418 = vunpack.c.h.b16 %v8179
        %v8419 = vunpack.c.l.b16 %v8180
        %v8420 = vunpack.c.l.b16 %v8181
        %v8421 = vunpack.c.h.b16 %v8181
        %v8422 = vunpack.c.l.b16 %v8182
        %v8423 = vunpack.c.l.b16 %v8183
        %v8424 = vunpack.c.h.b16 %v8183
        %v8425 = vunpack.c.l.b16 %v8184
        %v8426 = vunpack.c.l.b16 %v8185
        %v8427 = vunpack.c.h.b16 %v8185
        %v8428 = vunpack.c.l.b16 %v8186
        %v8429 = vunpack.c.l.b16 %v8187
        %v8430 = vunpack.c.h.b16 %v8187
        %v8431 = vunpack.c.l.b16 %v8188
        %v8432 = vunpack.c.l.b16 %v8189
        %v8433 = vunpack.c.h.b16 %v8189
        %v8434 = vunpack.c.l.b16 %v8190
        %v8435 = vunpack.c.l.b16 %v8191
        %v8436 = vunpack.c.h.b16 %v8191
        %v8437 = vunpack.c.l.b16 %v8192
        %v8438 = vunpack.c.l.b16 %v8193
        %v8439 = vunpack.c.h.b16 %v8193
        %v8440 = vunpack.c.l.b16 %v8194
        %v8441 = vunpack.c.l.b16 %v8195
        %v8442 = vunpack.c.h.b16 %v8195
        %v8443 = vunpack.c.l.b16 %v8196
        %v8444 = vunpack.c.l.b16 %v8197
        %v8445 = vunpack.c.h.b16 %v8197
        %v8446 = vunpack.c.l.b16 %v8198
        %v8447 = vunpack.c.l.b16 %v8199
        %v8448 = vunpack.c.h.b16 %v8199
        %v8449 = vunpack.c.l.b16 %v8200
        %v8450 = vunpack.c.l.b16 %v8201
        %v8451 = vunpack.c.h.b16 %v8201
        %v8452 = vunpack.c.l.b16 %v8202
        %v8453 = vunpack.c.l.b16 %v8203
        %v8454 = vunpack.c.h.b16 %v8203
        %v8455 = vunpack.c.l.b16 %v8204
        %v8456 = vunpack.c.l.b16 %v8205
        %v8457 = vunpack.c.h.b16 %v8205
        %v8458 = vunpack.c.l.b16 %v8206
        %v8459 = vunpack.c.l.b16 %v8207
        %v8460 = vunpack.c.h.b16 %v8207
        %v8461 = vunpack.c.l.b16 %v8208
        %v8462 = vunpack.c.l.b16 %v8209
        %v8463 = vunpack.c.h.b16 %v8209
        %v8464 = vunpack.c.l.b16 %v8210
        %v8465 = vunpack.c.l.b16 %v8211
        %v8466 = vunpack.c.h.b16 %v8211
        %v8467 = vunpack.c.l.b16 %v8212
        %v8468 = vunpack.c.l.b16 %v8213
        %v8469 = vunpack.c.h.b16 %v8213
        %v8470 = vunpack.c.l.b16 %v8214
        %v8471 = vunpack.c.l.b16 %v8215
        %v8472 = vunpack.c.h.b16 %v8215
        %v8473 = vunpack.c.l.b16 %v8216
        %v8474 = vpack.c.b16 %v8333, %v8330
        %v8475 = vpack.c.b16 %v8334, %v8331
        %v8476 = vpack.c.b16 %v8335, %v8332
        %v8477 = vpack.c.b16 %v8339, %v8336
        %v8478 = vpack.c.b16 %v8340, %v8337
        %v8479 = vpack.c.b16 %v8341, %v8338
        %v8480 = vpack.c.b16 %v8345, %v8342
        %v8481 = vpack.c.b16 %v8346, %v8343
        %v8482 = vpack.c.b16 %v8347, %v8344
        %v8483 = vpack.c.b16 %v8351, %v8348
        %v8484 = vpack.c.b16 %v8352, %v8349
        %v8485 = vpack.c.b16 %v8353, %v8350
        %v8486 = vpack.c.b16 %v8357, %v8354
        %v8487 = vpack.c.b16 %v8358, %v8355
        %v8488 = vpack.c.b16 %v8359, %v8356
        %v8489 = vpack.c.b16 %v8363, %v8360
        %v8490 = vpack.c.b16 %v8364, %v8361
        %v8491 = vpack.c.b16 %v8365, %v8362
        %v8492 = vpack.c.b16 %v8369, %v8366
        %v8493 = vpack.c.b16 %v8370, %v8367
        %v8494 = vpack.c.b16 %v8371, %v8368
        %v8495 = vpack.c.b16 %v8375, %v8372
        %v8496 = vpack.c.b16 %v8376, %v8373
        %v8497 = vpack.c.b16 %v8377, %v8374
        %v8498 = vpack.c.b16 %v8381, %v8378
        %v8499 = vpack.c.b16 %v8382, %v8379
        %v8500 = vpack.c.b16 %v8383, %v8380
        %v8501 = vpack.c.b16 %v8387, %v8384
        %v8502 = vpack.c.b16 %v8388, %v8385
        %v8503 = vpack.c.b16 %v8389, %v8386
        %v8504 = vpack.c.b16 %v8393, %v8390
        %v8505 = vpack.c.b16 %v8394, %v8391
        %v8506 = vpack.c.b16 %v8395, %v8392
        %v8507 = vpack.c.b16 %v8399, %v8396
        %v8508 = vpack.c.b16 %v8400, %v8397
        %v8509 = vpack.c.b16 %v8401, %v8398
        %v8510 = vpack.c.b16 %v8405, %v8402
        %v8511 = vpack.c.b16 %v8406, %v8403
        %v8512 = vpack.c.b16 %v8407, %v8404
        %v8513 = vpack.c.b16 %v8411, %v8408
        %v8514 = vpack.c.b16 %v8412, %v8409
        %v8515 = vpack.c.b16 %v8413, %v8410
        %v8516 = vpack.c.b16 %v8417, %v8414
        %v8517 = vpack.c.b16 %v8418, %v8415
        %v8518 = vpack.c.b16 %v8419, %v8416
        %v8519 = vpack.c.b16 %v8423, %v8420
        %v8520 = vpack.c.b16 %v8424, %v8421
        %v8521 = vpack.c.b16 %v8425, %v8422
        %v8522 = vpack.c.b16 %v8429, %v8426
        %v8523 = vpack.c.b16 %v8430, %v8427
        %v8524 = vpack.c.b16 %v8431, %v8428
        %v8525 = vpack.c.b16 %v8435, %v8432
        %v8526 = vpack.c.b16 %v8436, %v8433
        %v8527 = vpack.c.b16 %v8437, %v8434
        %v8528 = vpack.c.b16 %v8441, %v8438
        %v8529 = vpack.c.b16 %v8442, %v8439
        %v8530 = vpack.c.b16 %v8443, %v8440
        %v8531 = vpack.c.b16 %v8447, %v8444
        %v8532 = vpack.c.b16 %v8448, %v8445
        %v8533 = vpack.c.b16 %v8449, %v8446
        %v8534 = vpack.c.b16 %v8453, %v8450
        %v8535 = vpack.c.b16 %v8454, %v8451
        %v8536 = vpack.c.b16 %v8455, %v8452
        %v8537 = vpack.c.b16 %v8459, %v8456
        %v8538 = vpack.c.b16 %v8460, %v8457
        %v8539 = vpack.c.b16 %v8461, %v8458
        %v8540 = vpack.c.b16 %v8465, %v8462
        %v8541 = vpack.c.b16 %v8466, %v8463
        %v8542 = vpack.c.b16 %v8467, %v8464
        %v8543 = vpack.c.b16 %v8471, %v8468
        %v8544 = vpack.c.b16 %v8472, %v8469
        %v8545 = vpack.c.b16 %v8473, %v8470
        %8618 = vmatprep.subr.bf16.mxu0 %v8475
        %8619 = vmatpush1.bf16.msra.mxu0 %v8474
        %8620 = vmatprep.subr.bf16.mxu0 %v8478
        %8621 = vmatpush1.bf16.msra.mxu0 %v8477
        %8622 = vmatprep.subr.bf16.mxu0 %v8481
        %8623 = vmatpush1.bf16.msra.mxu0 %v8480
        %8624 = vmatprep.subr.bf16.mxu0 %v8484
        %8625 = vmatpush1.bf16.msra.mxu0 %v8483
        %8626 = vmatprep.subr.bf16.mxu0 %v8487
        %8627 = vmatpush1.bf16.msra.mxu0 %v8486
        %8628 = vmatprep.subr.bf16.mxu0 %v8490
        %8629 = vmatpush1.bf16.msra.mxu0 %v8489
        %8630 = vmatprep.subr.bf16.mxu0 %v8493
        %8631 = vmatpush1.bf16.msra.mxu0 %v8492
        %8632 = vmatprep.subr.bf16.mxu0 %v8496
        %8633 = vmatpush1.bf16.msra.mxu0 %v8495
        %8634 = vmatprep.subr.bf16.mxu0 %v8499
        %8635 = vmatpush1.bf16.msra.mxu0 %v8498
        %8636 = vmatprep.subr.bf16.mxu0 %v8502
        %8637 = vmatpush1.bf16.msra.mxu0 %v8501
        %8638 = vmatprep.subr.bf16.mxu0 %v8505
        %8639 = vmatpush1.bf16.msra.mxu0 %v8504
        %8640 = vmatprep.subr.bf16.mxu0 %v8508
        %8641 = vmatpush1.bf16.msra.mxu0 %v8507
        %8642 = vmatprep.subr.bf16.mxu0 %v8511
        %8643 = vmatpush1.bf16.msra.mxu0 %v8510
        %8644 = vmatprep.subr.bf16.mxu0 %v8514
        %8645 = vmatpush1.bf16.msra.mxu0 %v8513
        %8646 = vmatprep.subr.bf16.mxu0 %v8517
        %8647 = vmatpush1.bf16.msra.mxu0 %v8516
        %8648 = vmatprep.subr.bf16.mxu0 %v8520
        %8649 = vmatpush1.bf16.msra.mxu0 %v8519
        %8650 = vmatprep.mubr.bf16.mxu0 %v8098
        %8651 = vmatmul.mubr.bf16.gmra.mrb[0].mxu0 %v8097
        %v8652 = vpop.f32.mrb[0].mxu0
        %v8653 = vadd.f32 %v8222, %v8652
        %v8654 = vpop.f32.mrb[0].mxu0
        %v8655 = vadd.f32 %v8226, %v8654
        %v8656 = vpop.f32.mrb[0].mxu0
        %v8657 = vadd.f32 %v8222, %v8656
        %v8658 = vpop.f32.mrb[0].mxu0
        %v8659 = vadd.f32 %v8226, %v8658
        %8660 = vmatprep.mubr.bf16.mxu0 %v8101
        %8661 = vmatmul.mubr.bf16.gmra.mrb[0].mxu0 %v8100
        %v8662 = vpop.f32.mrb[0].mxu0
        %v8663 = vadd.f32 %v8222, %v8662
        %v8664 = vpop.f32.mrb[0].mxu0
        %v8665 = vadd.f32 %v8226, %v8664
        %v8666 = vpop.f32.mrb[0].mxu0
        %v8667 = vadd.f32 %v8222, %v8666
        %v8668 = vpop.f32.mrb[0].mxu0
        %v8669 = vadd.f32 %v8226, %v8668
        %8670 = vmatprep.mubr.bf16.mxu0 %v8104
        %8671 = vmatmul.mubr.bf16.gmra.mrb[0].mxu0 %v8103
        %v8672 = vpop.f32.mrb[0].mxu0
        %v8673 = vadd.f32 %v8222, %v8672
        %v8674 = vpop.f32.mrb[0].mxu0
        %v8675 = vadd.f32 %v8226, %v8674
        %v8676 = vpop.f32.mrb[0].mxu0
        %v8677 = vadd.f32 %v8222, %v8676
        %v8678 = vpop.f32.mrb[0].mxu0
        %v8679 = vadd.f32 %v8226, %v8678
        %8680 = vmatprep.mubr.bf16.mxu0 %v8107
        %8681 = vmatmul.mubr.bf16.gmra.mrb[0].mxu0 %v8106
        %v8682 = vpop.f32.mrb[0].mxu0
        %v8683 = vadd.f32 %v8222, %v8682
        %v8684 = vpop.f32.mrb[0].mxu0
        %v8685 = vadd.f32 %v8226, %v8684
        %v8686 = vpop.f32.mrb[0].mxu0
        %v8687 = vadd.f32 %v8222, %v8686
        %v8688 = vpop.f32.mrb[0].mxu0
        %v8689 = vadd.f32 %v8226, %v8688
        %8690 = vmatprep.mubr.bf16.mxu0 %v8110
        %8691 = vmatmul.mubr.bf16.gmra.mrb[0].mxu0 %v8109
        %v8692 = vpop.f32.mrb[0].mxu0
        %v8693 = vadd.f32 %v8222, %v8692
        %v8694 = vpop.f32.mrb[0].mxu0
        %v8695 = vadd.f32 %v8226, %v8694
        %v8696 = vpop.f32.mrb[0].mxu0
        %v8697 = vadd.f32 %v8222, %v8696
        %v8698 = vpop.f32.mrb[0].mxu0
        %v8699 = vadd.f32 %v8226, %v8698
        %8700 = vmatprep.mubr.bf16.mxu0 %v8113
        %8701 = vmatmul.mubr.bf16.gmra.mrb[0].mxu0 %v8112
        %v8702 = vpop.f32.mrb[0].mxu0
        %v8703 = vadd.f32 %v8222, %v8702
        %v8704 = vpop.f32.mrb[0].mxu0
        %v8705 = vadd.f32 %v8226, %v8704
        %v8706 = vpop.f32.mrb[0].mxu0
        %v8707 = vadd.f32 %v8222, %v8706
        %v8708 = vpop.f32.mrb[0].mxu0
        %v8709 = vadd.f32 %v8226, %v8708
        %8710 = vmatprep.mubr.bf16.mxu0 %v8116
        %8711 = vmatmul.mubr.bf16.gmra.mrb[0].mxu0 %v8115
        %v8712 = vpop.f32.mrb[0].mxu0
        %v8713 = vadd.f32 %v8222, %v8712
        %v8714 = vpop.f32.mrb[0].mxu0
        %v8715 = vadd.f32 %v8226, %v8714
        %v8716 = vpop.f32.mrb[0].mxu0
        %v8717 = vadd.f32 %v8222, %v8716
        %v8718 = vpop.f32.mrb[0].mxu0
        %v8719 = vadd.f32 %v8226, %v8718
        %8720 = vmatprep.mubr.bf16.mxu0 %v8119
        %8721 = vmatmul.mubr.bf16.gmra.mrb[0].mxu0 %v8118
        %v8722 = vpop.f32.mrb[0].mxu0
        %v8723 = vadd.f32 %v8222, %v8722
        %v8724 = vpop.f32.mrb[0].mxu0
        %v8725 = vadd.f32 %v8226, %v8724
        %v8726 = vpop.f32.mrb[0].mxu0
        %v8727 = vadd.f32 %v8222, %v8726
        %v8728 = vpop.f32.mrb[0].mxu0
        %v8729 = vadd.f32 %v8226, %v8728
        %8730 = vdwg.mxu0
        %8731 = vmatprep.subr.bf16.mxu0 %v8523
        %8732 = vmatpush1.bf16.msra.mxu0 %v8522
        %8733 = vmatprep.subr.bf16.mxu0 %v8526
        %8734 = vmatpush1.bf16.msra.mxu0 %v8525
        %8735 = vmatprep.subr.bf16.mxu0 %v8529
        %8736 = vmatpush1.bf16.msra.mxu0 %v8528
        %8737 = vmatprep.subr.bf16.mxu0 %v8532
        %8738 = vmatpush1.bf16.msra.mxu0 %v8531
        %8739 = vmatprep.subr.bf16.mxu0 %v8535
        %8740 = vmatpush1.bf16.msra.mxu0 %v8534
        %8741 = vmatprep.subr.bf16.mxu0 %v8538
        %8742 = vmatpush1.bf16.msra.mxu0 %v8537
        %8743 = vmatprep.subr.bf16.mxu0 %v8541
        %8744 = vmatpush1.bf16.msra.mxu0 %v8540
        %8745 = vmatprep.subr.bf16.mxu0 %v8544
        %8746 = vmatpush1.bf16.msra.mxu0 %v8543
        %8747 = vmatprep.subr.bf16.mxu0 0
        %8748 = vmatpush1.bf16.msra.mxu0 0
        %8749 = vmatprep.subr.bf16.mxu0 0
        %8750 = vmatpush1.bf16.msra.mxu0 0
        %8751 = vmatprep.subr.bf16.mxu0 0
        %8752 = vmatpush1.bf16.msra.mxu0 0
        %8753 = vmatprep.subr.bf16.mxu0 0
        %8754 = vmatpush1.bf16.msra.mxu0 0
        %8755 = vmatprep.subr.bf16.mxu0 0
        %8756 = vmatpush1.bf16.msra.mxu0 0
        %8757 = vmatprep.subr.bf16.mxu0 0
        %8758 = vmatpush1.bf16.msra.mxu0 0
        %8759 = vmatprep.subr.bf16.mxu0 0
        %8760 = vmatpush1.bf16.msra.mxu0 0
        %8761 = vmatprep.subr.bf16.mxu0 0
        %8762 = vmatpush1.bf16.msra.mxu0 0
        %8763 = vmatprep.mubr.bf16.mxu0 0
        %8764 = vmatmul.mubr.bf16.gmra.mrb[0].mxu0 %v8099
        %v8765 = vpop.f32.mrb[0].mxu0
        %v8766 = vadd.f32 %v8653, %v8765
        %v8767 = vpop.f32.mrb[0].mxu0
        %v8768 = vadd.f32 %v8655, %v8767
        %v8769 = vpop.f32.mrb[0].mxu0
        %v8770 = vadd.f32 %v8657, %v8769
        %v8771 = vpop.f32.mrb[0].mxu0
        %v8772 = vadd.f32 %v8659, %v8771
        %8773 = vmatprep.mubr.bf16.mxu0 0
        %8774 = vmatmul.mubr.bf16.gmra.mrb[0].mxu0 %v8102
        %v8775 = vpop.f32.mrb[0].mxu0
        %v8776 = vadd.f32 %v8663, %v8775
        %v8777 = vpop.f32.mrb[0].mxu0
        %v8778 = vadd.f32 %v8665, %v8777
        %v8779 = vpop.f32.mrb[0].mxu0
        %v8780 = vadd.f32 %v8667, %v8779
        %v8781 = vpop.f32.mrb[0].mxu0
        %v8782 = vadd.f32 %v8669, %v8781
        %8783 = vmatprep.mubr.bf16.mxu0 0
        %8784 = vmatmul.mubr.bf16.gmra.mrb[0].mxu0 %v8105
        %v8785 = vpop.f32.mrb[0].mxu0
        %v8786 = vadd.f32 %v8673, %v8785
        %v8787 = vpop.f32.mrb[0].mxu0
        %v8788 = vadd.f32 %v8675, %v8787
        %v8789 = vpop.f32.mrb[0].mxu0
        %v8790 = vadd.f32 %v8677, %v8789
        %v8791 = vpop.f32.mrb[0].mxu0
        %v8792 = vadd.f32 %v8679, %v8791
        %8793 = vmatprep.mubr.bf16.mxu0 0
        %8794 = vmatmul.mubr.bf16.gmra.mrb[0].mxu0 %v8108
        %v8795 = vpop.f32.mrb[0].mxu0
        %v8796 = vadd.f32 %v8683, %v8795
        %v8797 = vpop.f32.mrb[0].mxu0
        %v8798 = vadd.f32 %v8685, %v8797
        %v8799 = vpop.f32.mrb[0].mxu0
        %v8800 = vadd.f32 %v8687, %v8799
        %v8801 = vpop.f32.mrb[0].mxu0
        %v8802 = vadd.f32 %v8689, %v8801
        %8803 = vmatprep.mubr.bf16.mxu0 0
        %8804 = vmatmul.mubr.bf16.gmra.mrb[0].mxu0 %v8111
        %v8805 = vpop.f32.mrb[0].mxu0
        %v8806 = vadd.f32 %v8693, %v8805
        %v8807 = vpop.f32.mrb[0].mxu0
        %v8808 = vadd.f32 %v8695, %v8807
        %v8809 = vpop.f32.mrb[0].mxu0
        %v8810 = vadd.f32 %v8697, %v8809
        %v8811 = vpop.f32.mrb[0].mxu0
        %v8812 = vadd.f32 %v8699, %v8811
        %8813 = vmatprep.mubr.bf16.mxu0 0
        %8814 = vmatmul.mubr.bf16.gmra.mrb[0].mxu0 %v8114
        %v8815 = vpop.f32.mrb[0].mxu0
        %v8816 = vadd.f32 %v8703, %v8815
        %v8817 = vpop.f32.mrb[0].mxu0
        %v8818 = vadd.f32 %v8705, %v8817
        %v8819 = vpop.f32.mrb[0].mxu0
        %v8820 = vadd.f32 %v8707, %v8819
        %v8821 = vpop.f32.mrb[0].mxu0
        %v8822 = vadd.f32 %v8709, %v8821
        %8823 = vmatprep.mubr.bf16.mxu0 0
        %8824 = vmatmul.mubr.bf16.gmra.mrb[0].mxu0 %v8117
        %v8825 = vpop.f32.mrb[0].mxu0
        %v8826 = vadd.f32 %v8713, %v8825
        %v8827 = vpop.f32.mrb[0].mxu0
        %v8828 = vadd.f32 %v8715, %v8827
        %v8829 = vpop.f32.mrb[0].mxu0
        %v8830 = vadd.f32 %v8717, %v8829
        %v8831 = vpop.f32.mrb[0].mxu0
        %v8832 = vadd.f32 %v8719, %v8831
        %8833 = vmatprep.mubr.bf16.mxu0 0
        %8834 = vmatmul.mubr.bf16.gmra.mrb[0].mxu0 %v8120
        %v8835 = vpop.f32.mrb[0].mxu0
        %v8836 = vadd.f32 %v8723, %v8835
        %v8837 = vpop.f32.mrb[0].mxu0
        %v8838 = vadd.f32 %v8725, %v8837
        %v8839 = vpop.f32.mrb[0].mxu0
        %v8840 = vadd.f32 %v8727, %v8839
        %v8841 = vpop.f32.mrb[0].mxu0
        %v8842 = vadd.f32 %v8729, %v8841
        %8843 = vdwg.mxu0
        %8844 = vmatprep.subr.bf16.mxu0 0
        %8845 = vmatpush1.bf16.msra.mxu0 %v8476
        %8846 = vmatprep.subr.bf16.mxu0 0
        %8847 = vmatpush1.bf16.msra.mxu0 %v8479
        %8848 = vmatprep.subr.bf16.mxu0 0
        %8849 = vmatpush1.bf16.msra.mxu0 %v8482
        %8850 = vmatprep.subr.bf16.mxu0 0
        %8851 = vmatpush1.bf16.msra.mxu0 %v8485
        %8852 = vmatprep.subr.bf16.mxu0 0
        %8853 = vmatpush1.bf16.msra.mxu0 %v8488
        %8854 = vmatprep.subr.bf16.mxu0 0
        %8855 = vmatpush1.bf16.msra.mxu0 %v8491
        %8856 = vmatprep.subr.bf16.mxu0 0
        %8857 = vmatpush1.bf16.msra.mxu0 %v8494
        %8858 = vmatprep.subr.bf16.mxu0 0
        %8859 = vmatpush1.bf16.msra.mxu0 %v8497
        %8860 = vmatprep.subr.bf16.mxu0 0
        %8861 = vmatpush1.bf16.msra.mxu0 %v8500
        %8862 = vmatprep.subr.bf16.mxu0 0
        %8863 = vmatpush1.bf16.msra.mxu0 %v8503
        %8864 = vmatprep.subr.bf16.mxu0 0
        %8865 = vmatpush1.bf16.msra.mxu0 %v8506
        %8866 = vmatprep.subr.bf16.mxu0 0
        %8867 = vmatpush1.bf16.msra.mxu0 %v8509
        %8868 = vmatprep.subr.bf16.mxu0 0
        %8869 = vmatpush1.bf16.msra.mxu0 %v8512
        %8870 = vmatprep.subr.bf16.mxu0 0
        %8871 = vmatpush1.bf16.msra.mxu0 %v8515
        %8872 = vmatprep.subr.bf16.mxu0 0
        %8873 = vmatpush1.bf16.msra.mxu0 %v8518
        %8874 = vmatprep.subr.bf16.mxu0 0
        %8875 = vmatpush1.bf16.msra.mxu0 %v8521
        %8876 = vmatprep.mubr.bf16.mxu0 %v8098
        %8877 = vmatmul.mubr.bf16.gmra.mrb[0].mxu0 %v8097
        %v8878 = vpop.f32.mrb[0].mxu0
        %v8879 = vadd.f32 %v8230, %v8878
        %v8880 = vpop.f32.mrb[0].mxu0
        %v8881 = vpop.f32.mrb[0].mxu0
        %v8882 = vadd.f32 %v8230, %v8881
        %v8883 = vpop.f32.mrb[0].mxu0
        %8884 = vmatprep.mubr.bf16.mxu0 %v8101
        %8885 = vmatmul.mubr.bf16.gmra.mrb[0].mxu0 %v8100
        %v8886 = vpop.f32.mrb[0].mxu0
        %v8887 = vadd.f32 %v8230, %v8886
        %v8888 = vpop.f32.mrb[0].mxu0
        %v8889 = vpop.f32.mrb[0].mxu0
        %v8890 = vadd.f32 %v8230, %v8889
        %v8891 = vpop.f32.mrb[0].mxu0
        %8892 = vmatprep.mubr.bf16.mxu0 %v8104
        %8893 = vmatmul.mubr.bf16.gmra.mrb[0].mxu0 %v8103
        %v8894 = vpop.f32.mrb[0].mxu0
        %v8895 = vadd.f32 %v8230, %v8894
        %v8896 = vpop.f32.mrb[0].mxu0
        %v8897 = vpop.f32.mrb[0].mxu0
        %v8898 = vadd.f32 %v8230, %v8897
        %v8899 = vpop.f32.mrb[0].mxu0
        %8900 = vmatprep.mubr.bf16.mxu0 %v8107
        %8901 = vmatmul.mubr.bf16.gmra.mrb[0].mxu0 %v8106
        %v8902 = vpop.f32.mrb[0].mxu0
        %v8903 = vadd.f32 %v8230, %v8902
        %v8904 = vpop.f32.mrb[0].mxu0
        %v8905 = vpop.f32.mrb[0].mxu0
        %v8906 = vadd.f32 %v8230, %v8905
        %v8907 = vpop.f32.mrb[0].mxu0
        %8908 = vmatprep.mubr.bf16.mxu0 %v8110
        %8909 = vmatmul.mubr.bf16.gmra.mrb[0].mxu0 %v8109
        %v8910 = vpop.f32.mrb[0].mxu0
        %v8911 = vadd.f32 %v8230, %v8910
        %v8912 = vpop.f32.mrb[0].mxu0
        %v8913 = vpop.f32.mrb[0].mxu0
        %v8914 = vadd.f32 %v8230, %v8913
        %v8915 = vpop.f32.mrb[0].mxu0
        %8916 = vmatprep.mubr.bf16.mxu0 %v8113
        %8917 = vmatmul.mubr.bf16.gmra.mrb[0].mxu0 %v8112
        %v8918 = vpop.f32.mrb[0].mxu0
        %v8919 = vadd.f32 %v8230, %v8918
        %v8920 = vpop.f32.mrb[0].mxu0
        %v8921 = vpop.f32.mrb[0].mxu0
        %v8922 = vadd.f32 %v8230, %v8921
        %v8923 = vpop.f32.mrb[0].mxu0
        %8924 = vmatprep.mubr.bf16.mxu0 %v8116
        %8925 = vmatmul.mubr.bf16.gmra.mrb[0].mxu0 %v8115
        %v8926 = vpop.f32.mrb[0].mxu0
        %v8927 = vadd.f32 %v8230, %v8926
        %v8928 = vpop.f32.mrb[0].mxu0
        %v8929 = vpop.f32.mrb[0].mxu0
        %v8930 = vadd.f32 %v8230, %v8929
        %v8931 = vpop.f32.mrb[0].mxu0
        %8932 = vmatprep.mubr.bf16.mxu0 %v8119
        %8933 = vmatmul.mubr.bf16.gmra.mrb[0].mxu0 %v8118
        %v8934 = vpop.f32.mrb[0].mxu0
        %v8935 = vadd.f32 %v8230, %v8934
        %v8936 = vpop.f32.mrb[0].mxu0
        %v8937 = vpop.f32.mrb[0].mxu0
        %v8938 = vadd.f32 %v8230, %v8937
        %v8939 = vpop.f32.mrb[0].mxu0
        %8940 = vdwg.mxu0
        %8941 = vmatprep.subr.bf16.mxu0 0
        %8942 = vmatpush1.bf16.msra.mxu0 %v8524
        %8943 = vmatprep.subr.bf16.mxu0 0
        %8944 = vmatpush1.bf16.msra.mxu0 %v8527
        %8945 = vmatprep.subr.bf16.mxu0 0
        %8946 = vmatpush1.bf16.msra.mxu0 %v8530
        %8947 = vmatprep.subr.bf16.mxu0 0
        %8948 = vmatpush1.bf16.msra.mxu0 %v8533
        %8949 = vmatprep.subr.bf16.mxu0 0
        %8950 = vmatpush1.bf16.msra.mxu0 %v8536
        %8951 = vmatprep.subr.bf16.mxu0 0
        %8952 = vmatpush1.bf16.msra.mxu0 %v8539
        %8953 = vmatprep.subr.bf16.mxu0 0
        %8954 = vmatpush1.bf16.msra.mxu0 %v8542
        %8955 = vmatprep.subr.bf16.mxu0 0
        %8956 = vmatpush1.bf16.msra.mxu0 %v8545
        %8957 = vmatprep.subr.bf16.mxu0 0
        %8958 = vmatpush1.bf16.msra.mxu0 0
        %8959 = vmatprep.subr.bf16.mxu0 0
        %8960 = vmatpush1.bf16.msra.mxu0 0
        %8961 = vmatprep.subr.bf16.mxu0 0
        %8962 = vmatpush1.bf16.msra.mxu0 0
        %8963 = vmatprep.subr.bf16.mxu0 0
        %8964 = vmatpush1.bf16.msra.mxu0 0
        %8965 = vmatprep.subr.bf16.mxu0 0
        %8966 = vmatpush1.bf16.msra.mxu0 0
        %8967 = vmatprep.subr.bf16.mxu0 0
        %8968 = vmatpush1.bf16.msra.mxu0 0
        %8969 = vmatprep.subr.bf16.mxu0 0
        %8970 = vmatpush1.bf16.msra.mxu0 0
        %8971 = vmatprep.subr.bf16.mxu0 0
        %8972 = vmatpush1.bf16.msra.mxu0 0
        %8973 = vmatprep.mubr.bf16.mxu0 0
        %8974 = vmatmul.mubr.bf16.gmra.mrb[0].mxu0 %v8099
        %v8975 = vpop.f32.mrb[0].mxu0
        %v8976 = vadd.f32 %v8879, %v8975
        %v8977 = vpop.f32.mrb[0].mxu0
        %v8978 = vpop.f32.mrb[0].mxu0
        %v8979 = vadd.f32 %v8882, %v8978
        %v8980 = vpop.f32.mrb[0].mxu0
        %8981 = vmatprep.mubr.bf16.mxu0 0
        %8982 = vmatmul.mubr.bf16.gmra.mrb[0].mxu0 %v8102
        %v8983 = vpop.f32.mrb[0].mxu0
        %v8984 = vadd.f32 %v8887, %v8983
        %v8985 = vpop.f32.mrb[0].mxu0
        %v8986 = vpop.f32.mrb[0].mxu0
        %v8987 = vadd.f32 %v8890, %v8986
        %v8988 = vpop.f32.mrb[0].mxu0
        %8989 = vmatprep.mubr.bf16.mxu0 0
        %8990 = vmatmul.mubr.bf16.gmra.mrb[0].mxu0 %v8105
        %v8991 = vpop.f32.mrb[0].mxu0
        %v8992 = vadd.f32 %v8895, %v8991
        %v8993 = vpop.f32.mrb[0].mxu0
        %v8994 = vpop.f32.mrb[0].mxu0
        %v8995 = vadd.f32 %v8898, %v8994
        %v8996 = vpop.f32.mrb[0].mxu0
        %8997 = vmatprep.mubr.bf16.mxu0 0
        %8998 = vmatmul.mubr.bf16.gmra.mrb[0].mxu0 %v8108
        %v8999 = vpop.f32.mrb[0].mxu0
        %v9000 = vadd.f32 %v8903, %v8999
        %v9001 = vpop.f32.mrb[0].mxu0
        %v9002 = vpop.f32.mrb[0].mxu0
        %v9003 = vadd.f32 %v8906, %v9002
        %v9004 = vpop.f32.mrb[0].mxu0
        %9005 = vmatprep.mubr.bf16.mxu0 0
        %9006 = vmatmul.mubr.bf16.gmra.mrb[0].mxu0 %v8111
        %v9007 = vpop.f32.mrb[0].mxu0
        %v9008 = vadd.f32 %v8911, %v9007
        %v9009 = vpop.f32.mrb[0].mxu0
        %v9010 = vpop.f32.mrb[0].mxu0
        %v9011 = vadd.f32 %v8914, %v9010
        %v9012 = vpop.f32.mrb[0].mxu0
        %9013 = vmatprep.mubr.bf16.mxu0 0
        %9014 = vmatmul.mubr.bf16.gmra.mrb[0].mxu0 %v8114
        %v9015 = vpop.f32.mrb[0].mxu0
        %v9016 = vadd.f32 %v8919, %v9015
        %v9017 = vpop.f32.mrb[0].mxu0
        %v9018 = vpop.f32.mrb[0].mxu0
        %v9019 = vadd.f32 %v8922, %v9018
        %v9020 = vpop.f32.mrb[0].mxu0
        %9021 = vmatprep.mubr.bf16.mxu0 0
        %9022 = vmatmul.mubr.bf16.gmra.mrb[0].mxu0 %v8117
        %v9023 = vpop.f32.mrb[0].mxu0
        %v9024 = vadd.f32 %v8927, %v9023
        %v9025 = vpop.f32.mrb[0].mxu0
        %v9026 = vpop.f32.mrb[0].mxu0
        %v9027 = vadd.f32 %v8930, %v9026
        %v9028 = vpop.f32.mrb[0].mxu0
        %9029 = vmatprep.mubr.bf16.mxu0 0
        %9030 = vmatmul.mubr.bf16.gmra.mrb[0].mxu0 %v8120
        %v9031 = vpop.f32.mrb[0].mxu0
        %v9032 = vadd.f32 %v8935, %v9031
        %v9033 = vpop.f32.mrb[0].mxu0
        %v9034 = vpop.f32.mrb[0].mxu0
        %v9035 = vadd.f32 %v8938, %v9034
        %v9036 = vpop.f32.mrb[0].mxu0
        %9037 = vdwg.mxu0
        %9038 = vst [vmem:[%s300] sm:$0xff] %v8766
        %9039 = vst [vmem:[%s300 + $0x8] sm:$0xff] %v8768
        %9040 = vst [vmem:[%s300 + $0x10] sm:$0xff] %v8976
        %9041 = vst [vmem:[%s300 + $0x18] sm:$0xff] %v8770
        %9042 = vst [vmem:[%s300 + $0x20] sm:$0xff] %v8772
        %9043 = vst [vmem:[%s300 + $0x28] sm:$0xff] %v8979
        %9044 = vst [vmem:[%s300 + $0x30] sm:$0xff] %v8776
        %9045 = vst [vmem:[%s300 + $0x38] sm:$0xff] %v8778
        %9046 = vst [vmem:[%s300 + $0x40] sm:$0xff] %v8984
        %9047 = vst [vmem:[%s300 + $0x48] sm:$0xff] %v8780
        %9048 = vst [vmem:[%s300 + $0x50] sm:$0xff] %v8782
        %9049 = vst [vmem:[%s300 + $0x58] sm:$0xff] %v8987
        %9050 = vst [vmem:[%s300 + $0x60] sm:$0xff] %v8786
        %9051 = vst [vmem:[%s300 + $0x68] sm:$0xff] %v8788
        %9052 = vst [vmem:[%s300 + $0x70] sm:$0xff] %v8992
        %9053 = vst [vmem:[%s300 + $0x78] sm:$0xff] %v8790
        %9054 = vst [vmem:[%s300 + $0x80] sm:$0xff] %v8792
        %9055 = vst [vmem:[%s300 + $0x88] sm:$0xff] %v8995
        %9056 = vst [vmem:[%s300 + $0x90] sm:$0xff] %v8796
        %9057 = vst [vmem:[%s300 + $0x98] sm:$0xff] %v8798
        %9058 = vst [vmem:[%s300 + $0xa0] sm:$0xff] %v9000
        %9059 = vst [vmem:[%s300 + $0xa8] sm:$0xff] %v8800
        %9060 = vst [vmem:[%s300 + $0xb0] sm:$0xff] %v8802
        %9061 = vst [vmem:[%s300 + $0xb8] sm:$0xff] %v9003
        %9062 = vst [vmem:[%s300 + $0xc0] sm:$0xff] %v8806
        %9063 = vst [vmem:[%s300 + $0xc8] sm:$0xff] %v8808
        %9064 = vst [vmem:[%s300 + $0xd0] sm:$0xff] %v9008
        %9065 = vst [vmem:[%s300 + $0xd8] sm:$0xff] %v8810
        %9066 = vst [vmem:[%s300 + $0xe0] sm:$0xff] %v8812
        %9067 = vst [vmem:[%s300 + $0xe8] sm:$0xff] %v9011
        %9068 = vst [vmem:[%s300 + $0xf0] sm:$0xff] %v8816
        %9069 = vst [vmem:[%s300 + $0xf8] sm:$0xff] %v8818
        %9070 = vst [vmem:[%s300 + $0x100] sm:$0xff] %v9016
        %9071 = vst [vmem:[%s300 + $0x108] sm:$0xff] %v8820
        %9072 = vst [vmem:[%s300 + $0x110] sm:$0xff] %v8822
        %9073 = vst [vmem:[%s300 + $0x118] sm:$0xff] %v9019
        %9074 = vst [vmem:[%s300 + $0x120] sm:$0xff] %v8826
        %9075 = vst [vmem:[%s300 + $0x128] sm:$0xff] %v8828
        %9076 = vst [vmem:[%s300 + $0x130] sm:$0xff] %v9024
        %9077 = vst [vmem:[%s300 + $0x138] sm:$0xff] %v8830
        %9078 = vst [vmem:[%s300 + $0x140] sm:$0xff] %v8832
        %9079 = vst [vmem:[%s300 + $0x148] sm:$0xff] %v9027
        %9080 = vst [vmem:[%s300 + $0x150] sm:$0xff] %v8836
        %9081 = vst [vmem:[%s300 + $0x158] sm:$0xff] %v8838
        %9082 = vst [vmem:[%s300 + $0x160] sm:$0xff] %v9032
        %9083 = vst [vmem:[%s300 + $0x168] sm:$0xff] %v8840
        %9084 = vst [vmem:[%s300 + $0x170] sm:$0xff] %v8842
        %9085 = vst [vmem:[%s300 + $0x178] sm:$0xff] %v9035
        %s9086 = sand.u32 %s156, 1
        %s9087 = scalar_lea.sflag [#allocation4], %s9086
        %s9088 = sand.u32 %s156, 1
        %s9089 = smul.addr %s9088, 384
        %s9090 = scalar_lea.vmem [#allocation10], %s9089
        // Predicated region
        $region57: #{tpu_custom_call.1} parent=39 // pred_check
          %p9091 = pneg %p166
        $region58: #{tpu_custom_call.1} parent=39 // pred_check_branch
          %9093 = sbr.rel (%p9091) target = $region60
        $region59: #{tpu_custom_call.1} parent=39 // pred_region
          %s9094 = smul.u32 16, %s29
          %s9096 = ssub.s32 6144, 6144
          %9097 = vsyncadd %s9087, %s9096
          %s9098 = smul.addr %s9094, 3
          %s9099 = smul.addr %s28, 96
          %s9100 = sadd.s32 %s9098, %s9099
          %s9101 = smul.addr %s9100, 128
          %s9102 = scalar_lea.hbm %s5, %s9101
          %s9103 = sshll.u32 %s9090, 4
          %s9104 = int_to_ptr.vmem [resolvable:$true] %s9103
          %9109 = dma.vmem_to_hbm [thread:$0]  %s9104, 6144, %s9102, %s9087, 384, 384, 24
        $region60: #{tpu_custom_call.1} parent=39 // pred_fallthru
          _
      $region40: #{tpu_custom_call.1} parent=5 // pred_fallthru
        _
      %p9110 = scmp.le.s32.totalorder 2, %s19
      // Predicated region
      $region61: #{tpu_custom_call.1} parent=5 // pred_check
        %p9111 = pneg %p9110
      $region62: #{tpu_custom_call.1} parent=5 // pred_check_branch
        %9113 = sbr.rel (%p9111) target = $region64
      $region63: #{tpu_custom_call.1} parent=5 // pred_region
        %s9114 = ssub.s32 %s19, 2
        // Predicated region
        $region65: #{tpu_custom_call.1} parent=63 // pred_check
          %p9115 = pneg %p172
        $region66: #{tpu_custom_call.1} parent=63 // pred_check_branch
          %9117 = sbr.rel (%p9115) target = $region68
        $region67: #{tpu_custom_call.1} parent=63 // pred_region
          %s9118 = sand.u32 %s157, 1
          %s9119 = scalar_lea.sflag [#allocation4], %s9118
          %s9120 = sand.u32 %s157, 1
          %s9121 = smul.addr %s9120, 384
          %s9122 = scalar_lea.vmem [#allocation10], %s9121
          %9123 = dma.done %s9119, 6144
        $region68: #{tpu_custom_call.1} parent=63 // pred_fallthru
          _
      $region64: #{tpu_custom_call.1} parent=5 // pred_fallthru
        _
    $region6: #{tpu_custom_call.1} parent=1 // loop_footer
      %s23 = sadd.s32 1, %s19
    $region7: #{tpu_custom_call.1} parent=1 // loop_footer_branch
      %18 = sbr.rel target = $region3
    $region8: #{tpu_custom_call.1} parent=1 // loop_exit
      _
    %9124 = vsyncpa [#allocation3], 1
    %s9125 = scalar_lea.sflag [#allocation3], 1
    %9126 = vsyncpa %s9125, 1
    %9127 = vsyncpa [#allocation6], 1
    %9128 = vsyncpa [#allocation9], 1
    %9129 = vsyncpa [#allocation4], 1
    %s9130 = scalar_lea.sflag [#allocation4], 1
    %9131 = vsyncpa %s9130, 1

</llo_original>
